<compile_context>
chip_gen: v5e
topology: v5e:2x2
jax: 0.10.0
libtpu: 0.0.40
codegen_flags: <defaults>
</compile_context>

<pallas_src>
import functools

import jax
import jax.numpy as jnp
from jax.experimental import pallas as pl
from jax.experimental.pallas import tpu as pltpu


def _round_up(x, m):
    return (x + m - 1) // m * m


def _ceil_div(a, b):
    return -(-a // b)


# ---------------------------------------------------------------------------
# Kernel 1: fused transposed-conv phase GEMM  (taps accumulated in-kernel)
# ---------------------------------------------------------------------------
def _tconv_phase_kernel(a_cur_ref, a_nxt_ref, w_ref, b_ref, o_ref, acc_ref, *,
                        tap_offsets, tm, act):
    """One (M-tile, N-tile) grid step of a phase of the transposed conv.

    a_cur_ref / a_nxt_ref : (tm, Cin) f32   row tile i and its halo tile i+1
                            of the flattened padded activation slab.
    w_ref                 : (T, Cin, tn) bf16   per-tap weight slices.
    b_ref                 : (1, tn) f32         padded bias.
    o_ref                 : (tm, tn) f32        lane-dense output tile.
    acc_ref               : (tm, tn) f32        VMEM accumulator scratch.

    For tap t the A rows needed are rows [d_t, d_t + tm) of the virtual
    concatenation [cur | nxt] (d_t < tm by construction), so every tap is at
    most two partial MXU dots on ref slices -- no HBM im2col is ever built.
    """
    acc_ref[...] = jnp.zeros_like(acc_ref)
    for t, d in enumerate(tap_offsets):
        w_t = w_ref[t]                                     # (Cin, tn) bf16
        if d == 0:
            a_t = a_cur_ref[...].astype(jnp.bfloat16)
            acc_ref[...] = acc_ref[...] + jnp.dot(
                a_t, w_t, preferred_element_type=jnp.float32)
        else:
            n_hi = tm - d
            a_hi = a_cur_ref[pl.ds(d, n_hi), :].astype(jnp.bfloat16)
            acc_ref[pl.ds(0, n_hi), :] = acc_ref[pl.ds(0, n_hi), :] + jnp.dot(
                a_hi, w_t, preferred_element_type=jnp.float32)
            a_lo = a_nxt_ref[pl.ds(0, d), :].astype(jnp.bfloat16)
            acc_ref[pl.ds(n_hi, d), :] = acc_ref[pl.ds(n_hi, d), :] + jnp.dot(
                a_lo, w_t, preferred_element_type=jnp.float32)
    out = acc_ref[...] + b_ref[...]                        # f32 epilogue (v5e-safe)
    if act == "relu":
        out = jnp.maximum(out, 0.0)
    elif act == "tanh":
        out = jnp.tanh(out)
    o_ref[...] = out


def _phase_gemm(x2, w_taps, bias_p, tap_offsets, *, tm, num_m, act):
    """x2: (rows_pad, Cin) f32 (includes one extra zero halo tile);
       w_taps: (T, Cin, Np) bf16;  bias_p: (1, Np) f32."""
    rows_pad, cin = x2.shape
    T, _, npad = w_taps.shape
    tn = 256 if npad % 256 == 0 else 128        # MXU-aligned N tile
    num_n = npad // tn
    kernel = functools.partial(
        _tconv_phase_kernel, tap_offsets=tuple(tap_offsets), tm=tm, act=act)
    return pl.pallas_call(
        kernel,
        out_shape=jax.ShapeDtypeStruct((num_m * tm, npad), jnp.float32),
        grid_spec=pltpu.PrefetchScalarGridSpec(
            num_scalar_prefetch=0,
            grid=(num_m, num_n),
            in_specs=[
                pl.BlockSpec((tm, cin), lambda i, j: (i, 0)),       # row tile i
                pl.BlockSpec((tm, cin), lambda i, j: (i + 1, 0)),   # halo tile i+1
                pl.BlockSpec((T, cin, tn), lambda i, j: (0, 0, j)),  # tap weights
                pl.BlockSpec((1, tn), lambda i, j: (0, j)),          # bias
            ],
            out_specs=pl.BlockSpec((tm, tn), lambda i, j: (i, j)),
            scratch_shapes=[pltpu.VMEM((tm, tn), jnp.float32)],
        ),
        compiler_params=pltpu.CompilerParams(
            dimension_semantics=("parallel", "parallel"),  # megacore-friendly
            vmem_limit_bytes=32 * 1024 * 1024,
        ),
    )(x2, x2, w_taps, bias_p)


# ---------------------------------------------------------------------------
# Kernel 2: fused InstanceNorm2d (affine=False) + activation, row-tiled
# ---------------------------------------------------------------------------
def _instnorm_act_kernel(x_ref, o_ref, *, L, eps, act):
    x = x_ref[...]                                          # (tr, Lp) f32
    lane = jax.lax.broadcasted_iota(jnp.int32, x.shape, 1)
    mask = lane < L                                         # keep: padded lanes
    xm = jnp.where(mask, x, 0.0)
    inv_l = 1.0 / float(L)
    mean = jnp.sum(xm, axis=-1, keepdims=True) * inv_l
    d = jnp.where(mask, x - mean, 0.0)
    var = jnp.sum(d * d, axis=-1, keepdims=True) * inv_l    # biased, like PyTorch
    y = (x - mean) * jax.lax.rsqrt(var + eps)
    if act == "relu":
        y = jnp.maximum(y, 0.0)
    elif act == "tanh":
        y = jnp.tanh(y)
    o_ref[...] = y


def instance_norm_act(x, eps=1e-5, act="none"):
    """InstanceNorm2d(affine=False) + activation on NCHW input."""
    # TODO(synk): for very large H*W a two-pass chunked-L reduction would be
    # needed; single L-block is fine at these sizes.
    B, C, H, W = x.shape
    R, L = B * C, H * W
    Lp = _round_up(L, 128)
    tr = min(256, _round_up(R, 8))
    Rp = _round_up(R, tr)
    x2 = jnp.zeros((Rp, Lp), jnp.float32).at[:R, :L].set(
        x.astype(jnp.float32).reshape(R, L))
    out = pl.pallas_call(
        functools.partial(_instnorm_act_kernel, L=L, eps=eps, act=act),
        out_shape=jax.ShapeDtypeStruct((Rp, Lp), jnp.float32),
        grid_spec=pltpu.PrefetchScalarGridSpec(
            num_scalar_prefetch=0,
            grid=(Rp // tr,),
            in_specs=[pl.BlockSpec((tr, Lp), lambda i: (i, 0))],
            out_specs=pl.BlockSpec((tr, Lp), lambda i: (i, 0)),
        ),
        compiler_params=pltpu.CompilerParams(
            dimension_semantics=("parallel",),
            vmem_limit_bytes=32 * 1024 * 1024,
        ),
    )(x2)
    return out[:R, :L].reshape(B, C, H, W)


# ---------------------------------------------------------------------------
# Parameter setup (spectral norm applied once; weights pre-laid-out per phase)
# ---------------------------------------------------------------------------
def _spectral_normalize_tconv(w, key, n_iter=10):
    # PyTorch spectral_norm uses dim=1 for ConvTranspose2d: matrix (Cout, Cin*kh*kw)
    cin, cout, kh, kw = w.shape
    w_mat = jnp.transpose(w, (1, 0, 2, 3)).reshape(cout, -1)
    u = jax.random.normal(key, (cout,), jnp.float32)
    u = u / (jnp.linalg.norm(u) + 1e-12)
    v = None
    for _ in range(n_iter):
        v = w_mat.T @ u
        v = v / (jnp.linalg.norm(v) + 1e-12)
        u = w_mat @ v
        u = u / (jnp.linalg.norm(u) + 1e-12)
    sigma = u @ (w_mat @ v)
    return w / sigma


def init_tr_conv2d_block(key, in_planes, out_planes, kernel_size=3, stride=1,
                         padding=0, bias=True, norm=None, nl=None):
    k1, k2, k3 = jax.random.split(key, 3)
    w = 0.1 * jax.random.normal(
        k1, (in_planes, out_planes, kernel_size, kernel_size), jnp.float32)
    w = _spectral_normalize_tconv(w, k2)
    b = 0.01 * jax.random.normal(k3, (out_planes,), jnp.float32) if bias else None

    Np = _round_up(out_planes, 128)
    bias_p = jnp.zeros((1, Np), jnp.float32)
    if b is not None:
        bias_p = bias_p.at[0, :out_planes].set(b)

    # Pre-layout per-phase tap-gathered weights once (bf16, lane-padded Cout).
    phases = {}
    s = stride
    for qy in range(s):
        for qx in range(s):
            taps_y = [ky for ky in range(kernel_size) if ky % s == qy]
            taps_x = [kx for kx in range(kernel_size) if kx % s == qx]
            if not taps_y or not taps_x:
                phases[(qy, qx)] = None        # bias-only phase (only if k < s)
                continue
            w_taps = jnp.stack(
                [w[:, :, ky, kx] for ky in taps_y for kx in taps_x], axis=0)
            w_taps_p = jnp.zeros(
                (w_taps.shape[0], in_planes, Np),
                jnp.float32).at[:, :, :out_planes].set(w_taps)
            phases[(qy, qx)] = {"w": w_taps_p.astype(jnp.bfloat16),
                                "taps_y": taps_y, "taps_x": taps_x}

    cfg = dict(in_planes=in_planes, out_planes=out_planes, k=kernel_size,
               s=stride, p=padding, norm=norm, nl=nl, Np=Np)
    return {"w": w, "b": b, "bias_p": bias_p, "phases": phases, "cfg": cfg}


# ---------------------------------------------------------------------------
# Forward pass
# ---------------------------------------------------------------------------
def _axis_phase_geom(q, k, s, p, in_size, out_size):
    n_taps = len([kk for kk in range(k) if kk % s == q])
    n_lo = -((q - p) // s)                     # ceil((p - q) / s)
    n_hi = (out_size - 1 + p - q) // s
    count = n_hi - n_lo + 1
    if count <= 0:
        return dict(n_taps=n_taps, n_lo=n_lo, count=0, pad_lo=0, pad_hi=0, o0=0)
    pad_lo = max(0, (n_taps - 1) - n_lo) if n_taps > 0 else 0
    pad_hi = max(0, n_hi - (in_size - 1)) if n_taps > 0 else 0
    o0 = n_lo * s + q - p
    return dict(n_taps=n_taps, n_lo=n_lo, count=count,
                pad_lo=pad_lo, pad_hi=pad_hi, o0=o0)


def tr_conv2d_block_forward(params, x):
    cfg = params["cfg"]
    k, s, p = cfg["k"], cfg["s"], cfg["p"]
    cin, cout, Np = cfg["in_planes"], cfg["out_planes"], cfg["Np"]
    norm, nl = cfg["norm"], cfg["nl"]
    B, Cx, H, W = x.shape
    assert Cx == cin
    Ho = (H - 1) * s - 2 * p + k
    Wo = (W - 1) * s - 2 * p + k

    ygeo = [_axis_phase_geom(qy, k, s, p, H, Ho) for qy in range(s)]
    xgeo = [_axis_phase_geom(qx, k, s, p, W, Wo) for qx in range(s)]
    pt = max([g["pad_lo"] for g in ygeo if g["count"] > 0 and g["n_taps"] > 0] + [0])
    pb = max([g["pad_hi"] for g in ygeo if g["count"] > 0 and g["n_taps"] > 0] + [0])
    pL = max([g["pad_lo"] for g in xgeo if g["count"] > 0 and g["n_taps"] > 0] + [0])
    pR = max([g["pad_hi"] for g in xgeo if g["count"] > 0 and g["n_taps"] > 0] + [0])
    Hp, Wp = H + pt + pb, W + pL + pR

    # global max tap offset -> row-tile size (must exceed it for the 2-block halo)
    max_d = 0
    for qy in range(s):
        for qx in range(s):
            if params["phases"][(qy, qx)] is None:
                continue
            if ygeo[qy]["count"] <= 0 or xgeo[qx]["count"] <= 0:
                continue
            max_d = max(max_d,
                        (pt + ygeo[qy]["n_lo"]) * Wp + (pL + xgeo[qx]["n_lo"]))
    tm = max(256, _round_up(max_d + 1, 8))

    # Flattened, zero-padded activation slab (channels-last, f32), built once.
    x_nhwc = jnp.transpose(x, (0, 2, 3, 1)).astype(jnp.float32)
    x_pad = jnp.pad(x_nhwc, ((0, 0), (pt, pb), (pL, pR), (0, 0)))
    rows = B * Hp * Wp
    num_m = _ceil_div(rows, tm)
    rows_pad = (num_m + 1) * tm                      # +1 zero halo tile
    x2 = jnp.zeros((rows_pad, cin), jnp.float32).at[:rows].set(
        x_pad.reshape(rows, cin))

    conv_act = (nl or "none") if norm is None else "none"
    out_nhwc = jnp.zeros((B, Ho, Wo, cout), jnp.float32)

    for qy in range(s):
        gy = ygeo[qy]
        if gy["count"] <= 0:
            continue
        for qx in range(s):
            gx = xgeo[qx]
            if gx["count"] <= 0:
                continue
            Hq, Wq = gy["count"], gx["count"]
            oy0, ox0 = gy["o0"], gx["o0"]
            ph = params["phases"][(qy, qx)]
            if ph is None:                           # bias-only phase (k < s)
                fill = params["bias_p"][0, :cout]
                if conv_act == "relu":
                    fill = jnp.maximum(fill, 0.0)
                elif conv_act == "tanh":
                    fill = jnp.tanh(fill)
                out_nhwc = out_nhwc.at[:, oy0::s, ox0::s, :].set(
                    jnp.broadcast_to(fill, (B, Hq, Wq, cout)))
                continue
            My, Mx = len(ph["taps_y"]), len(ph["taps_x"])
            base_y = [pt + gy["n_lo"] - m for m in range(My)]
            base_x = [pL + gx["n_lo"] - m for m in range(Mx)]
            tap_offsets = tuple(by * Wp + bx for by in base_y for bx in base_x)
            o2 = _phase_gemm(x2, ph["w"], params["bias_p"], tap_offsets,
                             tm=tm, num_m=num_m, act=conv_act)
            po = o2[:rows].reshape(B, Hp, Wp, Np)[:, :Hq, :Wq, :cout]
            out_nhwc = out_nhwc.at[:, oy0::s, ox0::s, :].set(po)

    y = jnp.transpose(out_nhwc, (0, 3, 1, 2))        # NCHW
    if norm == "instance":
        y = instance_norm_act(y, eps=1e-5, act=(nl or "none"))
    return y


# ---------------------------------------------------------------------------
# Pure-JAX reference (same bf16-rounded operands)
# ---------------------------------------------------------------------------
def reference_forward(params, x):
    cfg = params["cfg"]
    k, s, p = cfg["k"], cfg["s"], cfg["p"]
    w = params["w"].astype(jnp.bfloat16).astype(jnp.float32)
    wf = jnp.transpose(jnp.flip(w, (2, 3)), (1, 0, 2, 3))    # (Cout, Cin, kh, kw)
    pad = k - 1 - p
    y = jax.lax.conv_general_dilated(
        x, wf, window_strides=(1, 1),
        padding=[(pad, pad), (pad, pad)],
        lhs_dilation=(s, s),
        dimension_numbers=("NCHW", "OIHW", "NCHW"),
        precision=jax.lax.Precision.HIGHEST)
    if params["b"] is not None:
        y = y + params["b"][None, :, None, None]
    if cfg["norm"] == "instance":
        m = jnp.mean(y, axis=(2, 3), keepdims=True)
        v = jnp.mean((y - m) ** 2, axis=(2, 3), keepdims=True)
        y = (y - m) * jax.lax.rsqrt(v + 1e-5)
    if cfg["nl"] == "relu":
        y = jnp.maximum(y, 0.0)
    elif cfg["nl"] == "tanh":
        y = jnp.tanh(y)
    return y


# ---------------------------------------------------------------------------
# main
# ---------------------------------------------------------------------------
if __name__ == "__main__":
    key = jax.random.PRNGKey(0)
    k_p1, k_p2, k_x = jax.random.split(key, 3)

    B, Cin, H, W = 2, 32, 16, 16
    x = jax.random.normal(k_x, (B, Cin, H, W), jnp.float32)
    x = x.astype(jnp.bfloat16).astype(jnp.float32)   # shared bf16 rounding w/ reference

    # Config 1: SoloGAN-decoder style upsampling block:
    #   TrConv2dBlock(32, 16, k=4, s=2, p=1, bias=True,
    #                 norm_layer=InstanceNorm2d, nl_layer=ReLU)
    p1 = init_tr_conv2d_block(k_p1, 32, 16, kernel_size=4, stride=2, padding=1,
                              bias=True, norm="instance", nl="relu")
    fwd1 = jax.jit(lambda xx: tr_conv2d_block_forward(p1, xx))
    y1 = jax.block_until_ready(fwd1(x))
    r1 = reference_forward(p1, x)
    assert y1.shape == (B, 16, 32, 32), y1.shape
    assert bool(jnp.all(jnp.isfinite(y1)))
    err1 = float(jnp.max(jnp.abs(y1 - r1)))
    assert err1 < 5e-3, err1

    # Config 2: module defaults (k=3, s=1, p=0, bias=True, no norm / activation)
    p2 = init_tr_conv2d_block(k_p2, 32, 16, kernel_size=3, stride=1, padding=0,
                              bias=True, norm=None, nl=None)
    fwd2 = jax.jit(lambda xx: tr_conv2d_block_forward(p2, xx))
    y2 = jax.block_until_ready(fwd2(x))
    r2 = reference_forward(p2, x)
    assert y2.shape == (B, 16, 18, 18), y2.shape
    assert bool(jnp.all(jnp.isfinite(y2)))
    err2 = float(jnp.max(jnp.abs(y2 - r2)))
    assert err2 < 5e-3, err2

    print("KERNEL_OK")
</pallas_src>

<mosaic_0001>
module attributes {stable_mosaic.version = 11 : i64} {
  func.func @_tconv_phase_kernel(%arg0: i32, %arg1: i32, %arg2: memref<256x32xf32, #tpu.memory_space<vmem>>, %arg3: memref<256x32xf32, #tpu.memory_space<vmem>>, %arg4: memref<4x32x128xbf16, #tpu.memory_space<vmem>>, %arg5: memref<1x128xf32, #tpu.memory_space<vmem>>, %arg6: memref<256x128xf32, #tpu.memory_space<vmem>>, %arg7: memref<256x128xf32, #tpu.memory_space<vmem>>) attributes {dimension_semantics = [#tpu.dimension_semantics<parallel>, #tpu.dimension_semantics<parallel>], iteration_bounds = array<i64: 3, 1>, scalar_prefetch = 0 : i64, scratch_operands = 1 : i64, tpu.core_type = #tpu.core_type<tc>, window_params = [{transform_indices = @transform_0, window_bounds = array<i64: 256, 32>}, {transform_indices = @transform_1, window_bounds = array<i64: 256, 32>}, {transform_indices = @transform_2, window_bounds = array<i64: 4, 32, 128>}, {transform_indices = @transform_3, window_bounds = array<i64: 1, 128>}, {transform_indices = @transform_4, window_bounds = array<i64: 256, 128>}]} {
    %cst = arith.constant 0.000000e+00 : f32
    %0 = vector.broadcast %cst : f32 to vector<256x128xf32>
    %c0 = arith.constant 0 : index
    %c0_0 = arith.constant 0 : index
    %1 = vector.load %arg7[%c0, %c0_0] : memref<256x128xf32, #tpu.memory_space<vmem>>, vector<256x128xf32>
    tpu.vector_store %arg7[%c0, %c0_0], %0 {strides = array<i32>} : memref<256x128xf32, #tpu.memory_space<vmem>>, vector<256x128xf32>,
    %c0_1 = arith.constant 0 : index
    %c0_2 = arith.constant 0 : index
    %c0_3 = arith.constant 0 : index
    %2 = vector.load %arg4[%c0_1, %c0_2, %c0_3] : memref<4x32x128xbf16, #tpu.memory_space<vmem>>, vector<1x32x128xbf16>
    %3 = vector.shape_cast %2 : vector<1x32x128xbf16> to vector<32x128xbf16>
    %c38 = arith.constant 38 : index
    %c0_4 = arith.constant 0 : index
    %4 = vector.load %arg2[%c38, %c0_4] : memref<256x32xf32, #tpu.memory_space<vmem>>, vector<218x32xf32>
    %5 = arith.truncf %4 : vector<218x32xf32> to vector<218x32xbf16>
    %c0_5 = arith.constant 0 : index
    %c0_6 = arith.constant 0 : index
    %6 = vector.load %arg7[%c0_5, %c0_6] : memref<256x128xf32, #tpu.memory_space<vmem>>, vector<218x128xf32>
    %cst_7 = arith.constant dense<0.000000e+00> : vector<218x128xf32>
    %7 = tpu.matmul %5, %3, %cst_7 {dimension_numbers = #tpu.dot_dimension_numbers<[1], [0], [0], [1], [0, 0, 1, 1], [], []>} : vector<218x32xbf16>, vector<32x128xbf16>, vector<218x128xf32> -> vector<218x128xf32>
    %8 = arith.addf %6, %7 : vector<218x128xf32>
    %c0_8 = arith.constant 0 : index
    %c0_9 = arith.constant 0 : index
    %9 = vector.load %arg7[%c0_8, %c0_9] : memref<256x128xf32, #tpu.memory_space<vmem>>, vector<218x128xf32>
    tpu.vector_store %arg7[%c0_8, %c0_9], %8 {strides = array<i32>} : memref<256x128xf32, #tpu.memory_space<vmem>>, vector<218x128xf32>,
    %c0_10 = arith.constant 0 : index
    %c0_11 = arith.constant 0 : index
    %10 = vector.load %arg3[%c0_10, %c0_11] : memref<256x32xf32, #tpu.memory_space<vmem>>, vector<38x32xf32>
    %11 = arith.truncf %10 : vector<38x32xf32> to vector<38x32xbf16>
    %c218 = arith.constant 218 : index
    %c0_12 = arith.constant 0 : index
    %12 = vector.load %arg7[%c218, %c0_12] : memref<256x128xf32, #tpu.memory_space<vmem>>, vector<38x128xf32>
    %cst_13 = arith.constant dense<0.000000e+00> : vector<38x128xf32>
    %13 = tpu.matmul %11, %3, %cst_13 {dimension_numbers = #tpu.dot_dimension_numbers<[1], [0], [0], [1], [0, 0, 1, 1], [], []>} : vector<38x32xbf16>, vector<32x128xbf16>, vector<38x128xf32> -> vector<38x128xf32>
    %14 = arith.addf %12, %13 : vector<38x128xf32>
    %c218_14 = arith.constant 218 : index
    %c0_15 = arith.constant 0 : index
    %15 = vector.load %arg7[%c218_14, %c0_15] : memref<256x128xf32, #tpu.memory_space<vmem>>, vector<38x128xf32>
    tpu.vector_store %arg7[%c218_14, %c0_15], %14 {strides = array<i32>} : memref<256x128xf32, #tpu.memory_space<vmem>>, vector<38x128xf32>,
    %c1 = arith.constant 1 : index
    %c0_16 = arith.constant 0 : index
    %c0_17 = arith.constant 0 : index
    %16 = vector.load %arg4[%c1, %c0_16, %c0_17] : memref<4x32x128xbf16, #tpu.memory_space<vmem>>, vector<1x32x128xbf16>
    %17 = vector.shape_cast %16 : vector<1x32x128xbf16> to vector<32x128xbf16>
    %c37 = arith.constant 37 : index
    %c0_18 = arith.constant 0 : index
    %18 = vector.load %arg2[%c37, %c0_18] : memref<256x32xf32, #tpu.memory_space<vmem>>, vector<219x32xf32>
    %19 = arith.truncf %18 : vector<219x32xf32> to vector<219x32xbf16>
    %c0_19 = arith.constant 0 : index
    %c0_20 = arith.constant 0 : index
    %20 = vector.load %arg7[%c0_19, %c0_20] : memref<256x128xf32, #tpu.memory_space<vmem>>, vector<219x128xf32>
    %cst_21 = arith.constant dense<0.000000e+00> : vector<219x128xf32>
    %21 = tpu.matmul %19, %17, %cst_21 {dimension_numbers = #tpu.dot_dimension_numbers<[1], [0], [0], [1], [0, 0, 1, 1], [], []>} : vector<219x32xbf16>, vector<32x128xbf16>, vector<219x128xf32> -> vector<219x128xf32>
    %22 = arith.addf %20, %21 : vector<219x128xf32>
    %c0_22 = arith.constant 0 : index
    %c0_23 = arith.constant 0 : index
    %23 = vector.load %arg7[%c0_22, %c0_23] : memref<256x128xf32, #tpu.memory_space<vmem>>, vector<219x128xf32>
    tpu.vector_store %arg7[%c0_22, %c0_23], %22 {strides = array<i32>} : memref<256x128xf32, #tpu.memory_space<vmem>>, vector<219x128xf32>,
    %c0_24 = arith.constant 0 : index
    %c0_25 = arith.constant 0 : index
    %24 = vector.load %arg3[%c0_24, %c0_25] : memref<256x32xf32, #tpu.memory_space<vmem>>, vector<37x32xf32>
    %25 = arith.truncf %24 : vector<37x32xf32> to vector<37x32xbf16>
    %c219 = arith.constant 219 : index
    %c0_26 = arith.constant 0 : index
    %26 = vector.load %arg7[%c219, %c0_26] : memref<256x128xf32, #tpu.memory_space<vmem>>, vector<37x128xf32>
    %cst_27 = arith.constant dense<0.000000e+00> : vector<37x128xf32>
    %27 = tpu.matmul %25, %17, %cst_27 {dimension_numbers = #tpu.dot_dimension_numbers<[1], [0], [0], [1], [0, 0, 1, 1], [], []>} : vector<37x32xbf16>, vector<32x128xbf16>, vector<37x128xf32> -> vector<37x128xf32>
    %28 = arith.addf %26, %27 : vector<37x128xf32>
    %c219_28 = arith.constant 219 : index
    %c0_29 = arith.constant 0 : index
    %29 = vector.load %arg7[%c219_28, %c0_29] : memref<256x128xf32, #tpu.memory_space<vmem>>, vector<37x128xf32>
    tpu.vector_store %arg7[%c219_28, %c0_29], %28 {strides = array<i32>} : memref<256x128xf32, #tpu.memory_space<vmem>>, vector<37x128xf32>,
    %c2 = arith.constant 2 : index
    %c0_30 = arith.constant 0 : index
    %c0_31 = arith.constant 0 : index
    %30 = vector.load %arg4[%c2, %c0_30, %c0_31] : memref<4x32x128xbf16, #tpu.memory_space<vmem>>, vector<1x32x128xbf16>
    %31 = vector.shape_cast %30 : vector<1x32x128xbf16> to vector<32x128xbf16>
    %c20 = arith.constant 20 : index
    %c0_32 = arith.constant 0 : index
    %32 = vector.load %arg2[%c20, %c0_32] : memref<256x32xf32, #tpu.memory_space<vmem>>, vector<236x32xf32>
    %33 = arith.truncf %32 : vector<236x32xf32> to vector<236x32xbf16>
    %c0_33 = arith.constant 0 : index
    %c0_34 = arith.constant 0 : index
    %34 = vector.load %arg7[%c0_33, %c0_34] : memref<256x128xf32, #tpu.memory_space<vmem>>, vector<236x128xf32>
    %cst_35 = arith.constant dense<0.000000e+00> : vector<236x128xf32>
    %35 = tpu.matmul %33, %31, %cst_35 {dimension_numbers = #tpu.dot_dimension_numbers<[1], [0], [0], [1], [0, 0, 1, 1], [], []>} : vector<236x32xbf16>, vector<32x128xbf16>, vector<236x128xf32> -> vector<236x128xf32>
    %36 = arith.addf %34, %35 : vector<236x128xf32>
    %c0_36 = arith.constant 0 : index
    %c0_37 = arith.constant 0 : index
    %37 = vector.load %arg7[%c0_36, %c0_37] : memref<256x128xf32, #tpu.memory_space<vmem>>, vector<236x128xf32>
    tpu.vector_store %arg7[%c0_36, %c0_37], %36 {strides = array<i32>} : memref<256x128xf32, #tpu.memory_space<vmem>>, vector<236x128xf32>,
    %c0_38 = arith.constant 0 : index
    %c0_39 = arith.constant 0 : index
    %38 = vector.load %arg3[%c0_38, %c0_39] : memref<256x32xf32, #tpu.memory_space<vmem>>, vector<20x32xf32>
    %39 = arith.truncf %38 : vector<20x32xf32> to vector<20x32xbf16>
    %c236 = arith.constant 236 : index
    %c0_40 = arith.constant 0 : index
    %40 = vector.load %arg7[%c236, %c0_40] : memref<256x128xf32, #tpu.memory_space<vmem>>, vector<20x128xf32>
    %cst_41 = arith.constant dense<0.000000e+00> : vector<20x128xf32>
    %41 = tpu.matmul %39, %31, %cst_41 {dimension_numbers = #tpu.dot_dimension_numbers<[1], [0], [0], [1], [0, 0, 1, 1], [], []>} : vector<20x32xbf16>, vector<32x128xbf16>, vector<20x128xf32> -> vector<20x128xf32>
    %42 = arith.addf %40, %41 : vector<20x128xf32>
    %c236_42 = arith.constant 236 : index
    %c0_43 = arith.constant 0 : index
    %43 = vector.load %arg7[%c236_42, %c0_43] : memref<256x128xf32, #tpu.memory_space<vmem>>, vector<20x128xf32>
    tpu.vector_store %arg7[%c236_42, %c0_43], %42 {strides = array<i32>} : memref<256x128xf32, #tpu.memory_space<vmem>>, vector<20x128xf32>,
    %c3 = arith.constant 3 : index
    %c0_44 = arith.constant 0 : index
    %c0_45 = arith.constant 0 : index
    %44 = vector.load %arg4[%c3, %c0_44, %c0_45] : memref<4x32x128xbf16, #tpu.memory_space<vmem>>, vector<1x32x128xbf16>
    %45 = vector.shape_cast %44 : vector<1x32x128xbf16> to vector<32x128xbf16>
    %c19 = arith.constant 19 : index
    %c0_46 = arith.constant 0 : index
    %46 = vector.load %arg2[%c19, %c0_46] : memref<256x32xf32, #tpu.memory_space<vmem>>, vector<237x32xf32>
    %47 = arith.truncf %46 : vector<237x32xf32> to vector<237x32xbf16>
    %c0_47 = arith.constant 0 : index
    %c0_48 = arith.constant 0 : index
    %48 = vector.load %arg7[%c0_47, %c0_48] : memref<256x128xf32, #tpu.memory_space<vmem>>, vector<237x128xf32>
    %cst_49 = arith.constant dense<0.000000e+00> : vector<237x128xf32>
    %49 = tpu.matmul %47, %45, %cst_49 {dimension_numbers = #tpu.dot_dimension_numbers<[1], [0], [0], [1], [0, 0, 1, 1], [], []>} : vector<237x32xbf16>, vector<32x128xbf16>, vector<237x128xf32> -> vector<237x128xf32>
    %50 = arith.addf %48, %49 : vector<237x128xf32>
    %c0_50 = arith.constant 0 : index
    %c0_51 = arith.constant 0 : index
    %51 = vector.load %arg7[%c0_50, %c0_51] : memref<256x128xf32, #tpu.memory_space<vmem>>, vector<237x128xf32>
    tpu.vector_store %arg7[%c0_50, %c0_51], %50 {strides = array<i32>} : memref<256x128xf32, #tpu.memory_space<vmem>>, vector<237x128xf32>,
    %c0_52 = arith.constant 0 : index
    %c0_53 = arith.constant 0 : index
    %52 = vector.load %arg3[%c0_52, %c0_53] : memref<256x32xf32, #tpu.memory_space<vmem>>, vector<19x32xf32>
    %53 = arith.truncf %52 : vector<19x32xf32> to vector<19x32xbf16>
    %c237 = arith.constant 237 : index
    %c0_54 = arith.constant 0 : index
    %54 = vector.load %arg7[%c237, %c0_54] : memref<256x128xf32, #tpu.memory_space<vmem>>, vector<19x128xf32>
    %cst_55 = arith.constant dense<0.000000e+00> : vector<19x128xf32>
    %55 = tpu.matmul %53, %45, %cst_55 {dimension_numbers = #tpu.dot_dimension_numbers<[1], [0], [0], [1], [0, 0, 1, 1], [], []>} : vector<19x32xbf16>, vector<32x128xbf16>, vector<19x128xf32> -> vector<19x128xf32>
    %56 = arith.addf %54, %55 : vector<19x128xf32>
    %c237_56 = arith.constant 237 : index
    %c0_57 = arith.constant 0 : index
    %57 = vector.load %arg7[%c237_56, %c0_57] : memref<256x128xf32, #tpu.memory_space<vmem>>, vector<19x128xf32>
    tpu.vector_store %arg7[%c237_56, %c0_57], %56 {strides = array<i32>} : memref<256x128xf32, #tpu.memory_space<vmem>>, vector<19x128xf32>,
    %c0_58 = arith.constant 0 : index
    %c0_59 = arith.constant 0 : index
    %58 = vector.load %arg7[%c0_58, %c0_59] : memref<256x128xf32, #tpu.memory_space<vmem>>, vector<256x128xf32>
    %c0_60 = arith.constant 0 : index
    %c0_61 = arith.constant 0 : index
    %59 = vector.load %arg5[%c0_60, %c0_61] : memref<1x128xf32, #tpu.memory_space<vmem>>, vector<1x128xf32>
    %60 = vector.broadcast %59 : vector<1x128xf32> to vector<256x128xf32>
    %61 = arith.addf %58, %60 : vector<256x128xf32>
    %c0_62 = arith.constant 0 : index
    %c0_63 = arith.constant 0 : index
    %62 = vector.load %arg6[%c0_62, %c0_63] : memref<256x128xf32, #tpu.memory_space<vmem>>, vector<256x128xf32>
    tpu.vector_store %arg6[%c0_62, %c0_63], %61 {strides = array<i32>} : memref<256x128xf32, #tpu.memory_space<vmem>>, vector<256x128xf32>,
    return
  }
  func.func @transform_0(%arg0: i32, %arg1: i32) -> (i32, i32) {
    %c0_i32 = arith.constant 0 : i32
    %c0_i32_0 = arith.constant 0 : i32
    return %arg0, %c0_i32 : i32, i32
  }
  func.func @transform_1(%arg0: i32, %arg1: i32) -> (i32, i32) {
    %c1_i32 = arith.constant 1 : i32
    %0 = arith.addi %arg0, %c1_i32 : i32
    %c0_i32 = arith.constant 0 : i32
    %c0_i32_0 = arith.constant 0 : i32
    return %0, %c0_i32 : i32, i32
  }
  func.func @transform_2(%arg0: i32, %arg1: i32) -> (i32, i32, i32) {
    %c0_i32 = arith.constant 0 : i32
    %c0_i32_0 = arith.constant 0 : i32
    %c0_i32_1 = arith.constant 0 : i32
    return %c0_i32, %c0_i32_0, %arg1 : i32, i32, i32
  }
  func.func @transform_3(%arg0: i32, %arg1: i32) -> (i32, i32) {
    %c0_i32 = arith.constant 0 : i32
    %c0_i32_0 = arith.constant 0 : i32
    return %c0_i32, %arg1 : i32, i32
  }
  func.func @transform_4(%arg0: i32, %arg1: i32) -> (i32, i32) {
    %c0_i32 = arith.constant 0 : i32
    return %arg0, %arg1 : i32, i32
  }
}

module attributes {stable_mosaic.version = 11 : i64} {
  func.func @_tconv_phase_kernel(%arg0: i32, %arg1: i32, %arg2: memref<256x32xf32, #tpu.memory_space<vmem>>, %arg3: memref<256x32xf32, #tpu.memory_space<vmem>>, %arg4: memref<4x32x128xbf16, #tpu.memory_space<vmem>>, %arg5: memref<1x128xf32, #tpu.memory_space<vmem>>, %arg6: memref<256x128xf32, #tpu.memory_space<vmem>>, %arg7: memref<256x128xf32, #tpu.memory_space<vmem>>) attributes {dimension_semantics = [#tpu.dimension_semantics<parallel>, #tpu.dimension_semantics<parallel>], iteration_bounds = array<i64: 3, 1>, scalar_prefetch = 0 : i64, scratch_operands = 1 : i64, tpu.core_type = #tpu.core_type<tc>, window_params = [{transform_indices = @transform_0, window_bounds = array<i64: 256, 32>}, {transform_indices = @transform_1, window_bounds = array<i64: 256, 32>}, {transform_indices = @transform_2, window_bounds = array<i64: 4, 32, 128>}, {transform_indices = @transform_3, window_bounds = array<i64: 1, 128>}, {transform_indices = @transform_4, window_bounds = array<i64: 256, 128>}]} {
    %cst = arith.constant 0.000000e+00 : f32
    %0 = vector.broadcast %cst : f32 to vector<256x128xf32>
    %c0 = arith.constant 0 : index
    %c0_0 = arith.constant 0 : index
    %1 = vector.load %arg7[%c0, %c0_0] : memref<256x128xf32, #tpu.memory_space<vmem>>, vector<256x128xf32>
    tpu.vector_store %arg7[%c0, %c0_0], %0 {strides = array<i32>} : memref<256x128xf32, #tpu.memory_space<vmem>>, vector<256x128xf32>,
    %c0_1 = arith.constant 0 : index
    %c0_2 = arith.constant 0 : index
    %c0_3 = arith.constant 0 : index
    %2 = vector.load %arg4[%c0_1, %c0_2, %c0_3] : memref<4x32x128xbf16, #tpu.memory_space<vmem>>, vector<1x32x128xbf16>
    %3 = vector.shape_cast %2 : vector<1x32x128xbf16> to vector<32x128xbf16>
    %c37 = arith.constant 37 : index
    %c0_4 = arith.constant 0 : index
    %4 = vector.load %arg2[%c37, %c0_4] : memref<256x32xf32, #tpu.memory_space<vmem>>, vector<219x32xf32>
    %5 = arith.truncf %4 : vector<219x32xf32> to vector<219x32xbf16>
    %c0_5 = arith.constant 0 : index
    %c0_6 = arith.constant 0 : index
    %6 = vector.load %arg7[%c0_5, %c0_6] : memref<256x128xf32, #tpu.memory_space<vmem>>, vector<219x128xf32>
    %cst_7 = arith.constant dense<0.000000e+00> : vector<219x128xf32>
    %7 = tpu.matmul %5, %3, %cst_7 {dimension_numbers = #tpu.dot_dimension_numbers<[1], [0], [0], [1], [0, 0, 1, 1], [], []>} : vector<219x32xbf16>, vector<32x128xbf16>, vector<219x128xf32> -> vector<219x128xf32>
    %8 = arith.addf %6, %7 : vector<219x128xf32>
    %c0_8 = arith.constant 0 : index
    %c0_9 = arith.constant 0 : index
    %9 = vector.load %arg7[%c0_8, %c0_9] : memref<256x128xf32, #tpu.memory_space<vmem>>, vector<219x128xf32>
    tpu.vector_store %arg7[%c0_8, %c0_9], %8 {strides = array<i32>} : memref<256x128xf32, #tpu.memory_space<vmem>>, vector<219x128xf32>,
    %c0_10 = arith.constant 0 : index
    %c0_11 = arith.constant 0 : index
    %10 = vector.load %arg3[%c0_10, %c0_11] : memref<256x32xf32, #tpu.memory_space<vmem>>, vector<37x32xf32>
    %11 = arith.truncf %10 : vector<37x32xf32> to vector<37x32xbf16>
    %c219 = arith.constant 219 : index
    %c0_12 = arith.constant 0 : index
    %12 = vector.load %arg7[%c219, %c0_12] : memref<256x128xf32, #tpu.memory_space<vmem>>, vector<37x128xf32>
    %cst_13 = arith.constant dense<0.000000e+00> : vector<37x128xf32>
    %13 = tpu.matmul %11, %3, %cst_13 {dimension_numbers = #tpu.dot_dimension_numbers<[1], [0], [0], [1], [0, 0, 1, 1], [], []>} : vector<37x32xbf16>, vector<32x128xbf16>, vector<37x128xf32> -> vector<37x128xf32>
    %14 = arith.addf %12, %13 : vector<37x128xf32>
    %c219_14 = arith.constant 219 : index
    %c0_15 = arith.constant 0 : index
    %15 = vector.load %arg7[%c219_14, %c0_15] : memref<256x128xf32, #tpu.memory_space<vmem>>, vector<37x128xf32>
    tpu.vector_store %arg7[%c219_14, %c0_15], %14 {strides = array<i32>} : memref<256x128xf32, #tpu.memory_space<vmem>>, vector<37x128xf32>,
    %c1 = arith.constant 1 : index
    %c0_16 = arith.constant 0 : index
    %c0_17 = arith.constant 0 : index
    %16 = vector.load %arg4[%c1, %c0_16, %c0_17] : memref<4x32x128xbf16, #tpu.memory_space<vmem>>, vector<1x32x128xbf16>
    %17 = vector.shape_cast %16 : vector<1x32x128xbf16> to vector<32x128xbf16>
    %c36 = arith.constant 36 : index
    %c0_18 = arith.constant 0 : index
    %18 = vector.load %arg2[%c36, %c0_18] : memref<256x32xf32, #tpu.memory_space<vmem>>, vector<220x32xf32>
    %19 = arith.truncf %18 : vector<220x32xf32> to vector<220x32xbf16>
    %c0_19 = arith.constant 0 : index
    %c0_20 = arith.constant 0 : index
    %20 = vector.load %arg7[%c0_19, %c0_20] : memref<256x128xf32, #tpu.memory_space<vmem>>, vector<220x128xf32>
    %cst_21 = arith.constant dense<0.000000e+00> : vector<220x128xf32>
    %21 = tpu.matmul %19, %17, %cst_21 {dimension_numbers = #tpu.dot_dimension_numbers<[1], [0], [0], [1], [0, 0, 1, 1], [], []>} : vector<220x32xbf16>, vector<32x128xbf16>, vector<220x128xf32> -> vector<220x128xf32>
    %22 = arith.addf %20, %21 : vector<220x128xf32>
    %c0_22 = arith.constant 0 : index
    %c0_23 = arith.constant 0 : index
    %23 = vector.load %arg7[%c0_22, %c0_23] : memref<256x128xf32, #tpu.memory_space<vmem>>, vector<220x128xf32>
    tpu.vector_store %arg7[%c0_22, %c0_23], %22 {strides = array<i32>} : memref<256x128xf32, #tpu.memory_space<vmem>>, vector<220x128xf32>,
    %c0_24 = arith.constant 0 : index
    %c0_25 = arith.constant 0 : index
    %24 = vector.load %arg3[%c0_24, %c0_25] : memref<256x32xf32, #tpu.memory_space<vmem>>, vector<36x32xf32>
    %25 = arith.truncf %24 : vector<36x32xf32> to vector<36x32xbf16>
    %c220 = arith.constant 220 : index
    %c0_26 = arith.constant 0 : index
    %26 = vector.load %arg7[%c220, %c0_26] : memref<256x128xf32, #tpu.memory_space<vmem>>, vector<36x128xf32>
    %cst_27 = arith.constant dense<0.000000e+00> : vector<36x128xf32>
    %27 = tpu.matmul %25, %17, %cst_27 {dimension_numbers = #tpu.dot_dimension_numbers<[1], [0], [0], [1], [0, 0, 1, 1], [], []>} : vector<36x32xbf16>, vector<32x128xbf16>, vector<36x128xf32> -> vector<36x128xf32>
    %28 = arith.addf %26, %27 : vector<36x128xf32>
    %c220_28 = arith.constant 220 : index
    %c0_29 = arith.constant 0 : index
    %29 = vector.load %arg7[%c220_28, %c0_29] : memref<256x128xf32, #tpu.memory_space<vmem>>, vector<36x128xf32>
    tpu.vector_store %arg7[%c220_28, %c0_29], %28 {strides = array<i32>} : memref<256x128xf32, #tpu.memory_space<vmem>>, vector<36x128xf32>,
    %c2 = arith.constant 2 : index
    %c0_30 = arith.constant 0 : index
    %c0_31 = arith.constant 0 : index
    %30 = vector.load %arg4[%c2, %c0_30, %c0_31] : memref<4x32x128xbf16, #tpu.memory_space<vmem>>, vector<1x32x128xbf16>
    %31 = vector.shape_cast %30 : vector<1x32x128xbf16> to vector<32x128xbf16>
    %c19 = arith.constant 19 : index
    %c0_32 = arith.constant 0 : index
    %32 = vector.load %arg2[%c19, %c0_32] : memref<256x32xf32, #tpu.memory_space<vmem>>, vector<237x32xf32>
    %33 = arith.truncf %32 : vector<237x32xf32> to vector<237x32xbf16>
    %c0_33 = arith.constant 0 : index
    %c0_34 = arith.constant 0 : index
    %34 = vector.load %arg7[%c0_33, %c0_34] : memref<256x128xf32, #tpu.memory_space<vmem>>, vector<237x128xf32>
    %cst_35 = arith.constant dense<0.000000e+00> : vector<237x128xf32>
    %35 = tpu.matmul %33, %31, %cst_35 {dimension_numbers = #tpu.dot_dimension_numbers<[1], [0], [0], [1], [0, 0, 1, 1], [], []>} : vector<237x32xbf16>, vector<32x128xbf16>, vector<237x128xf32> -> vector<237x128xf32>
    %36 = arith.addf %34, %35 : vector<237x128xf32>
    %c0_36 = arith.constant 0 : index
    %c0_37 = arith.constant 0 : index
    %37 = vector.load %arg7[%c0_36, %c0_37] : memref<256x128xf32, #tpu.memory_space<vmem>>, vector<237x128xf32>
    tpu.vector_store %arg7[%c0_36, %c0_37], %36 {strides = array<i32>} : memref<256x128xf32, #tpu.memory_space<vmem>>, vector<237x128xf32>,
    %c0_38 = arith.constant 0 : index
    %c0_39 = arith.constant 0 : index
    %38 = vector.load %arg3[%c0_38, %c0_39] : memref<256x32xf32, #tpu.memory_space<vmem>>, vector<19x32xf32>
    %39 = arith.truncf %38 : vector<19x32xf32> to vector<19x32xbf16>
    %c237 = arith.constant 237 : index
    %c0_40 = arith.constant 0 : index
    %40 = vector.load %arg7[%c237, %c0_40] : memref<256x128xf32, #tpu.memory_space<vmem>>, vector<19x128xf32>
    %cst_41 = arith.constant dense<0.000000e+00> : vector<19x128xf32>
    %41 = tpu.matmul %39, %31, %cst_41 {dimension_numbers = #tpu.dot_dimension_numbers<[1], [0], [0], [1], [0, 0, 1, 1], [], []>} : vector<19x32xbf16>, vector<32x128xbf16>, vector<19x128xf32> -> vector<19x128xf32>
    %42 = arith.addf %40, %41 : vector<19x128xf32>
    %c237_42 = arith.constant 237 : index
    %c0_43 = arith.constant 0 : index
    %43 = vector.load %arg7[%c237_42, %c0_43] : memref<256x128xf32, #tpu.memory_space<vmem>>, vector<19x128xf32>
    tpu.vector_store %arg7[%c237_42, %c0_43], %42 {strides = array<i32>} : memref<256x128xf32, #tpu.memory_space<vmem>>, vector<19x128xf32>,
    %c3 = arith.constant 3 : index
    %c0_44 = arith.constant 0 : index
    %c0_45 = arith.constant 0 : index
    %44 = vector.load %arg4[%c3, %c0_44, %c0_45] : memref<4x32x128xbf16, #tpu.memory_space<vmem>>, vector<1x32x128xbf16>
    %45 = vector.shape_cast %44 : vector<1x32x128xbf16> to vector<32x128xbf16>
    %c18 = arith.constant 18 : index
    %c0_46 = arith.constant 0 : index
    %46 = vector.load %arg2[%c18, %c0_46] : memref<256x32xf32, #tpu.memory_space<vmem>>, vector<238x32xf32>
    %47 = arith.truncf %46 : vector<238x32xf32> to vector<238x32xbf16>
    %c0_47 = arith.constant 0 : index
    %c0_48 = arith.constant 0 : index
    %48 = vector.load %arg7[%c0_47, %c0_48] : memref<256x128xf32, #tpu.memory_space<vmem>>, vector<238x128xf32>
    %cst_49 = arith.constant dense<0.000000e+00> : vector<238x128xf32>
    %49 = tpu.matmul %47, %45, %cst_49 {dimension_numbers = #tpu.dot_dimension_numbers<[1], [0], [0], [1], [0, 0, 1, 1], [], []>} : vector<238x32xbf16>, vector<32x128xbf16>, vector<238x128xf32> -> vector<238x128xf32>
    %50 = arith.addf %48, %49 : vector<238x128xf32>
    %c0_50 = arith.constant 0 : index
    %c0_51 = arith.constant 0 : index
    %51 = vector.load %arg7[%c0_50, %c0_51] : memref<256x128xf32, #tpu.memory_space<vmem>>, vector<238x128xf32>
    tpu.vector_store %arg7[%c0_50, %c0_51], %50 {strides = array<i32>} : memref<256x128xf32, #tpu.memory_space<vmem>>, vector<238x128xf32>,
    %c0_52 = arith.constant 0 : index
    %c0_53 = arith.constant 0 : index
    %52 = vector.load %arg3[%c0_52, %c0_53] : memref<256x32xf32, #tpu.memory_space<vmem>>, vector<18x32xf32>
    %53 = arith.truncf %52 : vector<18x32xf32> to vector<18x32xbf16>
    %c238 = arith.constant 238 : index
    %c0_54 = arith.constant 0 : index
    %54 = vector.load %arg7[%c238, %c0_54] : memref<256x128xf32, #tpu.memory_space<vmem>>, vector<18x128xf32>
    %cst_55 = arith.constant dense<0.000000e+00> : vector<18x128xf32>
    %55 = tpu.matmul %53, %45, %cst_55 {dimension_numbers = #tpu.dot_dimension_numbers<[1], [0], [0], [1], [0, 0, 1, 1], [], []>} : vector<18x32xbf16>, vector<32x128xbf16>, vector<18x128xf32> -> vector<18x128xf32>
    %56 = arith.addf %54, %55 : vector<18x128xf32>
    %c238_56 = arith.constant 238 : index
    %c0_57 = arith.constant 0 : index
    %57 = vector.load %arg7[%c238_56, %c0_57] : memref<256x128xf32, #tpu.memory_space<vmem>>, vector<18x128xf32>
    tpu.vector_store %arg7[%c238_56, %c0_57], %56 {strides = array<i32>} : memref<256x128xf32, #tpu.memory_space<vmem>>, vector<18x128xf32>,
    %c0_58 = arith.constant 0 : index
    %c0_59 = arith.constant 0 : index
    %58 = vector.load %arg7[%c0_58, %c0_59] : memref<256x128xf32, #tpu.memory_space<vmem>>, vector<256x128xf32>
    %c0_60 = arith.constant 0 : index
    %c0_61 = arith.constant 0 : index
    %59 = vector.load %arg5[%c0_60, %c0_61] : memref<1x128xf32, #tpu.memory_space<vmem>>, vector<1x128xf32>
    %60 = vector.broadcast %59 : vector<1x128xf32> to vector<256x128xf32>
    %61 = arith.addf %58, %60 : vector<256x128xf32>
    %c0_62 = arith.constant 0 : index
    %c0_63 = arith.constant 0 : index
    %62 = vector.load %arg6[%c0_62, %c0_63] : memref<256x128xf32, #tpu.memory_space<vmem>>, vector<256x128xf32>
    tpu.vector_store %arg6[%c0_62, %c0_63], %61 {strides = array<i32>} : memref<256x128xf32, #tpu.memory_space<vmem>>, vector<256x128xf32>,
    return
  }
  func.func @transform_0(%arg0: i32, %arg1: i32) -> (i32, i32) {
    %c0_i32 = arith.constant 0 : i32
    %c0_i32_0 = arith.constant 0 : i32
    return %arg0, %c0_i32 : i32, i32
  }
  func.func @transform_1(%arg0: i32, %arg1: i32) -> (i32, i32) {
    %c1_i32 = arith.constant 1 : i32
    %0 = arith.addi %arg0, %c1_i32 : i32
    %c0_i32 = arith.constant 0 : i32
    %c0_i32_0 = arith.constant 0 : i32
    return %0, %c0_i32 : i32, i32
  }
  func.func @transform_2(%arg0: i32, %arg1: i32) -> (i32, i32, i32) {
    %c0_i32 = arith.constant 0 : i32
    %c0_i32_0 = arith.constant 0 : i32
    %c0_i32_1 = arith.constant 0 : i32
    return %c0_i32, %c0_i32_0, %arg1 : i32, i32, i32
  }
  func.func @transform_3(%arg0: i32, %arg1: i32) -> (i32, i32) {
    %c0_i32 = arith.constant 0 : i32
    %c0_i32_0 = arith.constant 0 : i32
    return %c0_i32, %arg1 : i32, i32
  }
  func.func @transform_4(%arg0: i32, %arg1: i32) -> (i32, i32) {
    %c0_i32 = arith.constant 0 : i32
    return %arg0, %arg1 : i32, i32
  }
}

module attributes {stable_mosaic.version = 11 : i64} {
  func.func @_tconv_phase_kernel(%arg0: i32, %arg1: i32, %arg2: memref<256x32xf32, #tpu.memory_space<vmem>>, %arg3: memref<256x32xf32, #tpu.memory_space<vmem>>, %arg4: memref<4x32x128xbf16, #tpu.memory_space<vmem>>, %arg5: memref<1x128xf32, #tpu.memory_space<vmem>>, %arg6: memref<256x128xf32, #tpu.memory_space<vmem>>, %arg7: memref<256x128xf32, #tpu.memory_space<vmem>>) attributes {dimension_semantics = [#tpu.dimension_semantics<parallel>, #tpu.dimension_semantics<parallel>], iteration_bounds = array<i64: 3, 1>, scalar_prefetch = 0 : i64, scratch_operands = 1 : i64, tpu.core_type = #tpu.core_type<tc>, window_params = [{transform_indices = @transform_0, window_bounds = array<i64: 256, 32>}, {transform_indices = @transform_1, window_bounds = array<i64: 256, 32>}, {transform_indices = @transform_2, window_bounds = array<i64: 4, 32, 128>}, {transform_indices = @transform_3, window_bounds = array<i64: 1, 128>}, {transform_indices = @transform_4, window_bounds = array<i64: 256, 128>}]} {
    %cst = arith.constant 0.000000e+00 : f32
    %0 = vector.broadcast %cst : f32 to vector<256x128xf32>
    %c0 = arith.constant 0 : index
    %c0_0 = arith.constant 0 : index
    %1 = vector.load %arg7[%c0, %c0_0] : memref<256x128xf32, #tpu.memory_space<vmem>>, vector<256x128xf32>
    tpu.vector_store %arg7[%c0, %c0_0], %0 {strides = array<i32>} : memref<256x128xf32, #tpu.memory_space<vmem>>, vector<256x128xf32>,
    %c0_1 = arith.constant 0 : index
    %c0_2 = arith.constant 0 : index
    %c0_3 = arith.constant 0 : index
    %2 = vector.load %arg4[%c0_1, %c0_2, %c0_3] : memref<4x32x128xbf16, #tpu.memory_space<vmem>>, vector<1x32x128xbf16>
    %3 = vector.shape_cast %2 : vector<1x32x128xbf16> to vector<32x128xbf16>
    %c20 = arith.constant 20 : index
    %c0_4 = arith.constant 0 : index
    %4 = vector.load %arg2[%c20, %c0_4] : memref<256x32xf32, #tpu.memory_space<vmem>>, vector<236x32xf32>
    %5 = arith.truncf %4 : vector<236x32xf32> to vector<236x32xbf16>
    %c0_5 = arith.constant 0 : index
    %c0_6 = arith.constant 0 : index
    %6 = vector.load %arg7[%c0_5, %c0_6] : memref<256x128xf32, #tpu.memory_space<vmem>>, vector<236x128xf32>
    %cst_7 = arith.constant dense<0.000000e+00> : vector<236x128xf32>
    %7 = tpu.matmul %5, %3, %cst_7 {dimension_numbers = #tpu.dot_dimension_numbers<[1], [0], [0], [1], [0, 0, 1, 1], [], []>} : vector<236x32xbf16>, vector<32x128xbf16>, vector<236x128xf32> -> vector<236x128xf32>
    %8 = arith.addf %6, %7 : vector<236x128xf32>
    %c0_8 = arith.constant 0 : index
    %c0_9 = arith.constant 0 : index
    %9 = vector.load %arg7[%c0_8, %c0_9] : memref<256x128xf32, #tpu.memory_space<vmem>>, vector<236x128xf32>
    tpu.vector_store %arg7[%c0_8, %c0_9], %8 {strides = array<i32>} : memref<256x128xf32, #tpu.memory_space<vmem>>, vector<236x128xf32>,
    %c0_10 = arith.constant 0 : index
    %c0_11 = arith.constant 0 : index
    %10 = vector.load %arg3[%c0_10, %c0_11] : memref<256x32xf32, #tpu.memory_space<vmem>>, vector<20x32xf32>
    %11 = arith.truncf %10 : vector<20x32xf32> to vector<20x32xbf16>
    %c236 = arith.constant 236 : index
    %c0_12 = arith.constant 0 : index
    %12 = vector.load %arg7[%c236, %c0_12] : memref<256x128xf32, #tpu.memory_space<vmem>>, vector<20x128xf32>
    %cst_13 = arith.constant dense<0.000000e+00> : vector<20x128xf32>
    %13 = tpu.matmul %11, %3, %cst_13 {dimension_numbers = #tpu.dot_dimension_numbers<[1], [0], [0], [1], [0, 0, 1, 1], [], []>} : vector<20x32xbf16>, vector<32x128xbf16>, vector<20x128xf32> -> vector<20x128xf32>
    %14 = arith.addf %12, %13 : vector<20x128xf32>
    %c236_14 = arith.constant 236 : index
    %c0_15 = arith.constant 0 : index
    %15 = vector.load %arg7[%c236_14, %c0_15] : memref<256x128xf32, #tpu.memory_space<vmem>>, vector<20x128xf32>
    tpu.vector_store %arg7[%c236_14, %c0_15], %14 {strides = array<i32>} : memref<256x128xf32, #tpu.memory_space<vmem>>, vector<20x128xf32>,
    %c1 = arith.constant 1 : index
    %c0_16 = arith.constant 0 : index
    %c0_17 = arith.constant 0 : index
    %16 = vector.load %arg4[%c1, %c0_16, %c0_17] : memref<4x32x128xbf16, #tpu.memory_space<vmem>>, vector<1x32x128xbf16>
    %17 = vector.shape_cast %16 : vector<1x32x128xbf16> to vector<32x128xbf16>
    %c19 = arith.constant 19 : index
    %c0_18 = arith.constant 0 : index
    %18 = vector.load %arg2[%c19, %c0_18] : memref<256x32xf32, #tpu.memory_space<vmem>>, vector<237x32xf32>
    %19 = arith.truncf %18 : vector<237x32xf32> to vector<237x32xbf16>
    %c0_19 = arith.constant 0 : index
    %c0_20 = arith.constant 0 : index
    %20 = vector.load %arg7[%c0_19, %c0_20] : memref<256x128xf32, #tpu.memory_space<vmem>>, vector<237x128xf32>
    %cst_21 = arith.constant dense<0.000000e+00> : vector<237x128xf32>
    %21 = tpu.matmul %19, %17, %cst_21 {dimension_numbers = #tpu.dot_dimension_numbers<[1], [0], [0], [1], [0, 0, 1, 1], [], []>} : vector<237x32xbf16>, vector<32x128xbf16>, vector<237x128xf32> -> vector<237x128xf32>
    %22 = arith.addf %20, %21 : vector<237x128xf32>
    %c0_22 = arith.constant 0 : index
    %c0_23 = arith.constant 0 : index
    %23 = vector.load %arg7[%c0_22, %c0_23] : memref<256x128xf32, #tpu.memory_space<vmem>>, vector<237x128xf32>
    tpu.vector_store %arg7[%c0_22, %c0_23], %22 {strides = array<i32>} : memref<256x128xf32, #tpu.memory_space<vmem>>, vector<237x128xf32>,
    %c0_24 = arith.constant 0 : index
    %c0_25 = arith.constant 0 : index
    %24 = vector.load %arg3[%c0_24, %c0_25] : memref<256x32xf32, #tpu.memory_space<vmem>>, vector<19x32xf32>
    %25 = arith.truncf %24 : vector<19x32xf32> to vector<19x32xbf16>
    %c237 = arith.constant 237 : index
    %c0_26 = arith.constant 0 : index
    %26 = vector.load %arg7[%c237, %c0_26] : memref<256x128xf32, #tpu.memory_space<vmem>>, vector<19x128xf32>
    %cst_27 = arith.constant dense<0.000000e+00> : vector<19x128xf32>
    %27 = tpu.matmul %25, %17, %cst_27 {dimension_numbers = #tpu.dot_dimension_numbers<[1], [0], [0], [1], [0, 0, 1, 1], [], []>} : vector<19x32xbf16>, vector<32x128xbf16>, vector<19x128xf32> -> vector<19x128xf32>
    %28 = arith.addf %26, %27 : vector<19x128xf32>
    %c237_28 = arith.constant 237 : index
    %c0_29 = arith.constant 0 : index
    %29 = vector.load %arg7[%c237_28, %c0_29] : memref<256x128xf32, #tpu.memory_space<vmem>>, vector<19x128xf32>
    tpu.vector_store %arg7[%c237_28, %c0_29], %28 {strides = array<i32>} : memref<256x128xf32, #tpu.memory_space<vmem>>, vector<19x128xf32>,
    %c2 = arith.constant 2 : index
    %c0_30 = arith.constant 0 : index
    %c0_31 = arith.constant 0 : index
    %30 = vector.load %arg4[%c2, %c0_30, %c0_31] : memref<4x32x128xbf16, #tpu.memory_space<vmem>>, vector<1x32x128xbf16>
    %31 = vector.shape_cast %30 : vector<1x32x128xbf16> to vector<32x128xbf16>
    %c2_32 = arith.constant 2 : index
    %c0_33 = arith.constant 0 : index
    %32 = vector.load %arg2[%c2_32, %c0_33] : memref<256x32xf32, #tpu.memory_space<vmem>>, vector<254x32xf32>
    %33 = arith.truncf %32 : vector<254x32xf32> to vector<254x32xbf16>
    %c0_34 = arith.constant 0 : index
    %c0_35 = arith.constant 0 : index
    %34 = vector.load %arg7[%c0_34, %c0_35] : memref<256x128xf32, #tpu.memory_space<vmem>>, vector<254x128xf32>
    %cst_36 = arith.constant dense<0.000000e+00> : vector<254x128xf32>
    %35 = tpu.matmul %33, %31, %cst_36 {dimension_numbers = #tpu.dot_dimension_numbers<[1], [0], [0], [1], [0, 0, 1, 1], [], []>} : vector<254x32xbf16>, vector<32x128xbf16>, vector<254x128xf32> -> vector<254x128xf32>
    %36 = arith.addf %34, %35 : vector<254x128xf32>
    %c0_37 = arith.constant 0 : index
    %c0_38 = arith.constant 0 : index
    %37 = vector.load %arg7[%c0_37, %c0_38] : memref<256x128xf32, #tpu.memory_space<vmem>>, vector<254x128xf32>
    tpu.vector_store %arg7[%c0_37, %c0_38], %36 {strides = array<i32>} : memref<256x128xf32, #tpu.memory_space<vmem>>, vector<254x128xf32>,
    %c0_39 = arith.constant 0 : index
    %c0_40 = arith.constant 0 : index
    %38 = vector.load %arg3[%c0_39, %c0_40] : memref<256x32xf32, #tpu.memory_space<vmem>>, vector<2x32xf32>
    %39 = arith.truncf %38 : vector<2x32xf32> to vector<2x32xbf16>
    %c254 = arith.constant 254 : index
    %c0_41 = arith.constant 0 : index
    %40 = vector.load %arg7[%c254, %c0_41] : memref<256x128xf32, #tpu.memory_space<vmem>>, vector<2x128xf32>
    %cst_42 = arith.constant dense<0.000000e+00> : vector<2x128xf32>
    %41 = tpu.matmul %39, %31, %cst_42 {dimension_numbers = #tpu.dot_dimension_numbers<[1], [0], [0], [1], [0, 0, 1, 1], [], []>} : vector<2x32xbf16>, vector<32x128xbf16>, vector<2x128xf32> -> vector<2x128xf32>
    %42 = arith.addf %40, %41 : vector<2x128xf32>
    %c254_43 = arith.constant 254 : index
    %c0_44 = arith.constant 0 : index
    %43 = vector.load %arg7[%c254_43, %c0_44] : memref<256x128xf32, #tpu.memory_space<vmem>>, vector<2x128xf32>
    tpu.vector_store %arg7[%c254_43, %c0_44], %42 {strides = array<i32>} : memref<256x128xf32, #tpu.memory_space<vmem>>, vector<2x128xf32>,
    %c3 = arith.constant 3 : index
    %c0_45 = arith.constant 0 : index
    %c0_46 = arith.constant 0 : index
    %44 = vector.load %arg4[%c3, %c0_45, %c0_46] : memref<4x32x128xbf16, #tpu.memory_space<vmem>>, vector<1x32x128xbf16>
    %45 = vector.shape_cast %44 : vector<1x32x128xbf16> to vector<32x128xbf16>
    %c1_47 = arith.constant 1 : index
    %c0_48 = arith.constant 0 : index
    %46 = vector.load %arg2[%c1_47, %c0_48] : memref<256x32xf32, #tpu.memory_space<vmem>>, vector<255x32xf32>
    %47 = arith.truncf %46 : vector<255x32xf32> to vector<255x32xbf16>
    %c0_49 = arith.constant 0 : index
    %c0_50 = arith.constant 0 : index
    %48 = vector.load %arg7[%c0_49, %c0_50] : memref<256x128xf32, #tpu.memory_space<vmem>>, vector<255x128xf32>
    %cst_51 = arith.constant dense<0.000000e+00> : vector<255x128xf32>
    %49 = tpu.matmul %47, %45, %cst_51 {dimension_numbers = #tpu.dot_dimension_numbers<[1], [0], [0], [1], [0, 0, 1, 1], [], []>} : vector<255x32xbf16>, vector<32x128xbf16>, vector<255x128xf32> -> vector<255x128xf32>
    %50 = arith.addf %48, %49 : vector<255x128xf32>
    %c0_52 = arith.constant 0 : index
    %c0_53 = arith.constant 0 : index
    %51 = vector.load %arg7[%c0_52, %c0_53] : memref<256x128xf32, #tpu.memory_space<vmem>>, vector<255x128xf32>
    tpu.vector_store %arg7[%c0_52, %c0_53], %50 {strides = array<i32>} : memref<256x128xf32, #tpu.memory_space<vmem>>, vector<255x128xf32>,
    %c0_54 = arith.constant 0 : index
    %c0_55 = arith.constant 0 : index
    %52 = vector.load %arg3[%c0_54, %c0_55] : memref<256x32xf32, #tpu.memory_space<vmem>>, vector<1x32xf32>
    %53 = arith.truncf %52 : vector<1x32xf32> to vector<1x32xbf16>
    %c255 = arith.constant 255 : index
    %c0_56 = arith.constant 0 : index
    %54 = vector.load %arg7[%c255, %c0_56] : memref<256x128xf32, #tpu.memory_space<vmem>>, vector<1x128xf32>
    %cst_57 = arith.constant dense<0.000000e+00> : vector<1x128xf32>
    %55 = tpu.matmul %53, %45, %cst_57 {dimension_numbers = #tpu.dot_dimension_numbers<[1], [0], [0], [1], [0, 0, 1, 1], [], []>} : vector<1x32xbf16>, vector<32x128xbf16>, vector<1x128xf32> -> vector<1x128xf32>
    %56 = arith.addf %54, %55 : vector<1x128xf32>
    %c255_58 = arith.constant 255 : index
    %c0_59 = arith.constant 0 : index
    %57 = vector.load %arg7[%c255_58, %c0_59] : memref<256x128xf32, #tpu.memory_space<vmem>>, vector<1x128xf32>
    tpu.vector_store %arg7[%c255_58, %c0_59], %56 {strides = array<i32>} : memref<256x128xf32, #tpu.memory_space<vmem>>, vector<1x128xf32>,
    %c0_60 = arith.constant 0 : index
    %c0_61 = arith.constant 0 : index
    %58 = vector.load %arg7[%c0_60, %c0_61] : memref<256x128xf32, #tpu.memory_space<vmem>>, vector<256x128xf32>
    %c0_62 = arith.constant 0 : index
    %c0_63 = arith.constant 0 : index
    %59 = vector.load %arg5[%c0_62, %c0_63] : memref<1x128xf32, #tpu.memory_space<vmem>>, vector<1x128xf32>
    %60 = vector.broadcast %59 : vector<1x128xf32> to vector<256x128xf32>
    %61 = arith.addf %58, %60 : vector<256x128xf32>
    %c0_64 = arith.constant 0 : index
    %c0_65 = arith.constant 0 : index
    %62 = vector.load %arg6[%c0_64, %c0_65] : memref<256x128xf32, #tpu.memory_space<vmem>>, vector<256x128xf32>
    tpu.vector_store %arg6[%c0_64, %c0_65], %61 {strides = array<i32>} : memref<256x128xf32, #tpu.memory_space<vmem>>, vector<256x128xf32>,
    return
  }
  func.func @transform_0(%arg0: i32, %arg1: i32) -> (i32, i32) {
    %c0_i32 = arith.constant 0 : i32
    %c0_i32_0 = arith.constant 0 : i32
    return %arg0, %c0_i32 : i32, i32
  }
  func.func @transform_1(%arg0: i32, %arg1: i32) -> (i32, i32) {
    %c1_i32 = arith.constant 1 : i32
    %0 = arith.addi %arg0, %c1_i32 : i32
    %c0_i32 = arith.constant 0 : i32
    %c0_i32_0 = arith.constant 0 : i32
    return %0, %c0_i32 : i32, i32
  }
  func.func @transform_2(%arg0: i32, %arg1: i32) -> (i32, i32, i32) {
    %c0_i32 = arith.constant 0 : i32
    %c0_i32_0 = arith.constant 0 : i32
    %c0_i32_1 = arith.constant 0 : i32
    return %c0_i32, %c0_i32_0, %arg1 : i32, i32, i32
  }
  func.func @transform_3(%arg0: i32, %arg1: i32) -> (i32, i32) {
    %c0_i32 = arith.constant 0 : i32
    %c0_i32_0 = arith.constant 0 : i32
    return %c0_i32, %arg1 : i32, i32
  }
  func.func @transform_4(%arg0: i32, %arg1: i32) -> (i32, i32) {
    %c0_i32 = arith.constant 0 : i32
    return %arg0, %arg1 : i32, i32
  }
}

module attributes {stable_mosaic.version = 11 : i64} {
  func.func @_tconv_phase_kernel(%arg0: i32, %arg1: i32, %arg2: memref<256x32xf32, #tpu.memory_space<vmem>>, %arg3: memref<256x32xf32, #tpu.memory_space<vmem>>, %arg4: memref<4x32x128xbf16, #tpu.memory_space<vmem>>, %arg5: memref<1x128xf32, #tpu.memory_space<vmem>>, %arg6: memref<256x128xf32, #tpu.memory_space<vmem>>, %arg7: memref<256x128xf32, #tpu.memory_space<vmem>>) attributes {dimension_semantics = [#tpu.dimension_semantics<parallel>, #tpu.dimension_semantics<parallel>], iteration_bounds = array<i64: 3, 1>, scalar_prefetch = 0 : i64, scratch_operands = 1 : i64, tpu.core_type = #tpu.core_type<tc>, window_params = [{transform_indices = @transform_0, window_bounds = array<i64: 256, 32>}, {transform_indices = @transform_1, window_bounds = array<i64: 256, 32>}, {transform_indices = @transform_2, window_bounds = array<i64: 4, 32, 128>}, {transform_indices = @transform_3, window_bounds = array<i64: 1, 128>}, {transform_indices = @transform_4, window_bounds = array<i64: 256, 128>}]} {
    %cst = arith.constant 0.000000e+00 : f32
    %0 = vector.broadcast %cst : f32 to vector<256x128xf32>
    %c0 = arith.constant 0 : index
    %c0_0 = arith.constant 0 : index
    %1 = vector.load %arg7[%c0, %c0_0] : memref<256x128xf32, #tpu.memory_space<vmem>>, vector<256x128xf32>
    tpu.vector_store %arg7[%c0, %c0_0], %0 {strides = array<i32>} : memref<256x128xf32, #tpu.memory_space<vmem>>, vector<256x128xf32>,
    %c0_1 = arith.constant 0 : index
    %c0_2 = arith.constant 0 : index
    %c0_3 = arith.constant 0 : index
    %2 = vector.load %arg4[%c0_1, %c0_2, %c0_3] : memref<4x32x128xbf16, #tpu.memory_space<vmem>>, vector<1x32x128xbf16>
    %3 = vector.shape_cast %2 : vector<1x32x128xbf16> to vector<32x128xbf16>
    %c19 = arith.constant 19 : index
    %c0_4 = arith.constant 0 : index
    %4 = vector.load %arg2[%c19, %c0_4] : memref<256x32xf32, #tpu.memory_space<vmem>>, vector<237x32xf32>
    %5 = arith.truncf %4 : vector<237x32xf32> to vector<237x32xbf16>
    %c0_5 = arith.constant 0 : index
    %c0_6 = arith.constant 0 : index
    %6 = vector.load %arg7[%c0_5, %c0_6] : memref<256x128xf32, #tpu.memory_space<vmem>>, vector<237x128xf32>
    %cst_7 = arith.constant dense<0.000000e+00> : vector<237x128xf32>
    %7 = tpu.matmul %5, %3, %cst_7 {dimension_numbers = #tpu.dot_dimension_numbers<[1], [0], [0], [1], [0, 0, 1, 1], [], []>} : vector<237x32xbf16>, vector<32x128xbf16>, vector<237x128xf32> -> vector<237x128xf32>
    %8 = arith.addf %6, %7 : vector<237x128xf32>
    %c0_8 = arith.constant 0 : index
    %c0_9 = arith.constant 0 : index
    %9 = vector.load %arg7[%c0_8, %c0_9] : memref<256x128xf32, #tpu.memory_space<vmem>>, vector<237x128xf32>
    tpu.vector_store %arg7[%c0_8, %c0_9], %8 {strides = array<i32>} : memref<256x128xf32, #tpu.memory_space<vmem>>, vector<237x128xf32>,
    %c0_10 = arith.constant 0 : index
    %c0_11 = arith.constant 0 : index
    %10 = vector.load %arg3[%c0_10, %c0_11] : memref<256x32xf32, #tpu.memory_space<vmem>>, vector<19x32xf32>
    %11 = arith.truncf %10 : vector<19x32xf32> to vector<19x32xbf16>
    %c237 = arith.constant 237 : index
    %c0_12 = arith.constant 0 : index
    %12 = vector.load %arg7[%c237, %c0_12] : memref<256x128xf32, #tpu.memory_space<vmem>>, vector<19x128xf32>
    %cst_13 = arith.constant dense<0.000000e+00> : vector<19x128xf32>
    %13 = tpu.matmul %11, %3, %cst_13 {dimension_numbers = #tpu.dot_dimension_numbers<[1], [0], [0], [1], [0, 0, 1, 1], [], []>} : vector<19x32xbf16>, vector<32x128xbf16>, vector<19x128xf32> -> vector<19x128xf32>
    %14 = arith.addf %12, %13 : vector<19x128xf32>
    %c237_14 = arith.constant 237 : index
    %c0_15 = arith.constant 0 : index
    %15 = vector.load %arg7[%c237_14, %c0_15] : memref<256x128xf32, #tpu.memory_space<vmem>>, vector<19x128xf32>
    tpu.vector_store %arg7[%c237_14, %c0_15], %14 {strides = array<i32>} : memref<256x128xf32, #tpu.memory_space<vmem>>, vector<19x128xf32>,
    %c1 = arith.constant 1 : index
    %c0_16 = arith.constant 0 : index
    %c0_17 = arith.constant 0 : index
    %16 = vector.load %arg4[%c1, %c0_16, %c0_17] : memref<4x32x128xbf16, #tpu.memory_space<vmem>>, vector<1x32x128xbf16>
    %17 = vector.shape_cast %16 : vector<1x32x128xbf16> to vector<32x128xbf16>
    %c18 = arith.constant 18 : index
    %c0_18 = arith.constant 0 : index
    %18 = vector.load %arg2[%c18, %c0_18] : memref<256x32xf32, #tpu.memory_space<vmem>>, vector<238x32xf32>
    %19 = arith.truncf %18 : vector<238x32xf32> to vector<238x32xbf16>
    %c0_19 = arith.constant 0 : index
    %c0_20 = arith.constant 0 : index
    %20 = vector.load %arg7[%c0_19, %c0_20] : memref<256x128xf32, #tpu.memory_space<vmem>>, vector<238x128xf32>
    %cst_21 = arith.constant dense<0.000000e+00> : vector<238x128xf32>
    %21 = tpu.matmul %19, %17, %cst_21 {dimension_numbers = #tpu.dot_dimension_numbers<[1], [0], [0], [1], [0, 0, 1, 1], [], []>} : vector<238x32xbf16>, vector<32x128xbf16>, vector<238x128xf32> -> vector<238x128xf32>
    %22 = arith.addf %20, %21 : vector<238x128xf32>
    %c0_22 = arith.constant 0 : index
    %c0_23 = arith.constant 0 : index
    %23 = vector.load %arg7[%c0_22, %c0_23] : memref<256x128xf32, #tpu.memory_space<vmem>>, vector<238x128xf32>
    tpu.vector_store %arg7[%c0_22, %c0_23], %22 {strides = array<i32>} : memref<256x128xf32, #tpu.memory_space<vmem>>, vector<238x128xf32>,
    %c0_24 = arith.constant 0 : index
    %c0_25 = arith.constant 0 : index
    %24 = vector.load %arg3[%c0_24, %c0_25] : memref<256x32xf32, #tpu.memory_space<vmem>>, vector<18x32xf32>
    %25 = arith.truncf %24 : vector<18x32xf32> to vector<18x32xbf16>
    %c238 = arith.constant 238 : index
    %c0_26 = arith.constant 0 : index
    %26 = vector.load %arg7[%c238, %c0_26] : memref<256x128xf32, #tpu.memory_space<vmem>>, vector<18x128xf32>
    %cst_27 = arith.constant dense<0.000000e+00> : vector<18x128xf32>
    %27 = tpu.matmul %25, %17, %cst_27 {dimension_numbers = #tpu.dot_dimension_numbers<[1], [0], [0], [1], [0, 0, 1, 1], [], []>} : vector<18x32xbf16>, vector<32x128xbf16>, vector<18x128xf32> -> vector<18x128xf32>
    %28 = arith.addf %26, %27 : vector<18x128xf32>
    %c238_28 = arith.constant 238 : index
    %c0_29 = arith.constant 0 : index
    %29 = vector.load %arg7[%c238_28, %c0_29] : memref<256x128xf32, #tpu.memory_space<vmem>>, vector<18x128xf32>
    tpu.vector_store %arg7[%c238_28, %c0_29], %28 {strides = array<i32>} : memref<256x128xf32, #tpu.memory_space<vmem>>, vector<18x128xf32>,
    %c2 = arith.constant 2 : index
    %c0_30 = arith.constant 0 : index
    %c0_31 = arith.constant 0 : index
    %30 = vector.load %arg4[%c2, %c0_30, %c0_31] : memref<4x32x128xbf16, #tpu.memory_space<vmem>>, vector<1x32x128xbf16>
    %31 = vector.shape_cast %30 : vector<1x32x128xbf16> to vector<32x128xbf16>
    %c1_32 = arith.constant 1 : index
    %c0_33 = arith.constant 0 : index
    %32 = vector.load %arg2[%c1_32, %c0_33] : memref<256x32xf32, #tpu.memory_space<vmem>>, vector<255x32xf32>
    %33 = arith.truncf %32 : vector<255x32xf32> to vector<255x32xbf16>
    %c0_34 = arith.constant 0 : index
    %c0_35 = arith.constant 0 : index
    %34 = vector.load %arg7[%c0_34, %c0_35] : memref<256x128xf32, #tpu.memory_space<vmem>>, vector<255x128xf32>
    %cst_36 = arith.constant dense<0.000000e+00> : vector<255x128xf32>
    %35 = tpu.matmul %33, %31, %cst_36 {dimension_numbers = #tpu.dot_dimension_numbers<[1], [0], [0], [1], [0, 0, 1, 1], [], []>} : vector<255x32xbf16>, vector<32x128xbf16>, vector<255x128xf32> -> vector<255x128xf32>
    %36 = arith.addf %34, %35 : vector<255x128xf32>
    %c0_37 = arith.constant 0 : index
    %c0_38 = arith.constant 0 : index
    %37 = vector.load %arg7[%c0_37, %c0_38] : memref<256x128xf32, #tpu.memory_space<vmem>>, vector<255x128xf32>
    tpu.vector_store %arg7[%c0_37, %c0_38], %36 {strides = array<i32>} : memref<256x128xf32, #tpu.memory_space<vmem>>, vector<255x128xf32>,
    %c0_39 = arith.constant 0 : index
    %c0_40 = arith.constant 0 : index
    %38 = vector.load %arg3[%c0_39, %c0_40] : memref<256x32xf32, #tpu.memory_space<vmem>>, vector<1x32xf32>
    %39 = arith.truncf %38 : vector<1x32xf32> to vector<1x32xbf16>
    %c255 = arith.constant 255 : index
    %c0_41 = arith.constant 0 : index
    %40 = vector.load %arg7[%c255, %c0_41] : memref<256x128xf32, #tpu.memory_space<vmem>>, vector<1x128xf32>
    %cst_42 = arith.constant dense<0.000000e+00> : vector<1x128xf32>
    %41 = tpu.matmul %39, %31, %cst_42 {dimension_numbers = #tpu.dot_dimension_numbers<[1], [0], [0], [1], [0, 0, 1, 1], [], []>} : vector<1x32xbf16>, vector<32x128xbf16>, vector<1x128xf32> -> vector<1x128xf32>
    %42 = arith.addf %40, %41 : vector<1x128xf32>
    %c255_43 = arith.constant 255 : index
    %c0_44 = arith.constant 0 : index
    %43 = vector.load %arg7[%c255_43, %c0_44] : memref<256x128xf32, #tpu.memory_space<vmem>>, vector<1x128xf32>
    tpu.vector_store %arg7[%c255_43, %c0_44], %42 {strides = array<i32>} : memref<256x128xf32, #tpu.memory_space<vmem>>, vector<1x128xf32>,
    %c3 = arith.constant 3 : index
    %c0_45 = arith.constant 0 : index
    %c0_46 = arith.constant 0 : index
    %44 = vector.load %arg4[%c3, %c0_45, %c0_46] : memref<4x32x128xbf16, #tpu.memory_space<vmem>>, vector<1x32x128xbf16>
    %45 = vector.shape_cast %44 : vector<1x32x128xbf16> to vector<32x128xbf16>
    %c0_47 = arith.constant 0 : index
    %c0_48 = arith.constant 0 : index
    %46 = vector.load %arg2[%c0_47, %c0_48] : memref<256x32xf32, #tpu.memory_space<vmem>>, vector<256x32xf32>
    %47 = arith.truncf %46 : vector<256x32xf32> to vector<256x32xbf16>
    %c0_49 = arith.constant 0 : index
    %c0_50 = arith.constant 0 : index
    %48 = vector.load %arg7[%c0_49, %c0_50] : memref<256x128xf32, #tpu.memory_space<vmem>>, vector<256x128xf32>
    %cst_51 = arith.constant dense<0.000000e+00> : vector<256x128xf32>
    %49 = tpu.matmul %47, %45, %cst_51 {dimension_numbers = #tpu.dot_dimension_numbers<[1], [0], [0], [1], [0, 0, 1, 1], [], []>} : vector<256x32xbf16>, vector<32x128xbf16>, vector<256x128xf32> -> vector<256x128xf32>
    %50 = arith.addf %48, %49 : vector<256x128xf32>
    %c0_52 = arith.constant 0 : index
    %c0_53 = arith.constant 0 : index
    %51 = vector.load %arg7[%c0_52, %c0_53] : memref<256x128xf32, #tpu.memory_space<vmem>>, vector<256x128xf32>
    tpu.vector_store %arg7[%c0_52, %c0_53], %50 {strides = array<i32>} : memref<256x128xf32, #tpu.memory_space<vmem>>, vector<256x128xf32>,
    %c0_54 = arith.constant 0 : index
    %c0_55 = arith.constant 0 : index
    %52 = vector.load %arg7[%c0_54, %c0_55] : memref<256x128xf32, #tpu.memory_space<vmem>>, vector<256x128xf32>
    %c0_56 = arith.constant 0 : index
    %c0_57 = arith.constant 0 : index
    %53 = vector.load %arg5[%c0_56, %c0_57] : memref<1x128xf32, #tpu.memory_space<vmem>>, vector<1x128xf32>
    %54 = vector.broadcast %53 : vector<1x128xf32> to vector<256x128xf32>
    %55 = arith.addf %52, %54 : vector<256x128xf32>
    %c0_58 = arith.constant 0 : index
    %c0_59 = arith.constant 0 : index
    %56 = vector.load %arg6[%c0_58, %c0_59] : memref<256x128xf32, #tpu.memory_space<vmem>>, vector<256x128xf32>
    tpu.vector_store %arg6[%c0_58, %c0_59], %55 {strides = array<i32>} : memref<256x128xf32, #tpu.memory_space<vmem>>, vector<256x128xf32>,
    return
  }
  func.func @transform_0(%arg0: i32, %arg1: i32) -> (i32, i32) {
    %c0_i32 = arith.constant 0 : i32
    %c0_i32_0 = arith.constant 0 : i32
    return %arg0, %c0_i32 : i32, i32
  }
  func.func @transform_1(%arg0: i32, %arg1: i32) -> (i32, i32) {
    %c1_i32 = arith.constant 1 : i32
    %0 = arith.addi %arg0, %c1_i32 : i32
    %c0_i32 = arith.constant 0 : i32
    %c0_i32_0 = arith.constant 0 : i32
    return %0, %c0_i32 : i32, i32
  }
  func.func @transform_2(%arg0: i32, %arg1: i32) -> (i32, i32, i32) {
    %c0_i32 = arith.constant 0 : i32
    %c0_i32_0 = arith.constant 0 : i32
    %c0_i32_1 = arith.constant 0 : i32
    return %c0_i32, %c0_i32_0, %arg1 : i32, i32, i32
  }
  func.func @transform_3(%arg0: i32, %arg1: i32) -> (i32, i32) {
    %c0_i32 = arith.constant 0 : i32
    %c0_i32_0 = arith.constant 0 : i32
    return %c0_i32, %arg1 : i32, i32
  }
  func.func @transform_4(%arg0: i32, %arg1: i32) -> (i32, i32) {
    %c0_i32 = arith.constant 0 : i32
    return %arg0, %arg1 : i32, i32
  }
}

module attributes {stable_mosaic.version = 11 : i64} {
  func.func @_instnorm_act_kernel(%arg0: i32, %arg1: memref<32x1024xf32, #tpu.memory_space<vmem>>, %arg2: memref<32x1024xf32, #tpu.memory_space<vmem>>) attributes {dimension_semantics = [#tpu.dimension_semantics<parallel>], iteration_bounds = array<i64: 1>, scalar_prefetch = 0 : i64, scratch_operands = 0 : i64, tpu.core_type = #tpu.core_type<tc>, window_params = [{transform_indices = @transform_0, window_bounds = array<i64: 32, 1024>}, {transform_indices = @transform_1, window_bounds = array<i64: 32, 1024>}]} {
    %c0 = arith.constant 0 : index
    %c0_0 = arith.constant 0 : index
    %0 = vector.load %arg1[%c0, %c0_0] : memref<32x1024xf32, #tpu.memory_space<vmem>>, vector<32x1024xf32>
    %1 = tpu.iota {dimensions = array<i32: 1>} : vector<32x1024xi32>
    %c1024_i32 = arith.constant 1024 : i32
    %2 = vector.broadcast %c1024_i32 : i32 to vector<32x1024xi32>
    %3 = arith.cmpi slt, %1, %2 : vector<32x1024xi32>
    %cst = arith.constant 0.000000e+00 : f32
    %4 = vector.broadcast %cst : f32 to vector<32x1024xf32>
    %5 = arith.select %3, %0, %4 : vector<32x1024xi1>, vector<32x1024xf32>
    %cst_1 = arith.constant dense<0.000000e+00> : vector<32xf32>
    %6 = vector.multi_reduction <add>, %5, %cst_1 [1] : vector<32x1024xf32> to vector<32xf32>
    %7 = vector.shape_cast %6 : vector<32xf32> to vector<32x1xf32>
    %cst_2 = arith.constant 9.765625E-4 : f32
    %8 = vector.broadcast %cst_2 : f32 to vector<32x1xf32>
    %9 = arith.mulf %7, %8 : vector<32x1xf32>
    %10 = vector.broadcast %9 : vector<32x1xf32> to vector<32x1024xf32>
    %11 = arith.subf %0, %10 : vector<32x1024xf32>
    %cst_3 = arith.constant 0.000000e+00 : f32
    %12 = vector.broadcast %cst_3 : f32 to vector<32x1024xf32>
    %13 = arith.select %3, %11, %12 : vector<32x1024xi1>, vector<32x1024xf32>
    %14 = arith.mulf %13, %13 : vector<32x1024xf32>
    %cst_4 = arith.constant dense<0.000000e+00> : vector<32xf32>
    %15 = vector.multi_reduction <add>, %14, %cst_4 [1] : vector<32x1024xf32> to vector<32xf32>
    %16 = vector.shape_cast %15 : vector<32xf32> to vector<32x1xf32>
    %cst_5 = arith.constant 9.765625E-4 : f32
    %17 = vector.broadcast %cst_5 : f32 to vector<32x1xf32>
    %18 = arith.mulf %16, %17 : vector<32x1xf32>
    %19 = vector.broadcast %9 : vector<32x1xf32> to vector<32x1024xf32>
    %20 = arith.subf %0, %19 : vector<32x1024xf32>
    %cst_6 = arith.constant 9.99999974E-6 : f32
    %21 = vector.broadcast %cst_6 : f32 to vector<32x1xf32>
    %22 = arith.addf %18, %21 : vector<32x1xf32>
    %23 = math.rsqrt %22 : vector<32x1xf32>
    %24 = vector.broadcast %23 : vector<32x1xf32> to vector<32x1024xf32>
    %25 = arith.mulf %20, %24 : vector<32x1024xf32>
    %cst_7 = arith.constant 0.000000e+00 : f32
    %26 = vector.broadcast %cst_7 : f32 to vector<32x1024xf32>
    %27 = arith.maximumf %25, %26 : vector<32x1024xf32>
    %c0_8 = arith.constant 0 : index
    %c0_9 = arith.constant 0 : index
    %28 = vector.load %arg2[%c0_8, %c0_9] : memref<32x1024xf32, #tpu.memory_space<vmem>>, vector<32x1024xf32>
    tpu.vector_store %arg2[%c0_8, %c0_9], %27 {strides = array<i32>} : memref<32x1024xf32, #tpu.memory_space<vmem>>, vector<32x1024xf32>,
    return
  }
  func.func @transform_0(%arg0: i32) -> (i32, i32) {
    %c0_i32 = arith.constant 0 : i32
    %c0_i32_0 = arith.constant 0 : i32
    return %arg0, %c0_i32 : i32, i32
  }
  func.func @transform_1(%arg0: i32) -> (i32, i32) {
    %c0_i32 = arith.constant 0 : i32
    %c0_i32_0 = arith.constant 0 : i32
    return %arg0, %c0_i32 : i32, i32
  }
}

</mosaic_0001>

<llo_original>
// kernel: _lambda_.5
$region0: #{_lambda_.5}
  #allocation0 [shape = 'u32[]', space=smem, size = 0x4, offset = 0x4, fixed_abs, tag = 'smem constant byte address 0x4 - core index']
  #allocation1 [shape = 'u32[72,128]{1,0:T(1,128)}', space=vmem, size = 0x9000, scoped, tag = 'internal scratch']
  #allocation2 [shape = 'f32[256,128]{1,0:T(8,128)}', space=vmem, size = 0x20000, scoped, tag = 'scratch operand']
  %s0 = inlined_call_operand.vmem [shape: f32[1024,32], index: 0, kind: input, shape index: {}, may-alias: {0,1}]
  %s1 = inlined_call_operand.vmem [shape: f32[1024,32], index: 1, kind: input, shape index: {}, may-alias: {0,1}]
  %s2 = inlined_call_operand.vmem [shape: bf16[4,32,128], index: 2, kind: input, shape index: {}]
  %s3 = inlined_call_operand.vmem [shape: f32[1,128], index: 3, kind: input, shape index: {}]
  %s4 = inlined_call_operand.vmem [shape: f32[768,128], index: 4, kind: output, shape index: {}]
  %s5 = sld [smem:[#allocation0]]
  $region49: #{_lambda_.5} parent=0
    _
  %s7 = ssub.s32 1, %s5
  %s8 = scalar_select 0, %s7, %s5
  loop: start=0, step=1, limit=5
  $region2: #{_lambda_.5} parent=0 // loop_pre_header
    _
  $region3: #{_lambda_.5} parent=0 // loop_header
    %s10 = sphi 0, %s14
    %p11 = scmp.ge.s32.totalorder %s10, 5
    %s17 = sphi 0, %s29
    %s18 = sphi 0, %s25
    %s19 = sphi 0, %s17
    %s20 = sphi 0, %s18
    %s21 = sphi 0, %s19
    %s22 = sphi 0, %s20
    %s32 = sphi 0, %s34
    %s35 = sphi 0, %s32
    %s36 = sphi 0, %s35
    %s52 = sphi 0, %s36
    %s60 = sphi 0, %s62
    %s63 = sphi 0, %s60
    %s64 = sphi 0, %s63
    %s80 = sphi 0, %s64
    %s86 = sphi 0, %s88
    %s89 = sphi 0, %s86
    %s90 = sphi 0, %s89
    %s106 = sphi 0, %s90
    %s112 = sphi 0, %s114
    %s115 = sphi 0, %s112
    %s116 = sphi 0, %s115
    %s132 = sphi 0, %s116
    %s140 = sphi 0, %s142
    %s143 = sphi 0, %s140
    %s144 = sphi 0, %s143
    %s160 = sphi 0, %s144
  $region4: #{_lambda_.5} parent=0 // loop_header_branch
    %13 = sbr.rel (%p11) target = $region8
  $region5: #{_lambda_.5} parent=0 // loop_body
    %s15 = ssub.s32 %s10, 1
    %s16 = ssub.s32 %s10, 2
    %s23 = sadd.s32 1, %s18
    %p24 = scmp.ge.s32.totalorder %s23, 1
    %s25 = scalar_select %p24, 0, %s23
    %s26 = sadd.s32 1, %s17
    %s27 = scalar_select %p24, %s26, %s17
    %p28 = scmp.ge.s32.totalorder %s27, 3
    %s29 = scalar_select %p28, 0, %s27
    %s30 = ssub.s32 %s17, %s29
    %p31 = scmp.eq.s32.totalorder %s30, 0
    %s33 = sadd.s32 %s32, 1
    %s34 = scalar_select %p31, %s32, %s33
    %p37 = pneg %p31
    %p38 = scmp.eq.s32.totalorder %s10, 2
    %p39 = por %p37, %p38
    %p40 = scmp.ne.s32.totalorder %s32, %s35
    %p41 = scmp.eq.s32.totalorder %s10, 0
    %p42 = por %p40, %p41
    %p43 = scmp.ne.s32.totalorder %s32, %s35
    %p44 = scmp.eq.s32.totalorder %s15, 2
    %p45 = por %p43, %p44
    %p46 = scmp.ne.s32.totalorder %s35, %s36
    %p47 = scmp.eq.s32.totalorder %s15, 0
    %p48 = por %p46, %p47
    %p49 = scmp.ne.s32.totalorder %s35, %s36
    %p50 = scmp.eq.s32.totalorder %s16, 2
    %p51 = por %p49, %p50
    %p53 = scmp.ne.s32.totalorder %s36, %s52
    %p54 = scmp.eq.s32.totalorder %s16, 0
    %p55 = por %p53, %p54
    %s56 = sadd.s32 %s17, 1
    %s57 = sadd.s32 %s29, 1
    %s58 = ssub.s32 %s56, %s57
    %p59 = scmp.eq.s32.totalorder %s58, 0
    %s61 = sadd.s32 %s60, 1
    %s62 = scalar_select %p59, %s60, %s61
    %p65 = pneg %p59
    %p66 = scmp.eq.s32.totalorder %s10, 2
    %p67 = por %p65, %p66
    %p68 = scmp.ne.s32.totalorder %s60, %s63
    %p69 = scmp.eq.s32.totalorder %s10, 0
    %p70 = por %p68, %p69
    %p71 = scmp.ne.s32.totalorder %s60, %s63
    %p72 = scmp.eq.s32.totalorder %s15, 2
    %p73 = por %p71, %p72
    %p74 = scmp.ne.s32.totalorder %s63, %s64
    %p75 = scmp.eq.s32.totalorder %s15, 0
    %p76 = por %p74, %p75
    %p77 = scmp.ne.s32.totalorder %s63, %s64
    %p78 = scmp.eq.s32.totalorder %s16, 2
    %p79 = por %p77, %p78
    %p81 = scmp.ne.s32.totalorder %s64, %s80
    %p82 = scmp.eq.s32.totalorder %s16, 0
    %p83 = por %p81, %p82
    %s84 = ssub.s32 %s18, %s25
    %p85 = scmp.eq.s32.totalorder %s84, 0
    %s87 = sadd.s32 %s86, 1
    %s88 = scalar_select %p85, %s86, %s87
    %p91 = pneg %p85
    %p92 = scmp.eq.s32.totalorder %s10, 2
    %p93 = por %p91, %p92
    %p94 = scmp.ne.s32.totalorder %s86, %s89
    %p95 = scmp.eq.s32.totalorder %s10, 0
    %p96 = por %p94, %p95
    %p97 = scmp.ne.s32.totalorder %s86, %s89
    %p98 = scmp.eq.s32.totalorder %s15, 2
    %p99 = por %p97, %p98
    %p100 = scmp.ne.s32.totalorder %s89, %s90
    %p101 = scmp.eq.s32.totalorder %s15, 0
    %p102 = por %p100, %p101
    %p103 = scmp.ne.s32.totalorder %s89, %s90
    %p104 = scmp.eq.s32.totalorder %s16, 2
    %p105 = por %p103, %p104
    %p107 = scmp.ne.s32.totalorder %s90, %s106
    %p108 = scmp.eq.s32.totalorder %s16, 0
    %p109 = por %p107, %p108
    %s110 = ssub.s32 %s18, %s25
    %p111 = scmp.eq.s32.totalorder %s110, 0
    %s113 = sadd.s32 %s112, 1
    %s114 = scalar_select %p111, %s112, %s113
    %p117 = pneg %p111
    %p118 = scmp.eq.s32.totalorder %s10, 2
    %p119 = por %p117, %p118
    %p120 = scmp.ne.s32.totalorder %s112, %s115
    %p121 = scmp.eq.s32.totalorder %s10, 0
    %p122 = por %p120, %p121
    %p123 = scmp.ne.s32.totalorder %s112, %s115
    %p124 = scmp.eq.s32.totalorder %s15, 2
    %p125 = por %p123, %p124
    %p126 = scmp.ne.s32.totalorder %s115, %s116
    %p127 = scmp.eq.s32.totalorder %s15, 0
    %p128 = por %p126, %p127
    %p129 = scmp.ne.s32.totalorder %s115, %s116
    %p130 = scmp.eq.s32.totalorder %s16, 2
    %p131 = por %p129, %p130
    %p133 = scmp.ne.s32.totalorder %s116, %s132
    %p134 = scmp.eq.s32.totalorder %s16, 0
    %p135 = por %p133, %p134
    %s136 = ssub.s32 %s17, %s29
    %s137 = ssub.s32 %s18, %s25
    %s138 = sor.u32 %s136, %s137
    %p139 = scmp.eq.s32.totalorder %s138, 0
    %s141 = sadd.s32 %s140, 1
    %s142 = scalar_select %p139, %s140, %s141
    %p145 = pneg %p139
    %p146 = scmp.eq.s32.totalorder %s10, 2
    %p147 = por %p145, %p146
    %p148 = scmp.ne.s32.totalorder %s140, %s143
    %p149 = scmp.eq.s32.totalorder %s10, 0
    %p150 = por %p148, %p149
    %p151 = scmp.ne.s32.totalorder %s140, %s143
    %p152 = scmp.eq.s32.totalorder %s15, 2
    %p153 = por %p151, %p152
    %p154 = scmp.ne.s32.totalorder %s143, %s144
    %p155 = scmp.eq.s32.totalorder %s15, 0
    %p156 = por %p154, %p155
    %p157 = scmp.ne.s32.totalorder %s143, %s144
    %p158 = scmp.eq.s32.totalorder %s16, 2
    %p159 = por %p157, %p158
    %p161 = scmp.ne.s32.totalorder %s144, %s160
    %p162 = scmp.eq.s32.totalorder %s16, 0
    %p163 = por %p161, %p162
    %p164 = scmp.le.s32.totalorder 1, %s10
    %p165 = scmp.lt.s32.totalorder %s10, 4
    %p166 = pnand %p164, %p165
    %p167 = pneg %p166
    // Predicated region
    $region9: #{_lambda_.5} parent=5 // pred_check
      _
    $region10: #{_lambda_.5} parent=5 // pred_check_branch
      %169 = sbr.rel (%p166) target = $region12
    $region11: #{_lambda_.5} parent=5 // pred_region
      %s170 = ssub.s32 %s10, 1
      // Predicated region
      $region13: #{_lambda_.5} parent=11 // pred_check
        %p171 = pneg %p102
      $region14: #{_lambda_.5} parent=11 // pred_check_branch
        %173 = sbr.rel (%p171) target = $region16
      $region15: #{_lambda_.5} parent=11 // pred_region
        %p174 = scmp.lt.s32.totalorder %s20, 0
        %s175 = scalar_select %p174, %s20, 0
        %s176 = smul.addr %s175, 4
        %s177 = scalar_lea.vmem %s2, %s176
      $region16: #{_lambda_.5} parent=11 // pred_fallthru
        _
      // Predicated region
      $region17: #{_lambda_.5} parent=11 // pred_check
        %p178 = pneg %p128
      $region18: #{_lambda_.5} parent=11 // pred_check_branch
        %180 = sbr.rel (%p178) target = $region20
      $region19: #{_lambda_.5} parent=11 // pred_region
        %p181 = scmp.lt.s32.totalorder %s20, 0
        %s182 = scalar_select %p181, %s20, 0
        %s183 = scalar_lea.vmem %s3, %s182
      $region20: #{_lambda_.5} parent=11 // pred_fallthru
        _
    $region12: #{_lambda_.5} parent=5 // pred_fallthru
      _
    %p184 = scmp.lt.s32.totalorder %s10, 3
    // Predicated region
    $region21: #{_lambda_.5} parent=5 // pred_check
      %p185 = pneg %p184
    $region22: #{_lambda_.5} parent=5 // pred_check_branch
      %187 = sbr.rel (%p185) target = $region24
    $region23: #{_lambda_.5} parent=5 // pred_region
      // Predicated region
      $region25: #{_lambda_.5} parent=23 // pred_check
        %p188 = pneg %p42
      $region26: #{_lambda_.5} parent=23 // pred_check_branch
        %190 = sbr.rel (%p188) target = $region28
      $region27: #{_lambda_.5} parent=23 // pred_region
        %s191 = smul.u32 32, %s17
        %p192 = scmp.lt.s32.totalorder %s191, 127
        %s193 = scalar_select %p192, %s191, 127
        %s194 = smul.addr %s193, 8
        %s195 = scalar_lea.vmem %s0, %s194
        %s196 = smul.u32 32, %s17
      $region28: #{_lambda_.5} parent=23 // pred_fallthru
        _
      // Predicated region
      $region29: #{_lambda_.5} parent=23 // pred_check
        %p197 = pneg %p70
      $region30: #{_lambda_.5} parent=23 // pred_check_branch
        %199 = sbr.rel (%p197) target = $region32
      $region31: #{_lambda_.5} parent=23 // pred_region
        %s200 = sadd.s32 %s17, 1
        %s201 = smul.u32 32, %s200
        %p202 = scmp.lt.s32.totalorder %s201, 127
        %s203 = scalar_select %p202, %s201, 127
        %s204 = smul.addr %s203, 8
        %s205 = scalar_lea.vmem %s1, %s204
        %s206 = sadd.s32 %s17, 1
        %s207 = smul.u32 32, %s206
      $region32: #{_lambda_.5} parent=23 // pred_fallthru
        _
    $region24: #{_lambda_.5} parent=5 // pred_fallthru
      _
    %p208 = scmp.le.s32.totalorder 1, %s10
    %p209 = scmp.lt.s32.totalorder %s10, 4
    %p210 = pnand %p208, %p209
    %p211 = pneg %p210
    // Predicated region
    $region33: #{_lambda_.5} parent=5 // pred_check
      _
    $region34: #{_lambda_.5} parent=5 // pred_check_branch
      %213 = sbr.rel (%p210) target = $region36
    $region35: #{_lambda_.5} parent=5 // pred_region
      %s214 = ssub.s32 %s10, 1
      %s215 = smul.u32 32, %s19
      %p216 = scmp.lt.s32.totalorder %s215, 127
      %s217 = scalar_select %p216, %s215, 127
      %s218 = smul.addr %s217, 8
      %s219 = scalar_lea.vmem %s0, %s218
      %p220 = pneg %p48
      %p221 = pneg %p45
      %s222 = sadd.s32 %s19, 1
      %s223 = smul.u32 32, %s222
      %p224 = scmp.lt.s32.totalorder %s223, 127
      %s225 = scalar_select %p224, %s223, 127
      %s226 = smul.addr %s225, 8
      %s227 = scalar_lea.vmem %s1, %s226
      %p228 = pneg %p76
      %p229 = pneg %p73
      %p230 = scmp.lt.s32.totalorder %s20, 0
      %s231 = scalar_select %p230, %s20, 0
      %s232 = smul.addr %s231, 4
      %s233 = scalar_lea.vmem %s2, %s232
      %p234 = pneg %p102
      %p235 = pneg %p99
      %p236 = scmp.lt.s32.totalorder %s20, 0
      %s237 = scalar_select %p236, %s20, 0
      %s238 = scalar_lea.vmem %s3, %s237
      %p239 = pneg %p128
      %p240 = pneg %p125
      %p241 = pneg %p156
      %p242 = pneg %p153
      %s243 = smul.u32 32, %s19
      %p244 = scmp.lt.s32.totalorder %s243, 95
      %s245 = scalar_select %p244, %s243, 95
      %p246 = scmp.lt.s32.totalorder %s20, 0
      %s247 = scalar_select %p246, %s20, 0
      %s248 = sadd.s32 %s247, %s245
      %s249 = smul.addr %s248, 8
      %s250 = scalar_lea.vmem %s4, %s249
      %s251 = smul.u32 32, %s19
      %p252 = scmp.lt.s32.totalorder %s251, 127
      %s253 = scalar_select %p252, %s251, 127
      %s254 = smul.addr %s253, 8
      %s255 = scalar_lea.vmem %s0, %s254
      %s256 = smul.u32 32, %s19
      %s257 = sadd.s32 %s19, 1
      %s258 = smul.u32 32, %s257
      %p259 = scmp.lt.s32.totalorder %s258, 127
      %s260 = scalar_select %p259, %s258, 127
      %s261 = smul.addr %s260, 8
      %s262 = scalar_lea.vmem %s1, %s261
      %s263 = sadd.s32 %s19, 1
      %s264 = smul.u32 32, %s263
      %p265 = scmp.lt.s32.totalorder %s20, 0
      %s266 = scalar_select %p265, %s20, 0
      %s267 = smul.addr %s266, 4
      %s268 = scalar_lea.vmem %s2, %s267
      %p269 = scmp.lt.s32.totalorder %s20, 0
      %s270 = scalar_select %p269, %s20, 0
      %s271 = scalar_lea.vmem %s3, %s270
      %s272 = smul.u32 32, %s19
      %p273 = scmp.lt.s32.totalorder %s272, 95
      %s274 = scalar_select %p273, %s272, 95
      %p275 = scmp.lt.s32.totalorder %s20, 0
      %s276 = scalar_select %p275, %s20, 0
      %s277 = sadd.s32 %s276, %s274
      %s278 = smul.addr %s277, 8
      %s279 = scalar_lea.vmem %s4, %s278
      %s280 = smul.u32 32, %s19
      %282 = vst [vmem:[#allocation2] sm:$0xff] 0.0
      %283 = vst [vmem:[#allocation2 + $0x8] sm:$0xff] 0.0
      %284 = vst [vmem:[#allocation2 + $0x10] sm:$0xff] 0.0
      %285 = vst [vmem:[#allocation2 + $0x18] sm:$0xff] 0.0
      %286 = vst [vmem:[#allocation2 + $0x20] sm:$0xff] 0.0
      %287 = vst [vmem:[#allocation2 + $0x28] sm:$0xff] 0.0
      %288 = vst [vmem:[#allocation2 + $0x30] sm:$0xff] 0.0
      %289 = vst [vmem:[#allocation2 + $0x38] sm:$0xff] 0.0
      %290 = vst [vmem:[#allocation2 + $0x40] sm:$0xff] 0.0
      %291 = vst [vmem:[#allocation2 + $0x48] sm:$0xff] 0.0
      %292 = vst [vmem:[#allocation2 + $0x50] sm:$0xff] 0.0
      %293 = vst [vmem:[#allocation2 + $0x58] sm:$0xff] 0.0
      %294 = vst [vmem:[#allocation2 + $0x60] sm:$0xff] 0.0
      %295 = vst [vmem:[#allocation2 + $0x68] sm:$0xff] 0.0
      %296 = vst [vmem:[#allocation2 + $0x70] sm:$0xff] 0.0
      %297 = vst [vmem:[#allocation2 + $0x78] sm:$0xff] 0.0
      %298 = vst [vmem:[#allocation2 + $0x80] sm:$0xff] 0.0
      %299 = vst [vmem:[#allocation2 + $0x88] sm:$0xff] 0.0
      %300 = vst [vmem:[#allocation2 + $0x90] sm:$0xff] 0.0
      %301 = vst [vmem:[#allocation2 + $0x98] sm:$0xff] 0.0
      %302 = vst [vmem:[#allocation2 + $0xa0] sm:$0xff] 0.0
      %303 = vst [vmem:[#allocation2 + $0xa8] sm:$0xff] 0.0
      %304 = vst [vmem:[#allocation2 + $0xb0] sm:$0xff] 0.0
      %305 = vst [vmem:[#allocation2 + $0xb8] sm:$0xff] 0.0
      %306 = vst [vmem:[#allocation2 + $0xc0] sm:$0xff] 0.0
      %307 = vst [vmem:[#allocation2 + $0xc8] sm:$0xff] 0.0
      %308 = vst [vmem:[#allocation2 + $0xd0] sm:$0xff] 0.0
      %309 = vst [vmem:[#allocation2 + $0xd8] sm:$0xff] 0.0
      %310 = vst [vmem:[#allocation2 + $0xe0] sm:$0xff] 0.0
      %311 = vst [vmem:[#allocation2 + $0xe8] sm:$0xff] 0.0
      %312 = vst [vmem:[#allocation2 + $0xf0] sm:$0xff] 0.0
      %313 = vst [vmem:[#allocation2 + $0xf8] sm:$0xff] 0.0
      %v314 = vld [vmem:[%s268] sm:$0xf]
      %v315 = vld [vmem:[%s268 + $0x4] sm:$0xf]
      %v316 = vld [vmem:[%s268 + $0x8] sm:$0xf]
      %v317 = vld [vmem:[%s268 + $0xc] sm:$0xf]
      %v318 = vld [vmem:[%s255 + $0x26] sm:$0xff]
      %v319 = vld [vmem:[%s255 + $0x2e] sm:$0xff]
      %v320 = vld [vmem:[%s255 + $0x36] sm:$0xff]
      %v321 = vld [vmem:[%s255 + $0x3e] sm:$0xff]
      %v322 = vld [vmem:[%s255 + $0x46] sm:$0xff]
      %v323 = vld [vmem:[%s255 + $0x4e] sm:$0xff]
      %v324 = vld [vmem:[%s255 + $0x56] sm:$0xff]
      %v325 = vld [vmem:[%s255 + $0x5e] sm:$0xff]
      %v326 = vld [vmem:[%s255 + $0x66] sm:$0xff]
      %v327 = vld [vmem:[%s255 + $0x6e] sm:$0xff]
      %v328 = vld [vmem:[%s255 + $0x76] sm:$0xff]
      %v329 = vld [vmem:[%s255 + $0x7e] sm:$0xff]
      %v330 = vld [vmem:[%s255 + $0x86] sm:$0xff]
      %v331 = vld [vmem:[%s255 + $0x8e] sm:$0xff]
      %v332 = vld [vmem:[%s255 + $0x96] sm:$0xff]
      %v333 = vld [vmem:[%s255 + $0x9e] sm:$0xff]
      %v334 = vld [vmem:[%s255 + $0xa6] sm:$0xff]
      %v335 = vld [vmem:[%s255 + $0xae] sm:$0xff]
      %v336 = vld [vmem:[%s255 + $0xb6] sm:$0xff]
      %v337 = vld [vmem:[%s255 + $0xbe] sm:$0xff]
      %v338 = vld [vmem:[%s255 + $0xc6] sm:$0xff]
      %v339 = vld [vmem:[%s255 + $0xce] sm:$0xff]
      %v340 = vld [vmem:[%s255 + $0xd6] sm:$0xff]
      %v341 = vld [vmem:[%s255 + $0xde] sm:$0xff]
      %v342 = vld [vmem:[%s255 + $0xe6] sm:$0xff]
      %v343 = vld [vmem:[%s255 + $0xee] sm:$0xff]
      %v344 = vld [vmem:[%s255 + $0xf6] sm:$0xff]
      %v345 = vld [vmem:[%s255 + $0xfe] sm:$0x3]
      %v346 = vpack.c.bf16 %v319, %v318
      %v347 = vpack.c.bf16 %v321, %v320
      %v348 = vpack.c.bf16 %v323, %v322
      %v349 = vpack.c.bf16 %v325, %v324
      %v350 = vpack.c.bf16 %v327, %v326
      %v351 = vpack.c.bf16 %v329, %v328
      %v352 = vpack.c.bf16 %v331, %v330
      %v353 = vpack.c.bf16 %v333, %v332
      %v354 = vpack.c.bf16 %v335, %v334
      %v355 = vpack.c.bf16 %v337, %v336
      %v356 = vpack.c.bf16 %v339, %v338
      %v357 = vpack.c.bf16 %v341, %v340
      %v358 = vpack.c.bf16 %v343, %v342
      %v359 = vpack.c.bf16 %v345, %v344
      %v360 = vld [vmem:[#allocation2] sm:$0xff]
      %v361 = vld [vmem:[#allocation2 + $0x8] sm:$0xff]
      %v362 = vld [vmem:[#allocation2 + $0x10] sm:$0xff]
      %v363 = vld [vmem:[#allocation2 + $0x18] sm:$0xff]
      %v364 = vld [vmem:[#allocation2 + $0x20] sm:$0xff]
      %v365 = vld [vmem:[#allocation2 + $0x28] sm:$0xff]
      %v366 = vld [vmem:[#allocation2 + $0x30] sm:$0xff]
      %v367 = vld [vmem:[#allocation2 + $0x38] sm:$0xff]
      %v368 = vld [vmem:[#allocation2 + $0x40] sm:$0xff]
      %v369 = vld [vmem:[#allocation2 + $0x48] sm:$0xff]
      %v370 = vld [vmem:[#allocation2 + $0x50] sm:$0xff]
      %v371 = vld [vmem:[#allocation2 + $0x58] sm:$0xff]
      %v372 = vld [vmem:[#allocation2 + $0x60] sm:$0xff]
      %v373 = vld [vmem:[#allocation2 + $0x68] sm:$0xff]
      %v374 = vld [vmem:[#allocation2 + $0x70] sm:$0xff]
      %v375 = vld [vmem:[#allocation2 + $0x78] sm:$0xff]
      %v376 = vld [vmem:[#allocation2 + $0x80] sm:$0xff]
      %v377 = vld [vmem:[#allocation2 + $0x88] sm:$0xff]
      %v378 = vld [vmem:[#allocation2 + $0x90] sm:$0xff]
      %v379 = vld [vmem:[#allocation2 + $0x98] sm:$0xff]
      %v380 = vld [vmem:[#allocation2 + $0xa0] sm:$0xff]
      %v381 = vld [vmem:[#allocation2 + $0xa8] sm:$0xff]
      %v382 = vld [vmem:[#allocation2 + $0xb0] sm:$0xff]
      %v383 = vld [vmem:[#allocation2 + $0xb8] sm:$0xff]
      %v384 = vld [vmem:[#allocation2 + $0xc0] sm:$0xff]
      %v385 = vld [vmem:[#allocation2 + $0xc8] sm:$0xff]
      %v386 = vld [vmem:[#allocation2 + $0xd0] sm:$0xff]
      %v387 = vld [vmem:[#allocation2 + $0xd8] sm:$0x3]
      %v392 = vunpack.c.l.b16 %v314
      %v393 = vunpack.c.l.b16 %v315
      %v394 = vunpack.c.l.b16 %v316
      %v395 = vunpack.c.l.b16 %v317
      %v396 = vpack.c.b16 %v393, %v392
      %v397 = vpack.c.b16 %v395, %v394
      %vm400 = vcmask 261120
      %v402 = vsel %vm400, %v346, 0
      %v405 = vsel %vm400, %v347, 0
      %v408 = vsel %vm400, %v348, 0
      %v411 = vsel %vm400, %v349, 0
      %v414 = vsel %vm400, %v350, 0
      %v417 = vsel %vm400, %v351, 0
      %v420 = vsel %vm400, %v352, 0
      %v423 = vsel %vm400, %v353, 0
      %v426 = vsel %vm400, %v354, 0
      %v429 = vsel %vm400, %v355, 0
      %v432 = vsel %vm400, %v356, 0
      %v435 = vsel %vm400, %v357, 0
      %v438 = vsel %vm400, %v358, 0
      %v441 = vsel %vm400, %v359, 0
      %443 = vmatpush.bf16.msra.mxu0 0
      %444 = vmatpush.bf16.msra.mxu0 0
      %445 = vmatpush.bf16.msra.mxu0 0
      %446 = vmatpush.bf16.msra.mxu0 0
      %447 = vmatpush.bf16.msra.mxu0 0
      %448 = vmatpush.bf16.msra.mxu0 0
      %449 = vmatpush.bf16.msra.mxu0 %v397
      %450 = vmatpush.bf16.msra.mxu0 %v396
      %451 = vmatmul.bf16.gmra.mxu0 %v402
      %v452 = vpop.f32.mrf.mxu0
      %v453 = vadd.f32 0.0, %v452
      %v454 = vpop.f32.mrf.mxu0
      %v455 = vadd.f32 0.0, %v454
      %456 = vmatmul.bf16.gmra.mxu0 %v405
      %v457 = vpop.f32.mrf.mxu0
      %v458 = vadd.f32 0.0, %v457
      %v459 = vpop.f32.mrf.mxu0
      %v460 = vadd.f32 0.0, %v459
      %461 = vmatmul.bf16.gmra.mxu0 %v408
      %v462 = vpop.f32.mrf.mxu0
      %v463 = vadd.f32 0.0, %v462
      %v464 = vpop.f32.mrf.mxu0
      %v465 = vadd.f32 0.0, %v464
      %466 = vmatmul.bf16.gmra.mxu0 %v411
      %v467 = vpop.f32.mrf.mxu0
      %v468 = vadd.f32 0.0, %v467
      %v469 = vpop.f32.mrf.mxu0
      %v470 = vadd.f32 0.0, %v469
      %471 = vmatmul.bf16.gmra.mxu0 %v414
      %v472 = vpop.f32.mrf.mxu0
      %v473 = vadd.f32 0.0, %v472
      %v474 = vpop.f32.mrf.mxu0
      %v475 = vadd.f32 0.0, %v474
      %476 = vmatmul.bf16.gmra.mxu0 %v417
      %v477 = vpop.f32.mrf.mxu0
      %v478 = vadd.f32 0.0, %v477
      %v479 = vpop.f32.mrf.mxu0
      %v480 = vadd.f32 0.0, %v479
      %481 = vmatmul.bf16.gmra.mxu0 %v420
      %v482 = vpop.f32.mrf.mxu0
      %v483 = vadd.f32 0.0, %v482
      %v484 = vpop.f32.mrf.mxu0
      %v485 = vadd.f32 0.0, %v484
      %486 = vmatmul.bf16.gmra.mxu0 %v423
      %v487 = vpop.f32.mrf.mxu0
      %v488 = vadd.f32 0.0, %v487
      %v489 = vpop.f32.mrf.mxu0
      %v490 = vadd.f32 0.0, %v489
      %491 = vmatmul.bf16.gmra.mxu0 %v426
      %v492 = vpop.f32.mrf.mxu0
      %v493 = vadd.f32 0.0, %v492
      %v494 = vpop.f32.mrf.mxu0
      %v495 = vadd.f32 0.0, %v494
      %496 = vmatmul.bf16.gmra.mxu0 %v429
      %v497 = vpop.f32.mrf.mxu0
      %v498 = vadd.f32 0.0, %v497
      %v499 = vpop.f32.mrf.mxu0
      %v500 = vadd.f32 0.0, %v499
      %501 = vmatmul.bf16.gmra.mxu0 %v432
      %v502 = vpop.f32.mrf.mxu0
      %v503 = vadd.f32 0.0, %v502
      %v504 = vpop.f32.mrf.mxu0
      %v505 = vadd.f32 0.0, %v504
      %506 = vmatmul.bf16.gmra.mxu0 %v435
      %v507 = vpop.f32.mrf.mxu0
      %v508 = vadd.f32 0.0, %v507
      %v509 = vpop.f32.mrf.mxu0
      %v510 = vadd.f32 0.0, %v509
      %511 = vmatmul.bf16.gmra.mxu0 %v438
      %v512 = vpop.f32.mrf.mxu0
      %v513 = vadd.f32 0.0, %v512
      %v514 = vpop.f32.mrf.mxu0
      %v515 = vadd.f32 0.0, %v514
      %516 = vmatmul.bf16.gmra.mxu0 %v441
      %v517 = vpop.f32.mrf.mxu0
      %v518 = vadd.f32 0.0, %v517
      %v519 = vpop.f32.mrf.mxu0
      %v520 = vadd.f32 0.0, %v519
      %521 = vdwg.mxu0
      %v522 = vadd.f32 %v360, %v453
      %v523 = vadd.f32 %v361, %v455
      %v524 = vadd.f32 %v362, %v458
      %v525 = vadd.f32 %v363, %v460
      %v526 = vadd.f32 %v364, %v463
      %v527 = vadd.f32 %v365, %v465
      %v528 = vadd.f32 %v366, %v468
      %v529 = vadd.f32 %v367, %v470
      %v530 = vadd.f32 %v368, %v473
      %v531 = vadd.f32 %v369, %v475
      %v532 = vadd.f32 %v370, %v478
      %v533 = vadd.f32 %v371, %v480
      %v534 = vadd.f32 %v372, %v483
      %v535 = vadd.f32 %v373, %v485
      %v536 = vadd.f32 %v374, %v488
      %v537 = vadd.f32 %v375, %v490
      %v538 = vadd.f32 %v376, %v493
      %v539 = vadd.f32 %v377, %v495
      %v540 = vadd.f32 %v378, %v498
      %v541 = vadd.f32 %v379, %v500
      %v542 = vadd.f32 %v380, %v503
      %v543 = vadd.f32 %v381, %v505
      %v544 = vadd.f32 %v382, %v508
      %v545 = vadd.f32 %v383, %v510
      %v546 = vadd.f32 %v384, %v513
      %v547 = vadd.f32 %v385, %v515
      %v548 = vadd.f32 %v386, %v518
      %v549 = vadd.f32 %v387, %v520
      %550 = vst [vmem:[#allocation2] sm:$0xff] %v522
      %551 = vst [vmem:[#allocation2 + $0x8] sm:$0xff] %v523
      %552 = vst [vmem:[#allocation2 + $0x10] sm:$0xff] %v524
      %553 = vst [vmem:[#allocation2 + $0x18] sm:$0xff] %v525
      %554 = vst [vmem:[#allocation2 + $0x20] sm:$0xff] %v526
      %555 = vst [vmem:[#allocation2 + $0x28] sm:$0xff] %v527
      %556 = vst [vmem:[#allocation2 + $0x30] sm:$0xff] %v528
      %557 = vst [vmem:[#allocation2 + $0x38] sm:$0xff] %v529
      %558 = vst [vmem:[#allocation2 + $0x40] sm:$0xff] %v530
      %559 = vst [vmem:[#allocation2 + $0x48] sm:$0xff] %v531
      %560 = vst [vmem:[#allocation2 + $0x50] sm:$0xff] %v532
      %561 = vst [vmem:[#allocation2 + $0x58] sm:$0xff] %v533
      %562 = vst [vmem:[#allocation2 + $0x60] sm:$0xff] %v534
      %563 = vst [vmem:[#allocation2 + $0x68] sm:$0xff] %v535
      %564 = vst [vmem:[#allocation2 + $0x70] sm:$0xff] %v536
      %565 = vst [vmem:[#allocation2 + $0x78] sm:$0xff] %v537
      %566 = vst [vmem:[#allocation2 + $0x80] sm:$0xff] %v538
      %567 = vst [vmem:[#allocation2 + $0x88] sm:$0xff] %v539
      %568 = vst [vmem:[#allocation2 + $0x90] sm:$0xff] %v540
      %569 = vst [vmem:[#allocation2 + $0x98] sm:$0xff] %v541
      %570 = vst [vmem:[#allocation2 + $0xa0] sm:$0xff] %v542
      %571 = vst [vmem:[#allocation2 + $0xa8] sm:$0xff] %v543
      %572 = vst [vmem:[#allocation2 + $0xb0] sm:$0xff] %v544
      %573 = vst [vmem:[#allocation2 + $0xb8] sm:$0xff] %v545
      %574 = vst [vmem:[#allocation2 + $0xc0] sm:$0xff] %v546
      %575 = vst [vmem:[#allocation2 + $0xc8] sm:$0xff] %v547
      %576 = vst [vmem:[#allocation2 + $0xd0] sm:$0xff] %v548
      %577 = vst [vmem:[#allocation2 + $0xd8] sm:$0x3] %v549
      %v578 = vld [vmem:[%s262] sm:$0xff]
      %v579 = vld [vmem:[%s262 + $0x8] sm:$0xff]
      %v580 = vld [vmem:[%s262 + $0x10] sm:$0xff]
      %v581 = vld [vmem:[%s262 + $0x18] sm:$0xff]
      %v582 = vld [vmem:[%s262 + $0x20] sm:$0x3f]
      %v583 = vpack.c.bf16 %v579, %v578
      %v584 = vpack.c.bf16 %v581, %v580
      %v585 = vpack.c.bf16 %v582, %v582
      %v586 = vld [vmem:[#allocation2 + $0xda] sm:$0xff]
      %v587 = vld [vmem:[#allocation2 + $0xe2] sm:$0xff]
      %v588 = vld [vmem:[#allocation2 + $0xea] sm:$0xff]
      %v589 = vld [vmem:[#allocation2 + $0xf2] sm:$0xff]
      %v590 = vld [vmem:[#allocation2 + $0xfa] sm:$0x3f]
      %v592 = vsel %vm400, %v583, 0
      %v595 = vsel %vm400, %v584, 0
      %v598 = vsel %vm400, %v585, 0
      %600 = vmatpush.bf16.msra.mxu0 0
      %601 = vmatpush.bf16.msra.mxu0 0
      %602 = vmatpush.bf16.msra.mxu0 0
      %603 = vmatpush.bf16.msra.mxu0 0
      %604 = vmatpush.bf16.msra.mxu0 0
      %605 = vmatpush.bf16.msra.mxu0 0
      %606 = vmatpush.bf16.msra.mxu0 %v397
      %607 = vmatpush.bf16.msra.mxu0 %v396
      %608 = vmatmul.bf16.gmra.mxu0 %v592
      %v609 = vpop.f32.mrf.mxu0
      %v610 = vadd.f32 0.0, %v609
      %v611 = vpop.f32.mrf.mxu0
      %v612 = vadd.f32 0.0, %v611
      %613 = vmatmul.bf16.gmra.mxu0 %v595
      %v614 = vpop.f32.mrf.mxu0
      %v615 = vadd.f32 0.0, %v614
      %v616 = vpop.f32.mrf.mxu0
      %v617 = vadd.f32 0.0, %v616
      %618 = vmatmul.bf16.gmra.mxu0 %v598
      %v619 = vpop.f32.mrf.mxu0
      %v620 = vadd.f32 0.0, %v619
      %v621 = vpop.f32.mrf.mxu0
      %622 = vdwg.mxu0
      %v623 = vadd.f32 %v586, %v610
      %v624 = vadd.f32 %v587, %v612
      %v625 = vadd.f32 %v588, %v615
      %v626 = vadd.f32 %v589, %v617
      %v627 = vadd.f32 %v590, %v620
      %628 = vst [vmem:[#allocation2 + $0xda] sm:$0xff] %v623
      %629 = vst [vmem:[#allocation2 + $0xe2] sm:$0xff] %v624
      %630 = vst [vmem:[#allocation2 + $0xea] sm:$0xff] %v625
      %631 = vst [vmem:[#allocation2 + $0xf2] sm:$0xff] %v626
      %632 = vst [vmem:[#allocation2 + $0xfa] sm:$0x3f] %v627
      %s633 = scalar_lea.vmem %s268, 16
      %v634 = vld [vmem:[%s633] sm:$0xf]
      %v635 = vld [vmem:[%s633 + $0x4] sm:$0xf]
      %v636 = vld [vmem:[%s633 + $0x8] sm:$0xf]
      %v637 = vld [vmem:[%s633 + $0xc] sm:$0xf]
      %v638 = vld [vmem:[%s255 + $0x25] sm:$0xff]
      %v639 = vld [vmem:[%s255 + $0x2d] sm:$0xff]
      %v640 = vld [vmem:[%s255 + $0x35] sm:$0xff]
      %v641 = vld [vmem:[%s255 + $0x3d] sm:$0xff]
      %v642 = vld [vmem:[%s255 + $0x45] sm:$0xff]
      %v643 = vld [vmem:[%s255 + $0x4d] sm:$0xff]
      %v644 = vld [vmem:[%s255 + $0x55] sm:$0xff]
      %v645 = vld [vmem:[%s255 + $0x5d] sm:$0xff]
      %v646 = vld [vmem:[%s255 + $0x65] sm:$0xff]
      %v647 = vld [vmem:[%s255 + $0x6d] sm:$0xff]
      %v648 = vld [vmem:[%s255 + $0x75] sm:$0xff]
      %v649 = vld [vmem:[%s255 + $0x7d] sm:$0xff]
      %v650 = vld [vmem:[%s255 + $0x85] sm:$0xff]
      %v651 = vld [vmem:[%s255 + $0x8d] sm:$0xff]
      %v652 = vld [vmem:[%s255 + $0x95] sm:$0xff]
      %v653 = vld [vmem:[%s255 + $0x9d] sm:$0xff]
      %v654 = vld [vmem:[%s255 + $0xa5] sm:$0xff]
      %v655 = vld [vmem:[%s255 + $0xad] sm:$0xff]
      %v656 = vld [vmem:[%s255 + $0xb5] sm:$0xff]
      %v657 = vld [vmem:[%s255 + $0xbd] sm:$0xff]
      %v658 = vld [vmem:[%s255 + $0xc5] sm:$0xff]
      %v659 = vld [vmem:[%s255 + $0xcd] sm:$0xff]
      %v660 = vld [vmem:[%s255 + $0xd5] sm:$0xff]
      %v661 = vld [vmem:[%s255 + $0xdd] sm:$0xff]
      %v662 = vld [vmem:[%s255 + $0xe5] sm:$0xff]
      %v663 = vld [vmem:[%s255 + $0xed] sm:$0xff]
      %v664 = vld [vmem:[%s255 + $0xf5] sm:$0xff]
      %v665 = vld [vmem:[%s255 + $0xfd] sm:$0x7]
      %v666 = vpack.c.bf16 %v639, %v638
      %v667 = vpack.c.bf16 %v641, %v640
      %v668 = vpack.c.bf16 %v643, %v642
      %v669 = vpack.c.bf16 %v645, %v644
      %v670 = vpack.c.bf16 %v647, %v646
      %v671 = vpack.c.bf16 %v649, %v648
      %v672 = vpack.c.bf16 %v651, %v650
      %v673 = vpack.c.bf16 %v653, %v652
      %v674 = vpack.c.bf16 %v655, %v654
      %v675 = vpack.c.bf16 %v657, %v656
      %v676 = vpack.c.bf16 %v659, %v658
      %v677 = vpack.c.bf16 %v661, %v660
      %v678 = vpack.c.bf16 %v663, %v662
      %v679 = vpack.c.bf16 %v665, %v664
      %v680 = vld [vmem:[#allocation2] sm:$0xff]
      %v681 = vld [vmem:[#allocation2 + $0x8] sm:$0xff]
      %v682 = vld [vmem:[#allocation2 + $0x10] sm:$0xff]
      %v683 = vld [vmem:[#allocation2 + $0x18] sm:$0xff]
      %v684 = vld [vmem:[#allocation2 + $0x20] sm:$0xff]
      %v685 = vld [vmem:[#allocation2 + $0x28] sm:$0xff]
      %v686 = vld [vmem:[#allocation2 + $0x30] sm:$0xff]
      %v687 = vld [vmem:[#allocation2 + $0x38] sm:$0xff]
      %v688 = vld [vmem:[#allocation2 + $0x40] sm:$0xff]
      %v689 = vld [vmem:[#allocation2 + $0x48] sm:$0xff]
      %v690 = vld [vmem:[#allocation2 + $0x50] sm:$0xff]
      %v691 = vld [vmem:[#allocation2 + $0x58] sm:$0xff]
      %v692 = vld [vmem:[#allocation2 + $0x60] sm:$0xff]
      %v693 = vld [vmem:[#allocation2 + $0x68] sm:$0xff]
      %v694 = vld [vmem:[#allocation2 + $0x70] sm:$0xff]
      %v695 = vld [vmem:[#allocation2 + $0x78] sm:$0xff]
      %v696 = vld [vmem:[#allocation2 + $0x80] sm:$0xff]
      %v697 = vld [vmem:[#allocation2 + $0x88] sm:$0xff]
      %v698 = vld [vmem:[#allocation2 + $0x90] sm:$0xff]
      %v699 = vld [vmem:[#allocation2 + $0x98] sm:$0xff]
      %v700 = vld [vmem:[#allocation2 + $0xa0] sm:$0xff]
      %v701 = vld [vmem:[#allocation2 + $0xa8] sm:$0xff]
      %v702 = vld [vmem:[#allocation2 + $0xb0] sm:$0xff]
      %v703 = vld [vmem:[#allocation2 + $0xb8] sm:$0xff]
      %v704 = vld [vmem:[#allocation2 + $0xc0] sm:$0xff]
      %v705 = vld [vmem:[#allocation2 + $0xc8] sm:$0xff]
      %v706 = vld [vmem:[#allocation2 + $0xd0] sm:$0xff]
      %v707 = vld [vmem:[#allocation2 + $0xd8] sm:$0x7]
      %v712 = vunpack.c.l.b16 %v634
      %v713 = vunpack.c.l.b16 %v635
      %v714 = vunpack.c.l.b16 %v636
      %v715 = vunpack.c.l.b16 %v637
      %v716 = vpack.c.b16 %v713, %v712
      %v717 = vpack.c.b16 %v715, %v714
      %v721 = vsel %vm400, %v666, 0
      %v724 = vsel %vm400, %v667, 0
      %v727 = vsel %vm400, %v668, 0
      %v730 = vsel %vm400, %v669, 0
      %v733 = vsel %vm400, %v670, 0
      %v736 = vsel %vm400, %v671, 0
      %v739 = vsel %vm400, %v672, 0
      %v742 = vsel %vm400, %v673, 0
      %v745 = vsel %vm400, %v674, 0
      %v748 = vsel %vm400, %v675, 0
      %v751 = vsel %vm400, %v676, 0
      %v754 = vsel %vm400, %v677, 0
      %v757 = vsel %vm400, %v678, 0
      %v760 = vsel %vm400, %v679, 0
      %762 = vmatpush.bf16.msra.mxu0 0
      %763 = vmatpush.bf16.msra.mxu0 0
      %764 = vmatpush.bf16.msra.mxu0 0
      %765 = vmatpush.bf16.msra.mxu0 0
      %766 = vmatpush.bf16.msra.mxu0 0
      %767 = vmatpush.bf16.msra.mxu0 0
      %768 = vmatpush.bf16.msra.mxu0 %v717
      %769 = vmatpush.bf16.msra.mxu0 %v716
      %770 = vmatmul.bf16.gmra.mxu0 %v721
      %v771 = vpop.f32.mrf.mxu0
      %v772 = vadd.f32 0.0, %v771
      %v773 = vpop.f32.mrf.mxu0
      %v774 = vadd.f32 0.0, %v773
      %775 = vmatmul.bf16.gmra.mxu0 %v724
      %v776 = vpop.f32.mrf.mxu0
      %v777 = vadd.f32 0.0, %v776
      %v778 = vpop.f32.mrf.mxu0
      %v779 = vadd.f32 0.0, %v778
      %780 = vmatmul.bf16.gmra.mxu0 %v727
      %v781 = vpop.f32.mrf.mxu0
      %v782 = vadd.f32 0.0, %v781
      %v783 = vpop.f32.mrf.mxu0
      %v784 = vadd.f32 0.0, %v783
      %785 = vmatmul.bf16.gmra.mxu0 %v730
      %v786 = vpop.f32.mrf.mxu0
      %v787 = vadd.f32 0.0, %v786
      %v788 = vpop.f32.mrf.mxu0
      %v789 = vadd.f32 0.0, %v788
      %790 = vmatmul.bf16.gmra.mxu0 %v733
      %v791 = vpop.f32.mrf.mxu0
      %v792 = vadd.f32 0.0, %v791
      %v793 = vpop.f32.mrf.mxu0
      %v794 = vadd.f32 0.0, %v793
      %795 = vmatmul.bf16.gmra.mxu0 %v736
      %v796 = vpop.f32.mrf.mxu0
      %v797 = vadd.f32 0.0, %v796
      %v798 = vpop.f32.mrf.mxu0
      %v799 = vadd.f32 0.0, %v798
      %800 = vmatmul.bf16.gmra.mxu0 %v739
      %v801 = vpop.f32.mrf.mxu0
      %v802 = vadd.f32 0.0, %v801
      %v803 = vpop.f32.mrf.mxu0
      %v804 = vadd.f32 0.0, %v803
      %805 = vmatmul.bf16.gmra.mxu0 %v742
      %v806 = vpop.f32.mrf.mxu0
      %v807 = vadd.f32 0.0, %v806
      %v808 = vpop.f32.mrf.mxu0
      %v809 = vadd.f32 0.0, %v808
      %810 = vmatmul.bf16.gmra.mxu0 %v745
      %v811 = vpop.f32.mrf.mxu0
      %v812 = vadd.f32 0.0, %v811
      %v813 = vpop.f32.mrf.mxu0
      %v814 = vadd.f32 0.0, %v813
      %815 = vmatmul.bf16.gmra.mxu0 %v748
      %v816 = vpop.f32.mrf.mxu0
      %v817 = vadd.f32 0.0, %v816
      %v818 = vpop.f32.mrf.mxu0
      %v819 = vadd.f32 0.0, %v818
      %820 = vmatmul.bf16.gmra.mxu0 %v751
      %v821 = vpop.f32.mrf.mxu0
      %v822 = vadd.f32 0.0, %v821
      %v823 = vpop.f32.mrf.mxu0
      %v824 = vadd.f32 0.0, %v823
      %825 = vmatmul.bf16.gmra.mxu0 %v754
      %v826 = vpop.f32.mrf.mxu0
      %v827 = vadd.f32 0.0, %v826
      %v828 = vpop.f32.mrf.mxu0
      %v829 = vadd.f32 0.0, %v828
      %830 = vmatmul.bf16.gmra.mxu0 %v757
      %v831 = vpop.f32.mrf.mxu0
      %v832 = vadd.f32 0.0, %v831
      %v833 = vpop.f32.mrf.mxu0
      %v834 = vadd.f32 0.0, %v833
      %835 = vmatmul.bf16.gmra.mxu0 %v760
      %v836 = vpop.f32.mrf.mxu0
      %v837 = vadd.f32 0.0, %v836
      %v838 = vpop.f32.mrf.mxu0
      %v839 = vadd.f32 0.0, %v838
      %840 = vdwg.mxu0
      %v841 = vadd.f32 %v680, %v772
      %v842 = vadd.f32 %v681, %v774
      %v843 = vadd.f32 %v682, %v777
      %v844 = vadd.f32 %v683, %v779
      %v845 = vadd.f32 %v684, %v782
      %v846 = vadd.f32 %v685, %v784
      %v847 = vadd.f32 %v686, %v787
      %v848 = vadd.f32 %v687, %v789
      %v849 = vadd.f32 %v688, %v792
      %v850 = vadd.f32 %v689, %v794
      %v851 = vadd.f32 %v690, %v797
      %v852 = vadd.f32 %v691, %v799
      %v853 = vadd.f32 %v692, %v802
      %v854 = vadd.f32 %v693, %v804
      %v855 = vadd.f32 %v694, %v807
      %v856 = vadd.f32 %v695, %v809
      %v857 = vadd.f32 %v696, %v812
      %v858 = vadd.f32 %v697, %v814
      %v859 = vadd.f32 %v698, %v817
      %v860 = vadd.f32 %v699, %v819
      %v861 = vadd.f32 %v700, %v822
      %v862 = vadd.f32 %v701, %v824
      %v863 = vadd.f32 %v702, %v827
      %v864 = vadd.f32 %v703, %v829
      %v865 = vadd.f32 %v704, %v832
      %v866 = vadd.f32 %v705, %v834
      %v867 = vadd.f32 %v706, %v837
      %v868 = vadd.f32 %v707, %v839
      %869 = vst [vmem:[#allocation2] sm:$0xff] %v841
      %870 = vst [vmem:[#allocation2 + $0x8] sm:$0xff] %v842
      %871 = vst [vmem:[#allocation2 + $0x10] sm:$0xff] %v843
      %872 = vst [vmem:[#allocation2 + $0x18] sm:$0xff] %v844
      %873 = vst [vmem:[#allocation2 + $0x20] sm:$0xff] %v845
      %874 = vst [vmem:[#allocation2 + $0x28] sm:$0xff] %v846
      %875 = vst [vmem:[#allocation2 + $0x30] sm:$0xff] %v847
      %876 = vst [vmem:[#allocation2 + $0x38] sm:$0xff] %v848
      %877 = vst [vmem:[#allocation2 + $0x40] sm:$0xff] %v849
      %878 = vst [vmem:[#allocation2 + $0x48] sm:$0xff] %v850
      %879 = vst [vmem:[#allocation2 + $0x50] sm:$0xff] %v851
      %880 = vst [vmem:[#allocation2 + $0x58] sm:$0xff] %v852
      %881 = vst [vmem:[#allocation2 + $0x60] sm:$0xff] %v853
      %882 = vst [vmem:[#allocation2 + $0x68] sm:$0xff] %v854
      %883 = vst [vmem:[#allocation2 + $0x70] sm:$0xff] %v855
      %884 = vst [vmem:[#allocation2 + $0x78] sm:$0xff] %v856
      %885 = vst [vmem:[#allocation2 + $0x80] sm:$0xff] %v857
      %886 = vst [vmem:[#allocation2 + $0x88] sm:$0xff] %v858
      %887 = vst [vmem:[#allocation2 + $0x90] sm:$0xff] %v859
      %888 = vst [vmem:[#allocation2 + $0x98] sm:$0xff] %v860
      %889 = vst [vmem:[#allocation2 + $0xa0] sm:$0xff] %v861
      %890 = vst [vmem:[#allocation2 + $0xa8] sm:$0xff] %v862
      %891 = vst [vmem:[#allocation2 + $0xb0] sm:$0xff] %v863
      %892 = vst [vmem:[#allocation2 + $0xb8] sm:$0xff] %v864
      %893 = vst [vmem:[#allocation2 + $0xc0] sm:$0xff] %v865
      %894 = vst [vmem:[#allocation2 + $0xc8] sm:$0xff] %v866
      %895 = vst [vmem:[#allocation2 + $0xd0] sm:$0xff] %v867
      %896 = vst [vmem:[#allocation2 + $0xd8] sm:$0x7] %v868
      %v897 = vld [vmem:[%s262] sm:$0xff]
      %v898 = vld [vmem:[%s262 + $0x8] sm:$0xff]
      %v899 = vld [vmem:[%s262 + $0x10] sm:$0xff]
      %v900 = vld [vmem:[%s262 + $0x18] sm:$0xff]
      %v901 = vld [vmem:[%s262 + $0x20] sm:$0x1f]
      %v902 = vpack.c.bf16 %v898, %v897
      %v903 = vpack.c.bf16 %v900, %v899
      %v904 = vpack.c.bf16 %v901, %v901
      %v905 = vld [vmem:[#allocation2 + $0xdb] sm:$0xff]
      %v906 = vld [vmem:[#allocation2 + $0xe3] sm:$0xff]
      %v907 = vld [vmem:[#allocation2 + $0xeb] sm:$0xff]
      %v908 = vld [vmem:[#allocation2 + $0xf3] sm:$0xff]
      %v909 = vld [vmem:[#allocation2 + $0xfb] sm:$0x1f]
      %v911 = vsel %vm400, %v902, 0
      %v914 = vsel %vm400, %v903, 0
      %v917 = vsel %vm400, %v904, 0
      %919 = vmatpush.bf16.msra.mxu0 0
      %920 = vmatpush.bf16.msra.mxu0 0
      %921 = vmatpush.bf16.msra.mxu0 0
      %922 = vmatpush.bf16.msra.mxu0 0
      %923 = vmatpush.bf16.msra.mxu0 0
      %924 = vmatpush.bf16.msra.mxu0 0
      %925 = vmatpush.bf16.msra.mxu0 %v717
      %926 = vmatpush.bf16.msra.mxu0 %v716
      %927 = vmatmul.bf16.gmra.mxu0 %v911
      %v928 = vpop.f32.mrf.mxu0
      %v929 = vadd.f32 0.0, %v928
      %v930 = vpop.f32.mrf.mxu0
      %v931 = vadd.f32 0.0, %v930
      %932 = vmatmul.bf16.gmra.mxu0 %v914
      %v933 = vpop.f32.mrf.mxu0
      %v934 = vadd.f32 0.0, %v933
      %v935 = vpop.f32.mrf.mxu0
      %v936 = vadd.f32 0.0, %v935
      %937 = vmatmul.bf16.gmra.mxu0 %v917
      %v938 = vpop.f32.mrf.mxu0
      %v939 = vadd.f32 0.0, %v938
      %v940 = vpop.f32.mrf.mxu0
      %941 = vdwg.mxu0
      %v942 = vadd.f32 %v905, %v929
      %v943 = vadd.f32 %v906, %v931
      %v944 = vadd.f32 %v907, %v934
      %v945 = vadd.f32 %v908, %v936
      %v946 = vadd.f32 %v909, %v939
      %947 = vst [vmem:[#allocation2 + $0xdb] sm:$0xff] %v942
      %948 = vst [vmem:[#allocation2 + $0xe3] sm:$0xff] %v943
      %949 = vst [vmem:[#allocation2 + $0xeb] sm:$0xff] %v944
      %950 = vst [vmem:[#allocation2 + $0xf3] sm:$0xff] %v945
      %951 = vst [vmem:[#allocation2 + $0xfb] sm:$0x1f] %v946
      %s952 = scalar_lea.vmem %s268, 32
      %v953 = vld [vmem:[%s952] sm:$0xf]
      %v954 = vld [vmem:[%s952 + $0x4] sm:$0xf]
      %v955 = vld [vmem:[%s952 + $0x8] sm:$0xf]
      %v956 = vld [vmem:[%s952 + $0xc] sm:$0xf]
      %v957 = vld [vmem:[%s255 + $0x14] sm:$0xff]
      %v958 = vld [vmem:[%s255 + $0x1c] sm:$0xff]
      %v959 = vld [vmem:[%s255 + $0x24] sm:$0xff]
      %v960 = vld [vmem:[%s255 + $0x2c] sm:$0xff]
      %v961 = vld [vmem:[%s255 + $0x34] sm:$0xff]
      %v962 = vld [vmem:[%s255 + $0x3c] sm:$0xff]
      %v963 = vld [vmem:[%s255 + $0x44] sm:$0xff]
      %v964 = vld [vmem:[%s255 + $0x4c] sm:$0xff]
      %v965 = vld [vmem:[%s255 + $0x54] sm:$0xff]
      %v966 = vld [vmem:[%s255 + $0x5c] sm:$0xff]
      %v967 = vld [vmem:[%s255 + $0x64] sm:$0xff]
      %v968 = vld [vmem:[%s255 + $0x6c] sm:$0xff]
      %v969 = vld [vmem:[%s255 + $0x74] sm:$0xff]
      %v970 = vld [vmem:[%s255 + $0x7c] sm:$0xff]
      %v971 = vld [vmem:[%s255 + $0x84] sm:$0xff]
      %v972 = vld [vmem:[%s255 + $0x8c] sm:$0xff]
      %v973 = vld [vmem:[%s255 + $0x94] sm:$0xff]
      %v974 = vld [vmem:[%s255 + $0x9c] sm:$0xff]
      %v975 = vld [vmem:[%s255 + $0xa4] sm:$0xff]
      %v976 = vld [vmem:[%s255 + $0xac] sm:$0xff]
      %v977 = vld [vmem:[%s255 + $0xb4] sm:$0xff]
      %v978 = vld [vmem:[%s255 + $0xbc] sm:$0xff]
      %v979 = vld [vmem:[%s255 + $0xc4] sm:$0xff]
      %v980 = vld [vmem:[%s255 + $0xcc] sm:$0xff]
      %v981 = vld [vmem:[%s255 + $0xd4] sm:$0xff]
      %v982 = vld [vmem:[%s255 + $0xdc] sm:$0xff]
      %v983 = vld [vmem:[%s255 + $0xe4] sm:$0xff]
      %v984 = vld [vmem:[%s255 + $0xec] sm:$0xff]
      %v985 = vld [vmem:[%s255 + $0xf4] sm:$0xff]
      %v986 = vld [vmem:[%s255 + $0xfc] sm:$0xf]
      %v987 = vpack.c.bf16 %v958, %v957
      %v988 = vpack.c.bf16 %v960, %v959
      %v989 = vpack.c.bf16 %v962, %v961
      %v990 = vpack.c.bf16 %v964, %v963
      %v991 = vpack.c.bf16 %v966, %v965
      %v992 = vpack.c.bf16 %v968, %v967
      %v993 = vpack.c.bf16 %v970, %v969
      %v994 = vpack.c.bf16 %v972, %v971
      %v995 = vpack.c.bf16 %v974, %v973
      %v996 = vpack.c.bf16 %v976, %v975
      %v997 = vpack.c.bf16 %v978, %v977
      %v998 = vpack.c.bf16 %v980, %v979
      %v999 = vpack.c.bf16 %v982, %v981
      %v1000 = vpack.c.bf16 %v984, %v983
      %v1001 = vpack.c.bf16 %v986, %v985
      %v1002 = vld [vmem:[#allocation2] sm:$0xff]
      %v1003 = vld [vmem:[#allocation2 + $0x8] sm:$0xff]
      %v1004 = vld [vmem:[#allocation2 + $0x10] sm:$0xff]
      %v1005 = vld [vmem:[#allocation2 + $0x18] sm:$0xff]
      %v1006 = vld [vmem:[#allocation2 + $0x20] sm:$0xff]
      %v1007 = vld [vmem:[#allocation2 + $0x28] sm:$0xff]
      %v1008 = vld [vmem:[#allocation2 + $0x30] sm:$0xff]
      %v1009 = vld [vmem:[#allocation2 + $0x38] sm:$0xff]
      %v1010 = vld [vmem:[#allocation2 + $0x40] sm:$0xff]
      %v1011 = vld [vmem:[#allocation2 + $0x48] sm:$0xff]
      %v1012 = vld [vmem:[#allocation2 + $0x50] sm:$0xff]
      %v1013 = vld [vmem:[#allocation2 + $0x58] sm:$0xff]
      %v1014 = vld [vmem:[#allocation2 + $0x60] sm:$0xff]
      %v1015 = vld [vmem:[#allocation2 + $0x68] sm:$0xff]
      %v1016 = vld [vmem:[#allocation2 + $0x70] sm:$0xff]
      %v1017 = vld [vmem:[#allocation2 + $0x78] sm:$0xff]
      %v1018 = vld [vmem:[#allocation2 + $0x80] sm:$0xff]
      %v1019 = vld [vmem:[#allocation2 + $0x88] sm:$0xff]
      %v1020 = vld [vmem:[#allocation2 + $0x90] sm:$0xff]
      %v1021 = vld [vmem:[#allocation2 + $0x98] sm:$0xff]
      %v1022 = vld [vmem:[#allocation2 + $0xa0] sm:$0xff]
      %v1023 = vld [vmem:[#allocation2 + $0xa8] sm:$0xff]
      %v1024 = vld [vmem:[#allocation2 + $0xb0] sm:$0xff]
      %v1025 = vld [vmem:[#allocation2 + $0xb8] sm:$0xff]
      %v1026 = vld [vmem:[#allocation2 + $0xc0] sm:$0xff]
      %v1027 = vld [vmem:[#allocation2 + $0xc8] sm:$0xff]
      %v1028 = vld [vmem:[#allocation2 + $0xd0] sm:$0xff]
      %v1029 = vld [vmem:[#allocation2 + $0xd8] sm:$0xff]
      %v1030 = vld [vmem:[#allocation2 + $0xe0] sm:$0xff]
      %v1031 = vld [vmem:[#allocation2 + $0xe8] sm:$0xf]
      %v1036 = vunpack.c.l.b16 %v953
      %v1037 = vunpack.c.l.b16 %v954
      %v1038 = vunpack.c.l.b16 %v955
      %v1039 = vunpack.c.l.b16 %v956
      %v1040 = vpack.c.b16 %v1037, %v1036
      %v1041 = vpack.c.b16 %v1039, %v1038
      %v1045 = vsel %vm400, %v987, 0
      %v1048 = vsel %vm400, %v988, 0
      %v1051 = vsel %vm400, %v989, 0
      %v1054 = vsel %vm400, %v990, 0
      %v1057 = vsel %vm400, %v991, 0
      %v1060 = vsel %vm400, %v992, 0
      %v1063 = vsel %vm400, %v993, 0
      %v1066 = vsel %vm400, %v994, 0
      %v1069 = vsel %vm400, %v995, 0
      %v1072 = vsel %vm400, %v996, 0
      %v1075 = vsel %vm400, %v997, 0
      %v1078 = vsel %vm400, %v998, 0
      %v1081 = vsel %vm400, %v999, 0
      %v1084 = vsel %vm400, %v1000, 0
      %v1087 = vsel %vm400, %v1001, 0
      %1089 = vmatpush.bf16.msra.mxu0 0
      %1090 = vmatpush.bf16.msra.mxu0 0
      %1091 = vmatpush.bf16.msra.mxu0 0
      %1092 = vmatpush.bf16.msra.mxu0 0
      %1093 = vmatpush.bf16.msra.mxu0 0
      %1094 = vmatpush.bf16.msra.mxu0 0
      %1095 = vmatpush.bf16.msra.mxu0 %v1041
      %1096 = vmatpush.bf16.msra.mxu0 %v1040
      %1097 = vmatmul.bf16.gmra.mxu0 %v1045
      %v1098 = vpop.f32.mrf.mxu0
      %v1099 = vadd.f32 0.0, %v1098
      %v1100 = vpop.f32.mrf.mxu0
      %v1101 = vadd.f32 0.0, %v1100
      %1102 = vmatmul.bf16.gmra.mxu0 %v1048
      %v1103 = vpop.f32.mrf.mxu0
      %v1104 = vadd.f32 0.0, %v1103
      %v1105 = vpop.f32.mrf.mxu0
      %v1106 = vadd.f32 0.0, %v1105
      %1107 = vmatmul.bf16.gmra.mxu0 %v1051
      %v1108 = vpop.f32.mrf.mxu0
      %v1109 = vadd.f32 0.0, %v1108
      %v1110 = vpop.f32.mrf.mxu0
      %v1111 = vadd.f32 0.0, %v1110
      %1112 = vmatmul.bf16.gmra.mxu0 %v1054
      %v1113 = vpop.f32.mrf.mxu0
      %v1114 = vadd.f32 0.0, %v1113
      %v1115 = vpop.f32.mrf.mxu0
      %v1116 = vadd.f32 0.0, %v1115
      %1117 = vmatmul.bf16.gmra.mxu0 %v1057
      %v1118 = vpop.f32.mrf.mxu0
      %v1119 = vadd.f32 0.0, %v1118
      %v1120 = vpop.f32.mrf.mxu0
      %v1121 = vadd.f32 0.0, %v1120
      %1122 = vmatmul.bf16.gmra.mxu0 %v1060
      %v1123 = vpop.f32.mrf.mxu0
      %v1124 = vadd.f32 0.0, %v1123
      %v1125 = vpop.f32.mrf.mxu0
      %v1126 = vadd.f32 0.0, %v1125
      %1127 = vmatmul.bf16.gmra.mxu0 %v1063
      %v1128 = vpop.f32.mrf.mxu0
      %v1129 = vadd.f32 0.0, %v1128
      %v1130 = vpop.f32.mrf.mxu0
      %v1131 = vadd.f32 0.0, %v1130
      %1132 = vmatmul.bf16.gmra.mxu0 %v1066
      %v1133 = vpop.f32.mrf.mxu0
      %v1134 = vadd.f32 0.0, %v1133
      %v1135 = vpop.f32.mrf.mxu0
      %v1136 = vadd.f32 0.0, %v1135
      %1137 = vmatmul.bf16.gmra.mxu0 %v1069
      %v1138 = vpop.f32.mrf.mxu0
      %v1139 = vadd.f32 0.0, %v1138
      %v1140 = vpop.f32.mrf.mxu0
      %v1141 = vadd.f32 0.0, %v1140
      %1142 = vmatmul.bf16.gmra.mxu0 %v1072
      %v1143 = vpop.f32.mrf.mxu0
      %v1144 = vadd.f32 0.0, %v1143
      %v1145 = vpop.f32.mrf.mxu0
      %v1146 = vadd.f32 0.0, %v1145
      %1147 = vmatmul.bf16.gmra.mxu0 %v1075
      %v1148 = vpop.f32.mrf.mxu0
      %v1149 = vadd.f32 0.0, %v1148
      %v1150 = vpop.f32.mrf.mxu0
      %v1151 = vadd.f32 0.0, %v1150
      %1152 = vmatmul.bf16.gmra.mxu0 %v1078
      %v1153 = vpop.f32.mrf.mxu0
      %v1154 = vadd.f32 0.0, %v1153
      %v1155 = vpop.f32.mrf.mxu0
      %v1156 = vadd.f32 0.0, %v1155
      %1157 = vmatmul.bf16.gmra.mxu0 %v1081
      %v1158 = vpop.f32.mrf.mxu0
      %v1159 = vadd.f32 0.0, %v1158
      %v1160 = vpop.f32.mrf.mxu0
      %v1161 = vadd.f32 0.0, %v1160
      %1162 = vmatmul.bf16.gmra.mxu0 %v1084
      %v1163 = vpop.f32.mrf.mxu0
      %v1164 = vadd.f32 0.0, %v1163
      %v1165 = vpop.f32.mrf.mxu0
      %v1166 = vadd.f32 0.0, %v1165
      %1167 = vmatmul.bf16.gmra.mxu0 %v1087
      %v1168 = vpop.f32.mrf.mxu0
      %v1169 = vadd.f32 0.0, %v1168
      %v1170 = vpop.f32.mrf.mxu0
      %v1171 = vadd.f32 0.0, %v1170
      %1172 = vdwg.mxu0
      %v1173 = vadd.f32 %v1002, %v1099
      %v1174 = vadd.f32 %v1003, %v1101
      %v1175 = vadd.f32 %v1004, %v1104
      %v1176 = vadd.f32 %v1005, %v1106
      %v1177 = vadd.f32 %v1006, %v1109
      %v1178 = vadd.f32 %v1007, %v1111
      %v1179 = vadd.f32 %v1008, %v1114
      %v1180 = vadd.f32 %v1009, %v1116
      %v1181 = vadd.f32 %v1010, %v1119
      %v1182 = vadd.f32 %v1011, %v1121
      %v1183 = vadd.f32 %v1012, %v1124
      %v1184 = vadd.f32 %v1013, %v1126
      %v1185 = vadd.f32 %v1014, %v1129
      %v1186 = vadd.f32 %v1015, %v1131
      %v1187 = vadd.f32 %v1016, %v1134
      %v1188 = vadd.f32 %v1017, %v1136
      %v1189 = vadd.f32 %v1018, %v1139
      %v1190 = vadd.f32 %v1019, %v1141
      %v1191 = vadd.f32 %v1020, %v1144
      %v1192 = vadd.f32 %v1021, %v1146
      %v1193 = vadd.f32 %v1022, %v1149
      %v1194 = vadd.f32 %v1023, %v1151
      %v1195 = vadd.f32 %v1024, %v1154
      %v1196 = vadd.f32 %v1025, %v1156
      %v1197 = vadd.f32 %v1026, %v1159
      %v1198 = vadd.f32 %v1027, %v1161
      %v1199 = vadd.f32 %v1028, %v1164
      %v1200 = vadd.f32 %v1029, %v1166
      %v1201 = vadd.f32 %v1030, %v1169
      %v1202 = vadd.f32 %v1031, %v1171
      %1203 = vst [vmem:[#allocation2] sm:$0xff] %v1173
      %1204 = vst [vmem:[#allocation2 + $0x8] sm:$0xff] %v1174
      %1205 = vst [vmem:[#allocation2 + $0x10] sm:$0xff] %v1175
      %1206 = vst [vmem:[#allocation2 + $0x18] sm:$0xff] %v1176
      %1207 = vst [vmem:[#allocation2 + $0x20] sm:$0xff] %v1177
      %1208 = vst [vmem:[#allocation2 + $0x28] sm:$0xff] %v1178
      %1209 = vst [vmem:[#allocation2 + $0x30] sm:$0xff] %v1179
      %1210 = vst [vmem:[#allocation2 + $0x38] sm:$0xff] %v1180
      %1211 = vst [vmem:[#allocation2 + $0x40] sm:$0xff] %v1181
      %1212 = vst [vmem:[#allocation2 + $0x48] sm:$0xff] %v1182
      %1213 = vst [vmem:[#allocation2 + $0x50] sm:$0xff] %v1183
      %1214 = vst [vmem:[#allocation2 + $0x58] sm:$0xff] %v1184
      %1215 = vst [vmem:[#allocation2 + $0x60] sm:$0xff] %v1185
      %1216 = vst [vmem:[#allocation2 + $0x68] sm:$0xff] %v1186
      %1217 = vst [vmem:[#allocation2 + $0x70] sm:$0xff] %v1187
      %1218 = vst [vmem:[#allocation2 + $0x78] sm:$0xff] %v1188
      %1219 = vst [vmem:[#allocation2 + $0x80] sm:$0xff] %v1189
      %1220 = vst [vmem:[#allocation2 + $0x88] sm:$0xff] %v1190
      %1221 = vst [vmem:[#allocation2 + $0x90] sm:$0xff] %v1191
      %1222 = vst [vmem:[#allocation2 + $0x98] sm:$0xff] %v1192
      %1223 = vst [vmem:[#allocation2 + $0xa0] sm:$0xff] %v1193
      %1224 = vst [vmem:[#allocation2 + $0xa8] sm:$0xff] %v1194
      %1225 = vst [vmem:[#allocation2 + $0xb0] sm:$0xff] %v1195
      %1226 = vst [vmem:[#allocation2 + $0xb8] sm:$0xff] %v1196
      %1227 = vst [vmem:[#allocation2 + $0xc0] sm:$0xff] %v1197
      %1228 = vst [vmem:[#allocation2 + $0xc8] sm:$0xff] %v1198
      %1229 = vst [vmem:[#allocation2 + $0xd0] sm:$0xff] %v1199
      %1230 = vst [vmem:[#allocation2 + $0xd8] sm:$0xff] %v1200
      %1231 = vst [vmem:[#allocation2 + $0xe0] sm:$0xff] %v1201
      %1232 = vst [vmem:[#allocation2 + $0xe8] sm:$0xf] %v1202
      %v1233 = vld [vmem:[%s262] sm:$0xff]
      %v1234 = vld [vmem:[%s262 + $0x8] sm:$0xff]
      %v1235 = vld [vmem:[%s262 + $0x10] sm:$0xf]
      %v1236 = vpack.c.bf16 %v1234, %v1233
      %v1237 = vpack.c.bf16 %v1235, %v1235
      %v1238 = vld [vmem:[#allocation2 + $0xec] sm:$0xff]
      %v1239 = vld [vmem:[#allocation2 + $0xf4] sm:$0xff]
      %v1240 = vld [vmem:[#allocation2 + $0xfc] sm:$0xf]
      %v1242 = vsel %vm400, %v1236, 0
      %v1245 = vsel %vm400, %v1237, 0
      %1247 = vmatpush.bf16.msra.mxu0 0
      %1248 = vmatpush.bf16.msra.mxu0 0
      %1249 = vmatpush.bf16.msra.mxu0 0
      %1250 = vmatpush.bf16.msra.mxu0 0
      %1251 = vmatpush.bf16.msra.mxu0 0
      %1252 = vmatpush.bf16.msra.mxu0 0
      %1253 = vmatpush.bf16.msra.mxu0 %v1041
      %1254 = vmatpush.bf16.msra.mxu0 %v1040
      %1255 = vmatmul.bf16.gmra.mxu0 %v1242
      %v1256 = vpop.f32.mrf.mxu0
      %v1257 = vadd.f32 0.0, %v1256
      %v1258 = vpop.f32.mrf.mxu0
      %v1259 = vadd.f32 0.0, %v1258
      %1260 = vmatmul.bf16.gmra.mxu0 %v1245
      %v1261 = vpop.f32.mrf.mxu0
      %v1262 = vadd.f32 0.0, %v1261
      %v1263 = vpop.f32.mrf.mxu0
      %1264 = vdwg.mxu0
      %v1265 = vadd.f32 %v1238, %v1257
      %v1266 = vadd.f32 %v1239, %v1259
      %v1267 = vadd.f32 %v1240, %v1262
      %1268 = vst [vmem:[#allocation2 + $0xec] sm:$0xff] %v1265
      %1269 = vst [vmem:[#allocation2 + $0xf4] sm:$0xff] %v1266
      %1270 = vst [vmem:[#allocation2 + $0xfc] sm:$0xf] %v1267
      %s1271 = scalar_lea.vmem %s268, 48
      %v1272 = vld [vmem:[%s1271] sm:$0xf]
      %v1273 = vld [vmem:[%s1271 + $0x4] sm:$0xf]
      %v1274 = vld [vmem:[%s1271 + $0x8] sm:$0xf]
      %v1275 = vld [vmem:[%s1271 + $0xc] sm:$0xf]
      %v1276 = vld [vmem:[%s255 + $0x13] sm:$0xff]
      %v1277 = vld [vmem:[%s255 + $0x1b] sm:$0xff]
      %v1278 = vld [vmem:[%s255 + $0x23] sm:$0xff]
      %v1279 = vld [vmem:[%s255 + $0x2b] sm:$0xff]
      %v1280 = vld [vmem:[%s255 + $0x33] sm:$0xff]
      %v1281 = vld [vmem:[%s255 + $0x3b] sm:$0xff]
      %v1282 = vld [vmem:[%s255 + $0x43] sm:$0xff]
      %v1283 = vld [vmem:[%s255 + $0x4b] sm:$0xff]
      %v1284 = vld [vmem:[%s255 + $0x53] sm:$0xff]
      %v1285 = vld [vmem:[%s255 + $0x5b] sm:$0xff]
      %v1286 = vld [vmem:[%s255 + $0x63] sm:$0xff]
      %v1287 = vld [vmem:[%s255 + $0x6b] sm:$0xff]
      %v1288 = vld [vmem:[%s255 + $0x73] sm:$0xff]
      %v1289 = vld [vmem:[%s255 + $0x7b] sm:$0xff]
      %v1290 = vld [vmem:[%s255 + $0x83] sm:$0xff]
      %v1291 = vld [vmem:[%s255 + $0x8b] sm:$0xff]
      %v1292 = vld [vmem:[%s255 + $0x93] sm:$0xff]
      %v1293 = vld [vmem:[%s255 + $0x9b] sm:$0xff]
      %v1294 = vld [vmem:[%s255 + $0xa3] sm:$0xff]
      %v1295 = vld [vmem:[%s255 + $0xab] sm:$0xff]
      %v1296 = vld [vmem:[%s255 + $0xb3] sm:$0xff]
      %v1297 = vld [vmem:[%s255 + $0xbb] sm:$0xff]
      %v1298 = vld [vmem:[%s255 + $0xc3] sm:$0xff]
      %v1299 = vld [vmem:[%s255 + $0xcb] sm:$0xff]
      %v1300 = vld [vmem:[%s255 + $0xd3] sm:$0xff]
      %v1301 = vld [vmem:[%s255 + $0xdb] sm:$0xff]
      %v1302 = vld [vmem:[%s255 + $0xe3] sm:$0xff]
      %v1303 = vld [vmem:[%s255 + $0xeb] sm:$0xff]
      %v1304 = vld [vmem:[%s255 + $0xf3] sm:$0xff]
      %v1305 = vld [vmem:[%s255 + $0xfb] sm:$0x1f]
      %v1306 = vpack.c.bf16 %v1277, %v1276
      %v1307 = vpack.c.bf16 %v1279, %v1278
      %v1308 = vpack.c.bf16 %v1281, %v1280
      %v1309 = vpack.c.bf16 %v1283, %v1282
      %v1310 = vpack.c.bf16 %v1285, %v1284
      %v1311 = vpack.c.bf16 %v1287, %v1286
      %v1312 = vpack.c.bf16 %v1289, %v1288
      %v1313 = vpack.c.bf16 %v1291, %v1290
      %v1314 = vpack.c.bf16 %v1293, %v1292
      %v1315 = vpack.c.bf16 %v1295, %v1294
      %v1316 = vpack.c.bf16 %v1297, %v1296
      %v1317 = vpack.c.bf16 %v1299, %v1298
      %v1318 = vpack.c.bf16 %v1301, %v1300
      %v1319 = vpack.c.bf16 %v1303, %v1302
      %v1320 = vpack.c.bf16 %v1305, %v1304
      %v1321 = vld [vmem:[#allocation2] sm:$0xff]
      %v1322 = vld [vmem:[#allocation2 + $0x8] sm:$0xff]
      %v1323 = vld [vmem:[#allocation2 + $0x10] sm:$0xff]
      %v1324 = vld [vmem:[#allocation2 + $0x18] sm:$0xff]
      %v1325 = vld [vmem:[#allocation2 + $0x20] sm:$0xff]
      %v1326 = vld [vmem:[#allocation2 + $0x28] sm:$0xff]
      %v1327 = vld [vmem:[#allocation2 + $0x30] sm:$0xff]
      %v1328 = vld [vmem:[#allocation2 + $0x38] sm:$0xff]
      %v1329 = vld [vmem:[#allocation2 + $0x40] sm:$0xff]
      %v1330 = vld [vmem:[#allocation2 + $0x48] sm:$0xff]
      %v1331 = vld [vmem:[#allocation2 + $0x50] sm:$0xff]
      %v1332 = vld [vmem:[#allocation2 + $0x58] sm:$0xff]
      %v1333 = vld [vmem:[#allocation2 + $0x60] sm:$0xff]
      %v1334 = vld [vmem:[#allocation2 + $0x68] sm:$0xff]
      %v1335 = vld [vmem:[#allocation2 + $0x70] sm:$0xff]
      %v1336 = vld [vmem:[#allocation2 + $0x78] sm:$0xff]
      %v1337 = vld [vmem:[#allocation2 + $0x80] sm:$0xff]
      %v1338 = vld [vmem:[#allocation2 + $0x88] sm:$0xff]
      %v1339 = vld [vmem:[#allocation2 + $0x90] sm:$0xff]
      %v1340 = vld [vmem:[#allocation2 + $0x98] sm:$0xff]
      %v1341 = vld [vmem:[#allocation2 + $0xa0] sm:$0xff]
      %v1342 = vld [vmem:[#allocation2 + $0xa8] sm:$0xff]
      %v1343 = vld [vmem:[#allocation2 + $0xb0] sm:$0xff]
      %v1344 = vld [vmem:[#allocation2 + $0xb8] sm:$0xff]
      %v1345 = vld [vmem:[#allocation2 + $0xc0] sm:$0xff]
      %v1346 = vld [vmem:[#allocation2 + $0xc8] sm:$0xff]
      %v1347 = vld [vmem:[#allocation2 + $0xd0] sm:$0xff]
      %v1348 = vld [vmem:[#allocation2 + $0xd8] sm:$0xff]
      %v1349 = vld [vmem:[#allocation2 + $0xe0] sm:$0xff]
      %v1350 = vld [vmem:[#allocation2 + $0xe8] sm:$0x1f]
      %v1355 = vunpack.c.l.b16 %v1272
      %v1356 = vunpack.c.l.b16 %v1273
      %v1357 = vunpack.c.l.b16 %v1274
      %v1358 = vunpack.c.l.b16 %v1275
      %v1359 = vpack.c.b16 %v1356, %v1355
      %v1360 = vpack.c.b16 %v1358, %v1357
      %v1364 = vsel %vm400, %v1306, 0
      %v1367 = vsel %vm400, %v1307, 0
      %v1370 = vsel %vm400, %v1308, 0
      %v1373 = vsel %vm400, %v1309, 0
      %v1376 = vsel %vm400, %v1310, 0
      %v1379 = vsel %vm400, %v1311, 0
      %v1382 = vsel %vm400, %v1312, 0
      %v1385 = vsel %vm400, %v1313, 0
      %v1388 = vsel %vm400, %v1314, 0
      %v1391 = vsel %vm400, %v1315, 0
      %v1394 = vsel %vm400, %v1316, 0
      %v1397 = vsel %vm400, %v1317, 0
      %v1400 = vsel %vm400, %v1318, 0
      %v1403 = vsel %vm400, %v1319, 0
      %v1406 = vsel %vm400, %v1320, 0
      %1408 = vmatpush.bf16.msra.mxu0 0
      %1409 = vmatpush.bf16.msra.mxu0 0
      %1410 = vmatpush.bf16.msra.mxu0 0
      %1411 = vmatpush.bf16.msra.mxu0 0
      %1412 = vmatpush.bf16.msra.mxu0 0
      %1413 = vmatpush.bf16.msra.mxu0 0
      %1414 = vmatpush.bf16.msra.mxu0 %v1360
      %1415 = vmatpush.bf16.msra.mxu0 %v1359
      %1416 = vmatmul.bf16.gmra.mxu0 %v1364
      %v1417 = vpop.f32.mrf.mxu0
      %v1418 = vadd.f32 0.0, %v1417
      %v1419 = vpop.f32.mrf.mxu0
      %v1420 = vadd.f32 0.0, %v1419
      %1421 = vmatmul.bf16.gmra.mxu0 %v1367
      %v1422 = vpop.f32.mrf.mxu0
      %v1423 = vadd.f32 0.0, %v1422
      %v1424 = vpop.f32.mrf.mxu0
      %v1425 = vadd.f32 0.0, %v1424
      %1426 = vmatmul.bf16.gmra.mxu0 %v1370
      %v1427 = vpop.f32.mrf.mxu0
      %v1428 = vadd.f32 0.0, %v1427
      %v1429 = vpop.f32.mrf.mxu0
      %v1430 = vadd.f32 0.0, %v1429
      %1431 = vmatmul.bf16.gmra.mxu0 %v1373
      %v1432 = vpop.f32.mrf.mxu0
      %v1433 = vadd.f32 0.0, %v1432
      %v1434 = vpop.f32.mrf.mxu0
      %v1435 = vadd.f32 0.0, %v1434
      %1436 = vmatmul.bf16.gmra.mxu0 %v1376
      %v1437 = vpop.f32.mrf.mxu0
      %v1438 = vadd.f32 0.0, %v1437
      %v1439 = vpop.f32.mrf.mxu0
      %v1440 = vadd.f32 0.0, %v1439
      %1441 = vmatmul.bf16.gmra.mxu0 %v1379
      %v1442 = vpop.f32.mrf.mxu0
      %v1443 = vadd.f32 0.0, %v1442
      %v1444 = vpop.f32.mrf.mxu0
      %v1445 = vadd.f32 0.0, %v1444
      %1446 = vmatmul.bf16.gmra.mxu0 %v1382
      %v1447 = vpop.f32.mrf.mxu0
      %v1448 = vadd.f32 0.0, %v1447
      %v1449 = vpop.f32.mrf.mxu0
      %v1450 = vadd.f32 0.0, %v1449
      %1451 = vmatmul.bf16.gmra.mxu0 %v1385
      %v1452 = vpop.f32.mrf.mxu0
      %v1453 = vadd.f32 0.0, %v1452
      %v1454 = vpop.f32.mrf.mxu0
      %v1455 = vadd.f32 0.0, %v1454
      %1456 = vmatmul.bf16.gmra.mxu0 %v1388
      %v1457 = vpop.f32.mrf.mxu0
      %v1458 = vadd.f32 0.0, %v1457
      %v1459 = vpop.f32.mrf.mxu0
      %v1460 = vadd.f32 0.0, %v1459
      %1461 = vmatmul.bf16.gmra.mxu0 %v1391
      %v1462 = vpop.f32.mrf.mxu0
      %v1463 = vadd.f32 0.0, %v1462
      %v1464 = vpop.f32.mrf.mxu0
      %v1465 = vadd.f32 0.0, %v1464
      %1466 = vmatmul.bf16.gmra.mxu0 %v1394
      %v1467 = vpop.f32.mrf.mxu0
      %v1468 = vadd.f32 0.0, %v1467
      %v1469 = vpop.f32.mrf.mxu0
      %v1470 = vadd.f32 0.0, %v1469
      %1471 = vmatmul.bf16.gmra.mxu0 %v1397
      %v1472 = vpop.f32.mrf.mxu0
      %v1473 = vadd.f32 0.0, %v1472
      %v1474 = vpop.f32.mrf.mxu0
      %v1475 = vadd.f32 0.0, %v1474
      %1476 = vmatmul.bf16.gmra.mxu0 %v1400
      %v1477 = vpop.f32.mrf.mxu0
      %v1478 = vadd.f32 0.0, %v1477
      %v1479 = vpop.f32.mrf.mxu0
      %v1480 = vadd.f32 0.0, %v1479
      %1481 = vmatmul.bf16.gmra.mxu0 %v1403
      %v1482 = vpop.f32.mrf.mxu0
      %v1483 = vadd.f32 0.0, %v1482
      %v1484 = vpop.f32.mrf.mxu0
      %v1485 = vadd.f32 0.0, %v1484
      %1486 = vmatmul.bf16.gmra.mxu0 %v1406
      %v1487 = vpop.f32.mrf.mxu0
      %v1488 = vadd.f32 0.0, %v1487
      %v1489 = vpop.f32.mrf.mxu0
      %v1490 = vadd.f32 0.0, %v1489
      %1491 = vdwg.mxu0
      %v1492 = vadd.f32 %v1321, %v1418
      %v1493 = vadd.f32 %v1322, %v1420
      %v1494 = vadd.f32 %v1323, %v1423
      %v1495 = vadd.f32 %v1324, %v1425
      %v1496 = vadd.f32 %v1325, %v1428
      %v1497 = vadd.f32 %v1326, %v1430
      %v1498 = vadd.f32 %v1327, %v1433
      %v1499 = vadd.f32 %v1328, %v1435
      %v1500 = vadd.f32 %v1329, %v1438
      %v1501 = vadd.f32 %v1330, %v1440
      %v1502 = vadd.f32 %v1331, %v1443
      %v1503 = vadd.f32 %v1332, %v1445
      %v1504 = vadd.f32 %v1333, %v1448
      %v1505 = vadd.f32 %v1334, %v1450
      %v1506 = vadd.f32 %v1335, %v1453
      %v1507 = vadd.f32 %v1336, %v1455
      %v1508 = vadd.f32 %v1337, %v1458
      %v1509 = vadd.f32 %v1338, %v1460
      %v1510 = vadd.f32 %v1339, %v1463
      %v1511 = vadd.f32 %v1340, %v1465
      %v1512 = vadd.f32 %v1341, %v1468
      %v1513 = vadd.f32 %v1342, %v1470
      %v1514 = vadd.f32 %v1343, %v1473
      %v1515 = vadd.f32 %v1344, %v1475
      %v1516 = vadd.f32 %v1345, %v1478
      %v1517 = vadd.f32 %v1346, %v1480
      %v1518 = vadd.f32 %v1347, %v1483
      %v1519 = vadd.f32 %v1348, %v1485
      %v1520 = vadd.f32 %v1349, %v1488
      %v1521 = vadd.f32 %v1350, %v1490
      %1522 = vst [vmem:[#allocation2] sm:$0xff] %v1492
      %1523 = vst [vmem:[#allocation2 + $0x8] sm:$0xff] %v1493
      %1524 = vst [vmem:[#allocation2 + $0x10] sm:$0xff] %v1494
      %1525 = vst [vmem:[#allocation2 + $0x18] sm:$0xff] %v1495
      %1526 = vst [vmem:[#allocation2 + $0x20] sm:$0xff] %v1496
      %1527 = vst [vmem:[#allocation2 + $0x28] sm:$0xff] %v1497
      %1528 = vst [vmem:[#allocation2 + $0x30] sm:$0xff] %v1498
      %1529 = vst [vmem:[#allocation2 + $0x38] sm:$0xff] %v1499
      %1530 = vst [vmem:[#allocation2 + $0x40] sm:$0xff] %v1500
      %1531 = vst [vmem:[#allocation2 + $0x48] sm:$0xff] %v1501
      %1532 = vst [vmem:[#allocation2 + $0x50] sm:$0xff] %v1502
      %1533 = vst [vmem:[#allocation2 + $0x58] sm:$0xff] %v1503
      %1534 = vst [vmem:[#allocation2 + $0x60] sm:$0xff] %v1504
      %1535 = vst [vmem:[#allocation2 + $0x68] sm:$0xff] %v1505
      %1536 = vst [vmem:[#allocation2 + $0x70] sm:$0xff] %v1506
      %1537 = vst [vmem:[#allocation2 + $0x78] sm:$0xff] %v1507
      %1538 = vst [vmem:[#allocation2 + $0x80] sm:$0xff] %v1508
      %1539 = vst [vmem:[#allocation2 + $0x88] sm:$0xff] %v1509
      %1540 = vst [vmem:[#allocation2 + $0x90] sm:$0xff] %v1510
      %1541 = vst [vmem:[#allocation2 + $0x98] sm:$0xff] %v1511
      %1542 = vst [vmem:[#allocation2 + $0xa0] sm:$0xff] %v1512
      %1543 = vst [vmem:[#allocation2 + $0xa8] sm:$0xff] %v1513
      %1544 = vst [vmem:[#allocation2 + $0xb0] sm:$0xff] %v1514
      %1545 = vst [vmem:[#allocation2 + $0xb8] sm:$0xff] %v1515
      %1546 = vst [vmem:[#allocation2 + $0xc0] sm:$0xff] %v1516
      %1547 = vst [vmem:[#allocation2 + $0xc8] sm:$0xff] %v1517
      %1548 = vst [vmem:[#allocation2 + $0xd0] sm:$0xff] %v1518
      %1549 = vst [vmem:[#allocation2 + $0xd8] sm:$0xff] %v1519
      %1550 = vst [vmem:[#allocation2 + $0xe0] sm:$0xff] %v1520
      %1551 = vst [vmem:[#allocation2 + $0xe8] sm:$0x1f] %v1521
      %v1552 = vld [vmem:[%s262] sm:$0xff]
      %v1553 = vld [vmem:[%s262 + $0x8] sm:$0xff]
      %v1554 = vld [vmem:[%s262 + $0x10] sm:$0x7]
      %v1555 = vpack.c.bf16 %v1553, %v1552
      %v1556 = vpack.c.bf16 %v1554, %v1554
      %v1557 = vld [vmem:[#allocation2 + $0xed] sm:$0xff]
      %v1558 = vld [vmem:[#allocation2 + $0xf5] sm:$0xff]
      %v1559 = vld [vmem:[#allocation2 + $0xfd] sm:$0x7]
      %v1561 = vsel %vm400, %v1555, 0
      %v1564 = vsel %vm400, %v1556, 0
      %1566 = vmatpush.bf16.msra.mxu0 0
      %1567 = vmatpush.bf16.msra.mxu0 0
      %1568 = vmatpush.bf16.msra.mxu0 0
      %1569 = vmatpush.bf16.msra.mxu0 0
      %1570 = vmatpush.bf16.msra.mxu0 0
      %1571 = vmatpush.bf16.msra.mxu0 0
      %1572 = vmatpush.bf16.msra.mxu0 %v1360
      %1573 = vmatpush.bf16.msra.mxu0 %v1359
      %1574 = vmatmul.bf16.gmra.mxu0 %v1561
      %v1575 = vpop.f32.mrf.mxu0
      %v1576 = vadd.f32 0.0, %v1575
      %v1577 = vpop.f32.mrf.mxu0
      %v1578 = vadd.f32 0.0, %v1577
      %1579 = vmatmul.bf16.gmra.mxu0 %v1564
      %v1580 = vpop.f32.mrf.mxu0
      %v1581 = vadd.f32 0.0, %v1580
      %v1582 = vpop.f32.mrf.mxu0
      %1583 = vdwg.mxu0
      %v1584 = vadd.f32 %v1557, %v1576
      %v1585 = vadd.f32 %v1558, %v1578
      %v1586 = vadd.f32 %v1559, %v1581
      %1587 = vst [vmem:[#allocation2 + $0xed] sm:$0xff] %v1584
      %1588 = vst [vmem:[#allocation2 + $0xf5] sm:$0xff] %v1585
      %1589 = vst [vmem:[#allocation2 + $0xfd] sm:$0x7] %v1586
      %v1590 = vld [vmem:[#allocation2] sm:$0xff]
      %v1591 = vld [vmem:[#allocation2 + $0x8] sm:$0xff]
      %v1592 = vld [vmem:[#allocation2 + $0x10] sm:$0xff]
      %v1593 = vld [vmem:[#allocation2 + $0x18] sm:$0xff]
      %v1594 = vld [vmem:[#allocation2 + $0x20] sm:$0xff]
      %v1595 = vld [vmem:[#allocation2 + $0x28] sm:$0xff]
      %v1596 = vld [vmem:[#allocation2 + $0x30] sm:$0xff]
      %v1597 = vld [vmem:[#allocation2 + $0x38] sm:$0xff]
      %v1598 = vld [vmem:[#allocation2 + $0x40] sm:$0xff]
      %v1599 = vld [vmem:[#allocation2 + $0x48] sm:$0xff]
      %v1600 = vld [vmem:[#allocation2 + $0x50] sm:$0xff]
      %v1601 = vld [vmem:[#allocation2 + $0x58] sm:$0xff]
      %v1602 = vld [vmem:[#allocation2 + $0x60] sm:$0xff]
      %v1603 = vld [vmem:[#allocation2 + $0x68] sm:$0xff]
      %v1604 = vld [vmem:[#allocation2 + $0x70] sm:$0xff]
      %v1605 = vld [vmem:[#allocation2 + $0x78] sm:$0xff]
      %v1606 = vld [vmem:[#allocation2 + $0x80] sm:$0xff]
      %v1607 = vld [vmem:[#allocation2 + $0x88] sm:$0xff]
      %v1608 = vld [vmem:[#allocation2 + $0x90] sm:$0xff]
      %v1609 = vld [vmem:[#allocation2 + $0x98] sm:$0xff]
      %v1610 = vld [vmem:[#allocation2 + $0xa0] sm:$0xff]
      %v1611 = vld [vmem:[#allocation2 + $0xa8] sm:$0xff]
      %v1612 = vld [vmem:[#allocation2 + $0xb0] sm:$0xff]
      %v1613 = vld [vmem:[#allocation2 + $0xb8] sm:$0xff]
      %v1614 = vld [vmem:[#allocation2 + $0xc0] sm:$0xff]
      %v1615 = vld [vmem:[#allocation2 + $0xc8] sm:$0xff]
      %v1616 = vld [vmem:[#allocation2 + $0xd0] sm:$0xff]
      %v1617 = vld [vmem:[#allocation2 + $0xd8] sm:$0xff]
      %v1618 = vld [vmem:[#allocation2 + $0xe0] sm:$0xff]
      %v1619 = vld [vmem:[#allocation2 + $0xe8] sm:$0xff]
      %v1620 = vld [vmem:[#allocation2 + $0xf0] sm:$0xff]
      %v1621 = vld [vmem:[#allocation2 + $0xf8] sm:$0xff]
      %v1622 = vld [vmem:[%s271] sm:$0x1]
      %v1624 = vperm.slane %v1622, 0
      %v1626 = vadd.f32 %v1590, %v1624
      %v1627 = vadd.f32 %v1591, %v1624
      %v1628 = vadd.f32 %v1592, %v1624
      %v1629 = vadd.f32 %v1593, %v1624
      %v1630 = vadd.f32 %v1594, %v1624
      %v1631 = vadd.f32 %v1595, %v1624
      %v1632 = vadd.f32 %v1596, %v1624
      %v1633 = vadd.f32 %v1597, %v1624
      %v1634 = vadd.f32 %v1598, %v1624
      %v1635 = vadd.f32 %v1599, %v1624
      %v1636 = vadd.f32 %v1600, %v1624
      %v1637 = vadd.f32 %v1601, %v1624
      %v1638 = vadd.f32 %v1602, %v1624
      %v1639 = vadd.f32 %v1603, %v1624
      %v1640 = vadd.f32 %v1604, %v1624
      %v1641 = vadd.f32 %v1605, %v1624
      %v1642 = vadd.f32 %v1606, %v1624
      %v1643 = vadd.f32 %v1607, %v1624
      %v1644 = vadd.f32 %v1608, %v1624
      %v1645 = vadd.f32 %v1609, %v1624
      %v1646 = vadd.f32 %v1610, %v1624
      %v1647 = vadd.f32 %v1611, %v1624
      %v1648 = vadd.f32 %v1612, %v1624
      %v1649 = vadd.f32 %v1613, %v1624
      %v1650 = vadd.f32 %v1614, %v1624
      %v1651 = vadd.f32 %v1615, %v1624
      %v1652 = vadd.f32 %v1616, %v1624
      %v1653 = vadd.f32 %v1617, %v1624
      %v1654 = vadd.f32 %v1618, %v1624
      %v1655 = vadd.f32 %v1619, %v1624
      %v1656 = vadd.f32 %v1620, %v1624
      %v1657 = vadd.f32 %v1621, %v1624
      %1658 = vst [vmem:[%s279] sm:$0xff] %v1626
      %1659 = vst [vmem:[%s279 + $0x8] sm:$0xff] %v1627
      %1660 = vst [vmem:[%s279 + $0x10] sm:$0xff] %v1628
      %1661 = vst [vmem:[%s279 + $0x18] sm:$0xff] %v1629
      %1662 = vst [vmem:[%s279 + $0x20] sm:$0xff] %v1630
      %1663 = vst [vmem:[%s279 + $0x28] sm:$0xff] %v1631
      %1664 = vst [vmem:[%s279 + $0x30] sm:$0xff] %v1632
      %1665 = vst [vmem:[%s279 + $0x38] sm:$0xff] %v1633
      %1666 = vst [vmem:[%s279 + $0x40] sm:$0xff] %v1634
      %1667 = vst [vmem:[%s279 + $0x48] sm:$0xff] %v1635
      %1668 = vst [vmem:[%s279 + $0x50] sm:$0xff] %v1636
      %1669 = vst [vmem:[%s279 + $0x58] sm:$0xff] %v1637
      %1670 = vst [vmem:[%s279 + $0x60] sm:$0xff] %v1638
      %1671 = vst [vmem:[%s279 + $0x68] sm:$0xff] %v1639
      %1672 = vst [vmem:[%s279 + $0x70] sm:$0xff] %v1640
      %1673 = vst [vmem:[%s279 + $0x78] sm:$0xff] %v1641
      %1674 = vst [vmem:[%s279 + $0x80] sm:$0xff] %v1642
      %1675 = vst [vmem:[%s279 + $0x88] sm:$0xff] %v1643
      %1676 = vst [vmem:[%s279 + $0x90] sm:$0xff] %v1644
      %1677 = vst [vmem:[%s279 + $0x98] sm:$0xff] %v1645
      %1678 = vst [vmem:[%s279 + $0xa0] sm:$0xff] %v1646
      %1679 = vst [vmem:[%s279 + $0xa8] sm:$0xff] %v1647
      %1680 = vst [vmem:[%s279 + $0xb0] sm:$0xff] %v1648
      %1681 = vst [vmem:[%s279 + $0xb8] sm:$0xff] %v1649
      %1682 = vst [vmem:[%s279 + $0xc0] sm:$0xff] %v1650
      %1683 = vst [vmem:[%s279 + $0xc8] sm:$0xff] %v1651
      %1684 = vst [vmem:[%s279 + $0xd0] sm:$0xff] %v1652
      %1685 = vst [vmem:[%s279 + $0xd8] sm:$0xff] %v1653
      %1686 = vst [vmem:[%s279 + $0xe0] sm:$0xff] %v1654
      %1687 = vst [vmem:[%s279 + $0xe8] sm:$0xff] %v1655
      %1688 = vst [vmem:[%s279 + $0xf0] sm:$0xff] %v1656
      %1689 = vst [vmem:[%s279 + $0xf8] sm:$0xff] %v1657
      %s1690 = smul.u32 32, %s19
      %p1691 = scmp.lt.s32.totalorder %s1690, 95
      %s1692 = scalar_select %p1691, %s1690, 95
      %p1693 = scmp.lt.s32.totalorder %s20, 0
      %s1694 = scalar_select %p1693, %s20, 0
      %s1695 = sadd.s32 %s1694, %s1692
      %s1696 = smul.addr %s1695, 8
      %s1697 = scalar_lea.vmem %s4, %s1696
      // Predicated region
      $region37: #{_lambda_.5} parent=35 // pred_check
        %p1698 = pneg %p153
      $region38: #{_lambda_.5} parent=35 // pred_check_branch
        %1700 = sbr.rel (%p1698) target = $region40
      $region39: #{_lambda_.5} parent=35 // pred_region
        %s1701 = smul.u32 32, %s19
      $region40: #{_lambda_.5} parent=35 // pred_fallthru
        _
    $region36: #{_lambda_.5} parent=5 // pred_fallthru
      _
    %p1702 = scmp.le.s32.totalorder 2, %s10
    // Predicated region
    $region41: #{_lambda_.5} parent=5 // pred_check
      %p1703 = pneg %p1702
    $region42: #{_lambda_.5} parent=5 // pred_check_branch
      %1705 = sbr.rel (%p1703) target = $region44
    $region43: #{_lambda_.5} parent=5 // pred_region
      %s1706 = ssub.s32 %s10, 2
      // Predicated region
      $region45: #{_lambda_.5} parent=43 // pred_check
        %p1707 = pneg %p159
      $region46: #{_lambda_.5} parent=43 // pred_check_branch
        %1709 = sbr.rel (%p1707) target = $region48
      $region47: #{_lambda_.5} parent=43 // pred_region
        %s1710 = smul.u32 32, %s21
        %p1711 = scmp.lt.s32.totalorder %s1710, 95
        %s1712 = scalar_select %p1711, %s1710, 95
        %p1713 = scmp.lt.s32.totalorder %s22, 0
        %s1714 = scalar_select %p1713, %s22, 0
        %s1715 = sadd.s32 %s1714, %s1712
        %s1716 = smul.addr %s1715, 8
        %s1717 = scalar_lea.vmem %s4, %s1716
      $region48: #{_lambda_.5} parent=43 // pred_fallthru
        _
    $region44: #{_lambda_.5} parent=5 // pred_fallthru
      _
  $region6: #{_lambda_.5} parent=0 // loop_footer
    %s14 = sadd.s32 1, %s10
  $region7: #{_lambda_.5} parent=0 // loop_footer_branch
    %9 = sbr.rel target = $region3
  $region8: #{_lambda_.5} parent=0 // loop_exit
    _

// kernel: _lambda_.6
$region0: #{_lambda_.6}
  #allocation0 [shape = 'u32[]', space=smem, size = 0x4, offset = 0x4, fixed_abs, tag = 'smem constant byte address 0x4 - core index']
  #allocation1 [shape = 'u32[72,128]{1,0:T(1,128)}', space=vmem, size = 0x9000, scoped, tag = 'internal scratch']
  #allocation2 [shape = 'f32[256,128]{1,0:T(8,128)}', space=vmem, size = 0x20000, scoped, tag = 'scratch operand']
  %s0 = inlined_call_operand.vmem [shape: f32[1024,32], index: 0, kind: input, shape index: {}, may-alias: {0,1}]
  %s1 = inlined_call_operand.vmem [shape: f32[1024,32], index: 1, kind: input, shape index: {}, may-alias: {0,1}]
  %s2 = inlined_call_operand.vmem [shape: bf16[4,32,128], index: 2, kind: input, shape index: {}]
  %s3 = inlined_call_operand.vmem [shape: f32[1,128], index: 3, kind: input, shape index: {}]
  %s4 = inlined_call_operand.vmem [shape: f32[768,128], index: 4, kind: output, shape index: {}]
  %s5 = sld [smem:[#allocation0]]
  $region49: #{_lambda_.6} parent=0
    _
  %s7 = ssub.s32 1, %s5
  %s8 = scalar_select 0, %s7, %s5
  loop: start=0, step=1, limit=5
  $region2: #{_lambda_.6} parent=0 // loop_pre_header
    _
  $region3: #{_lambda_.6} parent=0 // loop_header
    %s10 = sphi 0, %s14
    %p11 = scmp.ge.s32.totalorder %s10, 5
    %s17 = sphi 0, %s29
    %s18 = sphi 0, %s25
    %s19 = sphi 0, %s17
    %s20 = sphi 0, %s18
    %s21 = sphi 0, %s19
    %s22 = sphi 0, %s20
    %s32 = sphi 0, %s34
    %s35 = sphi 0, %s32
    %s36 = sphi 0, %s35
    %s52 = sphi 0, %s36
    %s60 = sphi 0, %s62
    %s63 = sphi 0, %s60
    %s64 = sphi 0, %s63
    %s80 = sphi 0, %s64
    %s86 = sphi 0, %s88
    %s89 = sphi 0, %s86
    %s90 = sphi 0, %s89
    %s106 = sphi 0, %s90
    %s112 = sphi 0, %s114
    %s115 = sphi 0, %s112
    %s116 = sphi 0, %s115
    %s132 = sphi 0, %s116
    %s140 = sphi 0, %s142
    %s143 = sphi 0, %s140
    %s144 = sphi 0, %s143
    %s160 = sphi 0, %s144
  $region4: #{_lambda_.6} parent=0 // loop_header_branch
    %13 = sbr.rel (%p11) target = $region8
  $region5: #{_lambda_.6} parent=0 // loop_body
    %s15 = ssub.s32 %s10, 1
    %s16 = ssub.s32 %s10, 2
    %s23 = sadd.s32 1, %s18
    %p24 = scmp.ge.s32.totalorder %s23, 1
    %s25 = scalar_select %p24, 0, %s23
    %s26 = sadd.s32 1, %s17
    %s27 = scalar_select %p24, %s26, %s17
    %p28 = scmp.ge.s32.totalorder %s27, 3
    %s29 = scalar_select %p28, 0, %s27
    %s30 = ssub.s32 %s17, %s29
    %p31 = scmp.eq.s32.totalorder %s30, 0
    %s33 = sadd.s32 %s32, 1
    %s34 = scalar_select %p31, %s32, %s33
    %p37 = pneg %p31
    %p38 = scmp.eq.s32.totalorder %s10, 2
    %p39 = por %p37, %p38
    %p40 = scmp.ne.s32.totalorder %s32, %s35
    %p41 = scmp.eq.s32.totalorder %s10, 0
    %p42 = por %p40, %p41
    %p43 = scmp.ne.s32.totalorder %s32, %s35
    %p44 = scmp.eq.s32.totalorder %s15, 2
    %p45 = por %p43, %p44
    %p46 = scmp.ne.s32.totalorder %s35, %s36
    %p47 = scmp.eq.s32.totalorder %s15, 0
    %p48 = por %p46, %p47
    %p49 = scmp.ne.s32.totalorder %s35, %s36
    %p50 = scmp.eq.s32.totalorder %s16, 2
    %p51 = por %p49, %p50
    %p53 = scmp.ne.s32.totalorder %s36, %s52
    %p54 = scmp.eq.s32.totalorder %s16, 0
    %p55 = por %p53, %p54
    %s56 = sadd.s32 %s17, 1
    %s57 = sadd.s32 %s29, 1
    %s58 = ssub.s32 %s56, %s57
    %p59 = scmp.eq.s32.totalorder %s58, 0
    %s61 = sadd.s32 %s60, 1
    %s62 = scalar_select %p59, %s60, %s61
    %p65 = pneg %p59
    %p66 = scmp.eq.s32.totalorder %s10, 2
    %p67 = por %p65, %p66
    %p68 = scmp.ne.s32.totalorder %s60, %s63
    %p69 = scmp.eq.s32.totalorder %s10, 0
    %p70 = por %p68, %p69
    %p71 = scmp.ne.s32.totalorder %s60, %s63
    %p72 = scmp.eq.s32.totalorder %s15, 2
    %p73 = por %p71, %p72
    %p74 = scmp.ne.s32.totalorder %s63, %s64
    %p75 = scmp.eq.s32.totalorder %s15, 0
    %p76 = por %p74, %p75
    %p77 = scmp.ne.s32.totalorder %s63, %s64
    %p78 = scmp.eq.s32.totalorder %s16, 2
    %p79 = por %p77, %p78
    %p81 = scmp.ne.s32.totalorder %s64, %s80
    %p82 = scmp.eq.s32.totalorder %s16, 0
    %p83 = por %p81, %p82
    %s84 = ssub.s32 %s18, %s25
    %p85 = scmp.eq.s32.totalorder %s84, 0
    %s87 = sadd.s32 %s86, 1
    %s88 = scalar_select %p85, %s86, %s87
    %p91 = pneg %p85
    %p92 = scmp.eq.s32.totalorder %s10, 2
    %p93 = por %p91, %p92
    %p94 = scmp.ne.s32.totalorder %s86, %s89
    %p95 = scmp.eq.s32.totalorder %s10, 0
    %p96 = por %p94, %p95
    %p97 = scmp.ne.s32.totalorder %s86, %s89
    %p98 = scmp.eq.s32.totalorder %s15, 2
    %p99 = por %p97, %p98
    %p100 = scmp.ne.s32.totalorder %s89, %s90
    %p101 = scmp.eq.s32.totalorder %s15, 0
    %p102 = por %p100, %p101
    %p103 = scmp.ne.s32.totalorder %s89, %s90
    %p104 = scmp.eq.s32.totalorder %s16, 2
    %p105 = por %p103, %p104
    %p107 = scmp.ne.s32.totalorder %s90, %s106
    %p108 = scmp.eq.s32.totalorder %s16, 0
    %p109 = por %p107, %p108
    %s110 = ssub.s32 %s18, %s25
    %p111 = scmp.eq.s32.totalorder %s110, 0
    %s113 = sadd.s32 %s112, 1
    %s114 = scalar_select %p111, %s112, %s113
    %p117 = pneg %p111
    %p118 = scmp.eq.s32.totalorder %s10, 2
    %p119 = por %p117, %p118
    %p120 = scmp.ne.s32.totalorder %s112, %s115
    %p121 = scmp.eq.s32.totalorder %s10, 0
    %p122 = por %p120, %p121
    %p123 = scmp.ne.s32.totalorder %s112, %s115
    %p124 = scmp.eq.s32.totalorder %s15, 2
    %p125 = por %p123, %p124
    %p126 = scmp.ne.s32.totalorder %s115, %s116
    %p127 = scmp.eq.s32.totalorder %s15, 0
    %p128 = por %p126, %p127
    %p129 = scmp.ne.s32.totalorder %s115, %s116
    %p130 = scmp.eq.s32.totalorder %s16, 2
    %p131 = por %p129, %p130
    %p133 = scmp.ne.s32.totalorder %s116, %s132
    %p134 = scmp.eq.s32.totalorder %s16, 0
    %p135 = por %p133, %p134
    %s136 = ssub.s32 %s17, %s29
    %s137 = ssub.s32 %s18, %s25
    %s138 = sor.u32 %s136, %s137
    %p139 = scmp.eq.s32.totalorder %s138, 0
    %s141 = sadd.s32 %s140, 1
    %s142 = scalar_select %p139, %s140, %s141
    %p145 = pneg %p139
    %p146 = scmp.eq.s32.totalorder %s10, 2
    %p147 = por %p145, %p146
    %p148 = scmp.ne.s32.totalorder %s140, %s143
    %p149 = scmp.eq.s32.totalorder %s10, 0
    %p150 = por %p148, %p149
    %p151 = scmp.ne.s32.totalorder %s140, %s143
    %p152 = scmp.eq.s32.totalorder %s15, 2
    %p153 = por %p151, %p152
    %p154 = scmp.ne.s32.totalorder %s143, %s144
    %p155 = scmp.eq.s32.totalorder %s15, 0
    %p156 = por %p154, %p155
    %p157 = scmp.ne.s32.totalorder %s143, %s144
    %p158 = scmp.eq.s32.totalorder %s16, 2
    %p159 = por %p157, %p158
    %p161 = scmp.ne.s32.totalorder %s144, %s160
    %p162 = scmp.eq.s32.totalorder %s16, 0
    %p163 = por %p161, %p162
    %p164 = scmp.le.s32.totalorder 1, %s10
    %p165 = scmp.lt.s32.totalorder %s10, 4
    %p166 = pnand %p164, %p165
    %p167 = pneg %p166
    // Predicated region
    $region9: #{_lambda_.6} parent=5 // pred_check
      _
    $region10: #{_lambda_.6} parent=5 // pred_check_branch
      %169 = sbr.rel (%p166) target = $region12
    $region11: #{_lambda_.6} parent=5 // pred_region
      %s170 = ssub.s32 %s10, 1
      // Predicated region
      $region13: #{_lambda_.6} parent=11 // pred_check
        %p171 = pneg %p102
      $region14: #{_lambda_.6} parent=11 // pred_check_branch
        %173 = sbr.rel (%p171) target = $region16
      $region15: #{_lambda_.6} parent=11 // pred_region
        %p174 = scmp.lt.s32.totalorder %s20, 0
        %s175 = scalar_select %p174, %s20, 0
        %s176 = smul.addr %s175, 4
        %s177 = scalar_lea.vmem %s2, %s176
      $region16: #{_lambda_.6} parent=11 // pred_fallthru
        _
      // Predicated region
      $region17: #{_lambda_.6} parent=11 // pred_check
        %p178 = pneg %p128
      $region18: #{_lambda_.6} parent=11 // pred_check_branch
        %180 = sbr.rel (%p178) target = $region20
      $region19: #{_lambda_.6} parent=11 // pred_region
        %p181 = scmp.lt.s32.totalorder %s20, 0
        %s182 = scalar_select %p181, %s20, 0
        %s183 = scalar_lea.vmem %s3, %s182
      $region20: #{_lambda_.6} parent=11 // pred_fallthru
        _
    $region12: #{_lambda_.6} parent=5 // pred_fallthru
      _
    %p184 = scmp.lt.s32.totalorder %s10, 3
    // Predicated region
    $region21: #{_lambda_.6} parent=5 // pred_check
      %p185 = pneg %p184
    $region22: #{_lambda_.6} parent=5 // pred_check_branch
      %187 = sbr.rel (%p185) target = $region24
    $region23: #{_lambda_.6} parent=5 // pred_region
      // Predicated region
      $region25: #{_lambda_.6} parent=23 // pred_check
        %p188 = pneg %p42
      $region26: #{_lambda_.6} parent=23 // pred_check_branch
        %190 = sbr.rel (%p188) target = $region28
      $region27: #{_lambda_.6} parent=23 // pred_region
        %s191 = smul.u32 32, %s17
        %p192 = scmp.lt.s32.totalorder %s191, 127
        %s193 = scalar_select %p192, %s191, 127
        %s194 = smul.addr %s193, 8
        %s195 = scalar_lea.vmem %s0, %s194
        %s196 = smul.u32 32, %s17
      $region28: #{_lambda_.6} parent=23 // pred_fallthru
        _
      // Predicated region
      $region29: #{_lambda_.6} parent=23 // pred_check
        %p197 = pneg %p70
      $region30: #{_lambda_.6} parent=23 // pred_check_branch
        %199 = sbr.rel (%p197) target = $region32
      $region31: #{_lambda_.6} parent=23 // pred_region
        %s200 = sadd.s32 %s17, 1
        %s201 = smul.u32 32, %s200
        %p202 = scmp.lt.s32.totalorder %s201, 127
        %s203 = scalar_select %p202, %s201, 127
        %s204 = smul.addr %s203, 8
        %s205 = scalar_lea.vmem %s1, %s204
        %s206 = sadd.s32 %s17, 1
        %s207 = smul.u32 32, %s206
      $region32: #{_lambda_.6} parent=23 // pred_fallthru
        _
    $region24: #{_lambda_.6} parent=5 // pred_fallthru
      _
    %p208 = scmp.le.s32.totalorder 1, %s10
    %p209 = scmp.lt.s32.totalorder %s10, 4
    %p210 = pnand %p208, %p209
    %p211 = pneg %p210
    // Predicated region
    $region33: #{_lambda_.6} parent=5 // pred_check
      _
    $region34: #{_lambda_.6} parent=5 // pred_check_branch
      %213 = sbr.rel (%p210) target = $region36
    $region35: #{_lambda_.6} parent=5 // pred_region
      %s214 = ssub.s32 %s10, 1
      %s215 = smul.u32 32, %s19
      %p216 = scmp.lt.s32.totalorder %s215, 127
      %s217 = scalar_select %p216, %s215, 127
      %s218 = smul.addr %s217, 8
      %s219 = scalar_lea.vmem %s0, %s218
      %p220 = pneg %p48
      %p221 = pneg %p45
      %s222 = sadd.s32 %s19, 1
      %s223 = smul.u32 32, %s222
      %p224 = scmp.lt.s32.totalorder %s223, 127
      %s225 = scalar_select %p224, %s223, 127
      %s226 = smul.addr %s225, 8
      %s227 = scalar_lea.vmem %s1, %s226
      %p228 = pneg %p76
      %p229 = pneg %p73
      %p230 = scmp.lt.s32.totalorder %s20, 0
      %s231 = scalar_select %p230, %s20, 0
      %s232 = smul.addr %s231, 4
      %s233 = scalar_lea.vmem %s2, %s232
      %p234 = pneg %p102
      %p235 = pneg %p99
      %p236 = scmp.lt.s32.totalorder %s20, 0
      %s237 = scalar_select %p236, %s20, 0
      %s238 = scalar_lea.vmem %s3, %s237
      %p239 = pneg %p128
      %p240 = pneg %p125
      %p241 = pneg %p156
      %p242 = pneg %p153
      %s243 = smul.u32 32, %s19
      %p244 = scmp.lt.s32.totalorder %s243, 95
      %s245 = scalar_select %p244, %s243, 95
      %p246 = scmp.lt.s32.totalorder %s20, 0
      %s247 = scalar_select %p246, %s20, 0
      %s248 = sadd.s32 %s247, %s245
      %s249 = smul.addr %s248, 8
      %s250 = scalar_lea.vmem %s4, %s249
      %s251 = smul.u32 32, %s19
      %p252 = scmp.lt.s32.totalorder %s251, 127
      %s253 = scalar_select %p252, %s251, 127
      %s254 = smul.addr %s253, 8
      %s255 = scalar_lea.vmem %s0, %s254
      %s256 = smul.u32 32, %s19
      %s257 = sadd.s32 %s19, 1
      %s258 = smul.u32 32, %s257
      %p259 = scmp.lt.s32.totalorder %s258, 127
      %s260 = scalar_select %p259, %s258, 127
      %s261 = smul.addr %s260, 8
      %s262 = scalar_lea.vmem %s1, %s261
      %s263 = sadd.s32 %s19, 1
      %s264 = smul.u32 32, %s263
      %p265 = scmp.lt.s32.totalorder %s20, 0
      %s266 = scalar_select %p265, %s20, 0
      %s267 = smul.addr %s266, 4
      %s268 = scalar_lea.vmem %s2, %s267
      %p269 = scmp.lt.s32.totalorder %s20, 0
      %s270 = scalar_select %p269, %s20, 0
      %s271 = scalar_lea.vmem %s3, %s270
      %s272 = smul.u32 32, %s19
      %p273 = scmp.lt.s32.totalorder %s272, 95
      %s274 = scalar_select %p273, %s272, 95
      %p275 = scmp.lt.s32.totalorder %s20, 0
      %s276 = scalar_select %p275, %s20, 0
      %s277 = sadd.s32 %s276, %s274
      %s278 = smul.addr %s277, 8
      %s279 = scalar_lea.vmem %s4, %s278
      %s280 = smul.u32 32, %s19
      %282 = vst [vmem:[#allocation2] sm:$0xff] 0.0
      %283 = vst [vmem:[#allocation2 + $0x8] sm:$0xff] 0.0
      %284 = vst [vmem:[#allocation2 + $0x10] sm:$0xff] 0.0
      %285 = vst [vmem:[#allocation2 + $0x18] sm:$0xff] 0.0
      %286 = vst [vmem:[#allocation2 + $0x20] sm:$0xff] 0.0
      %287 = vst [vmem:[#allocation2 + $0x28] sm:$0xff] 0.0
      %288 = vst [vmem:[#allocation2 + $0x30] sm:$0xff] 0.0
      %289 = vst [vmem:[#allocation2 + $0x38] sm:$0xff] 0.0
      %290 = vst [vmem:[#allocation2 + $0x40] sm:$0xff] 0.0
      %291 = vst [vmem:[#allocation2 + $0x48] sm:$0xff] 0.0
      %292 = vst [vmem:[#allocation2 + $0x50] sm:$0xff] 0.0
      %293 = vst [vmem:[#allocation2 + $0x58] sm:$0xff] 0.0
      %294 = vst [vmem:[#allocation2 + $0x60] sm:$0xff] 0.0
      %295 = vst [vmem:[#allocation2 + $0x68] sm:$0xff] 0.0
      %296 = vst [vmem:[#allocation2 + $0x70] sm:$0xff] 0.0
      %297 = vst [vmem:[#allocation2 + $0x78] sm:$0xff] 0.0
      %298 = vst [vmem:[#allocation2 + $0x80] sm:$0xff] 0.0
      %299 = vst [vmem:[#allocation2 + $0x88] sm:$0xff] 0.0
      %300 = vst [vmem:[#allocation2 + $0x90] sm:$0xff] 0.0
      %301 = vst [vmem:[#allocation2 + $0x98] sm:$0xff] 0.0
      %302 = vst [vmem:[#allocation2 + $0xa0] sm:$0xff] 0.0
      %303 = vst [vmem:[#allocation2 + $0xa8] sm:$0xff] 0.0
      %304 = vst [vmem:[#allocation2 + $0xb0] sm:$0xff] 0.0
      %305 = vst [vmem:[#allocation2 + $0xb8] sm:$0xff] 0.0
      %306 = vst [vmem:[#allocation2 + $0xc0] sm:$0xff] 0.0
      %307 = vst [vmem:[#allocation2 + $0xc8] sm:$0xff] 0.0
      %308 = vst [vmem:[#allocation2 + $0xd0] sm:$0xff] 0.0
      %309 = vst [vmem:[#allocation2 + $0xd8] sm:$0xff] 0.0
      %310 = vst [vmem:[#allocation2 + $0xe0] sm:$0xff] 0.0
      %311 = vst [vmem:[#allocation2 + $0xe8] sm:$0xff] 0.0
      %312 = vst [vmem:[#allocation2 + $0xf0] sm:$0xff] 0.0
      %313 = vst [vmem:[#allocation2 + $0xf8] sm:$0xff] 0.0
      %v314 = vld [vmem:[%s268] sm:$0xf]
      %v315 = vld [vmem:[%s268 + $0x4] sm:$0xf]
      %v316 = vld [vmem:[%s268 + $0x8] sm:$0xf]
      %v317 = vld [vmem:[%s268 + $0xc] sm:$0xf]
      %v318 = vld [vmem:[%s255 + $0x25] sm:$0xff]
      %v319 = vld [vmem:[%s255 + $0x2d] sm:$0xff]
      %v320 = vld [vmem:[%s255 + $0x35] sm:$0xff]
      %v321 = vld [vmem:[%s255 + $0x3d] sm:$0xff]
      %v322 = vld [vmem:[%s255 + $0x45] sm:$0xff]
      %v323 = vld [vmem:[%s255 + $0x4d] sm:$0xff]
      %v324 = vld [vmem:[%s255 + $0x55] sm:$0xff]
      %v325 = vld [vmem:[%s255 + $0x5d] sm:$0xff]
      %v326 = vld [vmem:[%s255 + $0x65] sm:$0xff]
      %v327 = vld [vmem:[%s255 + $0x6d] sm:$0xff]
      %v328 = vld [vmem:[%s255 + $0x75] sm:$0xff]
      %v329 = vld [vmem:[%s255 + $0x7d] sm:$0xff]
      %v330 = vld [vmem:[%s255 + $0x85] sm:$0xff]
      %v331 = vld [vmem:[%s255 + $0x8d] sm:$0xff]
      %v332 = vld [vmem:[%s255 + $0x95] sm:$0xff]
      %v333 = vld [vmem:[%s255 + $0x9d] sm:$0xff]
      %v334 = vld [vmem:[%s255 + $0xa5] sm:$0xff]
      %v335 = vld [vmem:[%s255 + $0xad] sm:$0xff]
      %v336 = vld [vmem:[%s255 + $0xb5] sm:$0xff]
      %v337 = vld [vmem:[%s255 + $0xbd] sm:$0xff]
      %v338 = vld [vmem:[%s255 + $0xc5] sm:$0xff]
      %v339 = vld [vmem:[%s255 + $0xcd] sm:$0xff]
      %v340 = vld [vmem:[%s255 + $0xd5] sm:$0xff]
      %v341 = vld [vmem:[%s255 + $0xdd] sm:$0xff]
      %v342 = vld [vmem:[%s255 + $0xe5] sm:$0xff]
      %v343 = vld [vmem:[%s255 + $0xed] sm:$0xff]
      %v344 = vld [vmem:[%s255 + $0xf5] sm:$0xff]
      %v345 = vld [vmem:[%s255 + $0xfd] sm:$0x7]
      %v346 = vpack.c.bf16 %v319, %v318
      %v347 = vpack.c.bf16 %v321, %v320
      %v348 = vpack.c.bf16 %v323, %v322
      %v349 = vpack.c.bf16 %v325, %v324
      %v350 = vpack.c.bf16 %v327, %v326
      %v351 = vpack.c.bf16 %v329, %v328
      %v352 = vpack.c.bf16 %v331, %v330
      %v353 = vpack.c.bf16 %v333, %v332
      %v354 = vpack.c.bf16 %v335, %v334
      %v355 = vpack.c.bf16 %v337, %v336
      %v356 = vpack.c.bf16 %v339, %v338
      %v357 = vpack.c.bf16 %v341, %v340
      %v358 = vpack.c.bf16 %v343, %v342
      %v359 = vpack.c.bf16 %v345, %v344
      %v360 = vld [vmem:[#allocation2] sm:$0xff]
      %v361 = vld [vmem:[#allocation2 + $0x8] sm:$0xff]
      %v362 = vld [vmem:[#allocation2 + $0x10] sm:$0xff]
      %v363 = vld [vmem:[#allocation2 + $0x18] sm:$0xff]
      %v364 = vld [vmem:[#allocation2 + $0x20] sm:$0xff]
      %v365 = vld [vmem:[#allocation2 + $0x28] sm:$0xff]
      %v366 = vld [vmem:[#allocation2 + $0x30] sm:$0xff]
      %v367 = vld [vmem:[#allocation2 + $0x38] sm:$0xff]
      %v368 = vld [vmem:[#allocation2 + $0x40] sm:$0xff]
      %v369 = vld [vmem:[#allocation2 + $0x48] sm:$0xff]
      %v370 = vld [vmem:[#allocation2 + $0x50] sm:$0xff]
      %v371 = vld [vmem:[#allocation2 + $0x58] sm:$0xff]
      %v372 = vld [vmem:[#allocation2 + $0x60] sm:$0xff]
      %v373 = vld [vmem:[#allocation2 + $0x68] sm:$0xff]
      %v374 = vld [vmem:[#allocation2 + $0x70] sm:$0xff]
      %v375 = vld [vmem:[#allocation2 + $0x78] sm:$0xff]
      %v376 = vld [vmem:[#allocation2 + $0x80] sm:$0xff]
      %v377 = vld [vmem:[#allocation2 + $0x88] sm:$0xff]
      %v378 = vld [vmem:[#allocation2 + $0x90] sm:$0xff]
      %v379 = vld [vmem:[#allocation2 + $0x98] sm:$0xff]
      %v380 = vld [vmem:[#allocation2 + $0xa0] sm:$0xff]
      %v381 = vld [vmem:[#allocation2 + $0xa8] sm:$0xff]
      %v382 = vld [vmem:[#allocation2 + $0xb0] sm:$0xff]
      %v383 = vld [vmem:[#allocation2 + $0xb8] sm:$0xff]
      %v384 = vld [vmem:[#allocation2 + $0xc0] sm:$0xff]
      %v385 = vld [vmem:[#allocation2 + $0xc8] sm:$0xff]
      %v386 = vld [vmem:[#allocation2 + $0xd0] sm:$0xff]
      %v387 = vld [vmem:[#allocation2 + $0xd8] sm:$0x7]
      %v392 = vunpack.c.l.b16 %v314
      %v393 = vunpack.c.l.b16 %v315
      %v394 = vunpack.c.l.b16 %v316
      %v395 = vunpack.c.l.b16 %v317
      %v396 = vpack.c.b16 %v393, %v392
      %v397 = vpack.c.b16 %v395, %v394
      %vm400 = vcmask 261120
      %v402 = vsel %vm400, %v346, 0
      %v405 = vsel %vm400, %v347, 0
      %v408 = vsel %vm400, %v348, 0
      %v411 = vsel %vm400, %v349, 0
      %v414 = vsel %vm400, %v350, 0
      %v417 = vsel %vm400, %v351, 0
      %v420 = vsel %vm400, %v352, 0
      %v423 = vsel %vm400, %v353, 0
      %v426 = vsel %vm400, %v354, 0
      %v429 = vsel %vm400, %v355, 0
      %v432 = vsel %vm400, %v356, 0
      %v435 = vsel %vm400, %v357, 0
      %v438 = vsel %vm400, %v358, 0
      %v441 = vsel %vm400, %v359, 0
      %443 = vmatpush.bf16.msra.mxu0 0
      %444 = vmatpush.bf16.msra.mxu0 0
      %445 = vmatpush.bf16.msra.mxu0 0
      %446 = vmatpush.bf16.msra.mxu0 0
      %447 = vmatpush.bf16.msra.mxu0 0
      %448 = vmatpush.bf16.msra.mxu0 0
      %449 = vmatpush.bf16.msra.mxu0 %v397
      %450 = vmatpush.bf16.msra.mxu0 %v396
      %451 = vmatmul.bf16.gmra.mxu0 %v402
      %v452 = vpop.f32.mrf.mxu0
      %v453 = vadd.f32 0.0, %v452
      %v454 = vpop.f32.mrf.mxu0
      %v455 = vadd.f32 0.0, %v454
      %456 = vmatmul.bf16.gmra.mxu0 %v405
      %v457 = vpop.f32.mrf.mxu0
      %v458 = vadd.f32 0.0, %v457
      %v459 = vpop.f32.mrf.mxu0
      %v460 = vadd.f32 0.0, %v459
      %461 = vmatmul.bf16.gmra.mxu0 %v408
      %v462 = vpop.f32.mrf.mxu0
      %v463 = vadd.f32 0.0, %v462
      %v464 = vpop.f32.mrf.mxu0
      %v465 = vadd.f32 0.0, %v464
      %466 = vmatmul.bf16.gmra.mxu0 %v411
      %v467 = vpop.f32.mrf.mxu0
      %v468 = vadd.f32 0.0, %v467
      %v469 = vpop.f32.mrf.mxu0
      %v470 = vadd.f32 0.0, %v469
      %471 = vmatmul.bf16.gmra.mxu0 %v414
      %v472 = vpop.f32.mrf.mxu0
      %v473 = vadd.f32 0.0, %v472
      %v474 = vpop.f32.mrf.mxu0
      %v475 = vadd.f32 0.0, %v474
      %476 = vmatmul.bf16.gmra.mxu0 %v417
      %v477 = vpop.f32.mrf.mxu0
      %v478 = vadd.f32 0.0, %v477
      %v479 = vpop.f32.mrf.mxu0
      %v480 = vadd.f32 0.0, %v479
      %481 = vmatmul.bf16.gmra.mxu0 %v420
      %v482 = vpop.f32.mrf.mxu0
      %v483 = vadd.f32 0.0, %v482
      %v484 = vpop.f32.mrf.mxu0
      %v485 = vadd.f32 0.0, %v484
      %486 = vmatmul.bf16.gmra.mxu0 %v423
      %v487 = vpop.f32.mrf.mxu0
      %v488 = vadd.f32 0.0, %v487
      %v489 = vpop.f32.mrf.mxu0
      %v490 = vadd.f32 0.0, %v489
      %491 = vmatmul.bf16.gmra.mxu0 %v426
      %v492 = vpop.f32.mrf.mxu0
      %v493 = vadd.f32 0.0, %v492
      %v494 = vpop.f32.mrf.mxu0
      %v495 = vadd.f32 0.0, %v494
      %496 = vmatmul.bf16.gmra.mxu0 %v429
      %v497 = vpop.f32.mrf.mxu0
      %v498 = vadd.f32 0.0, %v497
      %v499 = vpop.f32.mrf.mxu0
      %v500 = vadd.f32 0.0, %v499
      %501 = vmatmul.bf16.gmra.mxu0 %v432
      %v502 = vpop.f32.mrf.mxu0
      %v503 = vadd.f32 0.0, %v502
      %v504 = vpop.f32.mrf.mxu0
      %v505 = vadd.f32 0.0, %v504
      %506 = vmatmul.bf16.gmra.mxu0 %v435
      %v507 = vpop.f32.mrf.mxu0
      %v508 = vadd.f32 0.0, %v507
      %v509 = vpop.f32.mrf.mxu0
      %v510 = vadd.f32 0.0, %v509
      %511 = vmatmul.bf16.gmra.mxu0 %v438
      %v512 = vpop.f32.mrf.mxu0
      %v513 = vadd.f32 0.0, %v512
      %v514 = vpop.f32.mrf.mxu0
      %v515 = vadd.f32 0.0, %v514
      %516 = vmatmul.bf16.gmra.mxu0 %v441
      %v517 = vpop.f32.mrf.mxu0
      %v518 = vadd.f32 0.0, %v517
      %v519 = vpop.f32.mrf.mxu0
      %v520 = vadd.f32 0.0, %v519
      %521 = vdwg.mxu0
      %v522 = vadd.f32 %v360, %v453
      %v523 = vadd.f32 %v361, %v455
      %v524 = vadd.f32 %v362, %v458
      %v525 = vadd.f32 %v363, %v460
      %v526 = vadd.f32 %v364, %v463
      %v527 = vadd.f32 %v365, %v465
      %v528 = vadd.f32 %v366, %v468
      %v529 = vadd.f32 %v367, %v470
      %v530 = vadd.f32 %v368, %v473
      %v531 = vadd.f32 %v369, %v475
      %v532 = vadd.f32 %v370, %v478
      %v533 = vadd.f32 %v371, %v480
      %v534 = vadd.f32 %v372, %v483
      %v535 = vadd.f32 %v373, %v485
      %v536 = vadd.f32 %v374, %v488
      %v537 = vadd.f32 %v375, %v490
      %v538 = vadd.f32 %v376, %v493
      %v539 = vadd.f32 %v377, %v495
      %v540 = vadd.f32 %v378, %v498
      %v541 = vadd.f32 %v379, %v500
      %v542 = vadd.f32 %v380, %v503
      %v543 = vadd.f32 %v381, %v505
      %v544 = vadd.f32 %v382, %v508
      %v545 = vadd.f32 %v383, %v510
      %v546 = vadd.f32 %v384, %v513
      %v547 = vadd.f32 %v385, %v515
      %v548 = vadd.f32 %v386, %v518
      %v549 = vadd.f32 %v387, %v520
      %550 = vst [vmem:[#allocation2] sm:$0xff] %v522
      %551 = vst [vmem:[#allocation2 + $0x8] sm:$0xff] %v523
      %552 = vst [vmem:[#allocation2 + $0x10] sm:$0xff] %v524
      %553 = vst [vmem:[#allocation2 + $0x18] sm:$0xff] %v525
      %554 = vst [vmem:[#allocation2 + $0x20] sm:$0xff] %v526
      %555 = vst [vmem:[#allocation2 + $0x28] sm:$0xff] %v527
      %556 = vst [vmem:[#allocation2 + $0x30] sm:$0xff] %v528
      %557 = vst [vmem:[#allocation2 + $0x38] sm:$0xff] %v529
      %558 = vst [vmem:[#allocation2 + $0x40] sm:$0xff] %v530
      %559 = vst [vmem:[#allocation2 + $0x48] sm:$0xff] %v531
      %560 = vst [vmem:[#allocation2 + $0x50] sm:$0xff] %v532
      %561 = vst [vmem:[#allocation2 + $0x58] sm:$0xff] %v533
      %562 = vst [vmem:[#allocation2 + $0x60] sm:$0xff] %v534
      %563 = vst [vmem:[#allocation2 + $0x68] sm:$0xff] %v535
      %564 = vst [vmem:[#allocation2 + $0x70] sm:$0xff] %v536
      %565 = vst [vmem:[#allocation2 + $0x78] sm:$0xff] %v537
      %566 = vst [vmem:[#allocation2 + $0x80] sm:$0xff] %v538
      %567 = vst [vmem:[#allocation2 + $0x88] sm:$0xff] %v539
      %568 = vst [vmem:[#allocation2 + $0x90] sm:$0xff] %v540
      %569 = vst [vmem:[#allocation2 + $0x98] sm:$0xff] %v541
      %570 = vst [vmem:[#allocation2 + $0xa0] sm:$0xff] %v542
      %571 = vst [vmem:[#allocation2 + $0xa8] sm:$0xff] %v543
      %572 = vst [vmem:[#allocation2 + $0xb0] sm:$0xff] %v544
      %573 = vst [vmem:[#allocation2 + $0xb8] sm:$0xff] %v545
      %574 = vst [vmem:[#allocation2 + $0xc0] sm:$0xff] %v546
      %575 = vst [vmem:[#allocation2 + $0xc8] sm:$0xff] %v547
      %576 = vst [vmem:[#allocation2 + $0xd0] sm:$0xff] %v548
      %577 = vst [vmem:[#allocation2 + $0xd8] sm:$0x7] %v549
      %v578 = vld [vmem:[%s262] sm:$0xff]
      %v579 = vld [vmem:[%s262 + $0x8] sm:$0xff]
      %v580 = vld [vmem:[%s262 + $0x10] sm:$0xff]
      %v581 = vld [vmem:[%s262 + $0x18] sm:$0xff]
      %v582 = vld [vmem:[%s262 + $0x20] sm:$0x1f]
      %v583 = vpack.c.bf16 %v579, %v578
      %v584 = vpack.c.bf16 %v581, %v580
      %v585 = vpack.c.bf16 %v582, %v582
      %v586 = vld [vmem:[#allocation2 + $0xdb] sm:$0xff]
      %v587 = vld [vmem:[#allocation2 + $0xe3] sm:$0xff]
      %v588 = vld [vmem:[#allocation2 + $0xeb] sm:$0xff]
      %v589 = vld [vmem:[#allocation2 + $0xf3] sm:$0xff]
      %v590 = vld [vmem:[#allocation2 + $0xfb] sm:$0x1f]
      %v592 = vsel %vm400, %v583, 0
      %v595 = vsel %vm400, %v584, 0
      %v598 = vsel %vm400, %v585, 0
      %600 = vmatpush.bf16.msra.mxu0 0
      %601 = vmatpush.bf16.msra.mxu0 0
      %602 = vmatpush.bf16.msra.mxu0 0
      %603 = vmatpush.bf16.msra.mxu0 0
      %604 = vmatpush.bf16.msra.mxu0 0
      %605 = vmatpush.bf16.msra.mxu0 0
      %606 = vmatpush.bf16.msra.mxu0 %v397
      %607 = vmatpush.bf16.msra.mxu0 %v396
      %608 = vmatmul.bf16.gmra.mxu0 %v592
      %v609 = vpop.f32.mrf.mxu0
      %v610 = vadd.f32 0.0, %v609
      %v611 = vpop.f32.mrf.mxu0
      %v612 = vadd.f32 0.0, %v611
      %613 = vmatmul.bf16.gmra.mxu0 %v595
      %v614 = vpop.f32.mrf.mxu0
      %v615 = vadd.f32 0.0, %v614
      %v616 = vpop.f32.mrf.mxu0
      %v617 = vadd.f32 0.0, %v616
      %618 = vmatmul.bf16.gmra.mxu0 %v598
      %v619 = vpop.f32.mrf.mxu0
      %v620 = vadd.f32 0.0, %v619
      %v621 = vpop.f32.mrf.mxu0
      %622 = vdwg.mxu0
      %v623 = vadd.f32 %v586, %v610
      %v624 = vadd.f32 %v587, %v612
      %v625 = vadd.f32 %v588, %v615
      %v626 = vadd.f32 %v589, %v617
      %v627 = vadd.f32 %v590, %v620
      %628 = vst [vmem:[#allocation2 + $0xdb] sm:$0xff] %v623
      %629 = vst [vmem:[#allocation2 + $0xe3] sm:$0xff] %v624
      %630 = vst [vmem:[#allocation2 + $0xeb] sm:$0xff] %v625
      %631 = vst [vmem:[#allocation2 + $0xf3] sm:$0xff] %v626
      %632 = vst [vmem:[#allocation2 + $0xfb] sm:$0x1f] %v627
      %s633 = scalar_lea.vmem %s268, 16
      %v634 = vld [vmem:[%s633] sm:$0xf]
      %v635 = vld [vmem:[%s633 + $0x4] sm:$0xf]
      %v636 = vld [vmem:[%s633 + $0x8] sm:$0xf]
      %v637 = vld [vmem:[%s633 + $0xc] sm:$0xf]
      %v638 = vld [vmem:[%s255 + $0x24] sm:$0xff]
      %v639 = vld [vmem:[%s255 + $0x2c] sm:$0xff]
      %v640 = vld [vmem:[%s255 + $0x34] sm:$0xff]
      %v641 = vld [vmem:[%s255 + $0x3c] sm:$0xff]
      %v642 = vld [vmem:[%s255 + $0x44] sm:$0xff]
      %v643 = vld [vmem:[%s255 + $0x4c] sm:$0xff]
      %v644 = vld [vmem:[%s255 + $0x54] sm:$0xff]
      %v645 = vld [vmem:[%s255 + $0x5c] sm:$0xff]
      %v646 = vld [vmem:[%s255 + $0x64] sm:$0xff]
      %v647 = vld [vmem:[%s255 + $0x6c] sm:$0xff]
      %v648 = vld [vmem:[%s255 + $0x74] sm:$0xff]
      %v649 = vld [vmem:[%s255 + $0x7c] sm:$0xff]
      %v650 = vld [vmem:[%s255 + $0x84] sm:$0xff]
      %v651 = vld [vmem:[%s255 + $0x8c] sm:$0xff]
      %v652 = vld [vmem:[%s255 + $0x94] sm:$0xff]
      %v653 = vld [vmem:[%s255 + $0x9c] sm:$0xff]
      %v654 = vld [vmem:[%s255 + $0xa4] sm:$0xff]
      %v655 = vld [vmem:[%s255 + $0xac] sm:$0xff]
      %v656 = vld [vmem:[%s255 + $0xb4] sm:$0xff]
      %v657 = vld [vmem:[%s255 + $0xbc] sm:$0xff]
      %v658 = vld [vmem:[%s255 + $0xc4] sm:$0xff]
      %v659 = vld [vmem:[%s255 + $0xcc] sm:$0xff]
      %v660 = vld [vmem:[%s255 + $0xd4] sm:$0xff]
      %v661 = vld [vmem:[%s255 + $0xdc] sm:$0xff]
      %v662 = vld [vmem:[%s255 + $0xe4] sm:$0xff]
      %v663 = vld [vmem:[%s255 + $0xec] sm:$0xff]
      %v664 = vld [vmem:[%s255 + $0xf4] sm:$0xff]
      %v665 = vld [vmem:[%s255 + $0xfc] sm:$0xf]
      %v666 = vpack.c.bf16 %v639, %v638
      %v667 = vpack.c.bf16 %v641, %v640
      %v668 = vpack.c.bf16 %v643, %v642
      %v669 = vpack.c.bf16 %v645, %v644
      %v670 = vpack.c.bf16 %v647, %v646
      %v671 = vpack.c.bf16 %v649, %v648
      %v672 = vpack.c.bf16 %v651, %v650
      %v673 = vpack.c.bf16 %v653, %v652
      %v674 = vpack.c.bf16 %v655, %v654
      %v675 = vpack.c.bf16 %v657, %v656
      %v676 = vpack.c.bf16 %v659, %v658
      %v677 = vpack.c.bf16 %v661, %v660
      %v678 = vpack.c.bf16 %v663, %v662
      %v679 = vpack.c.bf16 %v665, %v664
      %v680 = vld [vmem:[#allocation2] sm:$0xff]
      %v681 = vld [vmem:[#allocation2 + $0x8] sm:$0xff]
      %v682 = vld [vmem:[#allocation2 + $0x10] sm:$0xff]
      %v683 = vld [vmem:[#allocation2 + $0x18] sm:$0xff]
      %v684 = vld [vmem:[#allocation2 + $0x20] sm:$0xff]
      %v685 = vld [vmem:[#allocation2 + $0x28] sm:$0xff]
      %v686 = vld [vmem:[#allocation2 + $0x30] sm:$0xff]
      %v687 = vld [vmem:[#allocation2 + $0x38] sm:$0xff]
      %v688 = vld [vmem:[#allocation2 + $0x40] sm:$0xff]
      %v689 = vld [vmem:[#allocation2 + $0x48] sm:$0xff]
      %v690 = vld [vmem:[#allocation2 + $0x50] sm:$0xff]
      %v691 = vld [vmem:[#allocation2 + $0x58] sm:$0xff]
      %v692 = vld [vmem:[#allocation2 + $0x60] sm:$0xff]
      %v693 = vld [vmem:[#allocation2 + $0x68] sm:$0xff]
      %v694 = vld [vmem:[#allocation2 + $0x70] sm:$0xff]
      %v695 = vld [vmem:[#allocation2 + $0x78] sm:$0xff]
      %v696 = vld [vmem:[#allocation2 + $0x80] sm:$0xff]
      %v697 = vld [vmem:[#allocation2 + $0x88] sm:$0xff]
      %v698 = vld [vmem:[#allocation2 + $0x90] sm:$0xff]
      %v699 = vld [vmem:[#allocation2 + $0x98] sm:$0xff]
      %v700 = vld [vmem:[#allocation2 + $0xa0] sm:$0xff]
      %v701 = vld [vmem:[#allocation2 + $0xa8] sm:$0xff]
      %v702 = vld [vmem:[#allocation2 + $0xb0] sm:$0xff]
      %v703 = vld [vmem:[#allocation2 + $0xb8] sm:$0xff]
      %v704 = vld [vmem:[#allocation2 + $0xc0] sm:$0xff]
      %v705 = vld [vmem:[#allocation2 + $0xc8] sm:$0xff]
      %v706 = vld [vmem:[#allocation2 + $0xd0] sm:$0xff]
      %v707 = vld [vmem:[#allocation2 + $0xd8] sm:$0xf]
      %v712 = vunpack.c.l.b16 %v634
      %v713 = vunpack.c.l.b16 %v635
      %v714 = vunpack.c.l.b16 %v636
      %v715 = vunpack.c.l.b16 %v637
      %v716 = vpack.c.b16 %v713, %v712
      %v717 = vpack.c.b16 %v715, %v714
      %v721 = vsel %vm400, %v666, 0
      %v724 = vsel %vm400, %v667, 0
      %v727 = vsel %vm400, %v668, 0
      %v730 = vsel %vm400, %v669, 0
      %v733 = vsel %vm400, %v670, 0
      %v736 = vsel %vm400, %v671, 0
      %v739 = vsel %vm400, %v672, 0
      %v742 = vsel %vm400, %v673, 0
      %v745 = vsel %vm400, %v674, 0
      %v748 = vsel %vm400, %v675, 0
      %v751 = vsel %vm400, %v676, 0
      %v754 = vsel %vm400, %v677, 0
      %v757 = vsel %vm400, %v678, 0
      %v760 = vsel %vm400, %v679, 0
      %762 = vmatpush.bf16.msra.mxu0 0
      %763 = vmatpush.bf16.msra.mxu0 0
      %764 = vmatpush.bf16.msra.mxu0 0
      %765 = vmatpush.bf16.msra.mxu0 0
      %766 = vmatpush.bf16.msra.mxu0 0
      %767 = vmatpush.bf16.msra.mxu0 0
      %768 = vmatpush.bf16.msra.mxu0 %v717
      %769 = vmatpush.bf16.msra.mxu0 %v716
      %770 = vmatmul.bf16.gmra.mxu0 %v721
      %v771 = vpop.f32.mrf.mxu0
      %v772 = vadd.f32 0.0, %v771
      %v773 = vpop.f32.mrf.mxu0
      %v774 = vadd.f32 0.0, %v773
      %775 = vmatmul.bf16.gmra.mxu0 %v724
      %v776 = vpop.f32.mrf.mxu0
      %v777 = vadd.f32 0.0, %v776
      %v778 = vpop.f32.mrf.mxu0
      %v779 = vadd.f32 0.0, %v778
      %780 = vmatmul.bf16.gmra.mxu0 %v727
      %v781 = vpop.f32.mrf.mxu0
      %v782 = vadd.f32 0.0, %v781
      %v783 = vpop.f32.mrf.mxu0
      %v784 = vadd.f32 0.0, %v783
      %785 = vmatmul.bf16.gmra.mxu0 %v730
      %v786 = vpop.f32.mrf.mxu0
      %v787 = vadd.f32 0.0, %v786
      %v788 = vpop.f32.mrf.mxu0
      %v789 = vadd.f32 0.0, %v788
      %790 = vmatmul.bf16.gmra.mxu0 %v733
      %v791 = vpop.f32.mrf.mxu0
      %v792 = vadd.f32 0.0, %v791
      %v793 = vpop.f32.mrf.mxu0
      %v794 = vadd.f32 0.0, %v793
      %795 = vmatmul.bf16.gmra.mxu0 %v736
      %v796 = vpop.f32.mrf.mxu0
      %v797 = vadd.f32 0.0, %v796
      %v798 = vpop.f32.mrf.mxu0
      %v799 = vadd.f32 0.0, %v798
      %800 = vmatmul.bf16.gmra.mxu0 %v739
      %v801 = vpop.f32.mrf.mxu0
      %v802 = vadd.f32 0.0, %v801
      %v803 = vpop.f32.mrf.mxu0
      %v804 = vadd.f32 0.0, %v803
      %805 = vmatmul.bf16.gmra.mxu0 %v742
      %v806 = vpop.f32.mrf.mxu0
      %v807 = vadd.f32 0.0, %v806
      %v808 = vpop.f32.mrf.mxu0
      %v809 = vadd.f32 0.0, %v808
      %810 = vmatmul.bf16.gmra.mxu0 %v745
      %v811 = vpop.f32.mrf.mxu0
      %v812 = vadd.f32 0.0, %v811
      %v813 = vpop.f32.mrf.mxu0
      %v814 = vadd.f32 0.0, %v813
      %815 = vmatmul.bf16.gmra.mxu0 %v748
      %v816 = vpop.f32.mrf.mxu0
      %v817 = vadd.f32 0.0, %v816
      %v818 = vpop.f32.mrf.mxu0
      %v819 = vadd.f32 0.0, %v818
      %820 = vmatmul.bf16.gmra.mxu0 %v751
      %v821 = vpop.f32.mrf.mxu0
      %v822 = vadd.f32 0.0, %v821
      %v823 = vpop.f32.mrf.mxu0
      %v824 = vadd.f32 0.0, %v823
      %825 = vmatmul.bf16.gmra.mxu0 %v754
      %v826 = vpop.f32.mrf.mxu0
      %v827 = vadd.f32 0.0, %v826
      %v828 = vpop.f32.mrf.mxu0
      %v829 = vadd.f32 0.0, %v828
      %830 = vmatmul.bf16.gmra.mxu0 %v757
      %v831 = vpop.f32.mrf.mxu0
      %v832 = vadd.f32 0.0, %v831
      %v833 = vpop.f32.mrf.mxu0
      %v834 = vadd.f32 0.0, %v833
      %835 = vmatmul.bf16.gmra.mxu0 %v760
      %v836 = vpop.f32.mrf.mxu0
      %v837 = vadd.f32 0.0, %v836
      %v838 = vpop.f32.mrf.mxu0
      %v839 = vadd.f32 0.0, %v838
      %840 = vdwg.mxu0
      %v841 = vadd.f32 %v680, %v772
      %v842 = vadd.f32 %v681, %v774
      %v843 = vadd.f32 %v682, %v777
      %v844 = vadd.f32 %v683, %v779
      %v845 = vadd.f32 %v684, %v782
      %v846 = vadd.f32 %v685, %v784
      %v847 = vadd.f32 %v686, %v787
      %v848 = vadd.f32 %v687, %v789
      %v849 = vadd.f32 %v688, %v792
      %v850 = vadd.f32 %v689, %v794
      %v851 = vadd.f32 %v690, %v797
      %v852 = vadd.f32 %v691, %v799
      %v853 = vadd.f32 %v692, %v802
      %v854 = vadd.f32 %v693, %v804
      %v855 = vadd.f32 %v694, %v807
      %v856 = vadd.f32 %v695, %v809
      %v857 = vadd.f32 %v696, %v812
      %v858 = vadd.f32 %v697, %v814
      %v859 = vadd.f32 %v698, %v817
      %v860 = vadd.f32 %v699, %v819
      %v861 = vadd.f32 %v700, %v822
      %v862 = vadd.f32 %v701, %v824
      %v863 = vadd.f32 %v702, %v827
      %v864 = vadd.f32 %v703, %v829
      %v865 = vadd.f32 %v704, %v832
      %v866 = vadd.f32 %v705, %v834
      %v867 = vadd.f32 %v706, %v837
      %v868 = vadd.f32 %v707, %v839
      %869 = vst [vmem:[#allocation2] sm:$0xff] %v841
      %870 = vst [vmem:[#allocation2 + $0x8] sm:$0xff] %v842
      %871 = vst [vmem:[#allocation2 + $0x10] sm:$0xff] %v843
      %872 = vst [vmem:[#allocation2 + $0x18] sm:$0xff] %v844
      %873 = vst [vmem:[#allocation2 + $0x20] sm:$0xff] %v845
      %874 = vst [vmem:[#allocation2 + $0x28] sm:$0xff] %v846
      %875 = vst [vmem:[#allocation2 + $0x30] sm:$0xff] %v847
      %876 = vst [vmem:[#allocation2 + $0x38] sm:$0xff] %v848
      %877 = vst [vmem:[#allocation2 + $0x40] sm:$0xff] %v849
      %878 = vst [vmem:[#allocation2 + $0x48] sm:$0xff] %v850
      %879 = vst [vmem:[#allocation2 + $0x50] sm:$0xff] %v851
      %880 = vst [vmem:[#allocation2 + $0x58] sm:$0xff] %v852
      %881 = vst [vmem:[#allocation2 + $0x60] sm:$0xff] %v853
      %882 = vst [vmem:[#allocation2 + $0x68] sm:$0xff] %v854
      %883 = vst [vmem:[#allocation2 + $0x70] sm:$0xff] %v855
      %884 = vst [vmem:[#allocation2 + $0x78] sm:$0xff] %v856
      %885 = vst [vmem:[#allocation2 + $0x80] sm:$0xff] %v857
      %886 = vst [vmem:[#allocation2 + $0x88] sm:$0xff] %v858
      %887 = vst [vmem:[#allocation2 + $0x90] sm:$0xff] %v859
      %888 = vst [vmem:[#allocation2 + $0x98] sm:$0xff] %v860
      %889 = vst [vmem:[#allocation2 + $0xa0] sm:$0xff] %v861
      %890 = vst [vmem:[#allocation2 + $0xa8] sm:$0xff] %v862
      %891 = vst [vmem:[#allocation2 + $0xb0] sm:$0xff] %v863
      %892 = vst [vmem:[#allocation2 + $0xb8] sm:$0xff] %v864
      %893 = vst [vmem:[#allocation2 + $0xc0] sm:$0xff] %v865
      %894 = vst [vmem:[#allocation2 + $0xc8] sm:$0xff] %v866
      %895 = vst [vmem:[#allocation2 + $0xd0] sm:$0xff] %v867
      %896 = vst [vmem:[#allocation2 + $0xd8] sm:$0xf] %v868
      %v897 = vld [vmem:[%s262] sm:$0xff]
      %v898 = vld [vmem:[%s262 + $0x8] sm:$0xff]
      %v899 = vld [vmem:[%s262 + $0x10] sm:$0xff]
      %v900 = vld [vmem:[%s262 + $0x18] sm:$0xff]
      %v901 = vld [vmem:[%s262 + $0x20] sm:$0xf]
      %v902 = vpack.c.bf16 %v898, %v897
      %v903 = vpack.c.bf16 %v900, %v899
      %v904 = vpack.c.bf16 %v901, %v901
      %v905 = vld [vmem:[#allocation2 + $0xdc] sm:$0xff]
      %v906 = vld [vmem:[#allocation2 + $0xe4] sm:$0xff]
      %v907 = vld [vmem:[#allocation2 + $0xec] sm:$0xff]
      %v908 = vld [vmem:[#allocation2 + $0xf4] sm:$0xff]
      %v909 = vld [vmem:[#allocation2 + $0xfc] sm:$0xf]
      %v911 = vsel %vm400, %v902, 0
      %v914 = vsel %vm400, %v903, 0
      %v917 = vsel %vm400, %v904, 0
      %919 = vmatpush.bf16.msra.mxu0 0
      %920 = vmatpush.bf16.msra.mxu0 0
      %921 = vmatpush.bf16.msra.mxu0 0
      %922 = vmatpush.bf16.msra.mxu0 0
      %923 = vmatpush.bf16.msra.mxu0 0
      %924 = vmatpush.bf16.msra.mxu0 0
      %925 = vmatpush.bf16.msra.mxu0 %v717
      %926 = vmatpush.bf16.msra.mxu0 %v716
      %927 = vmatmul.bf16.gmra.mxu0 %v911
      %v928 = vpop.f32.mrf.mxu0
      %v929 = vadd.f32 0.0, %v928
      %v930 = vpop.f32.mrf.mxu0
      %v931 = vadd.f32 0.0, %v930
      %932 = vmatmul.bf16.gmra.mxu0 %v914
      %v933 = vpop.f32.mrf.mxu0
      %v934 = vadd.f32 0.0, %v933
      %v935 = vpop.f32.mrf.mxu0
      %v936 = vadd.f32 0.0, %v935
      %937 = vmatmul.bf16.gmra.mxu0 %v917
      %v938 = vpop.f32.mrf.mxu0
      %v939 = vadd.f32 0.0, %v938
      %v940 = vpop.f32.mrf.mxu0
      %941 = vdwg.mxu0
      %v942 = vadd.f32 %v905, %v929
      %v943 = vadd.f32 %v906, %v931
      %v944 = vadd.f32 %v907, %v934
      %v945 = vadd.f32 %v908, %v936
      %v946 = vadd.f32 %v909, %v939
      %947 = vst [vmem:[#allocation2 + $0xdc] sm:$0xff] %v942
      %948 = vst [vmem:[#allocation2 + $0xe4] sm:$0xff] %v943
      %949 = vst [vmem:[#allocation2 + $0xec] sm:$0xff] %v944
      %950 = vst [vmem:[#allocation2 + $0xf4] sm:$0xff] %v945
      %951 = vst [vmem:[#allocation2 + $0xfc] sm:$0xf] %v946
      %s952 = scalar_lea.vmem %s268, 32
      %v953 = vld [vmem:[%s952] sm:$0xf]
      %v954 = vld [vmem:[%s952 + $0x4] sm:$0xf]
      %v955 = vld [vmem:[%s952 + $0x8] sm:$0xf]
      %v956 = vld [vmem:[%s952 + $0xc] sm:$0xf]
      %v957 = vld [vmem:[%s255 + $0x13] sm:$0xff]
      %v958 = vld [vmem:[%s255 + $0x1b] sm:$0xff]
      %v959 = vld [vmem:[%s255 + $0x23] sm:$0xff]
      %v960 = vld [vmem:[%s255 + $0x2b] sm:$0xff]
      %v961 = vld [vmem:[%s255 + $0x33] sm:$0xff]
      %v962 = vld [vmem:[%s255 + $0x3b] sm:$0xff]
      %v963 = vld [vmem:[%s255 + $0x43] sm:$0xff]
      %v964 = vld [vmem:[%s255 + $0x4b] sm:$0xff]
      %v965 = vld [vmem:[%s255 + $0x53] sm:$0xff]
      %v966 = vld [vmem:[%s255 + $0x5b] sm:$0xff]
      %v967 = vld [vmem:[%s255 + $0x63] sm:$0xff]
      %v968 = vld [vmem:[%s255 + $0x6b] sm:$0xff]
      %v969 = vld [vmem:[%s255 + $0x73] sm:$0xff]
      %v970 = vld [vmem:[%s255 + $0x7b] sm:$0xff]
      %v971 = vld [vmem:[%s255 + $0x83] sm:$0xff]
      %v972 = vld [vmem:[%s255 + $0x8b] sm:$0xff]
      %v973 = vld [vmem:[%s255 + $0x93] sm:$0xff]
      %v974 = vld [vmem:[%s255 + $0x9b] sm:$0xff]
      %v975 = vld [vmem:[%s255 + $0xa3] sm:$0xff]
      %v976 = vld [vmem:[%s255 + $0xab] sm:$0xff]
      %v977 = vld [vmem:[%s255 + $0xb3] sm:$0xff]
      %v978 = vld [vmem:[%s255 + $0xbb] sm:$0xff]
      %v979 = vld [vmem:[%s255 + $0xc3] sm:$0xff]
      %v980 = vld [vmem:[%s255 + $0xcb] sm:$0xff]
      %v981 = vld [vmem:[%s255 + $0xd3] sm:$0xff]
      %v982 = vld [vmem:[%s255 + $0xdb] sm:$0xff]
      %v983 = vld [vmem:[%s255 + $0xe3] sm:$0xff]
      %v984 = vld [vmem:[%s255 + $0xeb] sm:$0xff]
      %v985 = vld [vmem:[%s255 + $0xf3] sm:$0xff]
      %v986 = vld [vmem:[%s255 + $0xfb] sm:$0x1f]
      %v987 = vpack.c.bf16 %v958, %v957
      %v988 = vpack.c.bf16 %v960, %v959
      %v989 = vpack.c.bf16 %v962, %v961
      %v990 = vpack.c.bf16 %v964, %v963
      %v991 = vpack.c.bf16 %v966, %v965
      %v992 = vpack.c.bf16 %v968, %v967
      %v993 = vpack.c.bf16 %v970, %v969
      %v994 = vpack.c.bf16 %v972, %v971
      %v995 = vpack.c.bf16 %v974, %v973
      %v996 = vpack.c.bf16 %v976, %v975
      %v997 = vpack.c.bf16 %v978, %v977
      %v998 = vpack.c.bf16 %v980, %v979
      %v999 = vpack.c.bf16 %v982, %v981
      %v1000 = vpack.c.bf16 %v984, %v983
      %v1001 = vpack.c.bf16 %v986, %v985
      %v1002 = vld [vmem:[#allocation2] sm:$0xff]
      %v1003 = vld [vmem:[#allocation2 + $0x8] sm:$0xff]
      %v1004 = vld [vmem:[#allocation2 + $0x10] sm:$0xff]
      %v1005 = vld [vmem:[#allocation2 + $0x18] sm:$0xff]
      %v1006 = vld [vmem:[#allocation2 + $0x20] sm:$0xff]
      %v1007 = vld [vmem:[#allocation2 + $0x28] sm:$0xff]
      %v1008 = vld [vmem:[#allocation2 + $0x30] sm:$0xff]
      %v1009 = vld [vmem:[#allocation2 + $0x38] sm:$0xff]
      %v1010 = vld [vmem:[#allocation2 + $0x40] sm:$0xff]
      %v1011 = vld [vmem:[#allocation2 + $0x48] sm:$0xff]
      %v1012 = vld [vmem:[#allocation2 + $0x50] sm:$0xff]
      %v1013 = vld [vmem:[#allocation2 + $0x58] sm:$0xff]
      %v1014 = vld [vmem:[#allocation2 + $0x60] sm:$0xff]
      %v1015 = vld [vmem:[#allocation2 + $0x68] sm:$0xff]
      %v1016 = vld [vmem:[#allocation2 + $0x70] sm:$0xff]
      %v1017 = vld [vmem:[#allocation2 + $0x78] sm:$0xff]
      %v1018 = vld [vmem:[#allocation2 + $0x80] sm:$0xff]
      %v1019 = vld [vmem:[#allocation2 + $0x88] sm:$0xff]
      %v1020 = vld [vmem:[#allocation2 + $0x90] sm:$0xff]
      %v1021 = vld [vmem:[#allocation2 + $0x98] sm:$0xff]
      %v1022 = vld [vmem:[#allocation2 + $0xa0] sm:$0xff]
      %v1023 = vld [vmem:[#allocation2 + $0xa8] sm:$0xff]
      %v1024 = vld [vmem:[#allocation2 + $0xb0] sm:$0xff]
      %v1025 = vld [vmem:[#allocation2 + $0xb8] sm:$0xff]
      %v1026 = vld [vmem:[#allocation2 + $0xc0] sm:$0xff]
      %v1027 = vld [vmem:[#allocation2 + $0xc8] sm:$0xff]
      %v1028 = vld [vmem:[#allocation2 + $0xd0] sm:$0xff]
      %v1029 = vld [vmem:[#allocation2 + $0xd8] sm:$0xff]
      %v1030 = vld [vmem:[#allocation2 + $0xe0] sm:$0xff]
      %v1031 = vld [vmem:[#allocation2 + $0xe8] sm:$0x1f]
      %v1036 = vunpack.c.l.b16 %v953
      %v1037 = vunpack.c.l.b16 %v954
      %v1038 = vunpack.c.l.b16 %v955
      %v1039 = vunpack.c.l.b16 %v956
      %v1040 = vpack.c.b16 %v1037, %v1036
      %v1041 = vpack.c.b16 %v1039, %v1038
      %v1045 = vsel %vm400, %v987, 0
      %v1048 = vsel %vm400, %v988, 0
      %v1051 = vsel %vm400, %v989, 0
      %v1054 = vsel %vm400, %v990, 0
      %v1057 = vsel %vm400, %v991, 0
      %v1060 = vsel %vm400, %v992, 0
      %v1063 = vsel %vm400, %v993, 0
      %v1066 = vsel %vm400, %v994, 0
      %v1069 = vsel %vm400, %v995, 0
      %v1072 = vsel %vm400, %v996, 0
      %v1075 = vsel %vm400, %v997, 0
      %v1078 = vsel %vm400, %v998, 0
      %v1081 = vsel %vm400, %v999, 0
      %v1084 = vsel %vm400, %v1000, 0
      %v1087 = vsel %vm400, %v1001, 0
      %1089 = vmatpush.bf16.msra.mxu0 0
      %1090 = vmatpush.bf16.msra.mxu0 0
      %1091 = vmatpush.bf16.msra.mxu0 0
      %1092 = vmatpush.bf16.msra.mxu0 0
      %1093 = vmatpush.bf16.msra.mxu0 0
      %1094 = vmatpush.bf16.msra.mxu0 0
      %1095 = vmatpush.bf16.msra.mxu0 %v1041
      %1096 = vmatpush.bf16.msra.mxu0 %v1040
      %1097 = vmatmul.bf16.gmra.mxu0 %v1045
      %v1098 = vpop.f32.mrf.mxu0
      %v1099 = vadd.f32 0.0, %v1098
      %v1100 = vpop.f32.mrf.mxu0
      %v1101 = vadd.f32 0.0, %v1100
      %1102 = vmatmul.bf16.gmra.mxu0 %v1048
      %v1103 = vpop.f32.mrf.mxu0
      %v1104 = vadd.f32 0.0, %v1103
      %v1105 = vpop.f32.mrf.mxu0
      %v1106 = vadd.f32 0.0, %v1105
      %1107 = vmatmul.bf16.gmra.mxu0 %v1051
      %v1108 = vpop.f32.mrf.mxu0
      %v1109 = vadd.f32 0.0, %v1108
      %v1110 = vpop.f32.mrf.mxu0
      %v1111 = vadd.f32 0.0, %v1110
      %1112 = vmatmul.bf16.gmra.mxu0 %v1054
      %v1113 = vpop.f32.mrf.mxu0
      %v1114 = vadd.f32 0.0, %v1113
      %v1115 = vpop.f32.mrf.mxu0
      %v1116 = vadd.f32 0.0, %v1115
      %1117 = vmatmul.bf16.gmra.mxu0 %v1057
      %v1118 = vpop.f32.mrf.mxu0
      %v1119 = vadd.f32 0.0, %v1118
      %v1120 = vpop.f32.mrf.mxu0
      %v1121 = vadd.f32 0.0, %v1120
      %1122 = vmatmul.bf16.gmra.mxu0 %v1060
      %v1123 = vpop.f32.mrf.mxu0
      %v1124 = vadd.f32 0.0, %v1123
      %v1125 = vpop.f32.mrf.mxu0
      %v1126 = vadd.f32 0.0, %v1125
      %1127 = vmatmul.bf16.gmra.mxu0 %v1063
      %v1128 = vpop.f32.mrf.mxu0
      %v1129 = vadd.f32 0.0, %v1128
      %v1130 = vpop.f32.mrf.mxu0
      %v1131 = vadd.f32 0.0, %v1130
      %1132 = vmatmul.bf16.gmra.mxu0 %v1066
      %v1133 = vpop.f32.mrf.mxu0
      %v1134 = vadd.f32 0.0, %v1133
      %v1135 = vpop.f32.mrf.mxu0
      %v1136 = vadd.f32 0.0, %v1135
      %1137 = vmatmul.bf16.gmra.mxu0 %v1069
      %v1138 = vpop.f32.mrf.mxu0
      %v1139 = vadd.f32 0.0, %v1138
      %v1140 = vpop.f32.mrf.mxu0
      %v1141 = vadd.f32 0.0, %v1140
      %1142 = vmatmul.bf16.gmra.mxu0 %v1072
      %v1143 = vpop.f32.mrf.mxu0
      %v1144 = vadd.f32 0.0, %v1143
      %v1145 = vpop.f32.mrf.mxu0
      %v1146 = vadd.f32 0.0, %v1145
      %1147 = vmatmul.bf16.gmra.mxu0 %v1075
      %v1148 = vpop.f32.mrf.mxu0
      %v1149 = vadd.f32 0.0, %v1148
      %v1150 = vpop.f32.mrf.mxu0
      %v1151 = vadd.f32 0.0, %v1150
      %1152 = vmatmul.bf16.gmra.mxu0 %v1078
      %v1153 = vpop.f32.mrf.mxu0
      %v1154 = vadd.f32 0.0, %v1153
      %v1155 = vpop.f32.mrf.mxu0
      %v1156 = vadd.f32 0.0, %v1155
      %1157 = vmatmul.bf16.gmra.mxu0 %v1081
      %v1158 = vpop.f32.mrf.mxu0
      %v1159 = vadd.f32 0.0, %v1158
      %v1160 = vpop.f32.mrf.mxu0
      %v1161 = vadd.f32 0.0, %v1160
      %1162 = vmatmul.bf16.gmra.mxu0 %v1084
      %v1163 = vpop.f32.mrf.mxu0
      %v1164 = vadd.f32 0.0, %v1163
      %v1165 = vpop.f32.mrf.mxu0
      %v1166 = vadd.f32 0.0, %v1165
      %1167 = vmatmul.bf16.gmra.mxu0 %v1087
      %v1168 = vpop.f32.mrf.mxu0
      %v1169 = vadd.f32 0.0, %v1168
      %v1170 = vpop.f32.mrf.mxu0
      %v1171 = vadd.f32 0.0, %v1170
      %1172 = vdwg.mxu0
      %v1173 = vadd.f32 %v1002, %v1099
      %v1174 = vadd.f32 %v1003, %v1101
      %v1175 = vadd.f32 %v1004, %v1104
      %v1176 = vadd.f32 %v1005, %v1106
      %v1177 = vadd.f32 %v1006, %v1109
      %v1178 = vadd.f32 %v1007, %v1111
      %v1179 = vadd.f32 %v1008, %v1114
      %v1180 = vadd.f32 %v1009, %v1116
      %v1181 = vadd.f32 %v1010, %v1119
      %v1182 = vadd.f32 %v1011, %v1121
      %v1183 = vadd.f32 %v1012, %v1124
      %v1184 = vadd.f32 %v1013, %v1126
      %v1185 = vadd.f32 %v1014, %v1129
      %v1186 = vadd.f32 %v1015, %v1131
      %v1187 = vadd.f32 %v1016, %v1134
      %v1188 = vadd.f32 %v1017, %v1136
      %v1189 = vadd.f32 %v1018, %v1139
      %v1190 = vadd.f32 %v1019, %v1141
      %v1191 = vadd.f32 %v1020, %v1144
      %v1192 = vadd.f32 %v1021, %v1146
      %v1193 = vadd.f32 %v1022, %v1149
      %v1194 = vadd.f32 %v1023, %v1151
      %v1195 = vadd.f32 %v1024, %v1154
      %v1196 = vadd.f32 %v1025, %v1156
      %v1197 = vadd.f32 %v1026, %v1159
      %v1198 = vadd.f32 %v1027, %v1161
      %v1199 = vadd.f32 %v1028, %v1164
      %v1200 = vadd.f32 %v1029, %v1166
      %v1201 = vadd.f32 %v1030, %v1169
      %v1202 = vadd.f32 %v1031, %v1171
      %1203 = vst [vmem:[#allocation2] sm:$0xff] %v1173
      %1204 = vst [vmem:[#allocation2 + $0x8] sm:$0xff] %v1174
      %1205 = vst [vmem:[#allocation2 + $0x10] sm:$0xff] %v1175
      %1206 = vst [vmem:[#allocation2 + $0x18] sm:$0xff] %v1176
      %1207 = vst [vmem:[#allocation2 + $0x20] sm:$0xff] %v1177
      %1208 = vst [vmem:[#allocation2 + $0x28] sm:$0xff] %v1178
      %1209 = vst [vmem:[#allocation2 + $0x30] sm:$0xff] %v1179
      %1210 = vst [vmem:[#allocation2 + $0x38] sm:$0xff] %v1180
      %1211 = vst [vmem:[#allocation2 + $0x40] sm:$0xff] %v1181
      %1212 = vst [vmem:[#allocation2 + $0x48] sm:$0xff] %v1182
      %1213 = vst [vmem:[#allocation2 + $0x50] sm:$0xff] %v1183
      %1214 = vst [vmem:[#allocation2 + $0x58] sm:$0xff] %v1184
      %1215 = vst [vmem:[#allocation2 + $0x60] sm:$0xff] %v1185
      %1216 = vst [vmem:[#allocation2 + $0x68] sm:$0xff] %v1186
      %1217 = vst [vmem:[#allocation2 + $0x70] sm:$0xff] %v1187
      %1218 = vst [vmem:[#allocation2 + $0x78] sm:$0xff] %v1188
      %1219 = vst [vmem:[#allocation2 + $0x80] sm:$0xff] %v1189
      %1220 = vst [vmem:[#allocation2 + $0x88] sm:$0xff] %v1190
      %1221 = vst [vmem:[#allocation2 + $0x90] sm:$0xff] %v1191
      %1222 = vst [vmem:[#allocation2 + $0x98] sm:$0xff] %v1192
      %1223 = vst [vmem:[#allocation2 + $0xa0] sm:$0xff] %v1193
      %1224 = vst [vmem:[#allocation2 + $0xa8] sm:$0xff] %v1194
      %1225 = vst [vmem:[#allocation2 + $0xb0] sm:$0xff] %v1195
      %1226 = vst [vmem:[#allocation2 + $0xb8] sm:$0xff] %v1196
      %1227 = vst [vmem:[#allocation2 + $0xc0] sm:$0xff] %v1197
      %1228 = vst [vmem:[#allocation2 + $0xc8] sm:$0xff] %v1198
      %1229 = vst [vmem:[#allocation2 + $0xd0] sm:$0xff] %v1199
      %1230 = vst [vmem:[#allocation2 + $0xd8] sm:$0xff] %v1200
      %1231 = vst [vmem:[#allocation2 + $0xe0] sm:$0xff] %v1201
      %1232 = vst [vmem:[#allocation2 + $0xe8] sm:$0x1f] %v1202
      %v1233 = vld [vmem:[%s262] sm:$0xff]
      %v1234 = vld [vmem:[%s262 + $0x8] sm:$0xff]
      %v1235 = vld [vmem:[%s262 + $0x10] sm:$0x7]
      %v1236 = vpack.c.bf16 %v1234, %v1233
      %v1237 = vpack.c.bf16 %v1235, %v1235
      %v1238 = vld [vmem:[#allocation2 + $0xed] sm:$0xff]
      %v1239 = vld [vmem:[#allocation2 + $0xf5] sm:$0xff]
      %v1240 = vld [vmem:[#allocation2 + $0xfd] sm:$0x7]
      %v1242 = vsel %vm400, %v1236, 0
      %v1245 = vsel %vm400, %v1237, 0
      %1247 = vmatpush.bf16.msra.mxu0 0
      %1248 = vmatpush.bf16.msra.mxu0 0
      %1249 = vmatpush.bf16.msra.mxu0 0
      %1250 = vmatpush.bf16.msra.mxu0 0
      %1251 = vmatpush.bf16.msra.mxu0 0
      %1252 = vmatpush.bf16.msra.mxu0 0
      %1253 = vmatpush.bf16.msra.mxu0 %v1041
      %1254 = vmatpush.bf16.msra.mxu0 %v1040
      %1255 = vmatmul.bf16.gmra.mxu0 %v1242
      %v1256 = vpop.f32.mrf.mxu0
      %v1257 = vadd.f32 0.0, %v1256
      %v1258 = vpop.f32.mrf.mxu0
      %v1259 = vadd.f32 0.0, %v1258
      %1260 = vmatmul.bf16.gmra.mxu0 %v1245
      %v1261 = vpop.f32.mrf.mxu0
      %v1262 = vadd.f32 0.0, %v1261
      %v1263 = vpop.f32.mrf.mxu0
      %1264 = vdwg.mxu0
      %v1265 = vadd.f32 %v1238, %v1257
      %v1266 = vadd.f32 %v1239, %v1259
      %v1267 = vadd.f32 %v1240, %v1262
      %1268 = vst [vmem:[#allocation2 + $0xed] sm:$0xff] %v1265
      %1269 = vst [vmem:[#allocation2 + $0xf5] sm:$0xff] %v1266
      %1270 = vst [vmem:[#allocation2 + $0xfd] sm:$0x7] %v1267
      %s1271 = scalar_lea.vmem %s268, 48
      %v1272 = vld [vmem:[%s1271] sm:$0xf]
      %v1273 = vld [vmem:[%s1271 + $0x4] sm:$0xf]
      %v1274 = vld [vmem:[%s1271 + $0x8] sm:$0xf]
      %v1275 = vld [vmem:[%s1271 + $0xc] sm:$0xf]
      %v1276 = vld [vmem:[%s255 + $0x12] sm:$0xff]
      %v1277 = vld [vmem:[%s255 + $0x1a] sm:$0xff]
      %v1278 = vld [vmem:[%s255 + $0x22] sm:$0xff]
      %v1279 = vld [vmem:[%s255 + $0x2a] sm:$0xff]
      %v1280 = vld [vmem:[%s255 + $0x32] sm:$0xff]
      %v1281 = vld [vmem:[%s255 + $0x3a] sm:$0xff]
      %v1282 = vld [vmem:[%s255 + $0x42] sm:$0xff]
      %v1283 = vld [vmem:[%s255 + $0x4a] sm:$0xff]
      %v1284 = vld [vmem:[%s255 + $0x52] sm:$0xff]
      %v1285 = vld [vmem:[%s255 + $0x5a] sm:$0xff]
      %v1286 = vld [vmem:[%s255 + $0x62] sm:$0xff]
      %v1287 = vld [vmem:[%s255 + $0x6a] sm:$0xff]
      %v1288 = vld [vmem:[%s255 + $0x72] sm:$0xff]
      %v1289 = vld [vmem:[%s255 + $0x7a] sm:$0xff]
      %v1290 = vld [vmem:[%s255 + $0x82] sm:$0xff]
      %v1291 = vld [vmem:[%s255 + $0x8a] sm:$0xff]
      %v1292 = vld [vmem:[%s255 + $0x92] sm:$0xff]
      %v1293 = vld [vmem:[%s255 + $0x9a] sm:$0xff]
      %v1294 = vld [vmem:[%s255 + $0xa2] sm:$0xff]
      %v1295 = vld [vmem:[%s255 + $0xaa] sm:$0xff]
      %v1296 = vld [vmem:[%s255 + $0xb2] sm:$0xff]
      %v1297 = vld [vmem:[%s255 + $0xba] sm:$0xff]
      %v1298 = vld [vmem:[%s255 + $0xc2] sm:$0xff]
      %v1299 = vld [vmem:[%s255 + $0xca] sm:$0xff]
      %v1300 = vld [vmem:[%s255 + $0xd2] sm:$0xff]
      %v1301 = vld [vmem:[%s255 + $0xda] sm:$0xff]
      %v1302 = vld [vmem:[%s255 + $0xe2] sm:$0xff]
      %v1303 = vld [vmem:[%s255 + $0xea] sm:$0xff]
      %v1304 = vld [vmem:[%s255 + $0xf2] sm:$0xff]
      %v1305 = vld [vmem:[%s255 + $0xfa] sm:$0x3f]
      %v1306 = vpack.c.bf16 %v1277, %v1276
      %v1307 = vpack.c.bf16 %v1279, %v1278
      %v1308 = vpack.c.bf16 %v1281, %v1280
      %v1309 = vpack.c.bf16 %v1283, %v1282
      %v1310 = vpack.c.bf16 %v1285, %v1284
      %v1311 = vpack.c.bf16 %v1287, %v1286
      %v1312 = vpack.c.bf16 %v1289, %v1288
      %v1313 = vpack.c.bf16 %v1291, %v1290
      %v1314 = vpack.c.bf16 %v1293, %v1292
      %v1315 = vpack.c.bf16 %v1295, %v1294
      %v1316 = vpack.c.bf16 %v1297, %v1296
      %v1317 = vpack.c.bf16 %v1299, %v1298
      %v1318 = vpack.c.bf16 %v1301, %v1300
      %v1319 = vpack.c.bf16 %v1303, %v1302
      %v1320 = vpack.c.bf16 %v1305, %v1304
      %v1321 = vld [vmem:[#allocation2] sm:$0xff]
      %v1322 = vld [vmem:[#allocation2 + $0x8] sm:$0xff]
      %v1323 = vld [vmem:[#allocation2 + $0x10] sm:$0xff]
      %v1324 = vld [vmem:[#allocation2 + $0x18] sm:$0xff]
      %v1325 = vld [vmem:[#allocation2 + $0x20] sm:$0xff]
      %v1326 = vld [vmem:[#allocation2 + $0x28] sm:$0xff]
      %v1327 = vld [vmem:[#allocation2 + $0x30] sm:$0xff]
      %v1328 = vld [vmem:[#allocation2 + $0x38] sm:$0xff]
      %v1329 = vld [vmem:[#allocation2 + $0x40] sm:$0xff]
      %v1330 = vld [vmem:[#allocation2 + $0x48] sm:$0xff]
      %v1331 = vld [vmem:[#allocation2 + $0x50] sm:$0xff]
      %v1332 = vld [vmem:[#allocation2 + $0x58] sm:$0xff]
      %v1333 = vld [vmem:[#allocation2 + $0x60] sm:$0xff]
      %v1334 = vld [vmem:[#allocation2 + $0x68] sm:$0xff]
      %v1335 = vld [vmem:[#allocation2 + $0x70] sm:$0xff]
      %v1336 = vld [vmem:[#allocation2 + $0x78] sm:$0xff]
      %v1337 = vld [vmem:[#allocation2 + $0x80] sm:$0xff]
      %v1338 = vld [vmem:[#allocation2 + $0x88] sm:$0xff]
      %v1339 = vld [vmem:[#allocation2 + $0x90] sm:$0xff]
      %v1340 = vld [vmem:[#allocation2 + $0x98] sm:$0xff]
      %v1341 = vld [vmem:[#allocation2 + $0xa0] sm:$0xff]
      %v1342 = vld [vmem:[#allocation2 + $0xa8] sm:$0xff]
      %v1343 = vld [vmem:[#allocation2 + $0xb0] sm:$0xff]
      %v1344 = vld [vmem:[#allocation2 + $0xb8] sm:$0xff]
      %v1345 = vld [vmem:[#allocation2 + $0xc0] sm:$0xff]
      %v1346 = vld [vmem:[#allocation2 + $0xc8] sm:$0xff]
      %v1347 = vld [vmem:[#allocation2 + $0xd0] sm:$0xff]
      %v1348 = vld [vmem:[#allocation2 + $0xd8] sm:$0xff]
      %v1349 = vld [vmem:[#allocation2 + $0xe0] sm:$0xff]
      %v1350 = vld [vmem:[#allocation2 + $0xe8] sm:$0x3f]
      %v1355 = vunpack.c.l.b16 %v1272
      %v1356 = vunpack.c.l.b16 %v1273
      %v1357 = vunpack.c.l.b16 %v1274
      %v1358 = vunpack.c.l.b16 %v1275
      %v1359 = vpack.c.b16 %v1356, %v1355
      %v1360 = vpack.c.b16 %v1358, %v1357
      %v1364 = vsel %vm400, %v1306, 0
      %v1367 = vsel %vm400, %v1307, 0
      %v1370 = vsel %vm400, %v1308, 0
      %v1373 = vsel %vm400, %v1309, 0
      %v1376 = vsel %vm400, %v1310, 0
      %v1379 = vsel %vm400, %v1311, 0
      %v1382 = vsel %vm400, %v1312, 0
      %v1385 = vsel %vm400, %v1313, 0
      %v1388 = vsel %vm400, %v1314, 0
      %v1391 = vsel %vm400, %v1315, 0
      %v1394 = vsel %vm400, %v1316, 0
      %v1397 = vsel %vm400, %v1317, 0
      %v1400 = vsel %vm400, %v1318, 0
      %v1403 = vsel %vm400, %v1319, 0
      %v1406 = vsel %vm400, %v1320, 0
      %1408 = vmatpush.bf16.msra.mxu0 0
      %1409 = vmatpush.bf16.msra.mxu0 0
      %1410 = vmatpush.bf16.msra.mxu0 0
      %1411 = vmatpush.bf16.msra.mxu0 0
      %1412 = vmatpush.bf16.msra.mxu0 0
      %1413 = vmatpush.bf16.msra.mxu0 0
      %1414 = vmatpush.bf16.msra.mxu0 %v1360
      %1415 = vmatpush.bf16.msra.mxu0 %v1359
      %1416 = vmatmul.bf16.gmra.mxu0 %v1364
      %v1417 = vpop.f32.mrf.mxu0
      %v1418 = vadd.f32 0.0, %v1417
      %v1419 = vpop.f32.mrf.mxu0
      %v1420 = vadd.f32 0.0, %v1419
      %1421 = vmatmul.bf16.gmra.mxu0 %v1367
      %v1422 = vpop.f32.mrf.mxu0
      %v1423 = vadd.f32 0.0, %v1422
      %v1424 = vpop.f32.mrf.mxu0
      %v1425 = vadd.f32 0.0, %v1424
      %1426 = vmatmul.bf16.gmra.mxu0 %v1370
      %v1427 = vpop.f32.mrf.mxu0
      %v1428 = vadd.f32 0.0, %v1427
      %v1429 = vpop.f32.mrf.mxu0
      %v1430 = vadd.f32 0.0, %v1429
      %1431 = vmatmul.bf16.gmra.mxu0 %v1373
      %v1432 = vpop.f32.mrf.mxu0
      %v1433 = vadd.f32 0.0, %v1432
      %v1434 = vpop.f32.mrf.mxu0
      %v1435 = vadd.f32 0.0, %v1434
      %1436 = vmatmul.bf16.gmra.mxu0 %v1376
      %v1437 = vpop.f32.mrf.mxu0
      %v1438 = vadd.f32 0.0, %v1437
      %v1439 = vpop.f32.mrf.mxu0
      %v1440 = vadd.f32 0.0, %v1439
      %1441 = vmatmul.bf16.gmra.mxu0 %v1379
      %v1442 = vpop.f32.mrf.mxu0
      %v1443 = vadd.f32 0.0, %v1442
      %v1444 = vpop.f32.mrf.mxu0
      %v1445 = vadd.f32 0.0, %v1444
      %1446 = vmatmul.bf16.gmra.mxu0 %v1382
      %v1447 = vpop.f32.mrf.mxu0
      %v1448 = vadd.f32 0.0, %v1447
      %v1449 = vpop.f32.mrf.mxu0
      %v1450 = vadd.f32 0.0, %v1449
      %1451 = vmatmul.bf16.gmra.mxu0 %v1385
      %v1452 = vpop.f32.mrf.mxu0
      %v1453 = vadd.f32 0.0, %v1452
      %v1454 = vpop.f32.mrf.mxu0
      %v1455 = vadd.f32 0.0, %v1454
      %1456 = vmatmul.bf16.gmra.mxu0 %v1388
      %v1457 = vpop.f32.mrf.mxu0
      %v1458 = vadd.f32 0.0, %v1457
      %v1459 = vpop.f32.mrf.mxu0
      %v1460 = vadd.f32 0.0, %v1459
      %1461 = vmatmul.bf16.gmra.mxu0 %v1391
      %v1462 = vpop.f32.mrf.mxu0
      %v1463 = vadd.f32 0.0, %v1462
      %v1464 = vpop.f32.mrf.mxu0
      %v1465 = vadd.f32 0.0, %v1464
      %1466 = vmatmul.bf16.gmra.mxu0 %v1394
      %v1467 = vpop.f32.mrf.mxu0
      %v1468 = vadd.f32 0.0, %v1467
      %v1469 = vpop.f32.mrf.mxu0
      %v1470 = vadd.f32 0.0, %v1469
      %1471 = vmatmul.bf16.gmra.mxu0 %v1397
      %v1472 = vpop.f32.mrf.mxu0
      %v1473 = vadd.f32 0.0, %v1472
      %v1474 = vpop.f32.mrf.mxu0
      %v1475 = vadd.f32 0.0, %v1474
      %1476 = vmatmul.bf16.gmra.mxu0 %v1400
      %v1477 = vpop.f32.mrf.mxu0
      %v1478 = vadd.f32 0.0, %v1477
      %v1479 = vpop.f32.mrf.mxu0
      %v1480 = vadd.f32 0.0, %v1479
      %1481 = vmatmul.bf16.gmra.mxu0 %v1403
      %v1482 = vpop.f32.mrf.mxu0
      %v1483 = vadd.f32 0.0, %v1482
      %v1484 = vpop.f32.mrf.mxu0
      %v1485 = vadd.f32 0.0, %v1484
      %1486 = vmatmul.bf16.gmra.mxu0 %v1406
      %v1487 = vpop.f32.mrf.mxu0
      %v1488 = vadd.f32 0.0, %v1487
      %v1489 = vpop.f32.mrf.mxu0
      %v1490 = vadd.f32 0.0, %v1489
      %1491 = vdwg.mxu0
      %v1492 = vadd.f32 %v1321, %v1418
      %v1493 = vadd.f32 %v1322, %v1420
      %v1494 = vadd.f32 %v1323, %v1423
      %v1495 = vadd.f32 %v1324, %v1425
      %v1496 = vadd.f32 %v1325, %v1428
      %v1497 = vadd.f32 %v1326, %v1430
      %v1498 = vadd.f32 %v1327, %v1433
      %v1499 = vadd.f32 %v1328, %v1435
      %v1500 = vadd.f32 %v1329, %v1438
      %v1501 = vadd.f32 %v1330, %v1440
      %v1502 = vadd.f32 %v1331, %v1443
      %v1503 = vadd.f32 %v1332, %v1445
      %v1504 = vadd.f32 %v1333, %v1448
      %v1505 = vadd.f32 %v1334, %v1450
      %v1506 = vadd.f32 %v1335, %v1453
      %v1507 = vadd.f32 %v1336, %v1455
      %v1508 = vadd.f32 %v1337, %v1458
      %v1509 = vadd.f32 %v1338, %v1460
      %v1510 = vadd.f32 %v1339, %v1463
      %v1511 = vadd.f32 %v1340, %v1465
      %v1512 = vadd.f32 %v1341, %v1468
      %v1513 = vadd.f32 %v1342, %v1470
      %v1514 = vadd.f32 %v1343, %v1473
      %v1515 = vadd.f32 %v1344, %v1475
      %v1516 = vadd.f32 %v1345, %v1478
      %v1517 = vadd.f32 %v1346, %v1480
      %v1518 = vadd.f32 %v1347, %v1483
      %v1519 = vadd.f32 %v1348, %v1485
      %v1520 = vadd.f32 %v1349, %v1488
      %v1521 = vadd.f32 %v1350, %v1490
      %1522 = vst [vmem:[#allocation2] sm:$0xff] %v1492
      %1523 = vst [vmem:[#allocation2 + $0x8] sm:$0xff] %v1493
      %1524 = vst [vmem:[#allocation2 + $0x10] sm:$0xff] %v1494
      %1525 = vst [vmem:[#allocation2 + $0x18] sm:$0xff] %v1495
      %1526 = vst [vmem:[#allocation2 + $0x20] sm:$0xff] %v1496
      %1527 = vst [vmem:[#allocation2 + $0x28] sm:$0xff] %v1497
      %1528 = vst [vmem:[#allocation2 + $0x30] sm:$0xff] %v1498
      %1529 = vst [vmem:[#allocation2 + $0x38] sm:$0xff] %v1499
      %1530 = vst [vmem:[#allocation2 + $0x40] sm:$0xff] %v1500
      %1531 = vst [vmem:[#allocation2 + $0x48] sm:$0xff] %v1501
      %1532 = vst [vmem:[#allocation2 + $0x50] sm:$0xff] %v1502
      %1533 = vst [vmem:[#allocation2 + $0x58] sm:$0xff] %v1503
      %1534 = vst [vmem:[#allocation2 + $0x60] sm:$0xff] %v1504
      %1535 = vst [vmem:[#allocation2 + $0x68] sm:$0xff] %v1505
      %1536 = vst [vmem:[#allocation2 + $0x70] sm:$0xff] %v1506
      %1537 = vst [vmem:[#allocation2 + $0x78] sm:$0xff] %v1507
      %1538 = vst [vmem:[#allocation2 + $0x80] sm:$0xff] %v1508
      %1539 = vst [vmem:[#allocation2 + $0x88] sm:$0xff] %v1509
      %1540 = vst [vmem:[#allocation2 + $0x90] sm:$0xff] %v1510
      %1541 = vst [vmem:[#allocation2 + $0x98] sm:$0xff] %v1511
      %1542 = vst [vmem:[#allocation2 + $0xa0] sm:$0xff] %v1512
      %1543 = vst [vmem:[#allocation2 + $0xa8] sm:$0xff] %v1513
      %1544 = vst [vmem:[#allocation2 + $0xb0] sm:$0xff] %v1514
      %1545 = vst [vmem:[#allocation2 + $0xb8] sm:$0xff] %v1515
      %1546 = vst [vmem:[#allocation2 + $0xc0] sm:$0xff] %v1516
      %1547 = vst [vmem:[#allocation2 + $0xc8] sm:$0xff] %v1517
      %1548 = vst [vmem:[#allocation2 + $0xd0] sm:$0xff] %v1518
      %1549 = vst [vmem:[#allocation2 + $0xd8] sm:$0xff] %v1519
      %1550 = vst [vmem:[#allocation2 + $0xe0] sm:$0xff] %v1520
      %1551 = vst [vmem:[#allocation2 + $0xe8] sm:$0x3f] %v1521
      %v1552 = vld [vmem:[%s262] sm:$0xff]
      %v1553 = vld [vmem:[%s262 + $0x8] sm:$0xff]
      %v1554 = vld [vmem:[%s262 + $0x10] sm:$0x3]
      %v1555 = vpack.c.bf16 %v1553, %v1552
      %v1556 = vpack.c.bf16 %v1554, %v1554
      %v1557 = vld [vmem:[#allocation2 + $0xee] sm:$0xff]
      %v1558 = vld [vmem:[#allocation2 + $0xf6] sm:$0xff]
      %v1559 = vld [vmem:[#allocation2 + $0xfe] sm:$0x3]
      %v1561 = vsel %vm400, %v1555, 0
      %v1564 = vsel %vm400, %v1556, 0
      %1566 = vmatpush.bf16.msra.mxu0 0
      %1567 = vmatpush.bf16.msra.mxu0 0
      %1568 = vmatpush.bf16.msra.mxu0 0
      %1569 = vmatpush.bf16.msra.mxu0 0
      %1570 = vmatpush.bf16.msra.mxu0 0
      %1571 = vmatpush.bf16.msra.mxu0 0
      %1572 = vmatpush.bf16.msra.mxu0 %v1360
      %1573 = vmatpush.bf16.msra.mxu0 %v1359
      %1574 = vmatmul.bf16.gmra.mxu0 %v1561
      %v1575 = vpop.f32.mrf.mxu0
      %v1576 = vadd.f32 0.0, %v1575
      %v1577 = vpop.f32.mrf.mxu0
      %v1578 = vadd.f32 0.0, %v1577
      %1579 = vmatmul.bf16.gmra.mxu0 %v1564
      %v1580 = vpop.f32.mrf.mxu0
      %v1581 = vadd.f32 0.0, %v1580
      %v1582 = vpop.f32.mrf.mxu0
      %1583 = vdwg.mxu0
      %v1584 = vadd.f32 %v1557, %v1576
      %v1585 = vadd.f32 %v1558, %v1578
      %v1586 = vadd.f32 %v1559, %v1581
      %1587 = vst [vmem:[#allocation2 + $0xee] sm:$0xff] %v1584
      %1588 = vst [vmem:[#allocation2 + $0xf6] sm:$0xff] %v1585
      %1589 = vst [vmem:[#allocation2 + $0xfe] sm:$0x3] %v1586
      %v1590 = vld [vmem:[#allocation2] sm:$0xff]
      %v1591 = vld [vmem:[#allocation2 + $0x8] sm:$0xff]
      %v1592 = vld [vmem:[#allocation2 + $0x10] sm:$0xff]
      %v1593 = vld [vmem:[#allocation2 + $0x18] sm:$0xff]
      %v1594 = vld [vmem:[#allocation2 + $0x20] sm:$0xff]
      %v1595 = vld [vmem:[#allocation2 + $0x28] sm:$0xff]
      %v1596 = vld [vmem:[#allocation2 + $0x30] sm:$0xff]
      %v1597 = vld [vmem:[#allocation2 + $0x38] sm:$0xff]
      %v1598 = vld [vmem:[#allocation2 + $0x40] sm:$0xff]
      %v1599 = vld [vmem:[#allocation2 + $0x48] sm:$0xff]
      %v1600 = vld [vmem:[#allocation2 + $0x50] sm:$0xff]
      %v1601 = vld [vmem:[#allocation2 + $0x58] sm:$0xff]
      %v1602 = vld [vmem:[#allocation2 + $0x60] sm:$0xff]
      %v1603 = vld [vmem:[#allocation2 + $0x68] sm:$0xff]
      %v1604 = vld [vmem:[#allocation2 + $0x70] sm:$0xff]
      %v1605 = vld [vmem:[#allocation2 + $0x78] sm:$0xff]
      %v1606 = vld [vmem:[#allocation2 + $0x80] sm:$0xff]
      %v1607 = vld [vmem:[#allocation2 + $0x88] sm:$0xff]
      %v1608 = vld [vmem:[#allocation2 + $0x90] sm:$0xff]
      %v1609 = vld [vmem:[#allocation2 + $0x98] sm:$0xff]
      %v1610 = vld [vmem:[#allocation2 + $0xa0] sm:$0xff]
      %v1611 = vld [vmem:[#allocation2 + $0xa8] sm:$0xff]
      %v1612 = vld [vmem:[#allocation2 + $0xb0] sm:$0xff]
      %v1613 = vld [vmem:[#allocation2 + $0xb8] sm:$0xff]
      %v1614 = vld [vmem:[#allocation2 + $0xc0] sm:$0xff]
      %v1615 = vld [vmem:[#allocation2 + $0xc8] sm:$0xff]
      %v1616 = vld [vmem:[#allocation2 + $0xd0] sm:$0xff]
      %v1617 = vld [vmem:[#allocation2 + $0xd8] sm:$0xff]
      %v1618 = vld [vmem:[#allocation2 + $0xe0] sm:$0xff]
      %v1619 = vld [vmem:[#allocation2 + $0xe8] sm:$0xff]
      %v1620 = vld [vmem:[#allocation2 + $0xf0] sm:$0xff]
      %v1621 = vld [vmem:[#allocation2 + $0xf8] sm:$0xff]
      %v1622 = vld [vmem:[%s271] sm:$0x1]
      %v1624 = vperm.slane %v1622, 0
      %v1626 = vadd.f32 %v1590, %v1624
      %v1627 = vadd.f32 %v1591, %v1624
      %v1628 = vadd.f32 %v1592, %v1624
      %v1629 = vadd.f32 %v1593, %v1624
      %v1630 = vadd.f32 %v1594, %v1624
      %v1631 = vadd.f32 %v1595, %v1624
      %v1632 = vadd.f32 %v1596, %v1624
      %v1633 = vadd.f32 %v1597, %v1624
      %v1634 = vadd.f32 %v1598, %v1624
      %v1635 = vadd.f32 %v1599, %v1624
      %v1636 = vadd.f32 %v1600, %v1624
      %v1637 = vadd.f32 %v1601, %v1624
      %v1638 = vadd.f32 %v1602, %v1624
      %v1639 = vadd.f32 %v1603, %v1624
      %v1640 = vadd.f32 %v1604, %v1624
      %v1641 = vadd.f32 %v1605, %v1624
      %v1642 = vadd.f32 %v1606, %v1624
      %v1643 = vadd.f32 %v1607, %v1624
      %v1644 = vadd.f32 %v1608, %v1624
      %v1645 = vadd.f32 %v1609, %v1624
      %v1646 = vadd.f32 %v1610, %v1624
      %v1647 = vadd.f32 %v1611, %v1624
      %v1648 = vadd.f32 %v1612, %v1624
      %v1649 = vadd.f32 %v1613, %v1624
      %v1650 = vadd.f32 %v1614, %v1624
      %v1651 = vadd.f32 %v1615, %v1624
      %v1652 = vadd.f32 %v1616, %v1624
      %v1653 = vadd.f32 %v1617, %v1624
      %v1654 = vadd.f32 %v1618, %v1624
      %v1655 = vadd.f32 %v1619, %v1624
      %v1656 = vadd.f32 %v1620, %v1624
      %v1657 = vadd.f32 %v1621, %v1624
      %1658 = vst [vmem:[%s279] sm:$0xff] %v1626
      %1659 = vst [vmem:[%s279 + $0x8] sm:$0xff] %v1627
      %1660 = vst [vmem:[%s279 + $0x10] sm:$0xff] %v1628
      %1661 = vst [vmem:[%s279 + $0x18] sm:$0xff] %v1629
      %1662 = vst [vmem:[%s279 + $0x20] sm:$0xff] %v1630
      %1663 = vst [vmem:[%s279 + $0x28] sm:$0xff] %v1631
      %1664 = vst [vmem:[%s279 + $0x30] sm:$0xff] %v1632
      %1665 = vst [vmem:[%s279 + $0x38] sm:$0xff] %v1633
      %1666 = vst [vmem:[%s279 + $0x40] sm:$0xff] %v1634
      %1667 = vst [vmem:[%s279 + $0x48] sm:$0xff] %v1635
      %1668 = vst [vmem:[%s279 + $0x50] sm:$0xff] %v1636
      %1669 = vst [vmem:[%s279 + $0x58] sm:$0xff] %v1637
      %1670 = vst [vmem:[%s279 + $0x60] sm:$0xff] %v1638
      %1671 = vst [vmem:[%s279 + $0x68] sm:$0xff] %v1639
      %1672 = vst [vmem:[%s279 + $0x70] sm:$0xff] %v1640
      %1673 = vst [vmem:[%s279 + $0x78] sm:$0xff] %v1641
      %1674 = vst [vmem:[%s279 + $0x80] sm:$0xff] %v1642
      %1675 = vst [vmem:[%s279 + $0x88] sm:$0xff] %v1643
      %1676 = vst [vmem:[%s279 + $0x90] sm:$0xff] %v1644
      %1677 = vst [vmem:[%s279 + $0x98] sm:$0xff] %v1645
      %1678 = vst [vmem:[%s279 + $0xa0] sm:$0xff] %v1646
      %1679 = vst [vmem:[%s279 + $0xa8] sm:$0xff] %v1647
      %1680 = vst [vmem:[%s279 + $0xb0] sm:$0xff] %v1648
      %1681 = vst [vmem:[%s279 + $0xb8] sm:$0xff] %v1649
      %1682 = vst [vmem:[%s279 + $0xc0] sm:$0xff] %v1650
      %1683 = vst [vmem:[%s279 + $0xc8] sm:$0xff] %v1651
      %1684 = vst [vmem:[%s279 + $0xd0] sm:$0xff] %v1652
      %1685 = vst [vmem:[%s279 + $0xd8] sm:$0xff] %v1653
      %1686 = vst [vmem:[%s279 + $0xe0] sm:$0xff] %v1654
      %1687 = vst [vmem:[%s279 + $0xe8] sm:$0xff] %v1655
      %1688 = vst [vmem:[%s279 + $0xf0] sm:$0xff] %v1656
      %1689 = vst [vmem:[%s279 + $0xf8] sm:$0xff] %v1657
      %s1690 = smul.u32 32, %s19
      %p1691 = scmp.lt.s32.totalorder %s1690, 95
      %s1692 = scalar_select %p1691, %s1690, 95
      %p1693 = scmp.lt.s32.totalorder %s20, 0
      %s1694 = scalar_select %p1693, %s20, 0
      %s1695 = sadd.s32 %s1694, %s1692
      %s1696 = smul.addr %s1695, 8
      %s1697 = scalar_lea.vmem %s4, %s1696
      // Predicated region
      $region37: #{_lambda_.6} parent=35 // pred_check
        %p1698 = pneg %p153
      $region38: #{_lambda_.6} parent=35 // pred_check_branch
        %1700 = sbr.rel (%p1698) target = $region40
      $region39: #{_lambda_.6} parent=35 // pred_region
        %s1701 = smul.u32 32, %s19
      $region40: #{_lambda_.6} parent=35 // pred_fallthru
        _
    $region36: #{_lambda_.6} parent=5 // pred_fallthru
      _
    %p1702 = scmp.le.s32.totalorder 2, %s10
    // Predicated region
    $region41: #{_lambda_.6} parent=5 // pred_check
      %p1703 = pneg %p1702
    $region42: #{_lambda_.6} parent=5 // pred_check_branch
      %1705 = sbr.rel (%p1703) target = $region44
    $region43: #{_lambda_.6} parent=5 // pred_region
      %s1706 = ssub.s32 %s10, 2
      // Predicated region
      $region45: #{_lambda_.6} parent=43 // pred_check
        %p1707 = pneg %p159
      $region46: #{_lambda_.6} parent=43 // pred_check_branch
        %1709 = sbr.rel (%p1707) target = $region48
      $region47: #{_lambda_.6} parent=43 // pred_region
        %s1710 = smul.u32 32, %s21
        %p1711 = scmp.lt.s32.totalorder %s1710, 95
        %s1712 = scalar_select %p1711, %s1710, 95
        %p1713 = scmp.lt.s32.totalorder %s22, 0
        %s1714 = scalar_select %p1713, %s22, 0
        %s1715 = sadd.s32 %s1714, %s1712
        %s1716 = smul.addr %s1715, 8
        %s1717 = scalar_lea.vmem %s4, %s1716
      $region48: #{_lambda_.6} parent=43 // pred_fallthru
        _
    $region44: #{_lambda_.6} parent=5 // pred_fallthru
      _
  $region6: #{_lambda_.6} parent=0 // loop_footer
    %s14 = sadd.s32 1, %s10
  $region7: #{_lambda_.6} parent=0 // loop_footer_branch
    %9 = sbr.rel target = $region3
  $region8: #{_lambda_.6} parent=0 // loop_exit
    _

// kernel: _lambda_.7
$region0: #{_lambda_.7}
  #allocation0 [shape = 'u32[]', space=smem, size = 0x4, offset = 0x4, fixed_abs, tag = 'smem constant byte address 0x4 - core index']
  #allocation1 [shape = 'u32[72,128]{1,0:T(1,128)}', space=vmem, size = 0x9000, scoped, tag = 'internal scratch']
  #allocation2 [shape = 'f32[256,128]{1,0:T(8,128)}', space=vmem, size = 0x20000, scoped, tag = 'scratch operand']
  %s0 = inlined_call_operand.vmem [shape: f32[1024,32], index: 0, kind: input, shape index: {}, may-alias: {0,1}]
  %s1 = inlined_call_operand.vmem [shape: f32[1024,32], index: 1, kind: input, shape index: {}, may-alias: {0,1}]
  %s2 = inlined_call_operand.vmem [shape: bf16[4,32,128], index: 2, kind: input, shape index: {}]
  %s3 = inlined_call_operand.vmem [shape: f32[1,128], index: 3, kind: input, shape index: {}]
  %s4 = inlined_call_operand.vmem [shape: f32[768,128], index: 4, kind: output, shape index: {}]
  %s5 = sld [smem:[#allocation0]]
  $region49: #{_lambda_.7} parent=0
    _
  %s7 = ssub.s32 1, %s5
  %s8 = scalar_select 0, %s7, %s5
  loop: start=0, step=1, limit=5
  $region2: #{_lambda_.7} parent=0 // loop_pre_header
    _
  $region3: #{_lambda_.7} parent=0 // loop_header
    %s10 = sphi 0, %s14
    %p11 = scmp.ge.s32.totalorder %s10, 5
    %s17 = sphi 0, %s29
    %s18 = sphi 0, %s25
    %s19 = sphi 0, %s17
    %s20 = sphi 0, %s18
    %s21 = sphi 0, %s19
    %s22 = sphi 0, %s20
    %s32 = sphi 0, %s34
    %s35 = sphi 0, %s32
    %s36 = sphi 0, %s35
    %s52 = sphi 0, %s36
    %s60 = sphi 0, %s62
    %s63 = sphi 0, %s60
    %s64 = sphi 0, %s63
    %s80 = sphi 0, %s64
    %s86 = sphi 0, %s88
    %s89 = sphi 0, %s86
    %s90 = sphi 0, %s89
    %s106 = sphi 0, %s90
    %s112 = sphi 0, %s114
    %s115 = sphi 0, %s112
    %s116 = sphi 0, %s115
    %s132 = sphi 0, %s116
    %s140 = sphi 0, %s142
    %s143 = sphi 0, %s140
    %s144 = sphi 0, %s143
    %s160 = sphi 0, %s144
  $region4: #{_lambda_.7} parent=0 // loop_header_branch
    %13 = sbr.rel (%p11) target = $region8
  $region5: #{_lambda_.7} parent=0 // loop_body
    %s15 = ssub.s32 %s10, 1
    %s16 = ssub.s32 %s10, 2
    %s23 = sadd.s32 1, %s18
    %p24 = scmp.ge.s32.totalorder %s23, 1
    %s25 = scalar_select %p24, 0, %s23
    %s26 = sadd.s32 1, %s17
    %s27 = scalar_select %p24, %s26, %s17
    %p28 = scmp.ge.s32.totalorder %s27, 3
    %s29 = scalar_select %p28, 0, %s27
    %s30 = ssub.s32 %s17, %s29
    %p31 = scmp.eq.s32.totalorder %s30, 0
    %s33 = sadd.s32 %s32, 1
    %s34 = scalar_select %p31, %s32, %s33
    %p37 = pneg %p31
    %p38 = scmp.eq.s32.totalorder %s10, 2
    %p39 = por %p37, %p38
    %p40 = scmp.ne.s32.totalorder %s32, %s35
    %p41 = scmp.eq.s32.totalorder %s10, 0
    %p42 = por %p40, %p41
    %p43 = scmp.ne.s32.totalorder %s32, %s35
    %p44 = scmp.eq.s32.totalorder %s15, 2
    %p45 = por %p43, %p44
    %p46 = scmp.ne.s32.totalorder %s35, %s36
    %p47 = scmp.eq.s32.totalorder %s15, 0
    %p48 = por %p46, %p47
    %p49 = scmp.ne.s32.totalorder %s35, %s36
    %p50 = scmp.eq.s32.totalorder %s16, 2
    %p51 = por %p49, %p50
    %p53 = scmp.ne.s32.totalorder %s36, %s52
    %p54 = scmp.eq.s32.totalorder %s16, 0
    %p55 = por %p53, %p54
    %s56 = sadd.s32 %s17, 1
    %s57 = sadd.s32 %s29, 1
    %s58 = ssub.s32 %s56, %s57
    %p59 = scmp.eq.s32.totalorder %s58, 0
    %s61 = sadd.s32 %s60, 1
    %s62 = scalar_select %p59, %s60, %s61
    %p65 = pneg %p59
    %p66 = scmp.eq.s32.totalorder %s10, 2
    %p67 = por %p65, %p66
    %p68 = scmp.ne.s32.totalorder %s60, %s63
    %p69 = scmp.eq.s32.totalorder %s10, 0
    %p70 = por %p68, %p69
    %p71 = scmp.ne.s32.totalorder %s60, %s63
    %p72 = scmp.eq.s32.totalorder %s15, 2
    %p73 = por %p71, %p72
    %p74 = scmp.ne.s32.totalorder %s63, %s64
    %p75 = scmp.eq.s32.totalorder %s15, 0
    %p76 = por %p74, %p75
    %p77 = scmp.ne.s32.totalorder %s63, %s64
    %p78 = scmp.eq.s32.totalorder %s16, 2
    %p79 = por %p77, %p78
    %p81 = scmp.ne.s32.totalorder %s64, %s80
    %p82 = scmp.eq.s32.totalorder %s16, 0
    %p83 = por %p81, %p82
    %s84 = ssub.s32 %s18, %s25
    %p85 = scmp.eq.s32.totalorder %s84, 0
    %s87 = sadd.s32 %s86, 1
    %s88 = scalar_select %p85, %s86, %s87
    %p91 = pneg %p85
    %p92 = scmp.eq.s32.totalorder %s10, 2
    %p93 = por %p91, %p92
    %p94 = scmp.ne.s32.totalorder %s86, %s89
    %p95 = scmp.eq.s32.totalorder %s10, 0
    %p96 = por %p94, %p95
    %p97 = scmp.ne.s32.totalorder %s86, %s89
    %p98 = scmp.eq.s32.totalorder %s15, 2
    %p99 = por %p97, %p98
    %p100 = scmp.ne.s32.totalorder %s89, %s90
    %p101 = scmp.eq.s32.totalorder %s15, 0
    %p102 = por %p100, %p101
    %p103 = scmp.ne.s32.totalorder %s89, %s90
    %p104 = scmp.eq.s32.totalorder %s16, 2
    %p105 = por %p103, %p104
    %p107 = scmp.ne.s32.totalorder %s90, %s106
    %p108 = scmp.eq.s32.totalorder %s16, 0
    %p109 = por %p107, %p108
    %s110 = ssub.s32 %s18, %s25
    %p111 = scmp.eq.s32.totalorder %s110, 0
    %s113 = sadd.s32 %s112, 1
    %s114 = scalar_select %p111, %s112, %s113
    %p117 = pneg %p111
    %p118 = scmp.eq.s32.totalorder %s10, 2
    %p119 = por %p117, %p118
    %p120 = scmp.ne.s32.totalorder %s112, %s115
    %p121 = scmp.eq.s32.totalorder %s10, 0
    %p122 = por %p120, %p121
    %p123 = scmp.ne.s32.totalorder %s112, %s115
    %p124 = scmp.eq.s32.totalorder %s15, 2
    %p125 = por %p123, %p124
    %p126 = scmp.ne.s32.totalorder %s115, %s116
    %p127 = scmp.eq.s32.totalorder %s15, 0
    %p128 = por %p126, %p127
    %p129 = scmp.ne.s32.totalorder %s115, %s116
    %p130 = scmp.eq.s32.totalorder %s16, 2
    %p131 = por %p129, %p130
    %p133 = scmp.ne.s32.totalorder %s116, %s132
    %p134 = scmp.eq.s32.totalorder %s16, 0
    %p135 = por %p133, %p134
    %s136 = ssub.s32 %s17, %s29
    %s137 = ssub.s32 %s18, %s25
    %s138 = sor.u32 %s136, %s137
    %p139 = scmp.eq.s32.totalorder %s138, 0
    %s141 = sadd.s32 %s140, 1
    %s142 = scalar_select %p139, %s140, %s141
    %p145 = pneg %p139
    %p146 = scmp.eq.s32.totalorder %s10, 2
    %p147 = por %p145, %p146
    %p148 = scmp.ne.s32.totalorder %s140, %s143
    %p149 = scmp.eq.s32.totalorder %s10, 0
    %p150 = por %p148, %p149
    %p151 = scmp.ne.s32.totalorder %s140, %s143
    %p152 = scmp.eq.s32.totalorder %s15, 2
    %p153 = por %p151, %p152
    %p154 = scmp.ne.s32.totalorder %s143, %s144
    %p155 = scmp.eq.s32.totalorder %s15, 0
    %p156 = por %p154, %p155
    %p157 = scmp.ne.s32.totalorder %s143, %s144
    %p158 = scmp.eq.s32.totalorder %s16, 2
    %p159 = por %p157, %p158
    %p161 = scmp.ne.s32.totalorder %s144, %s160
    %p162 = scmp.eq.s32.totalorder %s16, 0
    %p163 = por %p161, %p162
    %p164 = scmp.le.s32.totalorder 1, %s10
    %p165 = scmp.lt.s32.totalorder %s10, 4
    %p166 = pnand %p164, %p165
    %p167 = pneg %p166
    // Predicated region
    $region9: #{_lambda_.7} parent=5 // pred_check
      _
    $region10: #{_lambda_.7} parent=5 // pred_check_branch
      %169 = sbr.rel (%p166) target = $region12
    $region11: #{_lambda_.7} parent=5 // pred_region
      %s170 = ssub.s32 %s10, 1
      // Predicated region
      $region13: #{_lambda_.7} parent=11 // pred_check
        %p171 = pneg %p102
      $region14: #{_lambda_.7} parent=11 // pred_check_branch
        %173 = sbr.rel (%p171) target = $region16
      $region15: #{_lambda_.7} parent=11 // pred_region
        %p174 = scmp.lt.s32.totalorder %s20, 0
        %s175 = scalar_select %p174, %s20, 0
        %s176 = smul.addr %s175, 4
        %s177 = scalar_lea.vmem %s2, %s176
      $region16: #{_lambda_.7} parent=11 // pred_fallthru
        _
      // Predicated region
      $region17: #{_lambda_.7} parent=11 // pred_check
        %p178 = pneg %p128
      $region18: #{_lambda_.7} parent=11 // pred_check_branch
        %180 = sbr.rel (%p178) target = $region20
      $region19: #{_lambda_.7} parent=11 // pred_region
        %p181 = scmp.lt.s32.totalorder %s20, 0
        %s182 = scalar_select %p181, %s20, 0
        %s183 = scalar_lea.vmem %s3, %s182
      $region20: #{_lambda_.7} parent=11 // pred_fallthru
        _
    $region12: #{_lambda_.7} parent=5 // pred_fallthru
      _
    %p184 = scmp.lt.s32.totalorder %s10, 3
    // Predicated region
    $region21: #{_lambda_.7} parent=5 // pred_check
      %p185 = pneg %p184
    $region22: #{_lambda_.7} parent=5 // pred_check_branch
      %187 = sbr.rel (%p185) target = $region24
    $region23: #{_lambda_.7} parent=5 // pred_region
      // Predicated region
      $region25: #{_lambda_.7} parent=23 // pred_check
        %p188 = pneg %p42
      $region26: #{_lambda_.7} parent=23 // pred_check_branch
        %190 = sbr.rel (%p188) target = $region28
      $region27: #{_lambda_.7} parent=23 // pred_region
        %s191 = smul.u32 32, %s17
        %p192 = scmp.lt.s32.totalorder %s191, 127
        %s193 = scalar_select %p192, %s191, 127
        %s194 = smul.addr %s193, 8
        %s195 = scalar_lea.vmem %s0, %s194
        %s196 = smul.u32 32, %s17
      $region28: #{_lambda_.7} parent=23 // pred_fallthru
        _
      // Predicated region
      $region29: #{_lambda_.7} parent=23 // pred_check
        %p197 = pneg %p70
      $region30: #{_lambda_.7} parent=23 // pred_check_branch
        %199 = sbr.rel (%p197) target = $region32
      $region31: #{_lambda_.7} parent=23 // pred_region
        %s200 = sadd.s32 %s17, 1
        %s201 = smul.u32 32, %s200
        %p202 = scmp.lt.s32.totalorder %s201, 127
        %s203 = scalar_select %p202, %s201, 127
        %s204 = smul.addr %s203, 8
        %s205 = scalar_lea.vmem %s1, %s204
        %s206 = sadd.s32 %s17, 1
        %s207 = smul.u32 32, %s206
      $region32: #{_lambda_.7} parent=23 // pred_fallthru
        _
    $region24: #{_lambda_.7} parent=5 // pred_fallthru
      _
    %p208 = scmp.le.s32.totalorder 1, %s10
    %p209 = scmp.lt.s32.totalorder %s10, 4
    %p210 = pnand %p208, %p209
    %p211 = pneg %p210
    // Predicated region
    $region33: #{_lambda_.7} parent=5 // pred_check
      _
    $region34: #{_lambda_.7} parent=5 // pred_check_branch
      %213 = sbr.rel (%p210) target = $region36
    $region35: #{_lambda_.7} parent=5 // pred_region
      %s214 = ssub.s32 %s10, 1
      %s215 = smul.u32 32, %s19
      %p216 = scmp.lt.s32.totalorder %s215, 127
      %s217 = scalar_select %p216, %s215, 127
      %s218 = smul.addr %s217, 8
      %s219 = scalar_lea.vmem %s0, %s218
      %p220 = pneg %p48
      %p221 = pneg %p45
      %s222 = sadd.s32 %s19, 1
      %s223 = smul.u32 32, %s222
      %p224 = scmp.lt.s32.totalorder %s223, 127
      %s225 = scalar_select %p224, %s223, 127
      %s226 = smul.addr %s225, 8
      %s227 = scalar_lea.vmem %s1, %s226
      %p228 = pneg %p76
      %p229 = pneg %p73
      %p230 = scmp.lt.s32.totalorder %s20, 0
      %s231 = scalar_select %p230, %s20, 0
      %s232 = smul.addr %s231, 4
      %s233 = scalar_lea.vmem %s2, %s232
      %p234 = pneg %p102
      %p235 = pneg %p99
      %p236 = scmp.lt.s32.totalorder %s20, 0
      %s237 = scalar_select %p236, %s20, 0
      %s238 = scalar_lea.vmem %s3, %s237
      %p239 = pneg %p128
      %p240 = pneg %p125
      %p241 = pneg %p156
      %p242 = pneg %p153
      %s243 = smul.u32 32, %s19
      %p244 = scmp.lt.s32.totalorder %s243, 95
      %s245 = scalar_select %p244, %s243, 95
      %p246 = scmp.lt.s32.totalorder %s20, 0
      %s247 = scalar_select %p246, %s20, 0
      %s248 = sadd.s32 %s247, %s245
      %s249 = smul.addr %s248, 8
      %s250 = scalar_lea.vmem %s4, %s249
      %s251 = smul.u32 32, %s19
      %p252 = scmp.lt.s32.totalorder %s251, 127
      %s253 = scalar_select %p252, %s251, 127
      %s254 = smul.addr %s253, 8
      %s255 = scalar_lea.vmem %s0, %s254
      %s256 = smul.u32 32, %s19
      %s257 = sadd.s32 %s19, 1
      %s258 = smul.u32 32, %s257
      %p259 = scmp.lt.s32.totalorder %s258, 127
      %s260 = scalar_select %p259, %s258, 127
      %s261 = smul.addr %s260, 8
      %s262 = scalar_lea.vmem %s1, %s261
      %s263 = sadd.s32 %s19, 1
      %s264 = smul.u32 32, %s263
      %p265 = scmp.lt.s32.totalorder %s20, 0
      %s266 = scalar_select %p265, %s20, 0
      %s267 = smul.addr %s266, 4
      %s268 = scalar_lea.vmem %s2, %s267
      %p269 = scmp.lt.s32.totalorder %s20, 0
      %s270 = scalar_select %p269, %s20, 0
      %s271 = scalar_lea.vmem %s3, %s270
      %s272 = smul.u32 32, %s19
      %p273 = scmp.lt.s32.totalorder %s272, 95
      %s274 = scalar_select %p273, %s272, 95
      %p275 = scmp.lt.s32.totalorder %s20, 0
      %s276 = scalar_select %p275, %s20, 0
      %s277 = sadd.s32 %s276, %s274
      %s278 = smul.addr %s277, 8
      %s279 = scalar_lea.vmem %s4, %s278
      %s280 = smul.u32 32, %s19
      %282 = vst [vmem:[#allocation2] sm:$0xff] 0.0
      %283 = vst [vmem:[#allocation2 + $0x8] sm:$0xff] 0.0
      %284 = vst [vmem:[#allocation2 + $0x10] sm:$0xff] 0.0
      %285 = vst [vmem:[#allocation2 + $0x18] sm:$0xff] 0.0
      %286 = vst [vmem:[#allocation2 + $0x20] sm:$0xff] 0.0
      %287 = vst [vmem:[#allocation2 + $0x28] sm:$0xff] 0.0
      %288 = vst [vmem:[#allocation2 + $0x30] sm:$0xff] 0.0
      %289 = vst [vmem:[#allocation2 + $0x38] sm:$0xff] 0.0
      %290 = vst [vmem:[#allocation2 + $0x40] sm:$0xff] 0.0
      %291 = vst [vmem:[#allocation2 + $0x48] sm:$0xff] 0.0
      %292 = vst [vmem:[#allocation2 + $0x50] sm:$0xff] 0.0
      %293 = vst [vmem:[#allocation2 + $0x58] sm:$0xff] 0.0
      %294 = vst [vmem:[#allocation2 + $0x60] sm:$0xff] 0.0
      %295 = vst [vmem:[#allocation2 + $0x68] sm:$0xff] 0.0
      %296 = vst [vmem:[#allocation2 + $0x70] sm:$0xff] 0.0
      %297 = vst [vmem:[#allocation2 + $0x78] sm:$0xff] 0.0
      %298 = vst [vmem:[#allocation2 + $0x80] sm:$0xff] 0.0
      %299 = vst [vmem:[#allocation2 + $0x88] sm:$0xff] 0.0
      %300 = vst [vmem:[#allocation2 + $0x90] sm:$0xff] 0.0
      %301 = vst [vmem:[#allocation2 + $0x98] sm:$0xff] 0.0
      %302 = vst [vmem:[#allocation2 + $0xa0] sm:$0xff] 0.0
      %303 = vst [vmem:[#allocation2 + $0xa8] sm:$0xff] 0.0
      %304 = vst [vmem:[#allocation2 + $0xb0] sm:$0xff] 0.0
      %305 = vst [vmem:[#allocation2 + $0xb8] sm:$0xff] 0.0
      %306 = vst [vmem:[#allocation2 + $0xc0] sm:$0xff] 0.0
      %307 = vst [vmem:[#allocation2 + $0xc8] sm:$0xff] 0.0
      %308 = vst [vmem:[#allocation2 + $0xd0] sm:$0xff] 0.0
      %309 = vst [vmem:[#allocation2 + $0xd8] sm:$0xff] 0.0
      %310 = vst [vmem:[#allocation2 + $0xe0] sm:$0xff] 0.0
      %311 = vst [vmem:[#allocation2 + $0xe8] sm:$0xff] 0.0
      %312 = vst [vmem:[#allocation2 + $0xf0] sm:$0xff] 0.0
      %313 = vst [vmem:[#allocation2 + $0xf8] sm:$0xff] 0.0
      %v314 = vld [vmem:[%s268] sm:$0xf]
      %v315 = vld [vmem:[%s268 + $0x4] sm:$0xf]
      %v316 = vld [vmem:[%s268 + $0x8] sm:$0xf]
      %v317 = vld [vmem:[%s268 + $0xc] sm:$0xf]
      %v318 = vld [vmem:[%s255 + $0x14] sm:$0xff]
      %v319 = vld [vmem:[%s255 + $0x1c] sm:$0xff]
      %v320 = vld [vmem:[%s255 + $0x24] sm:$0xff]
      %v321 = vld [vmem:[%s255 + $0x2c] sm:$0xff]
      %v322 = vld [vmem:[%s255 + $0x34] sm:$0xff]
      %v323 = vld [vmem:[%s255 + $0x3c] sm:$0xff]
      %v324 = vld [vmem:[%s255 + $0x44] sm:$0xff]
      %v325 = vld [vmem:[%s255 + $0x4c] sm:$0xff]
      %v326 = vld [vmem:[%s255 + $0x54] sm:$0xff]
      %v327 = vld [vmem:[%s255 + $0x5c] sm:$0xff]
      %v328 = vld [vmem:[%s255 + $0x64] sm:$0xff]
      %v329 = vld [vmem:[%s255 + $0x6c] sm:$0xff]
      %v330 = vld [vmem:[%s255 + $0x74] sm:$0xff]
      %v331 = vld [vmem:[%s255 + $0x7c] sm:$0xff]
      %v332 = vld [vmem:[%s255 + $0x84] sm:$0xff]
      %v333 = vld [vmem:[%s255 + $0x8c] sm:$0xff]
      %v334 = vld [vmem:[%s255 + $0x94] sm:$0xff]
      %v335 = vld [vmem:[%s255 + $0x9c] sm:$0xff]
      %v336 = vld [vmem:[%s255 + $0xa4] sm:$0xff]
      %v337 = vld [vmem:[%s255 + $0xac] sm:$0xff]
      %v338 = vld [vmem:[%s255 + $0xb4] sm:$0xff]
      %v339 = vld [vmem:[%s255 + $0xbc] sm:$0xff]
      %v340 = vld [vmem:[%s255 + $0xc4] sm:$0xff]
      %v341 = vld [vmem:[%s255 + $0xcc] sm:$0xff]
      %v342 = vld [vmem:[%s255 + $0xd4] sm:$0xff]
      %v343 = vld [vmem:[%s255 + $0xdc] sm:$0xff]
      %v344 = vld [vmem:[%s255 + $0xe4] sm:$0xff]
      %v345 = vld [vmem:[%s255 + $0xec] sm:$0xff]
      %v346 = vld [vmem:[%s255 + $0xf4] sm:$0xff]
      %v347 = vld [vmem:[%s255 + $0xfc] sm:$0xf]
      %v348 = vpack.c.bf16 %v319, %v318
      %v349 = vpack.c.bf16 %v321, %v320
      %v350 = vpack.c.bf16 %v323, %v322
      %v351 = vpack.c.bf16 %v325, %v324
      %v352 = vpack.c.bf16 %v327, %v326
      %v353 = vpack.c.bf16 %v329, %v328
      %v354 = vpack.c.bf16 %v331, %v330
      %v355 = vpack.c.bf16 %v333, %v332
      %v356 = vpack.c.bf16 %v335, %v334
      %v357 = vpack.c.bf16 %v337, %v336
      %v358 = vpack.c.bf16 %v339, %v338
      %v359 = vpack.c.bf16 %v341, %v340
      %v360 = vpack.c.bf16 %v343, %v342
      %v361 = vpack.c.bf16 %v345, %v344
      %v362 = vpack.c.bf16 %v347, %v346
      %v363 = vld [vmem:[#allocation2] sm:$0xff]
      %v364 = vld [vmem:[#allocation2 + $0x8] sm:$0xff]
      %v365 = vld [vmem:[#allocation2 + $0x10] sm:$0xff]
      %v366 = vld [vmem:[#allocation2 + $0x18] sm:$0xff]
      %v367 = vld [vmem:[#allocation2 + $0x20] sm:$0xff]
      %v368 = vld [vmem:[#allocation2 + $0x28] sm:$0xff]
      %v369 = vld [vmem:[#allocation2 + $0x30] sm:$0xff]
      %v370 = vld [vmem:[#allocation2 + $0x38] sm:$0xff]
      %v371 = vld [vmem:[#allocation2 + $0x40] sm:$0xff]
      %v372 = vld [vmem:[#allocation2 + $0x48] sm:$0xff]
      %v373 = vld [vmem:[#allocation2 + $0x50] sm:$0xff]
      %v374 = vld [vmem:[#allocation2 + $0x58] sm:$0xff]
      %v375 = vld [vmem:[#allocation2 + $0x60] sm:$0xff]
      %v376 = vld [vmem:[#allocation2 + $0x68] sm:$0xff]
      %v377 = vld [vmem:[#allocation2 + $0x70] sm:$0xff]
      %v378 = vld [vmem:[#allocation2 + $0x78] sm:$0xff]
      %v379 = vld [vmem:[#allocation2 + $0x80] sm:$0xff]
      %v380 = vld [vmem:[#allocation2 + $0x88] sm:$0xff]
      %v381 = vld [vmem:[#allocation2 + $0x90] sm:$0xff]
      %v382 = vld [vmem:[#allocation2 + $0x98] sm:$0xff]
      %v383 = vld [vmem:[#allocation2 + $0xa0] sm:$0xff]
      %v384 = vld [vmem:[#allocation2 + $0xa8] sm:$0xff]
      %v385 = vld [vmem:[#allocation2 + $0xb0] sm:$0xff]
      %v386 = vld [vmem:[#allocation2 + $0xb8] sm:$0xff]
      %v387 = vld [vmem:[#allocation2 + $0xc0] sm:$0xff]
      %v388 = vld [vmem:[#allocation2 + $0xc8] sm:$0xff]
      %v389 = vld [vmem:[#allocation2 + $0xd0] sm:$0xff]
      %v390 = vld [vmem:[#allocation2 + $0xd8] sm:$0xff]
      %v391 = vld [vmem:[#allocation2 + $0xe0] sm:$0xff]
      %v392 = vld [vmem:[#allocation2 + $0xe8] sm:$0xf]
      %v397 = vunpack.c.l.b16 %v314
      %v398 = vunpack.c.l.b16 %v315
      %v399 = vunpack.c.l.b16 %v316
      %v400 = vunpack.c.l.b16 %v317
      %v401 = vpack.c.b16 %v398, %v397
      %v402 = vpack.c.b16 %v400, %v399
      %vm405 = vcmask 261120
      %v407 = vsel %vm405, %v348, 0
      %v410 = vsel %vm405, %v349, 0
      %v413 = vsel %vm405, %v350, 0
      %v416 = vsel %vm405, %v351, 0
      %v419 = vsel %vm405, %v352, 0
      %v422 = vsel %vm405, %v353, 0
      %v425 = vsel %vm405, %v354, 0
      %v428 = vsel %vm405, %v355, 0
      %v431 = vsel %vm405, %v356, 0
      %v434 = vsel %vm405, %v357, 0
      %v437 = vsel %vm405, %v358, 0
      %v440 = vsel %vm405, %v359, 0
      %v443 = vsel %vm405, %v360, 0
      %v446 = vsel %vm405, %v361, 0
      %v449 = vsel %vm405, %v362, 0
      %451 = vmatpush.bf16.msra.mxu0 0
      %452 = vmatpush.bf16.msra.mxu0 0
      %453 = vmatpush.bf16.msra.mxu0 0
      %454 = vmatpush.bf16.msra.mxu0 0
      %455 = vmatpush.bf16.msra.mxu0 0
      %456 = vmatpush.bf16.msra.mxu0 0
      %457 = vmatpush.bf16.msra.mxu0 %v402
      %458 = vmatpush.bf16.msra.mxu0 %v401
      %459 = vmatmul.bf16.gmra.mxu0 %v407
      %v460 = vpop.f32.mrf.mxu0
      %v461 = vadd.f32 0.0, %v460
      %v462 = vpop.f32.mrf.mxu0
      %v463 = vadd.f32 0.0, %v462
      %464 = vmatmul.bf16.gmra.mxu0 %v410
      %v465 = vpop.f32.mrf.mxu0
      %v466 = vadd.f32 0.0, %v465
      %v467 = vpop.f32.mrf.mxu0
      %v468 = vadd.f32 0.0, %v467
      %469 = vmatmul.bf16.gmra.mxu0 %v413
      %v470 = vpop.f32.mrf.mxu0
      %v471 = vadd.f32 0.0, %v470
      %v472 = vpop.f32.mrf.mxu0
      %v473 = vadd.f32 0.0, %v472
      %474 = vmatmul.bf16.gmra.mxu0 %v416
      %v475 = vpop.f32.mrf.mxu0
      %v476 = vadd.f32 0.0, %v475
      %v477 = vpop.f32.mrf.mxu0
      %v478 = vadd.f32 0.0, %v477
      %479 = vmatmul.bf16.gmra.mxu0 %v419
      %v480 = vpop.f32.mrf.mxu0
      %v481 = vadd.f32 0.0, %v480
      %v482 = vpop.f32.mrf.mxu0
      %v483 = vadd.f32 0.0, %v482
      %484 = vmatmul.bf16.gmra.mxu0 %v422
      %v485 = vpop.f32.mrf.mxu0
      %v486 = vadd.f32 0.0, %v485
      %v487 = vpop.f32.mrf.mxu0
      %v488 = vadd.f32 0.0, %v487
      %489 = vmatmul.bf16.gmra.mxu0 %v425
      %v490 = vpop.f32.mrf.mxu0
      %v491 = vadd.f32 0.0, %v490
      %v492 = vpop.f32.mrf.mxu0
      %v493 = vadd.f32 0.0, %v492
      %494 = vmatmul.bf16.gmra.mxu0 %v428
      %v495 = vpop.f32.mrf.mxu0
      %v496 = vadd.f32 0.0, %v495
      %v497 = vpop.f32.mrf.mxu0
      %v498 = vadd.f32 0.0, %v497
      %499 = vmatmul.bf16.gmra.mxu0 %v431
      %v500 = vpop.f32.mrf.mxu0
      %v501 = vadd.f32 0.0, %v500
      %v502 = vpop.f32.mrf.mxu0
      %v503 = vadd.f32 0.0, %v502
      %504 = vmatmul.bf16.gmra.mxu0 %v434
      %v505 = vpop.f32.mrf.mxu0
      %v506 = vadd.f32 0.0, %v505
      %v507 = vpop.f32.mrf.mxu0
      %v508 = vadd.f32 0.0, %v507
      %509 = vmatmul.bf16.gmra.mxu0 %v437
      %v510 = vpop.f32.mrf.mxu0
      %v511 = vadd.f32 0.0, %v510
      %v512 = vpop.f32.mrf.mxu0
      %v513 = vadd.f32 0.0, %v512
      %514 = vmatmul.bf16.gmra.mxu0 %v440
      %v515 = vpop.f32.mrf.mxu0
      %v516 = vadd.f32 0.0, %v515
      %v517 = vpop.f32.mrf.mxu0
      %v518 = vadd.f32 0.0, %v517
      %519 = vmatmul.bf16.gmra.mxu0 %v443
      %v520 = vpop.f32.mrf.mxu0
      %v521 = vadd.f32 0.0, %v520
      %v522 = vpop.f32.mrf.mxu0
      %v523 = vadd.f32 0.0, %v522
      %524 = vmatmul.bf16.gmra.mxu0 %v446
      %v525 = vpop.f32.mrf.mxu0
      %v526 = vadd.f32 0.0, %v525
      %v527 = vpop.f32.mrf.mxu0
      %v528 = vadd.f32 0.0, %v527
      %529 = vmatmul.bf16.gmra.mxu0 %v449
      %v530 = vpop.f32.mrf.mxu0
      %v531 = vadd.f32 0.0, %v530
      %v532 = vpop.f32.mrf.mxu0
      %v533 = vadd.f32 0.0, %v532
      %534 = vdwg.mxu0
      %v535 = vadd.f32 %v363, %v461
      %v536 = vadd.f32 %v364, %v463
      %v537 = vadd.f32 %v365, %v466
      %v538 = vadd.f32 %v366, %v468
      %v539 = vadd.f32 %v367, %v471
      %v540 = vadd.f32 %v368, %v473
      %v541 = vadd.f32 %v369, %v476
      %v542 = vadd.f32 %v370, %v478
      %v543 = vadd.f32 %v371, %v481
      %v544 = vadd.f32 %v372, %v483
      %v545 = vadd.f32 %v373, %v486
      %v546 = vadd.f32 %v374, %v488
      %v547 = vadd.f32 %v375, %v491
      %v548 = vadd.f32 %v376, %v493
      %v549 = vadd.f32 %v377, %v496
      %v550 = vadd.f32 %v378, %v498
      %v551 = vadd.f32 %v379, %v501
      %v552 = vadd.f32 %v380, %v503
      %v553 = vadd.f32 %v381, %v506
      %v554 = vadd.f32 %v382, %v508
      %v555 = vadd.f32 %v383, %v511
      %v556 = vadd.f32 %v384, %v513
      %v557 = vadd.f32 %v385, %v516
      %v558 = vadd.f32 %v386, %v518
      %v559 = vadd.f32 %v387, %v521
      %v560 = vadd.f32 %v388, %v523
      %v561 = vadd.f32 %v389, %v526
      %v562 = vadd.f32 %v390, %v528
      %v563 = vadd.f32 %v391, %v531
      %v564 = vadd.f32 %v392, %v533
      %565 = vst [vmem:[#allocation2] sm:$0xff] %v535
      %566 = vst [vmem:[#allocation2 + $0x8] sm:$0xff] %v536
      %567 = vst [vmem:[#allocation2 + $0x10] sm:$0xff] %v537
      %568 = vst [vmem:[#allocation2 + $0x18] sm:$0xff] %v538
      %569 = vst [vmem:[#allocation2 + $0x20] sm:$0xff] %v539
      %570 = vst [vmem:[#allocation2 + $0x28] sm:$0xff] %v540
      %571 = vst [vmem:[#allocation2 + $0x30] sm:$0xff] %v541
      %572 = vst [vmem:[#allocation2 + $0x38] sm:$0xff] %v542
      %573 = vst [vmem:[#allocation2 + $0x40] sm:$0xff] %v543
      %574 = vst [vmem:[#allocation2 + $0x48] sm:$0xff] %v544
      %575 = vst [vmem:[#allocation2 + $0x50] sm:$0xff] %v545
      %576 = vst [vmem:[#allocation2 + $0x58] sm:$0xff] %v546
      %577 = vst [vmem:[#allocation2 + $0x60] sm:$0xff] %v547
      %578 = vst [vmem:[#allocation2 + $0x68] sm:$0xff] %v548
      %579 = vst [vmem:[#allocation2 + $0x70] sm:$0xff] %v549
      %580 = vst [vmem:[#allocation2 + $0x78] sm:$0xff] %v550
      %581 = vst [vmem:[#allocation2 + $0x80] sm:$0xff] %v551
      %582 = vst [vmem:[#allocation2 + $0x88] sm:$0xff] %v552
      %583 = vst [vmem:[#allocation2 + $0x90] sm:$0xff] %v553
      %584 = vst [vmem:[#allocation2 + $0x98] sm:$0xff] %v554
      %585 = vst [vmem:[#allocation2 + $0xa0] sm:$0xff] %v555
      %586 = vst [vmem:[#allocation2 + $0xa8] sm:$0xff] %v556
      %587 = vst [vmem:[#allocation2 + $0xb0] sm:$0xff] %v557
      %588 = vst [vmem:[#allocation2 + $0xb8] sm:$0xff] %v558
      %589 = vst [vmem:[#allocation2 + $0xc0] sm:$0xff] %v559
      %590 = vst [vmem:[#allocation2 + $0xc8] sm:$0xff] %v560
      %591 = vst [vmem:[#allocation2 + $0xd0] sm:$0xff] %v561
      %592 = vst [vmem:[#allocation2 + $0xd8] sm:$0xff] %v562
      %593 = vst [vmem:[#allocation2 + $0xe0] sm:$0xff] %v563
      %594 = vst [vmem:[#allocation2 + $0xe8] sm:$0xf] %v564
      %v595 = vld [vmem:[%s262] sm:$0xff]
      %v596 = vld [vmem:[%s262 + $0x8] sm:$0xff]
      %v597 = vld [vmem:[%s262 + $0x10] sm:$0xf]
      %v598 = vpack.c.bf16 %v596, %v595
      %v599 = vpack.c.bf16 %v597, %v597
      %v600 = vld [vmem:[#allocation2 + $0xec] sm:$0xff]
      %v601 = vld [vmem:[#allocation2 + $0xf4] sm:$0xff]
      %v602 = vld [vmem:[#allocation2 + $0xfc] sm:$0xf]
      %v604 = vsel %vm405, %v598, 0
      %v607 = vsel %vm405, %v599, 0
      %609 = vmatpush.bf16.msra.mxu0 0
      %610 = vmatpush.bf16.msra.mxu0 0
      %611 = vmatpush.bf16.msra.mxu0 0
      %612 = vmatpush.bf16.msra.mxu0 0
      %613 = vmatpush.bf16.msra.mxu0 0
      %614 = vmatpush.bf16.msra.mxu0 0
      %615 = vmatpush.bf16.msra.mxu0 %v402
      %616 = vmatpush.bf16.msra.mxu0 %v401
      %617 = vmatmul.bf16.gmra.mxu0 %v604
      %v618 = vpop.f32.mrf.mxu0
      %v619 = vadd.f32 0.0, %v618
      %v620 = vpop.f32.mrf.mxu0
      %v621 = vadd.f32 0.0, %v620
      %622 = vmatmul.bf16.gmra.mxu0 %v607
      %v623 = vpop.f32.mrf.mxu0
      %v624 = vadd.f32 0.0, %v623
      %v625 = vpop.f32.mrf.mxu0
      %626 = vdwg.mxu0
      %v627 = vadd.f32 %v600, %v619
      %v628 = vadd.f32 %v601, %v621
      %v629 = vadd.f32 %v602, %v624
      %630 = vst [vmem:[#allocation2 + $0xec] sm:$0xff] %v627
      %631 = vst [vmem:[#allocation2 + $0xf4] sm:$0xff] %v628
      %632 = vst [vmem:[#allocation2 + $0xfc] sm:$0xf] %v629
      %s633 = scalar_lea.vmem %s268, 16
      %v634 = vld [vmem:[%s633] sm:$0xf]
      %v635 = vld [vmem:[%s633 + $0x4] sm:$0xf]
      %v636 = vld [vmem:[%s633 + $0x8] sm:$0xf]
      %v637 = vld [vmem:[%s633 + $0xc] sm:$0xf]
      %v638 = vld [vmem:[%s255 + $0x13] sm:$0xff]
      %v639 = vld [vmem:[%s255 + $0x1b] sm:$0xff]
      %v640 = vld [vmem:[%s255 + $0x23] sm:$0xff]
      %v641 = vld [vmem:[%s255 + $0x2b] sm:$0xff]
      %v642 = vld [vmem:[%s255 + $0x33] sm:$0xff]
      %v643 = vld [vmem:[%s255 + $0x3b] sm:$0xff]
      %v644 = vld [vmem:[%s255 + $0x43] sm:$0xff]
      %v645 = vld [vmem:[%s255 + $0x4b] sm:$0xff]
      %v646 = vld [vmem:[%s255 + $0x53] sm:$0xff]
      %v647 = vld [vmem:[%s255 + $0x5b] sm:$0xff]
      %v648 = vld [vmem:[%s255 + $0x63] sm:$0xff]
      %v649 = vld [vmem:[%s255 + $0x6b] sm:$0xff]
      %v650 = vld [vmem:[%s255 + $0x73] sm:$0xff]
      %v651 = vld [vmem:[%s255 + $0x7b] sm:$0xff]
      %v652 = vld [vmem:[%s255 + $0x83] sm:$0xff]
      %v653 = vld [vmem:[%s255 + $0x8b] sm:$0xff]
      %v654 = vld [vmem:[%s255 + $0x93] sm:$0xff]
      %v655 = vld [vmem:[%s255 + $0x9b] sm:$0xff]
      %v656 = vld [vmem:[%s255 + $0xa3] sm:$0xff]
      %v657 = vld [vmem:[%s255 + $0xab] sm:$0xff]
      %v658 = vld [vmem:[%s255 + $0xb3] sm:$0xff]
      %v659 = vld [vmem:[%s255 + $0xbb] sm:$0xff]
      %v660 = vld [vmem:[%s255 + $0xc3] sm:$0xff]
      %v661 = vld [vmem:[%s255 + $0xcb] sm:$0xff]
      %v662 = vld [vmem:[%s255 + $0xd3] sm:$0xff]
      %v663 = vld [vmem:[%s255 + $0xdb] sm:$0xff]
      %v664 = vld [vmem:[%s255 + $0xe3] sm:$0xff]
      %v665 = vld [vmem:[%s255 + $0xeb] sm:$0xff]
      %v666 = vld [vmem:[%s255 + $0xf3] sm:$0xff]
      %v667 = vld [vmem:[%s255 + $0xfb] sm:$0x1f]
      %v668 = vpack.c.bf16 %v639, %v638
      %v669 = vpack.c.bf16 %v641, %v640
      %v670 = vpack.c.bf16 %v643, %v642
      %v671 = vpack.c.bf16 %v645, %v644
      %v672 = vpack.c.bf16 %v647, %v646
      %v673 = vpack.c.bf16 %v649, %v648
      %v674 = vpack.c.bf16 %v651, %v650
      %v675 = vpack.c.bf16 %v653, %v652
      %v676 = vpack.c.bf16 %v655, %v654
      %v677 = vpack.c.bf16 %v657, %v656
      %v678 = vpack.c.bf16 %v659, %v658
      %v679 = vpack.c.bf16 %v661, %v660
      %v680 = vpack.c.bf16 %v663, %v662
      %v681 = vpack.c.bf16 %v665, %v664
      %v682 = vpack.c.bf16 %v667, %v666
      %v683 = vld [vmem:[#allocation2] sm:$0xff]
      %v684 = vld [vmem:[#allocation2 + $0x8] sm:$0xff]
      %v685 = vld [vmem:[#allocation2 + $0x10] sm:$0xff]
      %v686 = vld [vmem:[#allocation2 + $0x18] sm:$0xff]
      %v687 = vld [vmem:[#allocation2 + $0x20] sm:$0xff]
      %v688 = vld [vmem:[#allocation2 + $0x28] sm:$0xff]
      %v689 = vld [vmem:[#allocation2 + $0x30] sm:$0xff]
      %v690 = vld [vmem:[#allocation2 + $0x38] sm:$0xff]
      %v691 = vld [vmem:[#allocation2 + $0x40] sm:$0xff]
      %v692 = vld [vmem:[#allocation2 + $0x48] sm:$0xff]
      %v693 = vld [vmem:[#allocation2 + $0x50] sm:$0xff]
      %v694 = vld [vmem:[#allocation2 + $0x58] sm:$0xff]
      %v695 = vld [vmem:[#allocation2 + $0x60] sm:$0xff]
      %v696 = vld [vmem:[#allocation2 + $0x68] sm:$0xff]
      %v697 = vld [vmem:[#allocation2 + $0x70] sm:$0xff]
      %v698 = vld [vmem:[#allocation2 + $0x78] sm:$0xff]
      %v699 = vld [vmem:[#allocation2 + $0x80] sm:$0xff]
      %v700 = vld [vmem:[#allocation2 + $0x88] sm:$0xff]
      %v701 = vld [vmem:[#allocation2 + $0x90] sm:$0xff]
      %v702 = vld [vmem:[#allocation2 + $0x98] sm:$0xff]
      %v703 = vld [vmem:[#allocation2 + $0xa0] sm:$0xff]
      %v704 = vld [vmem:[#allocation2 + $0xa8] sm:$0xff]
      %v705 = vld [vmem:[#allocation2 + $0xb0] sm:$0xff]
      %v706 = vld [vmem:[#allocation2 + $0xb8] sm:$0xff]
      %v707 = vld [vmem:[#allocation2 + $0xc0] sm:$0xff]
      %v708 = vld [vmem:[#allocation2 + $0xc8] sm:$0xff]
      %v709 = vld [vmem:[#allocation2 + $0xd0] sm:$0xff]
      %v710 = vld [vmem:[#allocation2 + $0xd8] sm:$0xff]
      %v711 = vld [vmem:[#allocation2 + $0xe0] sm:$0xff]
      %v712 = vld [vmem:[#allocation2 + $0xe8] sm:$0x1f]
      %v717 = vunpack.c.l.b16 %v634
      %v718 = vunpack.c.l.b16 %v635
      %v719 = vunpack.c.l.b16 %v636
      %v720 = vunpack.c.l.b16 %v637
      %v721 = vpack.c.b16 %v718, %v717
      %v722 = vpack.c.b16 %v720, %v719
      %v726 = vsel %vm405, %v668, 0
      %v729 = vsel %vm405, %v669, 0
      %v732 = vsel %vm405, %v670, 0
      %v735 = vsel %vm405, %v671, 0
      %v738 = vsel %vm405, %v672, 0
      %v741 = vsel %vm405, %v673, 0
      %v744 = vsel %vm405, %v674, 0
      %v747 = vsel %vm405, %v675, 0
      %v750 = vsel %vm405, %v676, 0
      %v753 = vsel %vm405, %v677, 0
      %v756 = vsel %vm405, %v678, 0
      %v759 = vsel %vm405, %v679, 0
      %v762 = vsel %vm405, %v680, 0
      %v765 = vsel %vm405, %v681, 0
      %v768 = vsel %vm405, %v682, 0
      %770 = vmatpush.bf16.msra.mxu0 0
      %771 = vmatpush.bf16.msra.mxu0 0
      %772 = vmatpush.bf16.msra.mxu0 0
      %773 = vmatpush.bf16.msra.mxu0 0
      %774 = vmatpush.bf16.msra.mxu0 0
      %775 = vmatpush.bf16.msra.mxu0 0
      %776 = vmatpush.bf16.msra.mxu0 %v722
      %777 = vmatpush.bf16.msra.mxu0 %v721
      %778 = vmatmul.bf16.gmra.mxu0 %v726
      %v779 = vpop.f32.mrf.mxu0
      %v780 = vadd.f32 0.0, %v779
      %v781 = vpop.f32.mrf.mxu0
      %v782 = vadd.f32 0.0, %v781
      %783 = vmatmul.bf16.gmra.mxu0 %v729
      %v784 = vpop.f32.mrf.mxu0
      %v785 = vadd.f32 0.0, %v784
      %v786 = vpop.f32.mrf.mxu0
      %v787 = vadd.f32 0.0, %v786
      %788 = vmatmul.bf16.gmra.mxu0 %v732
      %v789 = vpop.f32.mrf.mxu0
      %v790 = vadd.f32 0.0, %v789
      %v791 = vpop.f32.mrf.mxu0
      %v792 = vadd.f32 0.0, %v791
      %793 = vmatmul.bf16.gmra.mxu0 %v735
      %v794 = vpop.f32.mrf.mxu0
      %v795 = vadd.f32 0.0, %v794
      %v796 = vpop.f32.mrf.mxu0
      %v797 = vadd.f32 0.0, %v796
      %798 = vmatmul.bf16.gmra.mxu0 %v738
      %v799 = vpop.f32.mrf.mxu0
      %v800 = vadd.f32 0.0, %v799
      %v801 = vpop.f32.mrf.mxu0
      %v802 = vadd.f32 0.0, %v801
      %803 = vmatmul.bf16.gmra.mxu0 %v741
      %v804 = vpop.f32.mrf.mxu0
      %v805 = vadd.f32 0.0, %v804
      %v806 = vpop.f32.mrf.mxu0
      %v807 = vadd.f32 0.0, %v806
      %808 = vmatmul.bf16.gmra.mxu0 %v744
      %v809 = vpop.f32.mrf.mxu0
      %v810 = vadd.f32 0.0, %v809
      %v811 = vpop.f32.mrf.mxu0
      %v812 = vadd.f32 0.0, %v811
      %813 = vmatmul.bf16.gmra.mxu0 %v747
      %v814 = vpop.f32.mrf.mxu0
      %v815 = vadd.f32 0.0, %v814
      %v816 = vpop.f32.mrf.mxu0
      %v817 = vadd.f32 0.0, %v816
      %818 = vmatmul.bf16.gmra.mxu0 %v750
      %v819 = vpop.f32.mrf.mxu0
      %v820 = vadd.f32 0.0, %v819
      %v821 = vpop.f32.mrf.mxu0
      %v822 = vadd.f32 0.0, %v821
      %823 = vmatmul.bf16.gmra.mxu0 %v753
      %v824 = vpop.f32.mrf.mxu0
      %v825 = vadd.f32 0.0, %v824
      %v826 = vpop.f32.mrf.mxu0
      %v827 = vadd.f32 0.0, %v826
      %828 = vmatmul.bf16.gmra.mxu0 %v756
      %v829 = vpop.f32.mrf.mxu0
      %v830 = vadd.f32 0.0, %v829
      %v831 = vpop.f32.mrf.mxu0
      %v832 = vadd.f32 0.0, %v831
      %833 = vmatmul.bf16.gmra.mxu0 %v759
      %v834 = vpop.f32.mrf.mxu0
      %v835 = vadd.f32 0.0, %v834
      %v836 = vpop.f32.mrf.mxu0
      %v837 = vadd.f32 0.0, %v836
      %838 = vmatmul.bf16.gmra.mxu0 %v762
      %v839 = vpop.f32.mrf.mxu0
      %v840 = vadd.f32 0.0, %v839
      %v841 = vpop.f32.mrf.mxu0
      %v842 = vadd.f32 0.0, %v841
      %843 = vmatmul.bf16.gmra.mxu0 %v765
      %v844 = vpop.f32.mrf.mxu0
      %v845 = vadd.f32 0.0, %v844
      %v846 = vpop.f32.mrf.mxu0
      %v847 = vadd.f32 0.0, %v846
      %848 = vmatmul.bf16.gmra.mxu0 %v768
      %v849 = vpop.f32.mrf.mxu0
      %v850 = vadd.f32 0.0, %v849
      %v851 = vpop.f32.mrf.mxu0
      %v852 = vadd.f32 0.0, %v851
      %853 = vdwg.mxu0
      %v854 = vadd.f32 %v683, %v780
      %v855 = vadd.f32 %v684, %v782
      %v856 = vadd.f32 %v685, %v785
      %v857 = vadd.f32 %v686, %v787
      %v858 = vadd.f32 %v687, %v790
      %v859 = vadd.f32 %v688, %v792
      %v860 = vadd.f32 %v689, %v795
      %v861 = vadd.f32 %v690, %v797
      %v862 = vadd.f32 %v691, %v800
      %v863 = vadd.f32 %v692, %v802
      %v864 = vadd.f32 %v693, %v805
      %v865 = vadd.f32 %v694, %v807
      %v866 = vadd.f32 %v695, %v810
      %v867 = vadd.f32 %v696, %v812
      %v868 = vadd.f32 %v697, %v815
      %v869 = vadd.f32 %v698, %v817
      %v870 = vadd.f32 %v699, %v820
      %v871 = vadd.f32 %v700, %v822
      %v872 = vadd.f32 %v701, %v825
      %v873 = vadd.f32 %v702, %v827
      %v874 = vadd.f32 %v703, %v830
      %v875 = vadd.f32 %v704, %v832
      %v876 = vadd.f32 %v705, %v835
      %v877 = vadd.f32 %v706, %v837
      %v878 = vadd.f32 %v707, %v840
      %v879 = vadd.f32 %v708, %v842
      %v880 = vadd.f32 %v709, %v845
      %v881 = vadd.f32 %v710, %v847
      %v882 = vadd.f32 %v711, %v850
      %v883 = vadd.f32 %v712, %v852
      %884 = vst [vmem:[#allocation2] sm:$0xff] %v854
      %885 = vst [vmem:[#allocation2 + $0x8] sm:$0xff] %v855
      %886 = vst [vmem:[#allocation2 + $0x10] sm:$0xff] %v856
      %887 = vst [vmem:[#allocation2 + $0x18] sm:$0xff] %v857
      %888 = vst [vmem:[#allocation2 + $0x20] sm:$0xff] %v858
      %889 = vst [vmem:[#allocation2 + $0x28] sm:$0xff] %v859
      %890 = vst [vmem:[#allocation2 + $0x30] sm:$0xff] %v860
      %891 = vst [vmem:[#allocation2 + $0x38] sm:$0xff] %v861
      %892 = vst [vmem:[#allocation2 + $0x40] sm:$0xff] %v862
      %893 = vst [vmem:[#allocation2 + $0x48] sm:$0xff] %v863
      %894 = vst [vmem:[#allocation2 + $0x50] sm:$0xff] %v864
      %895 = vst [vmem:[#allocation2 + $0x58] sm:$0xff] %v865
      %896 = vst [vmem:[#allocation2 + $0x60] sm:$0xff] %v866
      %897 = vst [vmem:[#allocation2 + $0x68] sm:$0xff] %v867
      %898 = vst [vmem:[#allocation2 + $0x70] sm:$0xff] %v868
      %899 = vst [vmem:[#allocation2 + $0x78] sm:$0xff] %v869
      %900 = vst [vmem:[#allocation2 + $0x80] sm:$0xff] %v870
      %901 = vst [vmem:[#allocation2 + $0x88] sm:$0xff] %v871
      %902 = vst [vmem:[#allocation2 + $0x90] sm:$0xff] %v872
      %903 = vst [vmem:[#allocation2 + $0x98] sm:$0xff] %v873
      %904 = vst [vmem:[#allocation2 + $0xa0] sm:$0xff] %v874
      %905 = vst [vmem:[#allocation2 + $0xa8] sm:$0xff] %v875
      %906 = vst [vmem:[#allocation2 + $0xb0] sm:$0xff] %v876
      %907 = vst [vmem:[#allocation2 + $0xb8] sm:$0xff] %v877
      %908 = vst [vmem:[#allocation2 + $0xc0] sm:$0xff] %v878
      %909 = vst [vmem:[#allocation2 + $0xc8] sm:$0xff] %v879
      %910 = vst [vmem:[#allocation2 + $0xd0] sm:$0xff] %v880
      %911 = vst [vmem:[#allocation2 + $0xd8] sm:$0xff] %v881
      %912 = vst [vmem:[#allocation2 + $0xe0] sm:$0xff] %v882
      %913 = vst [vmem:[#allocation2 + $0xe8] sm:$0x1f] %v883
      %v914 = vld [vmem:[%s262] sm:$0xff]
      %v915 = vld [vmem:[%s262 + $0x8] sm:$0xff]
      %v916 = vld [vmem:[%s262 + $0x10] sm:$0x7]
      %v917 = vpack.c.bf16 %v915, %v914
      %v918 = vpack.c.bf16 %v916, %v916
      %v919 = vld [vmem:[#allocation2 + $0xed] sm:$0xff]
      %v920 = vld [vmem:[#allocation2 + $0xf5] sm:$0xff]
      %v921 = vld [vmem:[#allocation2 + $0xfd] sm:$0x7]
      %v923 = vsel %vm405, %v917, 0
      %v926 = vsel %vm405, %v918, 0
      %928 = vmatpush.bf16.msra.mxu0 0
      %929 = vmatpush.bf16.msra.mxu0 0
      %930 = vmatpush.bf16.msra.mxu0 0
      %931 = vmatpush.bf16.msra.mxu0 0
      %932 = vmatpush.bf16.msra.mxu0 0
      %933 = vmatpush.bf16.msra.mxu0 0
      %934 = vmatpush.bf16.msra.mxu0 %v722
      %935 = vmatpush.bf16.msra.mxu0 %v721
      %936 = vmatmul.bf16.gmra.mxu0 %v923
      %v937 = vpop.f32.mrf.mxu0
      %v938 = vadd.f32 0.0, %v937
      %v939 = vpop.f32.mrf.mxu0
      %v940 = vadd.f32 0.0, %v939
      %941 = vmatmul.bf16.gmra.mxu0 %v926
      %v942 = vpop.f32.mrf.mxu0
      %v943 = vadd.f32 0.0, %v942
      %v944 = vpop.f32.mrf.mxu0
      %945 = vdwg.mxu0
      %v946 = vadd.f32 %v919, %v938
      %v947 = vadd.f32 %v920, %v940
      %v948 = vadd.f32 %v921, %v943
      %949 = vst [vmem:[#allocation2 + $0xed] sm:$0xff] %v946
      %950 = vst [vmem:[#allocation2 + $0xf5] sm:$0xff] %v947
      %951 = vst [vmem:[#allocation2 + $0xfd] sm:$0x7] %v948
      %s952 = scalar_lea.vmem %s268, 32
      %v953 = vld [vmem:[%s952] sm:$0xf]
      %v954 = vld [vmem:[%s952 + $0x4] sm:$0xf]
      %v955 = vld [vmem:[%s952 + $0x8] sm:$0xf]
      %v956 = vld [vmem:[%s952 + $0xc] sm:$0xf]
      %v957 = vld [vmem:[%s255 + $0x2] sm:$0xff]
      %v958 = vld [vmem:[%s255 + $0xa] sm:$0xff]
      %v959 = vld [vmem:[%s255 + $0x12] sm:$0xff]
      %v960 = vld [vmem:[%s255 + $0x1a] sm:$0xff]
      %v961 = vld [vmem:[%s255 + $0x22] sm:$0xff]
      %v962 = vld [vmem:[%s255 + $0x2a] sm:$0xff]
      %v963 = vld [vmem:[%s255 + $0x32] sm:$0xff]
      %v964 = vld [vmem:[%s255 + $0x3a] sm:$0xff]
      %v965 = vld [vmem:[%s255 + $0x42] sm:$0xff]
      %v966 = vld [vmem:[%s255 + $0x4a] sm:$0xff]
      %v967 = vld [vmem:[%s255 + $0x52] sm:$0xff]
      %v968 = vld [vmem:[%s255 + $0x5a] sm:$0xff]
      %v969 = vld [vmem:[%s255 + $0x62] sm:$0xff]
      %v970 = vld [vmem:[%s255 + $0x6a] sm:$0xff]
      %v971 = vld [vmem:[%s255 + $0x72] sm:$0xff]
      %v972 = vld [vmem:[%s255 + $0x7a] sm:$0xff]
      %v973 = vld [vmem:[%s255 + $0x82] sm:$0xff]
      %v974 = vld [vmem:[%s255 + $0x8a] sm:$0xff]
      %v975 = vld [vmem:[%s255 + $0x92] sm:$0xff]
      %v976 = vld [vmem:[%s255 + $0x9a] sm:$0xff]
      %v977 = vld [vmem:[%s255 + $0xa2] sm:$0xff]
      %v978 = vld [vmem:[%s255 + $0xaa] sm:$0xff]
      %v979 = vld [vmem:[%s255 + $0xb2] sm:$0xff]
      %v980 = vld [vmem:[%s255 + $0xba] sm:$0xff]
      %v981 = vld [vmem:[%s255 + $0xc2] sm:$0xff]
      %v982 = vld [vmem:[%s255 + $0xca] sm:$0xff]
      %v983 = vld [vmem:[%s255 + $0xd2] sm:$0xff]
      %v984 = vld [vmem:[%s255 + $0xda] sm:$0xff]
      %v985 = vld [vmem:[%s255 + $0xe2] sm:$0xff]
      %v986 = vld [vmem:[%s255 + $0xea] sm:$0xff]
      %v987 = vld [vmem:[%s255 + $0xf2] sm:$0xff]
      %v988 = vld [vmem:[%s255 + $0xfa] sm:$0x3f]
      %v989 = vpack.c.bf16 %v958, %v957
      %v990 = vpack.c.bf16 %v960, %v959
      %v991 = vpack.c.bf16 %v962, %v961
      %v992 = vpack.c.bf16 %v964, %v963
      %v993 = vpack.c.bf16 %v966, %v965
      %v994 = vpack.c.bf16 %v968, %v967
      %v995 = vpack.c.bf16 %v970, %v969
      %v996 = vpack.c.bf16 %v972, %v971
      %v997 = vpack.c.bf16 %v974, %v973
      %v998 = vpack.c.bf16 %v976, %v975
      %v999 = vpack.c.bf16 %v978, %v977
      %v1000 = vpack.c.bf16 %v980, %v979
      %v1001 = vpack.c.bf16 %v982, %v981
      %v1002 = vpack.c.bf16 %v984, %v983
      %v1003 = vpack.c.bf16 %v986, %v985
      %v1004 = vpack.c.bf16 %v988, %v987
      %v1005 = vld [vmem:[#allocation2] sm:$0xff]
      %v1006 = vld [vmem:[#allocation2 + $0x8] sm:$0xff]
      %v1007 = vld [vmem:[#allocation2 + $0x10] sm:$0xff]
      %v1008 = vld [vmem:[#allocation2 + $0x18] sm:$0xff]
      %v1009 = vld [vmem:[#allocation2 + $0x20] sm:$0xff]
      %v1010 = vld [vmem:[#allocation2 + $0x28] sm:$0xff]
      %v1011 = vld [vmem:[#allocation2 + $0x30] sm:$0xff]
      %v1012 = vld [vmem:[#allocation2 + $0x38] sm:$0xff]
      %v1013 = vld [vmem:[#allocation2 + $0x40] sm:$0xff]
      %v1014 = vld [vmem:[#allocation2 + $0x48] sm:$0xff]
      %v1015 = vld [vmem:[#allocation2 + $0x50] sm:$0xff]
      %v1016 = vld [vmem:[#allocation2 + $0x58] sm:$0xff]
      %v1017 = vld [vmem:[#allocation2 + $0x60] sm:$0xff]
      %v1018 = vld [vmem:[#allocation2 + $0x68] sm:$0xff]
      %v1019 = vld [vmem:[#allocation2 + $0x70] sm:$0xff]
      %v1020 = vld [vmem:[#allocation2 + $0x78] sm:$0xff]
      %v1021 = vld [vmem:[#allocation2 + $0x80] sm:$0xff]
      %v1022 = vld [vmem:[#allocation2 + $0x88] sm:$0xff]
      %v1023 = vld [vmem:[#allocation2 + $0x90] sm:$0xff]
      %v1024 = vld [vmem:[#allocation2 + $0x98] sm:$0xff]
      %v1025 = vld [vmem:[#allocation2 + $0xa0] sm:$0xff]
      %v1026 = vld [vmem:[#allocation2 + $0xa8] sm:$0xff]
      %v1027 = vld [vmem:[#allocation2 + $0xb0] sm:$0xff]
      %v1028 = vld [vmem:[#allocation2 + $0xb8] sm:$0xff]
      %v1029 = vld [vmem:[#allocation2 + $0xc0] sm:$0xff]
      %v1030 = vld [vmem:[#allocation2 + $0xc8] sm:$0xff]
      %v1031 = vld [vmem:[#allocation2 + $0xd0] sm:$0xff]
      %v1032 = vld [vmem:[#allocation2 + $0xd8] sm:$0xff]
      %v1033 = vld [vmem:[#allocation2 + $0xe0] sm:$0xff]
      %v1034 = vld [vmem:[#allocation2 + $0xe8] sm:$0xff]
      %v1035 = vld [vmem:[#allocation2 + $0xf0] sm:$0xff]
      %v1036 = vld [vmem:[#allocation2 + $0xf8] sm:$0x3f]
      %v1041 = vunpack.c.l.b16 %v953
      %v1042 = vunpack.c.l.b16 %v954
      %v1043 = vunpack.c.l.b16 %v955
      %v1044 = vunpack.c.l.b16 %v956
      %v1045 = vpack.c.b16 %v1042, %v1041
      %v1046 = vpack.c.b16 %v1044, %v1043
      %v1050 = vsel %vm405, %v989, 0
      %v1053 = vsel %vm405, %v990, 0
      %v1056 = vsel %vm405, %v991, 0
      %v1059 = vsel %vm405, %v992, 0
      %v1062 = vsel %vm405, %v993, 0
      %v1065 = vsel %vm405, %v994, 0
      %v1068 = vsel %vm405, %v995, 0
      %v1071 = vsel %vm405, %v996, 0
      %v1074 = vsel %vm405, %v997, 0
      %v1077 = vsel %vm405, %v998, 0
      %v1080 = vsel %vm405, %v999, 0
      %v1083 = vsel %vm405, %v1000, 0
      %v1086 = vsel %vm405, %v1001, 0
      %v1089 = vsel %vm405, %v1002, 0
      %v1092 = vsel %vm405, %v1003, 0
      %v1095 = vsel %vm405, %v1004, 0
      %1097 = vmatpush.bf16.msra.mxu0 0
      %1098 = vmatpush.bf16.msra.mxu0 0
      %1099 = vmatpush.bf16.msra.mxu0 0
      %1100 = vmatpush.bf16.msra.mxu0 0
      %1101 = vmatpush.bf16.msra.mxu0 0
      %1102 = vmatpush.bf16.msra.mxu0 0
      %1103 = vmatpush.bf16.msra.mxu0 %v1046
      %1104 = vmatpush.bf16.msra.mxu0 %v1045
      %1105 = vmatmul.bf16.gmra.mxu0 %v1050
      %v1106 = vpop.f32.mrf.mxu0
      %v1107 = vadd.f32 0.0, %v1106
      %v1108 = vpop.f32.mrf.mxu0
      %v1109 = vadd.f32 0.0, %v1108
      %1110 = vmatmul.bf16.gmra.mxu0 %v1053
      %v1111 = vpop.f32.mrf.mxu0
      %v1112 = vadd.f32 0.0, %v1111
      %v1113 = vpop.f32.mrf.mxu0
      %v1114 = vadd.f32 0.0, %v1113
      %1115 = vmatmul.bf16.gmra.mxu0 %v1056
      %v1116 = vpop.f32.mrf.mxu0
      %v1117 = vadd.f32 0.0, %v1116
      %v1118 = vpop.f32.mrf.mxu0
      %v1119 = vadd.f32 0.0, %v1118
      %1120 = vmatmul.bf16.gmra.mxu0 %v1059
      %v1121 = vpop.f32.mrf.mxu0
      %v1122 = vadd.f32 0.0, %v1121
      %v1123 = vpop.f32.mrf.mxu0
      %v1124 = vadd.f32 0.0, %v1123
      %1125 = vmatmul.bf16.gmra.mxu0 %v1062
      %v1126 = vpop.f32.mrf.mxu0
      %v1127 = vadd.f32 0.0, %v1126
      %v1128 = vpop.f32.mrf.mxu0
      %v1129 = vadd.f32 0.0, %v1128
      %1130 = vmatmul.bf16.gmra.mxu0 %v1065
      %v1131 = vpop.f32.mrf.mxu0
      %v1132 = vadd.f32 0.0, %v1131
      %v1133 = vpop.f32.mrf.mxu0
      %v1134 = vadd.f32 0.0, %v1133
      %1135 = vmatmul.bf16.gmra.mxu0 %v1068
      %v1136 = vpop.f32.mrf.mxu0
      %v1137 = vadd.f32 0.0, %v1136
      %v1138 = vpop.f32.mrf.mxu0
      %v1139 = vadd.f32 0.0, %v1138
      %1140 = vmatmul.bf16.gmra.mxu0 %v1071
      %v1141 = vpop.f32.mrf.mxu0
      %v1142 = vadd.f32 0.0, %v1141
      %v1143 = vpop.f32.mrf.mxu0
      %v1144 = vadd.f32 0.0, %v1143
      %1145 = vmatmul.bf16.gmra.mxu0 %v1074
      %v1146 = vpop.f32.mrf.mxu0
      %v1147 = vadd.f32 0.0, %v1146
      %v1148 = vpop.f32.mrf.mxu0
      %v1149 = vadd.f32 0.0, %v1148
      %1150 = vmatmul.bf16.gmra.mxu0 %v1077
      %v1151 = vpop.f32.mrf.mxu0
      %v1152 = vadd.f32 0.0, %v1151
      %v1153 = vpop.f32.mrf.mxu0
      %v1154 = vadd.f32 0.0, %v1153
      %1155 = vmatmul.bf16.gmra.mxu0 %v1080
      %v1156 = vpop.f32.mrf.mxu0
      %v1157 = vadd.f32 0.0, %v1156
      %v1158 = vpop.f32.mrf.mxu0
      %v1159 = vadd.f32 0.0, %v1158
      %1160 = vmatmul.bf16.gmra.mxu0 %v1083
      %v1161 = vpop.f32.mrf.mxu0
      %v1162 = vadd.f32 0.0, %v1161
      %v1163 = vpop.f32.mrf.mxu0
      %v1164 = vadd.f32 0.0, %v1163
      %1165 = vmatmul.bf16.gmra.mxu0 %v1086
      %v1166 = vpop.f32.mrf.mxu0
      %v1167 = vadd.f32 0.0, %v1166
      %v1168 = vpop.f32.mrf.mxu0
      %v1169 = vadd.f32 0.0, %v1168
      %1170 = vmatmul.bf16.gmra.mxu0 %v1089
      %v1171 = vpop.f32.mrf.mxu0
      %v1172 = vadd.f32 0.0, %v1171
      %v1173 = vpop.f32.mrf.mxu0
      %v1174 = vadd.f32 0.0, %v1173
      %1175 = vmatmul.bf16.gmra.mxu0 %v1092
      %v1176 = vpop.f32.mrf.mxu0
      %v1177 = vadd.f32 0.0, %v1176
      %v1178 = vpop.f32.mrf.mxu0
      %v1179 = vadd.f32 0.0, %v1178
      %1180 = vmatmul.bf16.gmra.mxu0 %v1095
      %v1181 = vpop.f32.mrf.mxu0
      %v1182 = vadd.f32 0.0, %v1181
      %v1183 = vpop.f32.mrf.mxu0
      %v1184 = vadd.f32 0.0, %v1183
      %1185 = vdwg.mxu0
      %v1186 = vadd.f32 %v1005, %v1107
      %v1187 = vadd.f32 %v1006, %v1109
      %v1188 = vadd.f32 %v1007, %v1112
      %v1189 = vadd.f32 %v1008, %v1114
      %v1190 = vadd.f32 %v1009, %v1117
      %v1191 = vadd.f32 %v1010, %v1119
      %v1192 = vadd.f32 %v1011, %v1122
      %v1193 = vadd.f32 %v1012, %v1124
      %v1194 = vadd.f32 %v1013, %v1127
      %v1195 = vadd.f32 %v1014, %v1129
      %v1196 = vadd.f32 %v1015, %v1132
      %v1197 = vadd.f32 %v1016, %v1134
      %v1198 = vadd.f32 %v1017, %v1137
      %v1199 = vadd.f32 %v1018, %v1139
      %v1200 = vadd.f32 %v1019, %v1142
      %v1201 = vadd.f32 %v1020, %v1144
      %v1202 = vadd.f32 %v1021, %v1147
      %v1203 = vadd.f32 %v1022, %v1149
      %v1204 = vadd.f32 %v1023, %v1152
      %v1205 = vadd.f32 %v1024, %v1154
      %v1206 = vadd.f32 %v1025, %v1157
      %v1207 = vadd.f32 %v1026, %v1159
      %v1208 = vadd.f32 %v1027, %v1162
      %v1209 = vadd.f32 %v1028, %v1164
      %v1210 = vadd.f32 %v1029, %v1167
      %v1211 = vadd.f32 %v1030, %v1169
      %v1212 = vadd.f32 %v1031, %v1172
      %v1213 = vadd.f32 %v1032, %v1174
      %v1214 = vadd.f32 %v1033, %v1177
      %v1215 = vadd.f32 %v1034, %v1179
      %v1216 = vadd.f32 %v1035, %v1182
      %v1217 = vadd.f32 %v1036, %v1184
      %1218 = vst [vmem:[#allocation2] sm:$0xff] %v1186
      %1219 = vst [vmem:[#allocation2 + $0x8] sm:$0xff] %v1187
      %1220 = vst [vmem:[#allocation2 + $0x10] sm:$0xff] %v1188
      %1221 = vst [vmem:[#allocation2 + $0x18] sm:$0xff] %v1189
      %1222 = vst [vmem:[#allocation2 + $0x20] sm:$0xff] %v1190
      %1223 = vst [vmem:[#allocation2 + $0x28] sm:$0xff] %v1191
      %1224 = vst [vmem:[#allocation2 + $0x30] sm:$0xff] %v1192
      %1225 = vst [vmem:[#allocation2 + $0x38] sm:$0xff] %v1193
      %1226 = vst [vmem:[#allocation2 + $0x40] sm:$0xff] %v1194
      %1227 = vst [vmem:[#allocation2 + $0x48] sm:$0xff] %v1195
      %1228 = vst [vmem:[#allocation2 + $0x50] sm:$0xff] %v1196
      %1229 = vst [vmem:[#allocation2 + $0x58] sm:$0xff] %v1197
      %1230 = vst [vmem:[#allocation2 + $0x60] sm:$0xff] %v1198
      %1231 = vst [vmem:[#allocation2 + $0x68] sm:$0xff] %v1199
      %1232 = vst [vmem:[#allocation2 + $0x70] sm:$0xff] %v1200
      %1233 = vst [vmem:[#allocation2 + $0x78] sm:$0xff] %v1201
      %1234 = vst [vmem:[#allocation2 + $0x80] sm:$0xff] %v1202
      %1235 = vst [vmem:[#allocation2 + $0x88] sm:$0xff] %v1203
      %1236 = vst [vmem:[#allocation2 + $0x90] sm:$0xff] %v1204
      %1237 = vst [vmem:[#allocation2 + $0x98] sm:$0xff] %v1205
      %1238 = vst [vmem:[#allocation2 + $0xa0] sm:$0xff] %v1206
      %1239 = vst [vmem:[#allocation2 + $0xa8] sm:$0xff] %v1207
      %1240 = vst [vmem:[#allocation2 + $0xb0] sm:$0xff] %v1208
      %1241 = vst [vmem:[#allocation2 + $0xb8] sm:$0xff] %v1209
      %1242 = vst [vmem:[#allocation2 + $0xc0] sm:$0xff] %v1210
      %1243 = vst [vmem:[#allocation2 + $0xc8] sm:$0xff] %v1211
      %1244 = vst [vmem:[#allocation2 + $0xd0] sm:$0xff] %v1212
      %1245 = vst [vmem:[#allocation2 + $0xd8] sm:$0xff] %v1213
      %1246 = vst [vmem:[#allocation2 + $0xe0] sm:$0xff] %v1214
      %1247 = vst [vmem:[#allocation2 + $0xe8] sm:$0xff] %v1215
      %1248 = vst [vmem:[#allocation2 + $0xf0] sm:$0xff] %v1216
      %1249 = vst [vmem:[#allocation2 + $0xf8] sm:$0x3f] %v1217
      %v1250 = vld [vmem:[%s262] sm:$0x3]
      %v1251 = vpack.c.bf16 %v1250, %v1250
      %v1252 = vld [vmem:[#allocation2 + $0xfe] sm:$0x3]
      %v1254 = vsel %vm405, %v1251, 0
      %1256 = vmatpush.bf16.msra.mxu0 0
      %1257 = vmatpush.bf16.msra.mxu0 0
      %1258 = vmatpush.bf16.msra.mxu0 0
      %1259 = vmatpush.bf16.msra.mxu0 0
      %1260 = vmatpush.bf16.msra.mxu0 0
      %1261 = vmatpush.bf16.msra.mxu0 0
      %1262 = vmatpush.bf16.msra.mxu0 %v1046
      %1263 = vmatpush.bf16.msra.mxu0 %v1045
      %1264 = vmatmul.bf16.gmra.mxu0 %v1254
      %v1265 = vpop.f32.mrf.mxu0
      %v1266 = vadd.f32 0.0, %v1265
      %v1267 = vpop.f32.mrf.mxu0
      %1268 = vdwg.mxu0
      %v1269 = vadd.f32 %v1252, %v1266
      %1270 = vst [vmem:[#allocation2 + $0xfe] sm:$0x3] %v1269
      %s1271 = scalar_lea.vmem %s268, 48
      %v1272 = vld [vmem:[%s1271] sm:$0xf]
      %v1273 = vld [vmem:[%s1271 + $0x4] sm:$0xf]
      %v1274 = vld [vmem:[%s1271 + $0x8] sm:$0xf]
      %v1275 = vld [vmem:[%s1271 + $0xc] sm:$0xf]
      %v1276 = vld [vmem:[%s255 + $0x1] sm:$0xff]
      %v1277 = vld [vmem:[%s255 + $0x9] sm:$0xff]
      %v1278 = vld [vmem:[%s255 + $0x11] sm:$0xff]
      %v1279 = vld [vmem:[%s255 + $0x19] sm:$0xff]
      %v1280 = vld [vmem:[%s255 + $0x21] sm:$0xff]
      %v1281 = vld [vmem:[%s255 + $0x29] sm:$0xff]
      %v1282 = vld [vmem:[%s255 + $0x31] sm:$0xff]
      %v1283 = vld [vmem:[%s255 + $0x39] sm:$0xff]
      %v1284 = vld [vmem:[%s255 + $0x41] sm:$0xff]
      %v1285 = vld [vmem:[%s255 + $0x49] sm:$0xff]
      %v1286 = vld [vmem:[%s255 + $0x51] sm:$0xff]
      %v1287 = vld [vmem:[%s255 + $0x59] sm:$0xff]
      %v1288 = vld [vmem:[%s255 + $0x61] sm:$0xff]
      %v1289 = vld [vmem:[%s255 + $0x69] sm:$0xff]
      %v1290 = vld [vmem:[%s255 + $0x71] sm:$0xff]
      %v1291 = vld [vmem:[%s255 + $0x79] sm:$0xff]
      %v1292 = vld [vmem:[%s255 + $0x81] sm:$0xff]
      %v1293 = vld [vmem:[%s255 + $0x89] sm:$0xff]
      %v1294 = vld [vmem:[%s255 + $0x91] sm:$0xff]
      %v1295 = vld [vmem:[%s255 + $0x99] sm:$0xff]
      %v1296 = vld [vmem:[%s255 + $0xa1] sm:$0xff]
      %v1297 = vld [vmem:[%s255 + $0xa9] sm:$0xff]
      %v1298 = vld [vmem:[%s255 + $0xb1] sm:$0xff]
      %v1299 = vld [vmem:[%s255 + $0xb9] sm:$0xff]
      %v1300 = vld [vmem:[%s255 + $0xc1] sm:$0xff]
      %v1301 = vld [vmem:[%s255 + $0xc9] sm:$0xff]
      %v1302 = vld [vmem:[%s255 + $0xd1] sm:$0xff]
      %v1303 = vld [vmem:[%s255 + $0xd9] sm:$0xff]
      %v1304 = vld [vmem:[%s255 + $0xe1] sm:$0xff]
      %v1305 = vld [vmem:[%s255 + $0xe9] sm:$0xff]
      %v1306 = vld [vmem:[%s255 + $0xf1] sm:$0xff]
      %v1307 = vld [vmem:[%s255 + $0xf9] sm:$0x7f]
      %v1308 = vpack.c.bf16 %v1277, %v1276
      %v1309 = vpack.c.bf16 %v1279, %v1278
      %v1310 = vpack.c.bf16 %v1281, %v1280
      %v1311 = vpack.c.bf16 %v1283, %v1282
      %v1312 = vpack.c.bf16 %v1285, %v1284
      %v1313 = vpack.c.bf16 %v1287, %v1286
      %v1314 = vpack.c.bf16 %v1289, %v1288
      %v1315 = vpack.c.bf16 %v1291, %v1290
      %v1316 = vpack.c.bf16 %v1293, %v1292
      %v1317 = vpack.c.bf16 %v1295, %v1294
      %v1318 = vpack.c.bf16 %v1297, %v1296
      %v1319 = vpack.c.bf16 %v1299, %v1298
      %v1320 = vpack.c.bf16 %v1301, %v1300
      %v1321 = vpack.c.bf16 %v1303, %v1302
      %v1322 = vpack.c.bf16 %v1305, %v1304
      %v1323 = vpack.c.bf16 %v1307, %v1306
      %v1324 = vld [vmem:[#allocation2] sm:$0xff]
      %v1325 = vld [vmem:[#allocation2 + $0x8] sm:$0xff]
      %v1326 = vld [vmem:[#allocation2 + $0x10] sm:$0xff]
      %v1327 = vld [vmem:[#allocation2 + $0x18] sm:$0xff]
      %v1328 = vld [vmem:[#allocation2 + $0x20] sm:$0xff]
      %v1329 = vld [vmem:[#allocation2 + $0x28] sm:$0xff]
      %v1330 = vld [vmem:[#allocation2 + $0x30] sm:$0xff]
      %v1331 = vld [vmem:[#allocation2 + $0x38] sm:$0xff]
      %v1332 = vld [vmem:[#allocation2 + $0x40] sm:$0xff]
      %v1333 = vld [vmem:[#allocation2 + $0x48] sm:$0xff]
      %v1334 = vld [vmem:[#allocation2 + $0x50] sm:$0xff]
      %v1335 = vld [vmem:[#allocation2 + $0x58] sm:$0xff]
      %v1336 = vld [vmem:[#allocation2 + $0x60] sm:$0xff]
      %v1337 = vld [vmem:[#allocation2 + $0x68] sm:$0xff]
      %v1338 = vld [vmem:[#allocation2 + $0x70] sm:$0xff]
      %v1339 = vld [vmem:[#allocation2 + $0x78] sm:$0xff]
      %v1340 = vld [vmem:[#allocation2 + $0x80] sm:$0xff]
      %v1341 = vld [vmem:[#allocation2 + $0x88] sm:$0xff]
      %v1342 = vld [vmem:[#allocation2 + $0x90] sm:$0xff]
      %v1343 = vld [vmem:[#allocation2 + $0x98] sm:$0xff]
      %v1344 = vld [vmem:[#allocation2 + $0xa0] sm:$0xff]
      %v1345 = vld [vmem:[#allocation2 + $0xa8] sm:$0xff]
      %v1346 = vld [vmem:[#allocation2 + $0xb0] sm:$0xff]
      %v1347 = vld [vmem:[#allocation2 + $0xb8] sm:$0xff]
      %v1348 = vld [vmem:[#allocation2 + $0xc0] sm:$0xff]
      %v1349 = vld [vmem:[#allocation2 + $0xc8] sm:$0xff]
      %v1350 = vld [vmem:[#allocation2 + $0xd0] sm:$0xff]
      %v1351 = vld [vmem:[#allocation2 + $0xd8] sm:$0xff]
      %v1352 = vld [vmem:[#allocation2 + $0xe0] sm:$0xff]
      %v1353 = vld [vmem:[#allocation2 + $0xe8] sm:$0xff]
      %v1354 = vld [vmem:[#allocation2 + $0xf0] sm:$0xff]
      %v1355 = vld [vmem:[#allocation2 + $0xf8] sm:$0x7f]
      %v1360 = vunpack.c.l.b16 %v1272
      %v1361 = vunpack.c.l.b16 %v1273
      %v1362 = vunpack.c.l.b16 %v1274
      %v1363 = vunpack.c.l.b16 %v1275
      %v1364 = vpack.c.b16 %v1361, %v1360
      %v1365 = vpack.c.b16 %v1363, %v1362
      %v1369 = vsel %vm405, %v1308, 0
      %v1372 = vsel %vm405, %v1309, 0
      %v1375 = vsel %vm405, %v1310, 0
      %v1378 = vsel %vm405, %v1311, 0
      %v1381 = vsel %vm405, %v1312, 0
      %v1384 = vsel %vm405, %v1313, 0
      %v1387 = vsel %vm405, %v1314, 0
      %v1390 = vsel %vm405, %v1315, 0
      %v1393 = vsel %vm405, %v1316, 0
      %v1396 = vsel %vm405, %v1317, 0
      %v1399 = vsel %vm405, %v1318, 0
      %v1402 = vsel %vm405, %v1319, 0
      %v1405 = vsel %vm405, %v1320, 0
      %v1408 = vsel %vm405, %v1321, 0
      %v1411 = vsel %vm405, %v1322, 0
      %v1414 = vsel %vm405, %v1323, 0
      %1416 = vmatpush.bf16.msra.mxu0 0
      %1417 = vmatpush.bf16.msra.mxu0 0
      %1418 = vmatpush.bf16.msra.mxu0 0
      %1419 = vmatpush.bf16.msra.mxu0 0
      %1420 = vmatpush.bf16.msra.mxu0 0
      %1421 = vmatpush.bf16.msra.mxu0 0
      %1422 = vmatpush.bf16.msra.mxu0 %v1365
      %1423 = vmatpush.bf16.msra.mxu0 %v1364
      %1424 = vmatmul.bf16.gmra.mxu0 %v1369
      %v1425 = vpop.f32.mrf.mxu0
      %v1426 = vadd.f32 0.0, %v1425
      %v1427 = vpop.f32.mrf.mxu0
      %v1428 = vadd.f32 0.0, %v1427
      %1429 = vmatmul.bf16.gmra.mxu0 %v1372
      %v1430 = vpop.f32.mrf.mxu0
      %v1431 = vadd.f32 0.0, %v1430
      %v1432 = vpop.f32.mrf.mxu0
      %v1433 = vadd.f32 0.0, %v1432
      %1434 = vmatmul.bf16.gmra.mxu0 %v1375
      %v1435 = vpop.f32.mrf.mxu0
      %v1436 = vadd.f32 0.0, %v1435
      %v1437 = vpop.f32.mrf.mxu0
      %v1438 = vadd.f32 0.0, %v1437
      %1439 = vmatmul.bf16.gmra.mxu0 %v1378
      %v1440 = vpop.f32.mrf.mxu0
      %v1441 = vadd.f32 0.0, %v1440
      %v1442 = vpop.f32.mrf.mxu0
      %v1443 = vadd.f32 0.0, %v1442
      %1444 = vmatmul.bf16.gmra.mxu0 %v1381
      %v1445 = vpop.f32.mrf.mxu0
      %v1446 = vadd.f32 0.0, %v1445
      %v1447 = vpop.f32.mrf.mxu0
      %v1448 = vadd.f32 0.0, %v1447
      %1449 = vmatmul.bf16.gmra.mxu0 %v1384
      %v1450 = vpop.f32.mrf.mxu0
      %v1451 = vadd.f32 0.0, %v1450
      %v1452 = vpop.f32.mrf.mxu0
      %v1453 = vadd.f32 0.0, %v1452
      %1454 = vmatmul.bf16.gmra.mxu0 %v1387
      %v1455 = vpop.f32.mrf.mxu0
      %v1456 = vadd.f32 0.0, %v1455
      %v1457 = vpop.f32.mrf.mxu0
      %v1458 = vadd.f32 0.0, %v1457
      %1459 = vmatmul.bf16.gmra.mxu0 %v1390
      %v1460 = vpop.f32.mrf.mxu0
      %v1461 = vadd.f32 0.0, %v1460
      %v1462 = vpop.f32.mrf.mxu0
      %v1463 = vadd.f32 0.0, %v1462
      %1464 = vmatmul.bf16.gmra.mxu0 %v1393
      %v1465 = vpop.f32.mrf.mxu0
      %v1466 = vadd.f32 0.0, %v1465
      %v1467 = vpop.f32.mrf.mxu0
      %v1468 = vadd.f32 0.0, %v1467
      %1469 = vmatmul.bf16.gmra.mxu0 %v1396
      %v1470 = vpop.f32.mrf.mxu0
      %v1471 = vadd.f32 0.0, %v1470
      %v1472 = vpop.f32.mrf.mxu0
      %v1473 = vadd.f32 0.0, %v1472
      %1474 = vmatmul.bf16.gmra.mxu0 %v1399
      %v1475 = vpop.f32.mrf.mxu0
      %v1476 = vadd.f32 0.0, %v1475
      %v1477 = vpop.f32.mrf.mxu0
      %v1478 = vadd.f32 0.0, %v1477
      %1479 = vmatmul.bf16.gmra.mxu0 %v1402
      %v1480 = vpop.f32.mrf.mxu0
      %v1481 = vadd.f32 0.0, %v1480
      %v1482 = vpop.f32.mrf.mxu0
      %v1483 = vadd.f32 0.0, %v1482
      %1484 = vmatmul.bf16.gmra.mxu0 %v1405
      %v1485 = vpop.f32.mrf.mxu0
      %v1486 = vadd.f32 0.0, %v1485
      %v1487 = vpop.f32.mrf.mxu0
      %v1488 = vadd.f32 0.0, %v1487
      %1489 = vmatmul.bf16.gmra.mxu0 %v1408
      %v1490 = vpop.f32.mrf.mxu0
      %v1491 = vadd.f32 0.0, %v1490
      %v1492 = vpop.f32.mrf.mxu0
      %v1493 = vadd.f32 0.0, %v1492
      %1494 = vmatmul.bf16.gmra.mxu0 %v1411
      %v1495 = vpop.f32.mrf.mxu0
      %v1496 = vadd.f32 0.0, %v1495
      %v1497 = vpop.f32.mrf.mxu0
      %v1498 = vadd.f32 0.0, %v1497
      %1499 = vmatmul.bf16.gmra.mxu0 %v1414
      %v1500 = vpop.f32.mrf.mxu0
      %v1501 = vadd.f32 0.0, %v1500
      %v1502 = vpop.f32.mrf.mxu0
      %v1503 = vadd.f32 0.0, %v1502
      %1504 = vdwg.mxu0
      %v1505 = vadd.f32 %v1324, %v1426
      %v1506 = vadd.f32 %v1325, %v1428
      %v1507 = vadd.f32 %v1326, %v1431
      %v1508 = vadd.f32 %v1327, %v1433
      %v1509 = vadd.f32 %v1328, %v1436
      %v1510 = vadd.f32 %v1329, %v1438
      %v1511 = vadd.f32 %v1330, %v1441
      %v1512 = vadd.f32 %v1331, %v1443
      %v1513 = vadd.f32 %v1332, %v1446
      %v1514 = vadd.f32 %v1333, %v1448
      %v1515 = vadd.f32 %v1334, %v1451
      %v1516 = vadd.f32 %v1335, %v1453
      %v1517 = vadd.f32 %v1336, %v1456
      %v1518 = vadd.f32 %v1337, %v1458
      %v1519 = vadd.f32 %v1338, %v1461
      %v1520 = vadd.f32 %v1339, %v1463
      %v1521 = vadd.f32 %v1340, %v1466
      %v1522 = vadd.f32 %v1341, %v1468
      %v1523 = vadd.f32 %v1342, %v1471
      %v1524 = vadd.f32 %v1343, %v1473
      %v1525 = vadd.f32 %v1344, %v1476
      %v1526 = vadd.f32 %v1345, %v1478
      %v1527 = vadd.f32 %v1346, %v1481
      %v1528 = vadd.f32 %v1347, %v1483
      %v1529 = vadd.f32 %v1348, %v1486
      %v1530 = vadd.f32 %v1349, %v1488
      %v1531 = vadd.f32 %v1350, %v1491
      %v1532 = vadd.f32 %v1351, %v1493
      %v1533 = vadd.f32 %v1352, %v1496
      %v1534 = vadd.f32 %v1353, %v1498
      %v1535 = vadd.f32 %v1354, %v1501
      %v1536 = vadd.f32 %v1355, %v1503
      %1537 = vst [vmem:[#allocation2] sm:$0xff] %v1505
      %1538 = vst [vmem:[#allocation2 + $0x8] sm:$0xff] %v1506
      %1539 = vst [vmem:[#allocation2 + $0x10] sm:$0xff] %v1507
      %1540 = vst [vmem:[#allocation2 + $0x18] sm:$0xff] %v1508
      %1541 = vst [vmem:[#allocation2 + $0x20] sm:$0xff] %v1509
      %1542 = vst [vmem:[#allocation2 + $0x28] sm:$0xff] %v1510
      %1543 = vst [vmem:[#allocation2 + $0x30] sm:$0xff] %v1511
      %1544 = vst [vmem:[#allocation2 + $0x38] sm:$0xff] %v1512
      %1545 = vst [vmem:[#allocation2 + $0x40] sm:$0xff] %v1513
      %1546 = vst [vmem:[#allocation2 + $0x48] sm:$0xff] %v1514
      %1547 = vst [vmem:[#allocation2 + $0x50] sm:$0xff] %v1515
      %1548 = vst [vmem:[#allocation2 + $0x58] sm:$0xff] %v1516
      %1549 = vst [vmem:[#allocation2 + $0x60] sm:$0xff] %v1517
      %1550 = vst [vmem:[#allocation2 + $0x68] sm:$0xff] %v1518
      %1551 = vst [vmem:[#allocation2 + $0x70] sm:$0xff] %v1519
      %1552 = vst [vmem:[#allocation2 + $0x78] sm:$0xff] %v1520
      %1553 = vst [vmem:[#allocation2 + $0x80] sm:$0xff] %v1521
      %1554 = vst [vmem:[#allocation2 + $0x88] sm:$0xff] %v1522
      %1555 = vst [vmem:[#allocation2 + $0x90] sm:$0xff] %v1523
      %1556 = vst [vmem:[#allocation2 + $0x98] sm:$0xff] %v1524
      %1557 = vst [vmem:[#allocation2 + $0xa0] sm:$0xff] %v1525
      %1558 = vst [vmem:[#allocation2 + $0xa8] sm:$0xff] %v1526
      %1559 = vst [vmem:[#allocation2 + $0xb0] sm:$0xff] %v1527
      %1560 = vst [vmem:[#allocation2 + $0xb8] sm:$0xff] %v1528
      %1561 = vst [vmem:[#allocation2 + $0xc0] sm:$0xff] %v1529
      %1562 = vst [vmem:[#allocation2 + $0xc8] sm:$0xff] %v1530
      %1563 = vst [vmem:[#allocation2 + $0xd0] sm:$0xff] %v1531
      %1564 = vst [vmem:[#allocation2 + $0xd8] sm:$0xff] %v1532
      %1565 = vst [vmem:[#allocation2 + $0xe0] sm:$0xff] %v1533
      %1566 = vst [vmem:[#allocation2 + $0xe8] sm:$0xff] %v1534
      %1567 = vst [vmem:[#allocation2 + $0xf0] sm:$0xff] %v1535
      %1568 = vst [vmem:[#allocation2 + $0xf8] sm:$0x7f] %v1536
      %v1569 = vld [vmem:[%s262] sm:$0x1]
      %v1570 = vpack.c.bf16 %v1569, %v1569
      %v1571 = vld [vmem:[#allocation2 + $0xff] sm:$0x1]
      %v1573 = vsel %vm405, %v1570, 0
      %1575 = vmatpush.bf16.msra.mxu0 0
      %1576 = vmatpush.bf16.msra.mxu0 0
      %1577 = vmatpush.bf16.msra.mxu0 0
      %1578 = vmatpush.bf16.msra.mxu0 0
      %1579 = vmatpush.bf16.msra.mxu0 0
      %1580 = vmatpush.bf16.msra.mxu0 0
      %1581 = vmatpush.bf16.msra.mxu0 %v1365
      %1582 = vmatpush.bf16.msra.mxu0 %v1364
      %1583 = vmatmul.bf16.gmra.mxu0 %v1573
      %v1584 = vpop.f32.mrf.mxu0
      %v1585 = vadd.f32 0.0, %v1584
      %v1586 = vpop.f32.mrf.mxu0
      %1587 = vdwg.mxu0
      %v1588 = vadd.f32 %v1571, %v1585
      %1589 = vst [vmem:[#allocation2 + $0xff] sm:$0x1] %v1588
      %v1590 = vld [vmem:[#allocation2] sm:$0xff]
      %v1591 = vld [vmem:[#allocation2 + $0x8] sm:$0xff]
      %v1592 = vld [vmem:[#allocation2 + $0x10] sm:$0xff]
      %v1593 = vld [vmem:[#allocation2 + $0x18] sm:$0xff]
      %v1594 = vld [vmem:[#allocation2 + $0x20] sm:$0xff]
      %v1595 = vld [vmem:[#allocation2 + $0x28] sm:$0xff]
      %v1596 = vld [vmem:[#allocation2 + $0x30] sm:$0xff]
      %v1597 = vld [vmem:[#allocation2 + $0x38] sm:$0xff]
      %v1598 = vld [vmem:[#allocation2 + $0x40] sm:$0xff]
      %v1599 = vld [vmem:[#allocation2 + $0x48] sm:$0xff]
      %v1600 = vld [vmem:[#allocation2 + $0x50] sm:$0xff]
      %v1601 = vld [vmem:[#allocation2 + $0x58] sm:$0xff]
      %v1602 = vld [vmem:[#allocation2 + $0x60] sm:$0xff]
      %v1603 = vld [vmem:[#allocation2 + $0x68] sm:$0xff]
      %v1604 = vld [vmem:[#allocation2 + $0x70] sm:$0xff]
      %v1605 = vld [vmem:[#allocation2 + $0x78] sm:$0xff]
      %v1606 = vld [vmem:[#allocation2 + $0x80] sm:$0xff]
      %v1607 = vld [vmem:[#allocation2 + $0x88] sm:$0xff]
      %v1608 = vld [vmem:[#allocation2 + $0x90] sm:$0xff]
      %v1609 = vld [vmem:[#allocation2 + $0x98] sm:$0xff]
      %v1610 = vld [vmem:[#allocation2 + $0xa0] sm:$0xff]
      %v1611 = vld [vmem:[#allocation2 + $0xa8] sm:$0xff]
      %v1612 = vld [vmem:[#allocation2 + $0xb0] sm:$0xff]
      %v1613 = vld [vmem:[#allocation2 + $0xb8] sm:$0xff]
      %v1614 = vld [vmem:[#allocation2 + $0xc0] sm:$0xff]
      %v1615 = vld [vmem:[#allocation2 + $0xc8] sm:$0xff]
      %v1616 = vld [vmem:[#allocation2 + $0xd0] sm:$0xff]
      %v1617 = vld [vmem:[#allocation2 + $0xd8] sm:$0xff]
      %v1618 = vld [vmem:[#allocation2 + $0xe0] sm:$0xff]
      %v1619 = vld [vmem:[#allocation2 + $0xe8] sm:$0xff]
      %v1620 = vld [vmem:[#allocation2 + $0xf0] sm:$0xff]
      %v1621 = vld [vmem:[#allocation2 + $0xf8] sm:$0xff]
      %v1622 = vld [vmem:[%s271] sm:$0x1]
      %v1624 = vperm.slane %v1622, 0
      %v1626 = vadd.f32 %v1590, %v1624
      %v1627 = vadd.f32 %v1591, %v1624
      %v1628 = vadd.f32 %v1592, %v1624
      %v1629 = vadd.f32 %v1593, %v1624
      %v1630 = vadd.f32 %v1594, %v1624
      %v1631 = vadd.f32 %v1595, %v1624
      %v1632 = vadd.f32 %v1596, %v1624
      %v1633 = vadd.f32 %v1597, %v1624
      %v1634 = vadd.f32 %v1598, %v1624
      %v1635 = vadd.f32 %v1599, %v1624
      %v1636 = vadd.f32 %v1600, %v1624
      %v1637 = vadd.f32 %v1601, %v1624
      %v1638 = vadd.f32 %v1602, %v1624
      %v1639 = vadd.f32 %v1603, %v1624
      %v1640 = vadd.f32 %v1604, %v1624
      %v1641 = vadd.f32 %v1605, %v1624
      %v1642 = vadd.f32 %v1606, %v1624
      %v1643 = vadd.f32 %v1607, %v1624
      %v1644 = vadd.f32 %v1608, %v1624
      %v1645 = vadd.f32 %v1609, %v1624
      %v1646 = vadd.f32 %v1610, %v1624
      %v1647 = vadd.f32 %v1611, %v1624
      %v1648 = vadd.f32 %v1612, %v1624
      %v1649 = vadd.f32 %v1613, %v1624
      %v1650 = vadd.f32 %v1614, %v1624
      %v1651 = vadd.f32 %v1615, %v1624
      %v1652 = vadd.f32 %v1616, %v1624
      %v1653 = vadd.f32 %v1617, %v1624
      %v1654 = vadd.f32 %v1618, %v1624
      %v1655 = vadd.f32 %v1619, %v1624
      %v1656 = vadd.f32 %v1620, %v1624
      %v1657 = vadd.f32 %v1621, %v1624
      %1658 = vst [vmem:[%s279] sm:$0xff] %v1626
      %1659 = vst [vmem:[%s279 + $0x8] sm:$0xff] %v1627
      %1660 = vst [vmem:[%s279 + $0x10] sm:$0xff] %v1628
      %1661 = vst [vmem:[%s279 + $0x18] sm:$0xff] %v1629
      %1662 = vst [vmem:[%s279 + $0x20] sm:$0xff] %v1630
      %1663 = vst [vmem:[%s279 + $0x28] sm:$0xff] %v1631
      %1664 = vst [vmem:[%s279 + $0x30] sm:$0xff] %v1632
      %1665 = vst [vmem:[%s279 + $0x38] sm:$0xff] %v1633
      %1666 = vst [vmem:[%s279 + $0x40] sm:$0xff] %v1634
      %1667 = vst [vmem:[%s279 + $0x48] sm:$0xff] %v1635
      %1668 = vst [vmem:[%s279 + $0x50] sm:$0xff] %v1636
      %1669 = vst [vmem:[%s279 + $0x58] sm:$0xff] %v1637
      %1670 = vst [vmem:[%s279 + $0x60] sm:$0xff] %v1638
      %1671 = vst [vmem:[%s279 + $0x68] sm:$0xff] %v1639
      %1672 = vst [vmem:[%s279 + $0x70] sm:$0xff] %v1640
      %1673 = vst [vmem:[%s279 + $0x78] sm:$0xff] %v1641
      %1674 = vst [vmem:[%s279 + $0x80] sm:$0xff] %v1642
      %1675 = vst [vmem:[%s279 + $0x88] sm:$0xff] %v1643
      %1676 = vst [vmem:[%s279 + $0x90] sm:$0xff] %v1644
      %1677 = vst [vmem:[%s279 + $0x98] sm:$0xff] %v1645
      %1678 = vst [vmem:[%s279 + $0xa0] sm:$0xff] %v1646
      %1679 = vst [vmem:[%s279 + $0xa8] sm:$0xff] %v1647
      %1680 = vst [vmem:[%s279 + $0xb0] sm:$0xff] %v1648
      %1681 = vst [vmem:[%s279 + $0xb8] sm:$0xff] %v1649
      %1682 = vst [vmem:[%s279 + $0xc0] sm:$0xff] %v1650
      %1683 = vst [vmem:[%s279 + $0xc8] sm:$0xff] %v1651
      %1684 = vst [vmem:[%s279 + $0xd0] sm:$0xff] %v1652
      %1685 = vst [vmem:[%s279 + $0xd8] sm:$0xff] %v1653
      %1686 = vst [vmem:[%s279 + $0xe0] sm:$0xff] %v1654
      %1687 = vst [vmem:[%s279 + $0xe8] sm:$0xff] %v1655
      %1688 = vst [vmem:[%s279 + $0xf0] sm:$0xff] %v1656
      %1689 = vst [vmem:[%s279 + $0xf8] sm:$0xff] %v1657
      %s1690 = smul.u32 32, %s19
      %p1691 = scmp.lt.s32.totalorder %s1690, 95
      %s1692 = scalar_select %p1691, %s1690, 95
      %p1693 = scmp.lt.s32.totalorder %s20, 0
      %s1694 = scalar_select %p1693, %s20, 0
      %s1695 = sadd.s32 %s1694, %s1692
      %s1696 = smul.addr %s1695, 8
      %s1697 = scalar_lea.vmem %s4, %s1696
      // Predicated region
      $region37: #{_lambda_.7} parent=35 // pred_check
        %p1698 = pneg %p153
      $region38: #{_lambda_.7} parent=35 // pred_check_branch
        %1700 = sbr.rel (%p1698) target = $region40
      $region39: #{_lambda_.7} parent=35 // pred_region
        %s1701 = smul.u32 32, %s19
      $region40: #{_lambda_.7} parent=35 // pred_fallthru
        _
    $region36: #{_lambda_.7} parent=5 // pred_fallthru
      _
    %p1702 = scmp.le.s32.totalorder 2, %s10
    // Predicated region
    $region41: #{_lambda_.7} parent=5 // pred_check
      %p1703 = pneg %p1702
    $region42: #{_lambda_.7} parent=5 // pred_check_branch
      %1705 = sbr.rel (%p1703) target = $region44
    $region43: #{_lambda_.7} parent=5 // pred_region
      %s1706 = ssub.s32 %s10, 2
      // Predicated region
      $region45: #{_lambda_.7} parent=43 // pred_check
        %p1707 = pneg %p159
      $region46: #{_lambda_.7} parent=43 // pred_check_branch
        %1709 = sbr.rel (%p1707) target = $region48
      $region47: #{_lambda_.7} parent=43 // pred_region
        %s1710 = smul.u32 32, %s21
        %p1711 = scmp.lt.s32.totalorder %s1710, 95
        %s1712 = scalar_select %p1711, %s1710, 95
        %p1713 = scmp.lt.s32.totalorder %s22, 0
        %s1714 = scalar_select %p1713, %s22, 0
        %s1715 = sadd.s32 %s1714, %s1712
        %s1716 = smul.addr %s1715, 8
        %s1717 = scalar_lea.vmem %s4, %s1716
      $region48: #{_lambda_.7} parent=43 // pred_fallthru
        _
    $region44: #{_lambda_.7} parent=5 // pred_fallthru
      _
  $region6: #{_lambda_.7} parent=0 // loop_footer
    %s14 = sadd.s32 1, %s10
  $region7: #{_lambda_.7} parent=0 // loop_footer_branch
    %9 = sbr.rel target = $region3
  $region8: #{_lambda_.7} parent=0 // loop_exit
    _

// kernel: _lambda_.8
$region0: #{_lambda_.8}
  #allocation0 [shape = 'u32[]', space=smem, size = 0x4, offset = 0x4, fixed_abs, tag = 'smem constant byte address 0x4 - core index']
  #allocation1 [shape = 'u32[72,128]{1,0:T(1,128)}', space=vmem, size = 0x9000, scoped, tag = 'internal scratch']
  #allocation2 [shape = 'f32[256,128]{1,0:T(8,128)}', space=vmem, size = 0x20000, scoped, tag = 'scratch operand']
  %s0 = inlined_call_operand.vmem [shape: f32[1024,32], index: 0, kind: input, shape index: {}, may-alias: {0,1}]
  %s1 = inlined_call_operand.vmem [shape: f32[1024,32], index: 1, kind: input, shape index: {}, may-alias: {0,1}]
  %s2 = inlined_call_operand.vmem [shape: bf16[4,32,128], index: 2, kind: input, shape index: {}]
  %s3 = inlined_call_operand.vmem [shape: f32[1,128], index: 3, kind: input, shape index: {}]
  %s4 = inlined_call_operand.vmem [shape: f32[768,128], index: 4, kind: output, shape index: {}]
  %s5 = sld [smem:[#allocation0]]
  $region49: #{_lambda_.8} parent=0
    _
  %s7 = ssub.s32 1, %s5
  %s8 = scalar_select 0, %s7, %s5
  loop: start=0, step=1, limit=5
  $region2: #{_lambda_.8} parent=0 // loop_pre_header
    _
  $region3: #{_lambda_.8} parent=0 // loop_header
    %s10 = sphi 0, %s14
    %p11 = scmp.ge.s32.totalorder %s10, 5
    %s17 = sphi 0, %s29
    %s18 = sphi 0, %s25
    %s19 = sphi 0, %s17
    %s20 = sphi 0, %s18
    %s21 = sphi 0, %s19
    %s22 = sphi 0, %s20
    %s32 = sphi 0, %s34
    %s35 = sphi 0, %s32
    %s36 = sphi 0, %s35
    %s52 = sphi 0, %s36
    %s60 = sphi 0, %s62
    %s63 = sphi 0, %s60
    %s64 = sphi 0, %s63
    %s80 = sphi 0, %s64
    %s86 = sphi 0, %s88
    %s89 = sphi 0, %s86
    %s90 = sphi 0, %s89
    %s106 = sphi 0, %s90
    %s112 = sphi 0, %s114
    %s115 = sphi 0, %s112
    %s116 = sphi 0, %s115
    %s132 = sphi 0, %s116
    %s140 = sphi 0, %s142
    %s143 = sphi 0, %s140
    %s144 = sphi 0, %s143
    %s160 = sphi 0, %s144
  $region4: #{_lambda_.8} parent=0 // loop_header_branch
    %13 = sbr.rel (%p11) target = $region8
  $region5: #{_lambda_.8} parent=0 // loop_body
    %s15 = ssub.s32 %s10, 1
    %s16 = ssub.s32 %s10, 2
    %s23 = sadd.s32 1, %s18
    %p24 = scmp.ge.s32.totalorder %s23, 1
    %s25 = scalar_select %p24, 0, %s23
    %s26 = sadd.s32 1, %s17
    %s27 = scalar_select %p24, %s26, %s17
    %p28 = scmp.ge.s32.totalorder %s27, 3
    %s29 = scalar_select %p28, 0, %s27
    %s30 = ssub.s32 %s17, %s29
    %p31 = scmp.eq.s32.totalorder %s30, 0
    %s33 = sadd.s32 %s32, 1
    %s34 = scalar_select %p31, %s32, %s33
    %p37 = pneg %p31
    %p38 = scmp.eq.s32.totalorder %s10, 2
    %p39 = por %p37, %p38
    %p40 = scmp.ne.s32.totalorder %s32, %s35
    %p41 = scmp.eq.s32.totalorder %s10, 0
    %p42 = por %p40, %p41
    %p43 = scmp.ne.s32.totalorder %s32, %s35
    %p44 = scmp.eq.s32.totalorder %s15, 2
    %p45 = por %p43, %p44
    %p46 = scmp.ne.s32.totalorder %s35, %s36
    %p47 = scmp.eq.s32.totalorder %s15, 0
    %p48 = por %p46, %p47
    %p49 = scmp.ne.s32.totalorder %s35, %s36
    %p50 = scmp.eq.s32.totalorder %s16, 2
    %p51 = por %p49, %p50
    %p53 = scmp.ne.s32.totalorder %s36, %s52
    %p54 = scmp.eq.s32.totalorder %s16, 0
    %p55 = por %p53, %p54
    %s56 = sadd.s32 %s17, 1
    %s57 = sadd.s32 %s29, 1
    %s58 = ssub.s32 %s56, %s57
    %p59 = scmp.eq.s32.totalorder %s58, 0
    %s61 = sadd.s32 %s60, 1
    %s62 = scalar_select %p59, %s60, %s61
    %p65 = pneg %p59
    %p66 = scmp.eq.s32.totalorder %s10, 2
    %p67 = por %p65, %p66
    %p68 = scmp.ne.s32.totalorder %s60, %s63
    %p69 = scmp.eq.s32.totalorder %s10, 0
    %p70 = por %p68, %p69
    %p71 = scmp.ne.s32.totalorder %s60, %s63
    %p72 = scmp.eq.s32.totalorder %s15, 2
    %p73 = por %p71, %p72
    %p74 = scmp.ne.s32.totalorder %s63, %s64
    %p75 = scmp.eq.s32.totalorder %s15, 0
    %p76 = por %p74, %p75
    %p77 = scmp.ne.s32.totalorder %s63, %s64
    %p78 = scmp.eq.s32.totalorder %s16, 2
    %p79 = por %p77, %p78
    %p81 = scmp.ne.s32.totalorder %s64, %s80
    %p82 = scmp.eq.s32.totalorder %s16, 0
    %p83 = por %p81, %p82
    %s84 = ssub.s32 %s18, %s25
    %p85 = scmp.eq.s32.totalorder %s84, 0
    %s87 = sadd.s32 %s86, 1
    %s88 = scalar_select %p85, %s86, %s87
    %p91 = pneg %p85
    %p92 = scmp.eq.s32.totalorder %s10, 2
    %p93 = por %p91, %p92
    %p94 = scmp.ne.s32.totalorder %s86, %s89
    %p95 = scmp.eq.s32.totalorder %s10, 0
    %p96 = por %p94, %p95
    %p97 = scmp.ne.s32.totalorder %s86, %s89
    %p98 = scmp.eq.s32.totalorder %s15, 2
    %p99 = por %p97, %p98
    %p100 = scmp.ne.s32.totalorder %s89, %s90
    %p101 = scmp.eq.s32.totalorder %s15, 0
    %p102 = por %p100, %p101
    %p103 = scmp.ne.s32.totalorder %s89, %s90
    %p104 = scmp.eq.s32.totalorder %s16, 2
    %p105 = por %p103, %p104
    %p107 = scmp.ne.s32.totalorder %s90, %s106
    %p108 = scmp.eq.s32.totalorder %s16, 0
    %p109 = por %p107, %p108
    %s110 = ssub.s32 %s18, %s25
    %p111 = scmp.eq.s32.totalorder %s110, 0
    %s113 = sadd.s32 %s112, 1
    %s114 = scalar_select %p111, %s112, %s113
    %p117 = pneg %p111
    %p118 = scmp.eq.s32.totalorder %s10, 2
    %p119 = por %p117, %p118
    %p120 = scmp.ne.s32.totalorder %s112, %s115
    %p121 = scmp.eq.s32.totalorder %s10, 0
    %p122 = por %p120, %p121
    %p123 = scmp.ne.s32.totalorder %s112, %s115
    %p124 = scmp.eq.s32.totalorder %s15, 2
    %p125 = por %p123, %p124
    %p126 = scmp.ne.s32.totalorder %s115, %s116
    %p127 = scmp.eq.s32.totalorder %s15, 0
    %p128 = por %p126, %p127
    %p129 = scmp.ne.s32.totalorder %s115, %s116
    %p130 = scmp.eq.s32.totalorder %s16, 2
    %p131 = por %p129, %p130
    %p133 = scmp.ne.s32.totalorder %s116, %s132
    %p134 = scmp.eq.s32.totalorder %s16, 0
    %p135 = por %p133, %p134
    %s136 = ssub.s32 %s17, %s29
    %s137 = ssub.s32 %s18, %s25
    %s138 = sor.u32 %s136, %s137
    %p139 = scmp.eq.s32.totalorder %s138, 0
    %s141 = sadd.s32 %s140, 1
    %s142 = scalar_select %p139, %s140, %s141
    %p145 = pneg %p139
    %p146 = scmp.eq.s32.totalorder %s10, 2
    %p147 = por %p145, %p146
    %p148 = scmp.ne.s32.totalorder %s140, %s143
    %p149 = scmp.eq.s32.totalorder %s10, 0
    %p150 = por %p148, %p149
    %p151 = scmp.ne.s32.totalorder %s140, %s143
    %p152 = scmp.eq.s32.totalorder %s15, 2
    %p153 = por %p151, %p152
    %p154 = scmp.ne.s32.totalorder %s143, %s144
    %p155 = scmp.eq.s32.totalorder %s15, 0
    %p156 = por %p154, %p155
    %p157 = scmp.ne.s32.totalorder %s143, %s144
    %p158 = scmp.eq.s32.totalorder %s16, 2
    %p159 = por %p157, %p158
    %p161 = scmp.ne.s32.totalorder %s144, %s160
    %p162 = scmp.eq.s32.totalorder %s16, 0
    %p163 = por %p161, %p162
    %p164 = scmp.le.s32.totalorder 1, %s10
    %p165 = scmp.lt.s32.totalorder %s10, 4
    %p166 = pnand %p164, %p165
    %p167 = pneg %p166
    // Predicated region
    $region9: #{_lambda_.8} parent=5 // pred_check
      _
    $region10: #{_lambda_.8} parent=5 // pred_check_branch
      %169 = sbr.rel (%p166) target = $region12
    $region11: #{_lambda_.8} parent=5 // pred_region
      %s170 = ssub.s32 %s10, 1
      // Predicated region
      $region13: #{_lambda_.8} parent=11 // pred_check
        %p171 = pneg %p102
      $region14: #{_lambda_.8} parent=11 // pred_check_branch
        %173 = sbr.rel (%p171) target = $region16
      $region15: #{_lambda_.8} parent=11 // pred_region
        %p174 = scmp.lt.s32.totalorder %s20, 0
        %s175 = scalar_select %p174, %s20, 0
        %s176 = smul.addr %s175, 4
        %s177 = scalar_lea.vmem %s2, %s176
      $region16: #{_lambda_.8} parent=11 // pred_fallthru
        _
      // Predicated region
      $region17: #{_lambda_.8} parent=11 // pred_check
        %p178 = pneg %p128
      $region18: #{_lambda_.8} parent=11 // pred_check_branch
        %180 = sbr.rel (%p178) target = $region20
      $region19: #{_lambda_.8} parent=11 // pred_region
        %p181 = scmp.lt.s32.totalorder %s20, 0
        %s182 = scalar_select %p181, %s20, 0
        %s183 = scalar_lea.vmem %s3, %s182
      $region20: #{_lambda_.8} parent=11 // pred_fallthru
        _
    $region12: #{_lambda_.8} parent=5 // pred_fallthru
      _
    %p184 = scmp.lt.s32.totalorder %s10, 3
    // Predicated region
    $region21: #{_lambda_.8} parent=5 // pred_check
      %p185 = pneg %p184
    $region22: #{_lambda_.8} parent=5 // pred_check_branch
      %187 = sbr.rel (%p185) target = $region24
    $region23: #{_lambda_.8} parent=5 // pred_region
      // Predicated region
      $region25: #{_lambda_.8} parent=23 // pred_check
        %p188 = pneg %p42
      $region26: #{_lambda_.8} parent=23 // pred_check_branch
        %190 = sbr.rel (%p188) target = $region28
      $region27: #{_lambda_.8} parent=23 // pred_region
        %s191 = smul.u32 32, %s17
        %p192 = scmp.lt.s32.totalorder %s191, 127
        %s193 = scalar_select %p192, %s191, 127
        %s194 = smul.addr %s193, 8
        %s195 = scalar_lea.vmem %s0, %s194
        %s196 = smul.u32 32, %s17
      $region28: #{_lambda_.8} parent=23 // pred_fallthru
        _
      // Predicated region
      $region29: #{_lambda_.8} parent=23 // pred_check
        %p197 = pneg %p70
      $region30: #{_lambda_.8} parent=23 // pred_check_branch
        %199 = sbr.rel (%p197) target = $region32
      $region31: #{_lambda_.8} parent=23 // pred_region
        %s200 = sadd.s32 %s17, 1
        %s201 = smul.u32 32, %s200
        %p202 = scmp.lt.s32.totalorder %s201, 127
        %s203 = scalar_select %p202, %s201, 127
        %s204 = smul.addr %s203, 8
        %s205 = scalar_lea.vmem %s1, %s204
        %s206 = sadd.s32 %s17, 1
        %s207 = smul.u32 32, %s206
      $region32: #{_lambda_.8} parent=23 // pred_fallthru
        _
    $region24: #{_lambda_.8} parent=5 // pred_fallthru
      _
    %p208 = scmp.le.s32.totalorder 1, %s10
    %p209 = scmp.lt.s32.totalorder %s10, 4
    %p210 = pnand %p208, %p209
    %p211 = pneg %p210
    // Predicated region
    $region33: #{_lambda_.8} parent=5 // pred_check
      _
    $region34: #{_lambda_.8} parent=5 // pred_check_branch
      %213 = sbr.rel (%p210) target = $region36
    $region35: #{_lambda_.8} parent=5 // pred_region
      %s214 = ssub.s32 %s10, 1
      %s215 = smul.u32 32, %s19
      %p216 = scmp.lt.s32.totalorder %s215, 127
      %s217 = scalar_select %p216, %s215, 127
      %s218 = smul.addr %s217, 8
      %s219 = scalar_lea.vmem %s0, %s218
      %p220 = pneg %p48
      %p221 = pneg %p45
      %s222 = sadd.s32 %s19, 1
      %s223 = smul.u32 32, %s222
      %p224 = scmp.lt.s32.totalorder %s223, 127
      %s225 = scalar_select %p224, %s223, 127
      %s226 = smul.addr %s225, 8
      %s227 = scalar_lea.vmem %s1, %s226
      %p228 = pneg %p76
      %p229 = pneg %p73
      %p230 = scmp.lt.s32.totalorder %s20, 0
      %s231 = scalar_select %p230, %s20, 0
      %s232 = smul.addr %s231, 4
      %s233 = scalar_lea.vmem %s2, %s232
      %p234 = pneg %p102
      %p235 = pneg %p99
      %p236 = scmp.lt.s32.totalorder %s20, 0
      %s237 = scalar_select %p236, %s20, 0
      %s238 = scalar_lea.vmem %s3, %s237
      %p239 = pneg %p128
      %p240 = pneg %p125
      %p241 = pneg %p156
      %p242 = pneg %p153
      %s243 = smul.u32 32, %s19
      %p244 = scmp.lt.s32.totalorder %s243, 95
      %s245 = scalar_select %p244, %s243, 95
      %p246 = scmp.lt.s32.totalorder %s20, 0
      %s247 = scalar_select %p246, %s20, 0
      %s248 = sadd.s32 %s247, %s245
      %s249 = smul.addr %s248, 8
      %s250 = scalar_lea.vmem %s4, %s249
      %s251 = smul.u32 32, %s19
      %p252 = scmp.lt.s32.totalorder %s251, 127
      %s253 = scalar_select %p252, %s251, 127
      %s254 = smul.addr %s253, 8
      %s255 = scalar_lea.vmem %s0, %s254
      %s256 = smul.u32 32, %s19
      %s257 = sadd.s32 %s19, 1
      %s258 = smul.u32 32, %s257
      %p259 = scmp.lt.s32.totalorder %s258, 127
      %s260 = scalar_select %p259, %s258, 127
      %s261 = smul.addr %s260, 8
      %s262 = scalar_lea.vmem %s1, %s261
      %s263 = sadd.s32 %s19, 1
      %s264 = smul.u32 32, %s263
      %p265 = scmp.lt.s32.totalorder %s20, 0
      %s266 = scalar_select %p265, %s20, 0
      %s267 = smul.addr %s266, 4
      %s268 = scalar_lea.vmem %s2, %s267
      %p269 = scmp.lt.s32.totalorder %s20, 0
      %s270 = scalar_select %p269, %s20, 0
      %s271 = scalar_lea.vmem %s3, %s270
      %s272 = smul.u32 32, %s19
      %p273 = scmp.lt.s32.totalorder %s272, 95
      %s274 = scalar_select %p273, %s272, 95
      %p275 = scmp.lt.s32.totalorder %s20, 0
      %s276 = scalar_select %p275, %s20, 0
      %s277 = sadd.s32 %s276, %s274
      %s278 = smul.addr %s277, 8
      %s279 = scalar_lea.vmem %s4, %s278
      %s280 = smul.u32 32, %s19
      %282 = vst [vmem:[#allocation2] sm:$0xff] 0.0
      %283 = vst [vmem:[#allocation2 + $0x8] sm:$0xff] 0.0
      %284 = vst [vmem:[#allocation2 + $0x10] sm:$0xff] 0.0
      %285 = vst [vmem:[#allocation2 + $0x18] sm:$0xff] 0.0
      %286 = vst [vmem:[#allocation2 + $0x20] sm:$0xff] 0.0
      %287 = vst [vmem:[#allocation2 + $0x28] sm:$0xff] 0.0
      %288 = vst [vmem:[#allocation2 + $0x30] sm:$0xff] 0.0
      %289 = vst [vmem:[#allocation2 + $0x38] sm:$0xff] 0.0
      %290 = vst [vmem:[#allocation2 + $0x40] sm:$0xff] 0.0
      %291 = vst [vmem:[#allocation2 + $0x48] sm:$0xff] 0.0
      %292 = vst [vmem:[#allocation2 + $0x50] sm:$0xff] 0.0
      %293 = vst [vmem:[#allocation2 + $0x58] sm:$0xff] 0.0
      %294 = vst [vmem:[#allocation2 + $0x60] sm:$0xff] 0.0
      %295 = vst [vmem:[#allocation2 + $0x68] sm:$0xff] 0.0
      %296 = vst [vmem:[#allocation2 + $0x70] sm:$0xff] 0.0
      %297 = vst [vmem:[#allocation2 + $0x78] sm:$0xff] 0.0
      %298 = vst [vmem:[#allocation2 + $0x80] sm:$0xff] 0.0
      %299 = vst [vmem:[#allocation2 + $0x88] sm:$0xff] 0.0
      %300 = vst [vmem:[#allocation2 + $0x90] sm:$0xff] 0.0
      %301 = vst [vmem:[#allocation2 + $0x98] sm:$0xff] 0.0
      %302 = vst [vmem:[#allocation2 + $0xa0] sm:$0xff] 0.0
      %303 = vst [vmem:[#allocation2 + $0xa8] sm:$0xff] 0.0
      %304 = vst [vmem:[#allocation2 + $0xb0] sm:$0xff] 0.0
      %305 = vst [vmem:[#allocation2 + $0xb8] sm:$0xff] 0.0
      %306 = vst [vmem:[#allocation2 + $0xc0] sm:$0xff] 0.0
      %307 = vst [vmem:[#allocation2 + $0xc8] sm:$0xff] 0.0
      %308 = vst [vmem:[#allocation2 + $0xd0] sm:$0xff] 0.0
      %309 = vst [vmem:[#allocation2 + $0xd8] sm:$0xff] 0.0
      %310 = vst [vmem:[#allocation2 + $0xe0] sm:$0xff] 0.0
      %311 = vst [vmem:[#allocation2 + $0xe8] sm:$0xff] 0.0
      %312 = vst [vmem:[#allocation2 + $0xf0] sm:$0xff] 0.0
      %313 = vst [vmem:[#allocation2 + $0xf8] sm:$0xff] 0.0
      %v314 = vld [vmem:[%s268] sm:$0xf]
      %v315 = vld [vmem:[%s268 + $0x4] sm:$0xf]
      %v316 = vld [vmem:[%s268 + $0x8] sm:$0xf]
      %v317 = vld [vmem:[%s268 + $0xc] sm:$0xf]
      %v318 = vld [vmem:[%s255 + $0x13] sm:$0xff]
      %v319 = vld [vmem:[%s255 + $0x1b] sm:$0xff]
      %v320 = vld [vmem:[%s255 + $0x23] sm:$0xff]
      %v321 = vld [vmem:[%s255 + $0x2b] sm:$0xff]
      %v322 = vld [vmem:[%s255 + $0x33] sm:$0xff]
      %v323 = vld [vmem:[%s255 + $0x3b] sm:$0xff]
      %v324 = vld [vmem:[%s255 + $0x43] sm:$0xff]
      %v325 = vld [vmem:[%s255 + $0x4b] sm:$0xff]
      %v326 = vld [vmem:[%s255 + $0x53] sm:$0xff]
      %v327 = vld [vmem:[%s255 + $0x5b] sm:$0xff]
      %v328 = vld [vmem:[%s255 + $0x63] sm:$0xff]
      %v329 = vld [vmem:[%s255 + $0x6b] sm:$0xff]
      %v330 = vld [vmem:[%s255 + $0x73] sm:$0xff]
      %v331 = vld [vmem:[%s255 + $0x7b] sm:$0xff]
      %v332 = vld [vmem:[%s255 + $0x83] sm:$0xff]
      %v333 = vld [vmem:[%s255 + $0x8b] sm:$0xff]
      %v334 = vld [vmem:[%s255 + $0x93] sm:$0xff]
      %v335 = vld [vmem:[%s255 + $0x9b] sm:$0xff]
      %v336 = vld [vmem:[%s255 + $0xa3] sm:$0xff]
      %v337 = vld [vmem:[%s255 + $0xab] sm:$0xff]
      %v338 = vld [vmem:[%s255 + $0xb3] sm:$0xff]
      %v339 = vld [vmem:[%s255 + $0xbb] sm:$0xff]
      %v340 = vld [vmem:[%s255 + $0xc3] sm:$0xff]
      %v341 = vld [vmem:[%s255 + $0xcb] sm:$0xff]
      %v342 = vld [vmem:[%s255 + $0xd3] sm:$0xff]
      %v343 = vld [vmem:[%s255 + $0xdb] sm:$0xff]
      %v344 = vld [vmem:[%s255 + $0xe3] sm:$0xff]
      %v345 = vld [vmem:[%s255 + $0xeb] sm:$0xff]
      %v346 = vld [vmem:[%s255 + $0xf3] sm:$0xff]
      %v347 = vld [vmem:[%s255 + $0xfb] sm:$0x1f]
      %v348 = vpack.c.bf16 %v319, %v318
      %v349 = vpack.c.bf16 %v321, %v320
      %v350 = vpack.c.bf16 %v323, %v322
      %v351 = vpack.c.bf16 %v325, %v324
      %v352 = vpack.c.bf16 %v327, %v326
      %v353 = vpack.c.bf16 %v329, %v328
      %v354 = vpack.c.bf16 %v331, %v330
      %v355 = vpack.c.bf16 %v333, %v332
      %v356 = vpack.c.bf16 %v335, %v334
      %v357 = vpack.c.bf16 %v337, %v336
      %v358 = vpack.c.bf16 %v339, %v338
      %v359 = vpack.c.bf16 %v341, %v340
      %v360 = vpack.c.bf16 %v343, %v342
      %v361 = vpack.c.bf16 %v345, %v344
      %v362 = vpack.c.bf16 %v347, %v346
      %v363 = vld [vmem:[#allocation2] sm:$0xff]
      %v364 = vld [vmem:[#allocation2 + $0x8] sm:$0xff]
      %v365 = vld [vmem:[#allocation2 + $0x10] sm:$0xff]
      %v366 = vld [vmem:[#allocation2 + $0x18] sm:$0xff]
      %v367 = vld [vmem:[#allocation2 + $0x20] sm:$0xff]
      %v368 = vld [vmem:[#allocation2 + $0x28] sm:$0xff]
      %v369 = vld [vmem:[#allocation2 + $0x30] sm:$0xff]
      %v370 = vld [vmem:[#allocation2 + $0x38] sm:$0xff]
      %v371 = vld [vmem:[#allocation2 + $0x40] sm:$0xff]
      %v372 = vld [vmem:[#allocation2 + $0x48] sm:$0xff]
      %v373 = vld [vmem:[#allocation2 + $0x50] sm:$0xff]
      %v374 = vld [vmem:[#allocation2 + $0x58] sm:$0xff]
      %v375 = vld [vmem:[#allocation2 + $0x60] sm:$0xff]
      %v376 = vld [vmem:[#allocation2 + $0x68] sm:$0xff]
      %v377 = vld [vmem:[#allocation2 + $0x70] sm:$0xff]
      %v378 = vld [vmem:[#allocation2 + $0x78] sm:$0xff]
      %v379 = vld [vmem:[#allocation2 + $0x80] sm:$0xff]
      %v380 = vld [vmem:[#allocation2 + $0x88] sm:$0xff]
      %v381 = vld [vmem:[#allocation2 + $0x90] sm:$0xff]
      %v382 = vld [vmem:[#allocation2 + $0x98] sm:$0xff]
      %v383 = vld [vmem:[#allocation2 + $0xa0] sm:$0xff]
      %v384 = vld [vmem:[#allocation2 + $0xa8] sm:$0xff]
      %v385 = vld [vmem:[#allocation2 + $0xb0] sm:$0xff]
      %v386 = vld [vmem:[#allocation2 + $0xb8] sm:$0xff]
      %v387 = vld [vmem:[#allocation2 + $0xc0] sm:$0xff]
      %v388 = vld [vmem:[#allocation2 + $0xc8] sm:$0xff]
      %v389 = vld [vmem:[#allocation2 + $0xd0] sm:$0xff]
      %v390 = vld [vmem:[#allocation2 + $0xd8] sm:$0xff]
      %v391 = vld [vmem:[#allocation2 + $0xe0] sm:$0xff]
      %v392 = vld [vmem:[#allocation2 + $0xe8] sm:$0x1f]
      %v397 = vunpack.c.l.b16 %v314
      %v398 = vunpack.c.l.b16 %v315
      %v399 = vunpack.c.l.b16 %v316
      %v400 = vunpack.c.l.b16 %v317
      %v401 = vpack.c.b16 %v398, %v397
      %v402 = vpack.c.b16 %v400, %v399
      %vm405 = vcmask 261120
      %v407 = vsel %vm405, %v348, 0
      %v410 = vsel %vm405, %v349, 0
      %v413 = vsel %vm405, %v350, 0
      %v416 = vsel %vm405, %v351, 0
      %v419 = vsel %vm405, %v352, 0
      %v422 = vsel %vm405, %v353, 0
      %v425 = vsel %vm405, %v354, 0
      %v428 = vsel %vm405, %v355, 0
      %v431 = vsel %vm405, %v356, 0
      %v434 = vsel %vm405, %v357, 0
      %v437 = vsel %vm405, %v358, 0
      %v440 = vsel %vm405, %v359, 0
      %v443 = vsel %vm405, %v360, 0
      %v446 = vsel %vm405, %v361, 0
      %v449 = vsel %vm405, %v362, 0
      %451 = vmatpush.bf16.msra.mxu0 0
      %452 = vmatpush.bf16.msra.mxu0 0
      %453 = vmatpush.bf16.msra.mxu0 0
      %454 = vmatpush.bf16.msra.mxu0 0
      %455 = vmatpush.bf16.msra.mxu0 0
      %456 = vmatpush.bf16.msra.mxu0 0
      %457 = vmatpush.bf16.msra.mxu0 %v402
      %458 = vmatpush.bf16.msra.mxu0 %v401
      %459 = vmatmul.bf16.gmra.mxu0 %v407
      %v460 = vpop.f32.mrf.mxu0
      %v461 = vadd.f32 0.0, %v460
      %v462 = vpop.f32.mrf.mxu0
      %v463 = vadd.f32 0.0, %v462
      %464 = vmatmul.bf16.gmra.mxu0 %v410
      %v465 = vpop.f32.mrf.mxu0
      %v466 = vadd.f32 0.0, %v465
      %v467 = vpop.f32.mrf.mxu0
      %v468 = vadd.f32 0.0, %v467
      %469 = vmatmul.bf16.gmra.mxu0 %v413
      %v470 = vpop.f32.mrf.mxu0
      %v471 = vadd.f32 0.0, %v470
      %v472 = vpop.f32.mrf.mxu0
      %v473 = vadd.f32 0.0, %v472
      %474 = vmatmul.bf16.gmra.mxu0 %v416
      %v475 = vpop.f32.mrf.mxu0
      %v476 = vadd.f32 0.0, %v475
      %v477 = vpop.f32.mrf.mxu0
      %v478 = vadd.f32 0.0, %v477
      %479 = vmatmul.bf16.gmra.mxu0 %v419
      %v480 = vpop.f32.mrf.mxu0
      %v481 = vadd.f32 0.0, %v480
      %v482 = vpop.f32.mrf.mxu0
      %v483 = vadd.f32 0.0, %v482
      %484 = vmatmul.bf16.gmra.mxu0 %v422
      %v485 = vpop.f32.mrf.mxu0
      %v486 = vadd.f32 0.0, %v485
      %v487 = vpop.f32.mrf.mxu0
      %v488 = vadd.f32 0.0, %v487
      %489 = vmatmul.bf16.gmra.mxu0 %v425
      %v490 = vpop.f32.mrf.mxu0
      %v491 = vadd.f32 0.0, %v490
      %v492 = vpop.f32.mrf.mxu0
      %v493 = vadd.f32 0.0, %v492
      %494 = vmatmul.bf16.gmra.mxu0 %v428
      %v495 = vpop.f32.mrf.mxu0
      %v496 = vadd.f32 0.0, %v495
      %v497 = vpop.f32.mrf.mxu0
      %v498 = vadd.f32 0.0, %v497
      %499 = vmatmul.bf16.gmra.mxu0 %v431
      %v500 = vpop.f32.mrf.mxu0
      %v501 = vadd.f32 0.0, %v500
      %v502 = vpop.f32.mrf.mxu0
      %v503 = vadd.f32 0.0, %v502
      %504 = vmatmul.bf16.gmra.mxu0 %v434
      %v505 = vpop.f32.mrf.mxu0
      %v506 = vadd.f32 0.0, %v505
      %v507 = vpop.f32.mrf.mxu0
      %v508 = vadd.f32 0.0, %v507
      %509 = vmatmul.bf16.gmra.mxu0 %v437
      %v510 = vpop.f32.mrf.mxu0
      %v511 = vadd.f32 0.0, %v510
      %v512 = vpop.f32.mrf.mxu0
      %v513 = vadd.f32 0.0, %v512
      %514 = vmatmul.bf16.gmra.mxu0 %v440
      %v515 = vpop.f32.mrf.mxu0
      %v516 = vadd.f32 0.0, %v515
      %v517 = vpop.f32.mrf.mxu0
      %v518 = vadd.f32 0.0, %v517
      %519 = vmatmul.bf16.gmra.mxu0 %v443
      %v520 = vpop.f32.mrf.mxu0
      %v521 = vadd.f32 0.0, %v520
      %v522 = vpop.f32.mrf.mxu0
      %v523 = vadd.f32 0.0, %v522
      %524 = vmatmul.bf16.gmra.mxu0 %v446
      %v525 = vpop.f32.mrf.mxu0
      %v526 = vadd.f32 0.0, %v525
      %v527 = vpop.f32.mrf.mxu0
      %v528 = vadd.f32 0.0, %v527
      %529 = vmatmul.bf16.gmra.mxu0 %v449
      %v530 = vpop.f32.mrf.mxu0
      %v531 = vadd.f32 0.0, %v530
      %v532 = vpop.f32.mrf.mxu0
      %v533 = vadd.f32 0.0, %v532
      %534 = vdwg.mxu0
      %v535 = vadd.f32 %v363, %v461
      %v536 = vadd.f32 %v364, %v463
      %v537 = vadd.f32 %v365, %v466
      %v538 = vadd.f32 %v366, %v468
      %v539 = vadd.f32 %v367, %v471
      %v540 = vadd.f32 %v368, %v473
      %v541 = vadd.f32 %v369, %v476
      %v542 = vadd.f32 %v370, %v478
      %v543 = vadd.f32 %v371, %v481
      %v544 = vadd.f32 %v372, %v483
      %v545 = vadd.f32 %v373, %v486
      %v546 = vadd.f32 %v374, %v488
      %v547 = vadd.f32 %v375, %v491
      %v548 = vadd.f32 %v376, %v493
      %v549 = vadd.f32 %v377, %v496
      %v550 = vadd.f32 %v378, %v498
      %v551 = vadd.f32 %v379, %v501
      %v552 = vadd.f32 %v380, %v503
      %v553 = vadd.f32 %v381, %v506
      %v554 = vadd.f32 %v382, %v508
      %v555 = vadd.f32 %v383, %v511
      %v556 = vadd.f32 %v384, %v513
      %v557 = vadd.f32 %v385, %v516
      %v558 = vadd.f32 %v386, %v518
      %v559 = vadd.f32 %v387, %v521
      %v560 = vadd.f32 %v388, %v523
      %v561 = vadd.f32 %v389, %v526
      %v562 = vadd.f32 %v390, %v528
      %v563 = vadd.f32 %v391, %v531
      %v564 = vadd.f32 %v392, %v533
      %565 = vst [vmem:[#allocation2] sm:$0xff] %v535
      %566 = vst [vmem:[#allocation2 + $0x8] sm:$0xff] %v536
      %567 = vst [vmem:[#allocation2 + $0x10] sm:$0xff] %v537
      %568 = vst [vmem:[#allocation2 + $0x18] sm:$0xff] %v538
      %569 = vst [vmem:[#allocation2 + $0x20] sm:$0xff] %v539
      %570 = vst [vmem:[#allocation2 + $0x28] sm:$0xff] %v540
      %571 = vst [vmem:[#allocation2 + $0x30] sm:$0xff] %v541
      %572 = vst [vmem:[#allocation2 + $0x38] sm:$0xff] %v542
      %573 = vst [vmem:[#allocation2 + $0x40] sm:$0xff] %v543
      %574 = vst [vmem:[#allocation2 + $0x48] sm:$0xff] %v544
      %575 = vst [vmem:[#allocation2 + $0x50] sm:$0xff] %v545
      %576 = vst [vmem:[#allocation2 + $0x58] sm:$0xff] %v546
      %577 = vst [vmem:[#allocation2 + $0x60] sm:$0xff] %v547
      %578 = vst [vmem:[#allocation2 + $0x68] sm:$0xff] %v548
      %579 = vst [vmem:[#allocation2 + $0x70] sm:$0xff] %v549
      %580 = vst [vmem:[#allocation2 + $0x78] sm:$0xff] %v550
      %581 = vst [vmem:[#allocation2 + $0x80] sm:$0xff] %v551
      %582 = vst [vmem:[#allocation2 + $0x88] sm:$0xff] %v552
      %583 = vst [vmem:[#allocation2 + $0x90] sm:$0xff] %v553
      %584 = vst [vmem:[#allocation2 + $0x98] sm:$0xff] %v554
      %585 = vst [vmem:[#allocation2 + $0xa0] sm:$0xff] %v555
      %586 = vst [vmem:[#allocation2 + $0xa8] sm:$0xff] %v556
      %587 = vst [vmem:[#allocation2 + $0xb0] sm:$0xff] %v557
      %588 = vst [vmem:[#allocation2 + $0xb8] sm:$0xff] %v558
      %589 = vst [vmem:[#allocation2 + $0xc0] sm:$0xff] %v559
      %590 = vst [vmem:[#allocation2 + $0xc8] sm:$0xff] %v560
      %591 = vst [vmem:[#allocation2 + $0xd0] sm:$0xff] %v561
      %592 = vst [vmem:[#allocation2 + $0xd8] sm:$0xff] %v562
      %593 = vst [vmem:[#allocation2 + $0xe0] sm:$0xff] %v563
      %594 = vst [vmem:[#allocation2 + $0xe8] sm:$0x1f] %v564
      %v595 = vld [vmem:[%s262] sm:$0xff]
      %v596 = vld [vmem:[%s262 + $0x8] sm:$0xff]
      %v597 = vld [vmem:[%s262 + $0x10] sm:$0x7]
      %v598 = vpack.c.bf16 %v596, %v595
      %v599 = vpack.c.bf16 %v597, %v597
      %v600 = vld [vmem:[#allocation2 + $0xed] sm:$0xff]
      %v601 = vld [vmem:[#allocation2 + $0xf5] sm:$0xff]
      %v602 = vld [vmem:[#allocation2 + $0xfd] sm:$0x7]
      %v604 = vsel %vm405, %v598, 0
      %v607 = vsel %vm405, %v599, 0
      %609 = vmatpush.bf16.msra.mxu0 0
      %610 = vmatpush.bf16.msra.mxu0 0
      %611 = vmatpush.bf16.msra.mxu0 0
      %612 = vmatpush.bf16.msra.mxu0 0
      %613 = vmatpush.bf16.msra.mxu0 0
      %614 = vmatpush.bf16.msra.mxu0 0
      %615 = vmatpush.bf16.msra.mxu0 %v402
      %616 = vmatpush.bf16.msra.mxu0 %v401
      %617 = vmatmul.bf16.gmra.mxu0 %v604
      %v618 = vpop.f32.mrf.mxu0
      %v619 = vadd.f32 0.0, %v618
      %v620 = vpop.f32.mrf.mxu0
      %v621 = vadd.f32 0.0, %v620
      %622 = vmatmul.bf16.gmra.mxu0 %v607
      %v623 = vpop.f32.mrf.mxu0
      %v624 = vadd.f32 0.0, %v623
      %v625 = vpop.f32.mrf.mxu0
      %626 = vdwg.mxu0
      %v627 = vadd.f32 %v600, %v619
      %v628 = vadd.f32 %v601, %v621
      %v629 = vadd.f32 %v602, %v624
      %630 = vst [vmem:[#allocation2 + $0xed] sm:$0xff] %v627
      %631 = vst [vmem:[#allocation2 + $0xf5] sm:$0xff] %v628
      %632 = vst [vmem:[#allocation2 + $0xfd] sm:$0x7] %v629
      %s633 = scalar_lea.vmem %s268, 16
      %v634 = vld [vmem:[%s633] sm:$0xf]
      %v635 = vld [vmem:[%s633 + $0x4] sm:$0xf]
      %v636 = vld [vmem:[%s633 + $0x8] sm:$0xf]
      %v637 = vld [vmem:[%s633 + $0xc] sm:$0xf]
      %v638 = vld [vmem:[%s255 + $0x12] sm:$0xff]
      %v639 = vld [vmem:[%s255 + $0x1a] sm:$0xff]
      %v640 = vld [vmem:[%s255 + $0x22] sm:$0xff]
      %v641 = vld [vmem:[%s255 + $0x2a] sm:$0xff]
      %v642 = vld [vmem:[%s255 + $0x32] sm:$0xff]
      %v643 = vld [vmem:[%s255 + $0x3a] sm:$0xff]
      %v644 = vld [vmem:[%s255 + $0x42] sm:$0xff]
      %v645 = vld [vmem:[%s255 + $0x4a] sm:$0xff]
      %v646 = vld [vmem:[%s255 + $0x52] sm:$0xff]
      %v647 = vld [vmem:[%s255 + $0x5a] sm:$0xff]
      %v648 = vld [vmem:[%s255 + $0x62] sm:$0xff]
      %v649 = vld [vmem:[%s255 + $0x6a] sm:$0xff]
      %v650 = vld [vmem:[%s255 + $0x72] sm:$0xff]
      %v651 = vld [vmem:[%s255 + $0x7a] sm:$0xff]
      %v652 = vld [vmem:[%s255 + $0x82] sm:$0xff]
      %v653 = vld [vmem:[%s255 + $0x8a] sm:$0xff]
      %v654 = vld [vmem:[%s255 + $0x92] sm:$0xff]
      %v655 = vld [vmem:[%s255 + $0x9a] sm:$0xff]
      %v656 = vld [vmem:[%s255 + $0xa2] sm:$0xff]
      %v657 = vld [vmem:[%s255 + $0xaa] sm:$0xff]
      %v658 = vld [vmem:[%s255 + $0xb2] sm:$0xff]
      %v659 = vld [vmem:[%s255 + $0xba] sm:$0xff]
      %v660 = vld [vmem:[%s255 + $0xc2] sm:$0xff]
      %v661 = vld [vmem:[%s255 + $0xca] sm:$0xff]
      %v662 = vld [vmem:[%s255 + $0xd2] sm:$0xff]
      %v663 = vld [vmem:[%s255 + $0xda] sm:$0xff]
      %v664 = vld [vmem:[%s255 + $0xe2] sm:$0xff]
      %v665 = vld [vmem:[%s255 + $0xea] sm:$0xff]
      %v666 = vld [vmem:[%s255 + $0xf2] sm:$0xff]
      %v667 = vld [vmem:[%s255 + $0xfa] sm:$0x3f]
      %v668 = vpack.c.bf16 %v639, %v638
      %v669 = vpack.c.bf16 %v641, %v640
      %v670 = vpack.c.bf16 %v643, %v642
      %v671 = vpack.c.bf16 %v645, %v644
      %v672 = vpack.c.bf16 %v647, %v646
      %v673 = vpack.c.bf16 %v649, %v648
      %v674 = vpack.c.bf16 %v651, %v650
      %v675 = vpack.c.bf16 %v653, %v652
      %v676 = vpack.c.bf16 %v655, %v654
      %v677 = vpack.c.bf16 %v657, %v656
      %v678 = vpack.c.bf16 %v659, %v658
      %v679 = vpack.c.bf16 %v661, %v660
      %v680 = vpack.c.bf16 %v663, %v662
      %v681 = vpack.c.bf16 %v665, %v664
      %v682 = vpack.c.bf16 %v667, %v666
      %v683 = vld [vmem:[#allocation2] sm:$0xff]
      %v684 = vld [vmem:[#allocation2 + $0x8] sm:$0xff]
      %v685 = vld [vmem:[#allocation2 + $0x10] sm:$0xff]
      %v686 = vld [vmem:[#allocation2 + $0x18] sm:$0xff]
      %v687 = vld [vmem:[#allocation2 + $0x20] sm:$0xff]
      %v688 = vld [vmem:[#allocation2 + $0x28] sm:$0xff]
      %v689 = vld [vmem:[#allocation2 + $0x30] sm:$0xff]
      %v690 = vld [vmem:[#allocation2 + $0x38] sm:$0xff]
      %v691 = vld [vmem:[#allocation2 + $0x40] sm:$0xff]
      %v692 = vld [vmem:[#allocation2 + $0x48] sm:$0xff]
      %v693 = vld [vmem:[#allocation2 + $0x50] sm:$0xff]
      %v694 = vld [vmem:[#allocation2 + $0x58] sm:$0xff]
      %v695 = vld [vmem:[#allocation2 + $0x60] sm:$0xff]
      %v696 = vld [vmem:[#allocation2 + $0x68] sm:$0xff]
      %v697 = vld [vmem:[#allocation2 + $0x70] sm:$0xff]
      %v698 = vld [vmem:[#allocation2 + $0x78] sm:$0xff]
      %v699 = vld [vmem:[#allocation2 + $0x80] sm:$0xff]
      %v700 = vld [vmem:[#allocation2 + $0x88] sm:$0xff]
      %v701 = vld [vmem:[#allocation2 + $0x90] sm:$0xff]
      %v702 = vld [vmem:[#allocation2 + $0x98] sm:$0xff]
      %v703 = vld [vmem:[#allocation2 + $0xa0] sm:$0xff]
      %v704 = vld [vmem:[#allocation2 + $0xa8] sm:$0xff]
      %v705 = vld [vmem:[#allocation2 + $0xb0] sm:$0xff]
      %v706 = vld [vmem:[#allocation2 + $0xb8] sm:$0xff]
      %v707 = vld [vmem:[#allocation2 + $0xc0] sm:$0xff]
      %v708 = vld [vmem:[#allocation2 + $0xc8] sm:$0xff]
      %v709 = vld [vmem:[#allocation2 + $0xd0] sm:$0xff]
      %v710 = vld [vmem:[#allocation2 + $0xd8] sm:$0xff]
      %v711 = vld [vmem:[#allocation2 + $0xe0] sm:$0xff]
      %v712 = vld [vmem:[#allocation2 + $0xe8] sm:$0x3f]
      %v717 = vunpack.c.l.b16 %v634
      %v718 = vunpack.c.l.b16 %v635
      %v719 = vunpack.c.l.b16 %v636
      %v720 = vunpack.c.l.b16 %v637
      %v721 = vpack.c.b16 %v718, %v717
      %v722 = vpack.c.b16 %v720, %v719
      %v726 = vsel %vm405, %v668, 0
      %v729 = vsel %vm405, %v669, 0
      %v732 = vsel %vm405, %v670, 0
      %v735 = vsel %vm405, %v671, 0
      %v738 = vsel %vm405, %v672, 0
      %v741 = vsel %vm405, %v673, 0
      %v744 = vsel %vm405, %v674, 0
      %v747 = vsel %vm405, %v675, 0
      %v750 = vsel %vm405, %v676, 0
      %v753 = vsel %vm405, %v677, 0
      %v756 = vsel %vm405, %v678, 0
      %v759 = vsel %vm405, %v679, 0
      %v762 = vsel %vm405, %v680, 0
      %v765 = vsel %vm405, %v681, 0
      %v768 = vsel %vm405, %v682, 0
      %770 = vmatpush.bf16.msra.mxu0 0
      %771 = vmatpush.bf16.msra.mxu0 0
      %772 = vmatpush.bf16.msra.mxu0 0
      %773 = vmatpush.bf16.msra.mxu0 0
      %774 = vmatpush.bf16.msra.mxu0 0
      %775 = vmatpush.bf16.msra.mxu0 0
      %776 = vmatpush.bf16.msra.mxu0 %v722
      %777 = vmatpush.bf16.msra.mxu0 %v721
      %778 = vmatmul.bf16.gmra.mxu0 %v726
      %v779 = vpop.f32.mrf.mxu0
      %v780 = vadd.f32 0.0, %v779
      %v781 = vpop.f32.mrf.mxu0
      %v782 = vadd.f32 0.0, %v781
      %783 = vmatmul.bf16.gmra.mxu0 %v729
      %v784 = vpop.f32.mrf.mxu0
      %v785 = vadd.f32 0.0, %v784
      %v786 = vpop.f32.mrf.mxu0
      %v787 = vadd.f32 0.0, %v786
      %788 = vmatmul.bf16.gmra.mxu0 %v732
      %v789 = vpop.f32.mrf.mxu0
      %v790 = vadd.f32 0.0, %v789
      %v791 = vpop.f32.mrf.mxu0
      %v792 = vadd.f32 0.0, %v791
      %793 = vmatmul.bf16.gmra.mxu0 %v735
      %v794 = vpop.f32.mrf.mxu0
      %v795 = vadd.f32 0.0, %v794
      %v796 = vpop.f32.mrf.mxu0
      %v797 = vadd.f32 0.0, %v796
      %798 = vmatmul.bf16.gmra.mxu0 %v738
      %v799 = vpop.f32.mrf.mxu0
      %v800 = vadd.f32 0.0, %v799
      %v801 = vpop.f32.mrf.mxu0
      %v802 = vadd.f32 0.0, %v801
      %803 = vmatmul.bf16.gmra.mxu0 %v741
      %v804 = vpop.f32.mrf.mxu0
      %v805 = vadd.f32 0.0, %v804
      %v806 = vpop.f32.mrf.mxu0
      %v807 = vadd.f32 0.0, %v806
      %808 = vmatmul.bf16.gmra.mxu0 %v744
      %v809 = vpop.f32.mrf.mxu0
      %v810 = vadd.f32 0.0, %v809
      %v811 = vpop.f32.mrf.mxu0
      %v812 = vadd.f32 0.0, %v811
      %813 = vmatmul.bf16.gmra.mxu0 %v747
      %v814 = vpop.f32.mrf.mxu0
      %v815 = vadd.f32 0.0, %v814
      %v816 = vpop.f32.mrf.mxu0
      %v817 = vadd.f32 0.0, %v816
      %818 = vmatmul.bf16.gmra.mxu0 %v750
      %v819 = vpop.f32.mrf.mxu0
      %v820 = vadd.f32 0.0, %v819
      %v821 = vpop.f32.mrf.mxu0
      %v822 = vadd.f32 0.0, %v821
      %823 = vmatmul.bf16.gmra.mxu0 %v753
      %v824 = vpop.f32.mrf.mxu0
      %v825 = vadd.f32 0.0, %v824
      %v826 = vpop.f32.mrf.mxu0
      %v827 = vadd.f32 0.0, %v826
      %828 = vmatmul.bf16.gmra.mxu0 %v756
      %v829 = vpop.f32.mrf.mxu0
      %v830 = vadd.f32 0.0, %v829
      %v831 = vpop.f32.mrf.mxu0
      %v832 = vadd.f32 0.0, %v831
      %833 = vmatmul.bf16.gmra.mxu0 %v759
      %v834 = vpop.f32.mrf.mxu0
      %v835 = vadd.f32 0.0, %v834
      %v836 = vpop.f32.mrf.mxu0
      %v837 = vadd.f32 0.0, %v836
      %838 = vmatmul.bf16.gmra.mxu0 %v762
      %v839 = vpop.f32.mrf.mxu0
      %v840 = vadd.f32 0.0, %v839
      %v841 = vpop.f32.mrf.mxu0
      %v842 = vadd.f32 0.0, %v841
      %843 = vmatmul.bf16.gmra.mxu0 %v765
      %v844 = vpop.f32.mrf.mxu0
      %v845 = vadd.f32 0.0, %v844
      %v846 = vpop.f32.mrf.mxu0
      %v847 = vadd.f32 0.0, %v846
      %848 = vmatmul.bf16.gmra.mxu0 %v768
      %v849 = vpop.f32.mrf.mxu0
      %v850 = vadd.f32 0.0, %v849
      %v851 = vpop.f32.mrf.mxu0
      %v852 = vadd.f32 0.0, %v851
      %853 = vdwg.mxu0
      %v854 = vadd.f32 %v683, %v780
      %v855 = vadd.f32 %v684, %v782
      %v856 = vadd.f32 %v685, %v785
      %v857 = vadd.f32 %v686, %v787
      %v858 = vadd.f32 %v687, %v790
      %v859 = vadd.f32 %v688, %v792
      %v860 = vadd.f32 %v689, %v795
      %v861 = vadd.f32 %v690, %v797
      %v862 = vadd.f32 %v691, %v800
      %v863 = vadd.f32 %v692, %v802
      %v864 = vadd.f32 %v693, %v805
      %v865 = vadd.f32 %v694, %v807
      %v866 = vadd.f32 %v695, %v810
      %v867 = vadd.f32 %v696, %v812
      %v868 = vadd.f32 %v697, %v815
      %v869 = vadd.f32 %v698, %v817
      %v870 = vadd.f32 %v699, %v820
      %v871 = vadd.f32 %v700, %v822
      %v872 = vadd.f32 %v701, %v825
      %v873 = vadd.f32 %v702, %v827
      %v874 = vadd.f32 %v703, %v830
      %v875 = vadd.f32 %v704, %v832
      %v876 = vadd.f32 %v705, %v835
      %v877 = vadd.f32 %v706, %v837
      %v878 = vadd.f32 %v707, %v840
      %v879 = vadd.f32 %v708, %v842
      %v880 = vadd.f32 %v709, %v845
      %v881 = vadd.f32 %v710, %v847
      %v882 = vadd.f32 %v711, %v850
      %v883 = vadd.f32 %v712, %v852
      %884 = vst [vmem:[#allocation2] sm:$0xff] %v854
      %885 = vst [vmem:[#allocation2 + $0x8] sm:$0xff] %v855
      %886 = vst [vmem:[#allocation2 + $0x10] sm:$0xff] %v856
      %887 = vst [vmem:[#allocation2 + $0x18] sm:$0xff] %v857
      %888 = vst [vmem:[#allocation2 + $0x20] sm:$0xff] %v858
      %889 = vst [vmem:[#allocation2 + $0x28] sm:$0xff] %v859
      %890 = vst [vmem:[#allocation2 + $0x30] sm:$0xff] %v860
      %891 = vst [vmem:[#allocation2 + $0x38] sm:$0xff] %v861
      %892 = vst [vmem:[#allocation2 + $0x40] sm:$0xff] %v862
      %893 = vst [vmem:[#allocation2 + $0x48] sm:$0xff] %v863
      %894 = vst [vmem:[#allocation2 + $0x50] sm:$0xff] %v864
      %895 = vst [vmem:[#allocation2 + $0x58] sm:$0xff] %v865
      %896 = vst [vmem:[#allocation2 + $0x60] sm:$0xff] %v866
      %897 = vst [vmem:[#allocation2 + $0x68] sm:$0xff] %v867
      %898 = vst [vmem:[#allocation2 + $0x70] sm:$0xff] %v868
      %899 = vst [vmem:[#allocation2 + $0x78] sm:$0xff] %v869
      %900 = vst [vmem:[#allocation2 + $0x80] sm:$0xff] %v870
      %901 = vst [vmem:[#allocation2 + $0x88] sm:$0xff] %v871
      %902 = vst [vmem:[#allocation2 + $0x90] sm:$0xff] %v872
      %903 = vst [vmem:[#allocation2 + $0x98] sm:$0xff] %v873
      %904 = vst [vmem:[#allocation2 + $0xa0] sm:$0xff] %v874
      %905 = vst [vmem:[#allocation2 + $0xa8] sm:$0xff] %v875
      %906 = vst [vmem:[#allocation2 + $0xb0] sm:$0xff] %v876
      %907 = vst [vmem:[#allocation2 + $0xb8] sm:$0xff] %v877
      %908 = vst [vmem:[#allocation2 + $0xc0] sm:$0xff] %v878
      %909 = vst [vmem:[#allocation2 + $0xc8] sm:$0xff] %v879
      %910 = vst [vmem:[#allocation2 + $0xd0] sm:$0xff] %v880
      %911 = vst [vmem:[#allocation2 + $0xd8] sm:$0xff] %v881
      %912 = vst [vmem:[#allocation2 + $0xe0] sm:$0xff] %v882
      %913 = vst [vmem:[#allocation2 + $0xe8] sm:$0x3f] %v883
      %v914 = vld [vmem:[%s262] sm:$0xff]
      %v915 = vld [vmem:[%s262 + $0x8] sm:$0xff]
      %v916 = vld [vmem:[%s262 + $0x10] sm:$0x3]
      %v917 = vpack.c.bf16 %v915, %v914
      %v918 = vpack.c.bf16 %v916, %v916
      %v919 = vld [vmem:[#allocation2 + $0xee] sm:$0xff]
      %v920 = vld [vmem:[#allocation2 + $0xf6] sm:$0xff]
      %v921 = vld [vmem:[#allocation2 + $0xfe] sm:$0x3]
      %v923 = vsel %vm405, %v917, 0
      %v926 = vsel %vm405, %v918, 0
      %928 = vmatpush.bf16.msra.mxu0 0
      %929 = vmatpush.bf16.msra.mxu0 0
      %930 = vmatpush.bf16.msra.mxu0 0
      %931 = vmatpush.bf16.msra.mxu0 0
      %932 = vmatpush.bf16.msra.mxu0 0
      %933 = vmatpush.bf16.msra.mxu0 0
      %934 = vmatpush.bf16.msra.mxu0 %v722
      %935 = vmatpush.bf16.msra.mxu0 %v721
      %936 = vmatmul.bf16.gmra.mxu0 %v923
      %v937 = vpop.f32.mrf.mxu0
      %v938 = vadd.f32 0.0, %v937
      %v939 = vpop.f32.mrf.mxu0
      %v940 = vadd.f32 0.0, %v939
      %941 = vmatmul.bf16.gmra.mxu0 %v926
      %v942 = vpop.f32.mrf.mxu0
      %v943 = vadd.f32 0.0, %v942
      %v944 = vpop.f32.mrf.mxu0
      %945 = vdwg.mxu0
      %v946 = vadd.f32 %v919, %v938
      %v947 = vadd.f32 %v920, %v940
      %v948 = vadd.f32 %v921, %v943
      %949 = vst [vmem:[#allocation2 + $0xee] sm:$0xff] %v946
      %950 = vst [vmem:[#allocation2 + $0xf6] sm:$0xff] %v947
      %951 = vst [vmem:[#allocation2 + $0xfe] sm:$0x3] %v948
      %s952 = scalar_lea.vmem %s268, 32
      %v953 = vld [vmem:[%s952] sm:$0xf]
      %v954 = vld [vmem:[%s952 + $0x4] sm:$0xf]
      %v955 = vld [vmem:[%s952 + $0x8] sm:$0xf]
      %v956 = vld [vmem:[%s952 + $0xc] sm:$0xf]
      %v957 = vld [vmem:[%s255 + $0x1] sm:$0xff]
      %v958 = vld [vmem:[%s255 + $0x9] sm:$0xff]
      %v959 = vld [vmem:[%s255 + $0x11] sm:$0xff]
      %v960 = vld [vmem:[%s255 + $0x19] sm:$0xff]
      %v961 = vld [vmem:[%s255 + $0x21] sm:$0xff]
      %v962 = vld [vmem:[%s255 + $0x29] sm:$0xff]
      %v963 = vld [vmem:[%s255 + $0x31] sm:$0xff]
      %v964 = vld [vmem:[%s255 + $0x39] sm:$0xff]
      %v965 = vld [vmem:[%s255 + $0x41] sm:$0xff]
      %v966 = vld [vmem:[%s255 + $0x49] sm:$0xff]
      %v967 = vld [vmem:[%s255 + $0x51] sm:$0xff]
      %v968 = vld [vmem:[%s255 + $0x59] sm:$0xff]
      %v969 = vld [vmem:[%s255 + $0x61] sm:$0xff]
      %v970 = vld [vmem:[%s255 + $0x69] sm:$0xff]
      %v971 = vld [vmem:[%s255 + $0x71] sm:$0xff]
      %v972 = vld [vmem:[%s255 + $0x79] sm:$0xff]
      %v973 = vld [vmem:[%s255 + $0x81] sm:$0xff]
      %v974 = vld [vmem:[%s255 + $0x89] sm:$0xff]
      %v975 = vld [vmem:[%s255 + $0x91] sm:$0xff]
      %v976 = vld [vmem:[%s255 + $0x99] sm:$0xff]
      %v977 = vld [vmem:[%s255 + $0xa1] sm:$0xff]
      %v978 = vld [vmem:[%s255 + $0xa9] sm:$0xff]
      %v979 = vld [vmem:[%s255 + $0xb1] sm:$0xff]
      %v980 = vld [vmem:[%s255 + $0xb9] sm:$0xff]
      %v981 = vld [vmem:[%s255 + $0xc1] sm:$0xff]
      %v982 = vld [vmem:[%s255 + $0xc9] sm:$0xff]
      %v983 = vld [vmem:[%s255 + $0xd1] sm:$0xff]
      %v984 = vld [vmem:[%s255 + $0xd9] sm:$0xff]
      %v985 = vld [vmem:[%s255 + $0xe1] sm:$0xff]
      %v986 = vld [vmem:[%s255 + $0xe9] sm:$0xff]
      %v987 = vld [vmem:[%s255 + $0xf1] sm:$0xff]
      %v988 = vld [vmem:[%s255 + $0xf9] sm:$0x7f]
      %v989 = vpack.c.bf16 %v958, %v957
      %v990 = vpack.c.bf16 %v960, %v959
      %v991 = vpack.c.bf16 %v962, %v961
      %v992 = vpack.c.bf16 %v964, %v963
      %v993 = vpack.c.bf16 %v966, %v965
      %v994 = vpack.c.bf16 %v968, %v967
      %v995 = vpack.c.bf16 %v970, %v969
      %v996 = vpack.c.bf16 %v972, %v971
      %v997 = vpack.c.bf16 %v974, %v973
      %v998 = vpack.c.bf16 %v976, %v975
      %v999 = vpack.c.bf16 %v978, %v977
      %v1000 = vpack.c.bf16 %v980, %v979
      %v1001 = vpack.c.bf16 %v982, %v981
      %v1002 = vpack.c.bf16 %v984, %v983
      %v1003 = vpack.c.bf16 %v986, %v985
      %v1004 = vpack.c.bf16 %v988, %v987
      %v1005 = vld [vmem:[#allocation2] sm:$0xff]
      %v1006 = vld [vmem:[#allocation2 + $0x8] sm:$0xff]
      %v1007 = vld [vmem:[#allocation2 + $0x10] sm:$0xff]
      %v1008 = vld [vmem:[#allocation2 + $0x18] sm:$0xff]
      %v1009 = vld [vmem:[#allocation2 + $0x20] sm:$0xff]
      %v1010 = vld [vmem:[#allocation2 + $0x28] sm:$0xff]
      %v1011 = vld [vmem:[#allocation2 + $0x30] sm:$0xff]
      %v1012 = vld [vmem:[#allocation2 + $0x38] sm:$0xff]
      %v1013 = vld [vmem:[#allocation2 + $0x40] sm:$0xff]
      %v1014 = vld [vmem:[#allocation2 + $0x48] sm:$0xff]
      %v1015 = vld [vmem:[#allocation2 + $0x50] sm:$0xff]
      %v1016 = vld [vmem:[#allocation2 + $0x58] sm:$0xff]
      %v1017 = vld [vmem:[#allocation2 + $0x60] sm:$0xff]
      %v1018 = vld [vmem:[#allocation2 + $0x68] sm:$0xff]
      %v1019 = vld [vmem:[#allocation2 + $0x70] sm:$0xff]
      %v1020 = vld [vmem:[#allocation2 + $0x78] sm:$0xff]
      %v1021 = vld [vmem:[#allocation2 + $0x80] sm:$0xff]
      %v1022 = vld [vmem:[#allocation2 + $0x88] sm:$0xff]
      %v1023 = vld [vmem:[#allocation2 + $0x90] sm:$0xff]
      %v1024 = vld [vmem:[#allocation2 + $0x98] sm:$0xff]
      %v1025 = vld [vmem:[#allocation2 + $0xa0] sm:$0xff]
      %v1026 = vld [vmem:[#allocation2 + $0xa8] sm:$0xff]
      %v1027 = vld [vmem:[#allocation2 + $0xb0] sm:$0xff]
      %v1028 = vld [vmem:[#allocation2 + $0xb8] sm:$0xff]
      %v1029 = vld [vmem:[#allocation2 + $0xc0] sm:$0xff]
      %v1030 = vld [vmem:[#allocation2 + $0xc8] sm:$0xff]
      %v1031 = vld [vmem:[#allocation2 + $0xd0] sm:$0xff]
      %v1032 = vld [vmem:[#allocation2 + $0xd8] sm:$0xff]
      %v1033 = vld [vmem:[#allocation2 + $0xe0] sm:$0xff]
      %v1034 = vld [vmem:[#allocation2 + $0xe8] sm:$0xff]
      %v1035 = vld [vmem:[#allocation2 + $0xf0] sm:$0xff]
      %v1036 = vld [vmem:[#allocation2 + $0xf8] sm:$0x7f]
      %v1041 = vunpack.c.l.b16 %v953
      %v1042 = vunpack.c.l.b16 %v954
      %v1043 = vunpack.c.l.b16 %v955
      %v1044 = vunpack.c.l.b16 %v956
      %v1045 = vpack.c.b16 %v1042, %v1041
      %v1046 = vpack.c.b16 %v1044, %v1043
      %v1050 = vsel %vm405, %v989, 0
      %v1053 = vsel %vm405, %v990, 0
      %v1056 = vsel %vm405, %v991, 0
      %v1059 = vsel %vm405, %v992, 0
      %v1062 = vsel %vm405, %v993, 0
      %v1065 = vsel %vm405, %v994, 0
      %v1068 = vsel %vm405, %v995, 0
      %v1071 = vsel %vm405, %v996, 0
      %v1074 = vsel %vm405, %v997, 0
      %v1077 = vsel %vm405, %v998, 0
      %v1080 = vsel %vm405, %v999, 0
      %v1083 = vsel %vm405, %v1000, 0
      %v1086 = vsel %vm405, %v1001, 0
      %v1089 = vsel %vm405, %v1002, 0
      %v1092 = vsel %vm405, %v1003, 0
      %v1095 = vsel %vm405, %v1004, 0
      %1097 = vmatpush.bf16.msra.mxu0 0
      %1098 = vmatpush.bf16.msra.mxu0 0
      %1099 = vmatpush.bf16.msra.mxu0 0
      %1100 = vmatpush.bf16.msra.mxu0 0
      %1101 = vmatpush.bf16.msra.mxu0 0
      %1102 = vmatpush.bf16.msra.mxu0 0
      %1103 = vmatpush.bf16.msra.mxu0 %v1046
      %1104 = vmatpush.bf16.msra.mxu0 %v1045
      %1105 = vmatmul.bf16.gmra.mxu0 %v1050
      %v1106 = vpop.f32.mrf.mxu0
      %v1107 = vadd.f32 0.0, %v1106
      %v1108 = vpop.f32.mrf.mxu0
      %v1109 = vadd.f32 0.0, %v1108
      %1110 = vmatmul.bf16.gmra.mxu0 %v1053
      %v1111 = vpop.f32.mrf.mxu0
      %v1112 = vadd.f32 0.0, %v1111
      %v1113 = vpop.f32.mrf.mxu0
      %v1114 = vadd.f32 0.0, %v1113
      %1115 = vmatmul.bf16.gmra.mxu0 %v1056
      %v1116 = vpop.f32.mrf.mxu0
      %v1117 = vadd.f32 0.0, %v1116
      %v1118 = vpop.f32.mrf.mxu0
      %v1119 = vadd.f32 0.0, %v1118
      %1120 = vmatmul.bf16.gmra.mxu0 %v1059
      %v1121 = vpop.f32.mrf.mxu0
      %v1122 = vadd.f32 0.0, %v1121
      %v1123 = vpop.f32.mrf.mxu0
      %v1124 = vadd.f32 0.0, %v1123
      %1125 = vmatmul.bf16.gmra.mxu0 %v1062
      %v1126 = vpop.f32.mrf.mxu0
      %v1127 = vadd.f32 0.0, %v1126
      %v1128 = vpop.f32.mrf.mxu0
      %v1129 = vadd.f32 0.0, %v1128
      %1130 = vmatmul.bf16.gmra.mxu0 %v1065
      %v1131 = vpop.f32.mrf.mxu0
      %v1132 = vadd.f32 0.0, %v1131
      %v1133 = vpop.f32.mrf.mxu0
      %v1134 = vadd.f32 0.0, %v1133
      %1135 = vmatmul.bf16.gmra.mxu0 %v1068
      %v1136 = vpop.f32.mrf.mxu0
      %v1137 = vadd.f32 0.0, %v1136
      %v1138 = vpop.f32.mrf.mxu0
      %v1139 = vadd.f32 0.0, %v1138
      %1140 = vmatmul.bf16.gmra.mxu0 %v1071
      %v1141 = vpop.f32.mrf.mxu0
      %v1142 = vadd.f32 0.0, %v1141
      %v1143 = vpop.f32.mrf.mxu0
      %v1144 = vadd.f32 0.0, %v1143
      %1145 = vmatmul.bf16.gmra.mxu0 %v1074
      %v1146 = vpop.f32.mrf.mxu0
      %v1147 = vadd.f32 0.0, %v1146
      %v1148 = vpop.f32.mrf.mxu0
      %v1149 = vadd.f32 0.0, %v1148
      %1150 = vmatmul.bf16.gmra.mxu0 %v1077
      %v1151 = vpop.f32.mrf.mxu0
      %v1152 = vadd.f32 0.0, %v1151
      %v1153 = vpop.f32.mrf.mxu0
      %v1154 = vadd.f32 0.0, %v1153
      %1155 = vmatmul.bf16.gmra.mxu0 %v1080
      %v1156 = vpop.f32.mrf.mxu0
      %v1157 = vadd.f32 0.0, %v1156
      %v1158 = vpop.f32.mrf.mxu0
      %v1159 = vadd.f32 0.0, %v1158
      %1160 = vmatmul.bf16.gmra.mxu0 %v1083
      %v1161 = vpop.f32.mrf.mxu0
      %v1162 = vadd.f32 0.0, %v1161
      %v1163 = vpop.f32.mrf.mxu0
      %v1164 = vadd.f32 0.0, %v1163
      %1165 = vmatmul.bf16.gmra.mxu0 %v1086
      %v1166 = vpop.f32.mrf.mxu0
      %v1167 = vadd.f32 0.0, %v1166
      %v1168 = vpop.f32.mrf.mxu0
      %v1169 = vadd.f32 0.0, %v1168
      %1170 = vmatmul.bf16.gmra.mxu0 %v1089
      %v1171 = vpop.f32.mrf.mxu0
      %v1172 = vadd.f32 0.0, %v1171
      %v1173 = vpop.f32.mrf.mxu0
      %v1174 = vadd.f32 0.0, %v1173
      %1175 = vmatmul.bf16.gmra.mxu0 %v1092
      %v1176 = vpop.f32.mrf.mxu0
      %v1177 = vadd.f32 0.0, %v1176
      %v1178 = vpop.f32.mrf.mxu0
      %v1179 = vadd.f32 0.0, %v1178
      %1180 = vmatmul.bf16.gmra.mxu0 %v1095
      %v1181 = vpop.f32.mrf.mxu0
      %v1182 = vadd.f32 0.0, %v1181
      %v1183 = vpop.f32.mrf.mxu0
      %v1184 = vadd.f32 0.0, %v1183
      %1185 = vdwg.mxu0
      %v1186 = vadd.f32 %v1005, %v1107
      %v1187 = vadd.f32 %v1006, %v1109
      %v1188 = vadd.f32 %v1007, %v1112
      %v1189 = vadd.f32 %v1008, %v1114
      %v1190 = vadd.f32 %v1009, %v1117
      %v1191 = vadd.f32 %v1010, %v1119
      %v1192 = vadd.f32 %v1011, %v1122
      %v1193 = vadd.f32 %v1012, %v1124
      %v1194 = vadd.f32 %v1013, %v1127
      %v1195 = vadd.f32 %v1014, %v1129
      %v1196 = vadd.f32 %v1015, %v1132
      %v1197 = vadd.f32 %v1016, %v1134
      %v1198 = vadd.f32 %v1017, %v1137
      %v1199 = vadd.f32 %v1018, %v1139
      %v1200 = vadd.f32 %v1019, %v1142
      %v1201 = vadd.f32 %v1020, %v1144
      %v1202 = vadd.f32 %v1021, %v1147
      %v1203 = vadd.f32 %v1022, %v1149
      %v1204 = vadd.f32 %v1023, %v1152
      %v1205 = vadd.f32 %v1024, %v1154
      %v1206 = vadd.f32 %v1025, %v1157
      %v1207 = vadd.f32 %v1026, %v1159
      %v1208 = vadd.f32 %v1027, %v1162
      %v1209 = vadd.f32 %v1028, %v1164
      %v1210 = vadd.f32 %v1029, %v1167
      %v1211 = vadd.f32 %v1030, %v1169
      %v1212 = vadd.f32 %v1031, %v1172
      %v1213 = vadd.f32 %v1032, %v1174
      %v1214 = vadd.f32 %v1033, %v1177
      %v1215 = vadd.f32 %v1034, %v1179
      %v1216 = vadd.f32 %v1035, %v1182
      %v1217 = vadd.f32 %v1036, %v1184
      %1218 = vst [vmem:[#allocation2] sm:$0xff] %v1186
      %1219 = vst [vmem:[#allocation2 + $0x8] sm:$0xff] %v1187
      %1220 = vst [vmem:[#allocation2 + $0x10] sm:$0xff] %v1188
      %1221 = vst [vmem:[#allocation2 + $0x18] sm:$0xff] %v1189
      %1222 = vst [vmem:[#allocation2 + $0x20] sm:$0xff] %v1190
      %1223 = vst [vmem:[#allocation2 + $0x28] sm:$0xff] %v1191
      %1224 = vst [vmem:[#allocation2 + $0x30] sm:$0xff] %v1192
      %1225 = vst [vmem:[#allocation2 + $0x38] sm:$0xff] %v1193
      %1226 = vst [vmem:[#allocation2 + $0x40] sm:$0xff] %v1194
      %1227 = vst [vmem:[#allocation2 + $0x48] sm:$0xff] %v1195
      %1228 = vst [vmem:[#allocation2 + $0x50] sm:$0xff] %v1196
      %1229 = vst [vmem:[#allocation2 + $0x58] sm:$0xff] %v1197
      %1230 = vst [vmem:[#allocation2 + $0x60] sm:$0xff] %v1198
      %1231 = vst [vmem:[#allocation2 + $0x68] sm:$0xff] %v1199
      %1232 = vst [vmem:[#allocation2 + $0x70] sm:$0xff] %v1200
      %1233 = vst [vmem:[#allocation2 + $0x78] sm:$0xff] %v1201
      %1234 = vst [vmem:[#allocation2 + $0x80] sm:$0xff] %v1202
      %1235 = vst [vmem:[#allocation2 + $0x88] sm:$0xff] %v1203
      %1236 = vst [vmem:[#allocation2 + $0x90] sm:$0xff] %v1204
      %1237 = vst [vmem:[#allocation2 + $0x98] sm:$0xff] %v1205
      %1238 = vst [vmem:[#allocation2 + $0xa0] sm:$0xff] %v1206
      %1239 = vst [vmem:[#allocation2 + $0xa8] sm:$0xff] %v1207
      %1240 = vst [vmem:[#allocation2 + $0xb0] sm:$0xff] %v1208
      %1241 = vst [vmem:[#allocation2 + $0xb8] sm:$0xff] %v1209
      %1242 = vst [vmem:[#allocation2 + $0xc0] sm:$0xff] %v1210
      %1243 = vst [vmem:[#allocation2 + $0xc8] sm:$0xff] %v1211
      %1244 = vst [vmem:[#allocation2 + $0xd0] sm:$0xff] %v1212
      %1245 = vst [vmem:[#allocation2 + $0xd8] sm:$0xff] %v1213
      %1246 = vst [vmem:[#allocation2 + $0xe0] sm:$0xff] %v1214
      %1247 = vst [vmem:[#allocation2 + $0xe8] sm:$0xff] %v1215
      %1248 = vst [vmem:[#allocation2 + $0xf0] sm:$0xff] %v1216
      %1249 = vst [vmem:[#allocation2 + $0xf8] sm:$0x7f] %v1217
      %v1250 = vld [vmem:[%s262] sm:$0x1]
      %v1251 = vpack.c.bf16 %v1250, %v1250
      %v1252 = vld [vmem:[#allocation2 + $0xff] sm:$0x1]
      %v1254 = vsel %vm405, %v1251, 0
      %1256 = vmatpush.bf16.msra.mxu0 0
      %1257 = vmatpush.bf16.msra.mxu0 0
      %1258 = vmatpush.bf16.msra.mxu0 0
      %1259 = vmatpush.bf16.msra.mxu0 0
      %1260 = vmatpush.bf16.msra.mxu0 0
      %1261 = vmatpush.bf16.msra.mxu0 0
      %1262 = vmatpush.bf16.msra.mxu0 %v1046
      %1263 = vmatpush.bf16.msra.mxu0 %v1045
      %1264 = vmatmul.bf16.gmra.mxu0 %v1254
      %v1265 = vpop.f32.mrf.mxu0
      %v1266 = vadd.f32 0.0, %v1265
      %v1267 = vpop.f32.mrf.mxu0
      %1268 = vdwg.mxu0
      %v1269 = vadd.f32 %v1252, %v1266
      %1270 = vst [vmem:[#allocation2 + $0xff] sm:$0x1] %v1269
      %s1271 = scalar_lea.vmem %s268, 48
      %v1272 = vld [vmem:[%s1271] sm:$0xf]
      %v1273 = vld [vmem:[%s1271 + $0x4] sm:$0xf]
      %v1274 = vld [vmem:[%s1271 + $0x8] sm:$0xf]
      %v1275 = vld [vmem:[%s1271 + $0xc] sm:$0xf]
      %v1276 = vld [vmem:[%s255] sm:$0xff]
      %v1277 = vld [vmem:[%s255 + $0x8] sm:$0xff]
      %v1278 = vld [vmem:[%s255 + $0x10] sm:$0xff]
      %v1279 = vld [vmem:[%s255 + $0x18] sm:$0xff]
      %v1280 = vld [vmem:[%s255 + $0x20] sm:$0xff]
      %v1281 = vld [vmem:[%s255 + $0x28] sm:$0xff]
      %v1282 = vld [vmem:[%s255 + $0x30] sm:$0xff]
      %v1283 = vld [vmem:[%s255 + $0x38] sm:$0xff]
      %v1284 = vld [vmem:[%s255 + $0x40] sm:$0xff]
      %v1285 = vld [vmem:[%s255 + $0x48] sm:$0xff]
      %v1286 = vld [vmem:[%s255 + $0x50] sm:$0xff]
      %v1287 = vld [vmem:[%s255 + $0x58] sm:$0xff]
      %v1288 = vld [vmem:[%s255 + $0x60] sm:$0xff]
      %v1289 = vld [vmem:[%s255 + $0x68] sm:$0xff]
      %v1290 = vld [vmem:[%s255 + $0x70] sm:$0xff]
      %v1291 = vld [vmem:[%s255 + $0x78] sm:$0xff]
      %v1292 = vld [vmem:[%s255 + $0x80] sm:$0xff]
      %v1293 = vld [vmem:[%s255 + $0x88] sm:$0xff]
      %v1294 = vld [vmem:[%s255 + $0x90] sm:$0xff]
      %v1295 = vld [vmem:[%s255 + $0x98] sm:$0xff]
      %v1296 = vld [vmem:[%s255 + $0xa0] sm:$0xff]
      %v1297 = vld [vmem:[%s255 + $0xa8] sm:$0xff]
      %v1298 = vld [vmem:[%s255 + $0xb0] sm:$0xff]
      %v1299 = vld [vmem:[%s255 + $0xb8] sm:$0xff]
      %v1300 = vld [vmem:[%s255 + $0xc0] sm:$0xff]
      %v1301 = vld [vmem:[%s255 + $0xc8] sm:$0xff]
      %v1302 = vld [vmem:[%s255 + $0xd0] sm:$0xff]
      %v1303 = vld [vmem:[%s255 + $0xd8] sm:$0xff]
      %v1304 = vld [vmem:[%s255 + $0xe0] sm:$0xff]
      %v1305 = vld [vmem:[%s255 + $0xe8] sm:$0xff]
      %v1306 = vld [vmem:[%s255 + $0xf0] sm:$0xff]
      %v1307 = vld [vmem:[%s255 + $0xf8] sm:$0xff]
      %v1308 = vpack.c.bf16 %v1277, %v1276
      %v1309 = vpack.c.bf16 %v1279, %v1278
      %v1310 = vpack.c.bf16 %v1281, %v1280
      %v1311 = vpack.c.bf16 %v1283, %v1282
      %v1312 = vpack.c.bf16 %v1285, %v1284
      %v1313 = vpack.c.bf16 %v1287, %v1286
      %v1314 = vpack.c.bf16 %v1289, %v1288
      %v1315 = vpack.c.bf16 %v1291, %v1290
      %v1316 = vpack.c.bf16 %v1293, %v1292
      %v1317 = vpack.c.bf16 %v1295, %v1294
      %v1318 = vpack.c.bf16 %v1297, %v1296
      %v1319 = vpack.c.bf16 %v1299, %v1298
      %v1320 = vpack.c.bf16 %v1301, %v1300
      %v1321 = vpack.c.bf16 %v1303, %v1302
      %v1322 = vpack.c.bf16 %v1305, %v1304
      %v1323 = vpack.c.bf16 %v1307, %v1306
      %v1324 = vld [vmem:[#allocation2] sm:$0xff]
      %v1325 = vld [vmem:[#allocation2 + $0x8] sm:$0xff]
      %v1326 = vld [vmem:[#allocation2 + $0x10] sm:$0xff]
      %v1327 = vld [vmem:[#allocation2 + $0x18] sm:$0xff]
      %v1328 = vld [vmem:[#allocation2 + $0x20] sm:$0xff]
      %v1329 = vld [vmem:[#allocation2 + $0x28] sm:$0xff]
      %v1330 = vld [vmem:[#allocation2 + $0x30] sm:$0xff]
      %v1331 = vld [vmem:[#allocation2 + $0x38] sm:$0xff]
      %v1332 = vld [vmem:[#allocation2 + $0x40] sm:$0xff]
      %v1333 = vld [vmem:[#allocation2 + $0x48] sm:$0xff]
      %v1334 = vld [vmem:[#allocation2 + $0x50] sm:$0xff]
      %v1335 = vld [vmem:[#allocation2 + $0x58] sm:$0xff]
      %v1336 = vld [vmem:[#allocation2 + $0x60] sm:$0xff]
      %v1337 = vld [vmem:[#allocation2 + $0x68] sm:$0xff]
      %v1338 = vld [vmem:[#allocation2 + $0x70] sm:$0xff]
      %v1339 = vld [vmem:[#allocation2 + $0x78] sm:$0xff]
      %v1340 = vld [vmem:[#allocation2 + $0x80] sm:$0xff]
      %v1341 = vld [vmem:[#allocation2 + $0x88] sm:$0xff]
      %v1342 = vld [vmem:[#allocation2 + $0x90] sm:$0xff]
      %v1343 = vld [vmem:[#allocation2 + $0x98] sm:$0xff]
      %v1344 = vld [vmem:[#allocation2 + $0xa0] sm:$0xff]
      %v1345 = vld [vmem:[#allocation2 + $0xa8] sm:$0xff]
      %v1346 = vld [vmem:[#allocation2 + $0xb0] sm:$0xff]
      %v1347 = vld [vmem:[#allocation2 + $0xb8] sm:$0xff]
      %v1348 = vld [vmem:[#allocation2 + $0xc0] sm:$0xff]
      %v1349 = vld [vmem:[#allocation2 + $0xc8] sm:$0xff]
      %v1350 = vld [vmem:[#allocation2 + $0xd0] sm:$0xff]
      %v1351 = vld [vmem:[#allocation2 + $0xd8] sm:$0xff]
      %v1352 = vld [vmem:[#allocation2 + $0xe0] sm:$0xff]
      %v1353 = vld [vmem:[#allocation2 + $0xe8] sm:$0xff]
      %v1354 = vld [vmem:[#allocation2 + $0xf0] sm:$0xff]
      %v1355 = vld [vmem:[#allocation2 + $0xf8] sm:$0xff]
      %v1360 = vunpack.c.l.b16 %v1272
      %v1361 = vunpack.c.l.b16 %v1273
      %v1362 = vunpack.c.l.b16 %v1274
      %v1363 = vunpack.c.l.b16 %v1275
      %v1364 = vpack.c.b16 %v1361, %v1360
      %v1365 = vpack.c.b16 %v1363, %v1362
      %v1369 = vsel %vm405, %v1308, 0
      %v1372 = vsel %vm405, %v1309, 0
      %v1375 = vsel %vm405, %v1310, 0
      %v1378 = vsel %vm405, %v1311, 0
      %v1381 = vsel %vm405, %v1312, 0
      %v1384 = vsel %vm405, %v1313, 0
      %v1387 = vsel %vm405, %v1314, 0
      %v1390 = vsel %vm405, %v1315, 0
      %v1393 = vsel %vm405, %v1316, 0
      %v1396 = vsel %vm405, %v1317, 0
      %v1399 = vsel %vm405, %v1318, 0
      %v1402 = vsel %vm405, %v1319, 0
      %v1405 = vsel %vm405, %v1320, 0
      %v1408 = vsel %vm405, %v1321, 0
      %v1411 = vsel %vm405, %v1322, 0
      %v1414 = vsel %vm405, %v1323, 0
      %1416 = vmatpush.bf16.msra.mxu0 0
      %1417 = vmatpush.bf16.msra.mxu0 0
      %1418 = vmatpush.bf16.msra.mxu0 0
      %1419 = vmatpush.bf16.msra.mxu0 0
      %1420 = vmatpush.bf16.msra.mxu0 0
      %1421 = vmatpush.bf16.msra.mxu0 0
      %1422 = vmatpush.bf16.msra.mxu0 %v1365
      %1423 = vmatpush.bf16.msra.mxu0 %v1364
      %1424 = vmatmul.bf16.gmra.mxu0 %v1369
      %v1425 = vpop.f32.mrf.mxu0
      %v1426 = vadd.f32 0.0, %v1425
      %v1427 = vpop.f32.mrf.mxu0
      %v1428 = vadd.f32 0.0, %v1427
      %1429 = vmatmul.bf16.gmra.mxu0 %v1372
      %v1430 = vpop.f32.mrf.mxu0
      %v1431 = vadd.f32 0.0, %v1430
      %v1432 = vpop.f32.mrf.mxu0
      %v1433 = vadd.f32 0.0, %v1432
      %1434 = vmatmul.bf16.gmra.mxu0 %v1375
      %v1435 = vpop.f32.mrf.mxu0
      %v1436 = vadd.f32 0.0, %v1435
      %v1437 = vpop.f32.mrf.mxu0
      %v1438 = vadd.f32 0.0, %v1437
      %1439 = vmatmul.bf16.gmra.mxu0 %v1378
      %v1440 = vpop.f32.mrf.mxu0
      %v1441 = vadd.f32 0.0, %v1440
      %v1442 = vpop.f32.mrf.mxu0
      %v1443 = vadd.f32 0.0, %v1442
      %1444 = vmatmul.bf16.gmra.mxu0 %v1381
      %v1445 = vpop.f32.mrf.mxu0
      %v1446 = vadd.f32 0.0, %v1445
      %v1447 = vpop.f32.mrf.mxu0
      %v1448 = vadd.f32 0.0, %v1447
      %1449 = vmatmul.bf16.gmra.mxu0 %v1384
      %v1450 = vpop.f32.mrf.mxu0
      %v1451 = vadd.f32 0.0, %v1450
      %v1452 = vpop.f32.mrf.mxu0
      %v1453 = vadd.f32 0.0, %v1452
      %1454 = vmatmul.bf16.gmra.mxu0 %v1387
      %v1455 = vpop.f32.mrf.mxu0
      %v1456 = vadd.f32 0.0, %v1455
      %v1457 = vpop.f32.mrf.mxu0
      %v1458 = vadd.f32 0.0, %v1457
      %1459 = vmatmul.bf16.gmra.mxu0 %v1390
      %v1460 = vpop.f32.mrf.mxu0
      %v1461 = vadd.f32 0.0, %v1460
      %v1462 = vpop.f32.mrf.mxu0
      %v1463 = vadd.f32 0.0, %v1462
      %1464 = vmatmul.bf16.gmra.mxu0 %v1393
      %v1465 = vpop.f32.mrf.mxu0
      %v1466 = vadd.f32 0.0, %v1465
      %v1467 = vpop.f32.mrf.mxu0
      %v1468 = vadd.f32 0.0, %v1467
      %1469 = vmatmul.bf16.gmra.mxu0 %v1396
      %v1470 = vpop.f32.mrf.mxu0
      %v1471 = vadd.f32 0.0, %v1470
      %v1472 = vpop.f32.mrf.mxu0
      %v1473 = vadd.f32 0.0, %v1472
      %1474 = vmatmul.bf16.gmra.mxu0 %v1399
      %v1475 = vpop.f32.mrf.mxu0
      %v1476 = vadd.f32 0.0, %v1475
      %v1477 = vpop.f32.mrf.mxu0
      %v1478 = vadd.f32 0.0, %v1477
      %1479 = vmatmul.bf16.gmra.mxu0 %v1402
      %v1480 = vpop.f32.mrf.mxu0
      %v1481 = vadd.f32 0.0, %v1480
      %v1482 = vpop.f32.mrf.mxu0
      %v1483 = vadd.f32 0.0, %v1482
      %1484 = vmatmul.bf16.gmra.mxu0 %v1405
      %v1485 = vpop.f32.mrf.mxu0
      %v1486 = vadd.f32 0.0, %v1485
      %v1487 = vpop.f32.mrf.mxu0
      %v1488 = vadd.f32 0.0, %v1487
      %1489 = vmatmul.bf16.gmra.mxu0 %v1408
      %v1490 = vpop.f32.mrf.mxu0
      %v1491 = vadd.f32 0.0, %v1490
      %v1492 = vpop.f32.mrf.mxu0
      %v1493 = vadd.f32 0.0, %v1492
      %1494 = vmatmul.bf16.gmra.mxu0 %v1411
      %v1495 = vpop.f32.mrf.mxu0
      %v1496 = vadd.f32 0.0, %v1495
      %v1497 = vpop.f32.mrf.mxu0
      %v1498 = vadd.f32 0.0, %v1497
      %1499 = vmatmul.bf16.gmra.mxu0 %v1414
      %v1500 = vpop.f32.mrf.mxu0
      %v1501 = vadd.f32 0.0, %v1500
      %v1502 = vpop.f32.mrf.mxu0
      %v1503 = vadd.f32 0.0, %v1502
      %1504 = vdwg.mxu0
      %v1505 = vadd.f32 %v1324, %v1426
      %v1506 = vadd.f32 %v1325, %v1428
      %v1507 = vadd.f32 %v1326, %v1431
      %v1508 = vadd.f32 %v1327, %v1433
      %v1509 = vadd.f32 %v1328, %v1436
      %v1510 = vadd.f32 %v1329, %v1438
      %v1511 = vadd.f32 %v1330, %v1441
      %v1512 = vadd.f32 %v1331, %v1443
      %v1513 = vadd.f32 %v1332, %v1446
      %v1514 = vadd.f32 %v1333, %v1448
      %v1515 = vadd.f32 %v1334, %v1451
      %v1516 = vadd.f32 %v1335, %v1453
      %v1517 = vadd.f32 %v1336, %v1456
      %v1518 = vadd.f32 %v1337, %v1458
      %v1519 = vadd.f32 %v1338, %v1461
      %v1520 = vadd.f32 %v1339, %v1463
      %v1521 = vadd.f32 %v1340, %v1466
      %v1522 = vadd.f32 %v1341, %v1468
      %v1523 = vadd.f32 %v1342, %v1471
      %v1524 = vadd.f32 %v1343, %v1473
      %v1525 = vadd.f32 %v1344, %v1476
      %v1526 = vadd.f32 %v1345, %v1478
      %v1527 = vadd.f32 %v1346, %v1481
      %v1528 = vadd.f32 %v1347, %v1483
      %v1529 = vadd.f32 %v1348, %v1486
      %v1530 = vadd.f32 %v1349, %v1488
      %v1531 = vadd.f32 %v1350, %v1491
      %v1532 = vadd.f32 %v1351, %v1493
      %v1533 = vadd.f32 %v1352, %v1496
      %v1534 = vadd.f32 %v1353, %v1498
      %v1535 = vadd.f32 %v1354, %v1501
      %v1536 = vadd.f32 %v1355, %v1503
      %1537 = vst [vmem:[#allocation2] sm:$0xff] %v1505
      %1538 = vst [vmem:[#allocation2 + $0x8] sm:$0xff] %v1506
      %1539 = vst [vmem:[#allocation2 + $0x10] sm:$0xff] %v1507
      %1540 = vst [vmem:[#allocation2 + $0x18] sm:$0xff] %v1508
      %1541 = vst [vmem:[#allocation2 + $0x20] sm:$0xff] %v1509
      %1542 = vst [vmem:[#allocation2 + $0x28] sm:$0xff] %v1510
      %1543 = vst [vmem:[#allocation2 + $0x30] sm:$0xff] %v1511
      %1544 = vst [vmem:[#allocation2 + $0x38] sm:$0xff] %v1512
      %1545 = vst [vmem:[#allocation2 + $0x40] sm:$0xff] %v1513
      %1546 = vst [vmem:[#allocation2 + $0x48] sm:$0xff] %v1514
      %1547 = vst [vmem:[#allocation2 + $0x50] sm:$0xff] %v1515
      %1548 = vst [vmem:[#allocation2 + $0x58] sm:$0xff] %v1516
      %1549 = vst [vmem:[#allocation2 + $0x60] sm:$0xff] %v1517
      %1550 = vst [vmem:[#allocation2 + $0x68] sm:$0xff] %v1518
      %1551 = vst [vmem:[#allocation2 + $0x70] sm:$0xff] %v1519
      %1552 = vst [vmem:[#allocation2 + $0x78] sm:$0xff] %v1520
      %1553 = vst [vmem:[#allocation2 + $0x80] sm:$0xff] %v1521
      %1554 = vst [vmem:[#allocation2 + $0x88] sm:$0xff] %v1522
      %1555 = vst [vmem:[#allocation2 + $0x90] sm:$0xff] %v1523
      %1556 = vst [vmem:[#allocation2 + $0x98] sm:$0xff] %v1524
      %1557 = vst [vmem:[#allocation2 + $0xa0] sm:$0xff] %v1525
      %1558 = vst [vmem:[#allocation2 + $0xa8] sm:$0xff] %v1526
      %1559 = vst [vmem:[#allocation2 + $0xb0] sm:$0xff] %v1527
      %1560 = vst [vmem:[#allocation2 + $0xb8] sm:$0xff] %v1528
      %1561 = vst [vmem:[#allocation2 + $0xc0] sm:$0xff] %v1529
      %1562 = vst [vmem:[#allocation2 + $0xc8] sm:$0xff] %v1530
      %1563 = vst [vmem:[#allocation2 + $0xd0] sm:$0xff] %v1531
      %1564 = vst [vmem:[#allocation2 + $0xd8] sm:$0xff] %v1532
      %1565 = vst [vmem:[#allocation2 + $0xe0] sm:$0xff] %v1533
      %1566 = vst [vmem:[#allocation2 + $0xe8] sm:$0xff] %v1534
      %1567 = vst [vmem:[#allocation2 + $0xf0] sm:$0xff] %v1535
      %1568 = vst [vmem:[#allocation2 + $0xf8] sm:$0xff] %v1536
      %v1569 = vld [vmem:[#allocation2] sm:$0xff]
      %v1570 = vld [vmem:[#allocation2 + $0x8] sm:$0xff]
      %v1571 = vld [vmem:[#allocation2 + $0x10] sm:$0xff]
      %v1572 = vld [vmem:[#allocation2 + $0x18] sm:$0xff]
      %v1573 = vld [vmem:[#allocation2 + $0x20] sm:$0xff]
      %v1574 = vld [vmem:[#allocation2 + $0x28] sm:$0xff]
      %v1575 = vld [vmem:[#allocation2 + $0x30] sm:$0xff]
      %v1576 = vld [vmem:[#allocation2 + $0x38] sm:$0xff]
      %v1577 = vld [vmem:[#allocation2 + $0x40] sm:$0xff]
      %v1578 = vld [vmem:[#allocation2 + $0x48] sm:$0xff]
      %v1579 = vld [vmem:[#allocation2 + $0x50] sm:$0xff]
      %v1580 = vld [vmem:[#allocation2 + $0x58] sm:$0xff]
      %v1581 = vld [vmem:[#allocation2 + $0x60] sm:$0xff]
      %v1582 = vld [vmem:[#allocation2 + $0x68] sm:$0xff]
      %v1583 = vld [vmem:[#allocation2 + $0x70] sm:$0xff]
      %v1584 = vld [vmem:[#allocation2 + $0x78] sm:$0xff]
      %v1585 = vld [vmem:[#allocation2 + $0x80] sm:$0xff]
      %v1586 = vld [vmem:[#allocation2 + $0x88] sm:$0xff]
      %v1587 = vld [vmem:[#allocation2 + $0x90] sm:$0xff]
      %v1588 = vld [vmem:[#allocation2 + $0x98] sm:$0xff]
      %v1589 = vld [vmem:[#allocation2 + $0xa0] sm:$0xff]
      %v1590 = vld [vmem:[#allocation2 + $0xa8] sm:$0xff]
      %v1591 = vld [vmem:[#allocation2 + $0xb0] sm:$0xff]
      %v1592 = vld [vmem:[#allocation2 + $0xb8] sm:$0xff]
      %v1593 = vld [vmem:[#allocation2 + $0xc0] sm:$0xff]
      %v1594 = vld [vmem:[#allocation2 + $0xc8] sm:$0xff]
      %v1595 = vld [vmem:[#allocation2 + $0xd0] sm:$0xff]
      %v1596 = vld [vmem:[#allocation2 + $0xd8] sm:$0xff]
      %v1597 = vld [vmem:[#allocation2 + $0xe0] sm:$0xff]
      %v1598 = vld [vmem:[#allocation2 + $0xe8] sm:$0xff]
      %v1599 = vld [vmem:[#allocation2 + $0xf0] sm:$0xff]
      %v1600 = vld [vmem:[#allocation2 + $0xf8] sm:$0xff]
      %v1601 = vld [vmem:[%s271] sm:$0x1]
      %v1603 = vperm.slane %v1601, 0
      %v1605 = vadd.f32 %v1569, %v1603
      %v1606 = vadd.f32 %v1570, %v1603
      %v1607 = vadd.f32 %v1571, %v1603
      %v1608 = vadd.f32 %v1572, %v1603
      %v1609 = vadd.f32 %v1573, %v1603
      %v1610 = vadd.f32 %v1574, %v1603
      %v1611 = vadd.f32 %v1575, %v1603
      %v1612 = vadd.f32 %v1576, %v1603
      %v1613 = vadd.f32 %v1577, %v1603
      %v1614 = vadd.f32 %v1578, %v1603
      %v1615 = vadd.f32 %v1579, %v1603
      %v1616 = vadd.f32 %v1580, %v1603
      %v1617 = vadd.f32 %v1581, %v1603
      %v1618 = vadd.f32 %v1582, %v1603
      %v1619 = vadd.f32 %v1583, %v1603
      %v1620 = vadd.f32 %v1584, %v1603
      %v1621 = vadd.f32 %v1585, %v1603
      %v1622 = vadd.f32 %v1586, %v1603
      %v1623 = vadd.f32 %v1587, %v1603
      %v1624 = vadd.f32 %v1588, %v1603
      %v1625 = vadd.f32 %v1589, %v1603
      %v1626 = vadd.f32 %v1590, %v1603
      %v1627 = vadd.f32 %v1591, %v1603
      %v1628 = vadd.f32 %v1592, %v1603
      %v1629 = vadd.f32 %v1593, %v1603
      %v1630 = vadd.f32 %v1594, %v1603
      %v1631 = vadd.f32 %v1595, %v1603
      %v1632 = vadd.f32 %v1596, %v1603
      %v1633 = vadd.f32 %v1597, %v1603
      %v1634 = vadd.f32 %v1598, %v1603
      %v1635 = vadd.f32 %v1599, %v1603
      %v1636 = vadd.f32 %v1600, %v1603
      %1637 = vst [vmem:[%s279] sm:$0xff] %v1605
      %1638 = vst [vmem:[%s279 + $0x8] sm:$0xff] %v1606
      %1639 = vst [vmem:[%s279 + $0x10] sm:$0xff] %v1607
      %1640 = vst [vmem:[%s279 + $0x18] sm:$0xff] %v1608
      %1641 = vst [vmem:[%s279 + $0x20] sm:$0xff] %v1609
      %1642 = vst [vmem:[%s279 + $0x28] sm:$0xff] %v1610
      %1643 = vst [vmem:[%s279 + $0x30] sm:$0xff] %v1611
      %1644 = vst [vmem:[%s279 + $0x38] sm:$0xff] %v1612
      %1645 = vst [vmem:[%s279 + $0x40] sm:$0xff] %v1613
      %1646 = vst [vmem:[%s279 + $0x48] sm:$0xff] %v1614
      %1647 = vst [vmem:[%s279 + $0x50] sm:$0xff] %v1615
      %1648 = vst [vmem:[%s279 + $0x58] sm:$0xff] %v1616
      %1649 = vst [vmem:[%s279 + $0x60] sm:$0xff] %v1617
      %1650 = vst [vmem:[%s279 + $0x68] sm:$0xff] %v1618
      %1651 = vst [vmem:[%s279 + $0x70] sm:$0xff] %v1619
      %1652 = vst [vmem:[%s279 + $0x78] sm:$0xff] %v1620
      %1653 = vst [vmem:[%s279 + $0x80] sm:$0xff] %v1621
      %1654 = vst [vmem:[%s279 + $0x88] sm:$0xff] %v1622
      %1655 = vst [vmem:[%s279 + $0x90] sm:$0xff] %v1623
      %1656 = vst [vmem:[%s279 + $0x98] sm:$0xff] %v1624
      %1657 = vst [vmem:[%s279 + $0xa0] sm:$0xff] %v1625
      %1658 = vst [vmem:[%s279 + $0xa8] sm:$0xff] %v1626
      %1659 = vst [vmem:[%s279 + $0xb0] sm:$0xff] %v1627
      %1660 = vst [vmem:[%s279 + $0xb8] sm:$0xff] %v1628
      %1661 = vst [vmem:[%s279 + $0xc0] sm:$0xff] %v1629
      %1662 = vst [vmem:[%s279 + $0xc8] sm:$0xff] %v1630
      %1663 = vst [vmem:[%s279 + $0xd0] sm:$0xff] %v1631
      %1664 = vst [vmem:[%s279 + $0xd8] sm:$0xff] %v1632
      %1665 = vst [vmem:[%s279 + $0xe0] sm:$0xff] %v1633
      %1666 = vst [vmem:[%s279 + $0xe8] sm:$0xff] %v1634
      %1667 = vst [vmem:[%s279 + $0xf0] sm:$0xff] %v1635
      %1668 = vst [vmem:[%s279 + $0xf8] sm:$0xff] %v1636
      %s1669 = smul.u32 32, %s19
      %p1670 = scmp.lt.s32.totalorder %s1669, 95
      %s1671 = scalar_select %p1670, %s1669, 95
      %p1672 = scmp.lt.s32.totalorder %s20, 0
      %s1673 = scalar_select %p1672, %s20, 0
      %s1674 = sadd.s32 %s1673, %s1671
      %s1675 = smul.addr %s1674, 8
      %s1676 = scalar_lea.vmem %s4, %s1675
      // Predicated region
      $region37: #{_lambda_.8} parent=35 // pred_check
        %p1677 = pneg %p153
      $region38: #{_lambda_.8} parent=35 // pred_check_branch
        %1679 = sbr.rel (%p1677) target = $region40
      $region39: #{_lambda_.8} parent=35 // pred_region
        %s1680 = smul.u32 32, %s19
      $region40: #{_lambda_.8} parent=35 // pred_fallthru
        _
    $region36: #{_lambda_.8} parent=5 // pred_fallthru
      _
    %p1681 = scmp.le.s32.totalorder 2, %s10
    // Predicated region
    $region41: #{_lambda_.8} parent=5 // pred_check
      %p1682 = pneg %p1681
    $region42: #{_lambda_.8} parent=5 // pred_check_branch
      %1684 = sbr.rel (%p1682) target = $region44
    $region43: #{_lambda_.8} parent=5 // pred_region
      %s1685 = ssub.s32 %s10, 2
      // Predicated region
      $region45: #{_lambda_.8} parent=43 // pred_check
        %p1686 = pneg %p159
      $region46: #{_lambda_.8} parent=43 // pred_check_branch
        %1688 = sbr.rel (%p1686) target = $region48
      $region47: #{_lambda_.8} parent=43 // pred_region
        %s1689 = smul.u32 32, %s21
        %p1690 = scmp.lt.s32.totalorder %s1689, 95
        %s1691 = scalar_select %p1690, %s1689, 95
        %p1692 = scmp.lt.s32.totalorder %s22, 0
        %s1693 = scalar_select %p1692, %s22, 0
        %s1694 = sadd.s32 %s1693, %s1691
        %s1695 = smul.addr %s1694, 8
        %s1696 = scalar_lea.vmem %s4, %s1695
      $region48: #{_lambda_.8} parent=43 // pred_fallthru
        _
    $region44: #{_lambda_.8} parent=5 // pred_fallthru
      _
  $region6: #{_lambda_.8} parent=0 // loop_footer
    %s14 = sadd.s32 1, %s10
  $region7: #{_lambda_.8} parent=0 // loop_footer_branch
    %9 = sbr.rel target = $region3
  $region8: #{_lambda_.8} parent=0 // loop_exit
    _

// kernel: _lambda_.9
$region0: #{_lambda_.9}
  #allocation0 [shape = 'u32[]', space=smem, size = 0x4, offset = 0x4, fixed_abs, tag = 'smem constant byte address 0x4 - core index']
  #allocation1 [shape = 'u32[72,128]{1,0:T(1,128)}', space=vmem, size = 0x9000, scoped, tag = 'internal scratch']
  %s0 = inlined_call_operand.vmem [shape: f32[32,1024], index: 0, kind: input, shape index: {}]
  %s1 = inlined_call_operand.vmem [shape: f32[32,1024], index: 1, kind: output, shape index: {}]
  %s2 = sld [smem:[#allocation0]]
  $region14: #{_lambda_.9} parent=0
    _
  %s4 = ssub.s32 1, %s2
  %s5 = scalar_select 0, %s4, %s2
  // Predicated region
  $region2: #{_lambda_.9} parent=0 // pred_check
    _
  $region3: #{_lambda_.9} parent=0 // pred_check_branch
    %7 = sbr.rel (0) target = $region5
  $region4: #{_lambda_.9} parent=0 // pred_region
    _
  $region5: #{_lambda_.9} parent=0 // pred_fallthru
    _
  %v8 = vld [vmem:[%s0] sm:$0xff]
  %v9 = vld [vmem:[%s0 + $0x8] sm:$0xff]
  %v10 = vld [vmem:[%s0 + $0x10] sm:$0xff]
  %v11 = vld [vmem:[%s0 + $0x18] sm:$0xff]
  %v12 = vld [vmem:[%s0 + $0x20] sm:$0xff]
  %v13 = vld [vmem:[%s0 + $0x28] sm:$0xff]
  %v14 = vld [vmem:[%s0 + $0x30] sm:$0xff]
  %v15 = vld [vmem:[%s0 + $0x38] sm:$0xff]
  %v16 = vld [vmem:[%s0 + $0x40] sm:$0xff]
  %v17 = vld [vmem:[%s0 + $0x48] sm:$0xff]
  %v18 = vld [vmem:[%s0 + $0x50] sm:$0xff]
  %v19 = vld [vmem:[%s0 + $0x58] sm:$0xff]
  %v20 = vld [vmem:[%s0 + $0x60] sm:$0xff]
  %v21 = vld [vmem:[%s0 + $0x68] sm:$0xff]
  %v22 = vld [vmem:[%s0 + $0x70] sm:$0xff]
  %v23 = vld [vmem:[%s0 + $0x78] sm:$0xff]
  %v24 = vld [vmem:[%s0 + $0x80] sm:$0xff]
  %v25 = vld [vmem:[%s0 + $0x88] sm:$0xff]
  %v26 = vld [vmem:[%s0 + $0x90] sm:$0xff]
  %v27 = vld [vmem:[%s0 + $0x98] sm:$0xff]
  %v28 = vld [vmem:[%s0 + $0xa0] sm:$0xff]
  %v29 = vld [vmem:[%s0 + $0xa8] sm:$0xff]
  %v30 = vld [vmem:[%s0 + $0xb0] sm:$0xff]
  %v31 = vld [vmem:[%s0 + $0xb8] sm:$0xff]
  %v32 = vld [vmem:[%s0 + $0xc0] sm:$0xff]
  %v33 = vld [vmem:[%s0 + $0xc8] sm:$0xff]
  %v34 = vld [vmem:[%s0 + $0xd0] sm:$0xff]
  %v35 = vld [vmem:[%s0 + $0xd8] sm:$0xff]
  %v36 = vld [vmem:[%s0 + $0xe0] sm:$0xff]
  %v37 = vld [vmem:[%s0 + $0xe8] sm:$0xff]
  %v38 = vld [vmem:[%s0 + $0xf0] sm:$0xff]
  %v39 = vld [vmem:[%s0 + $0xf8] sm:$0xff]
  %v40 = vlaneseq
  %v41 = vand.u32 %v40, 127
  %v42 = vadd.s32 %v41, 128
  %v43 = vadd.s32 %v41, 256
  %v44 = vadd.s32 %v41, 384
  %v45 = vadd.s32 %v41, 512
  %v46 = vadd.s32 %v41, 640
  %v47 = vadd.s32 %v41, 768
  %v48 = vadd.s32 %v41, 896
  %vm49 = vcmp.lt.s32.totalorder %v41, 1024
  %vm50 = vcmp.lt.s32.totalorder %v42, 1024
  %vm51 = vcmp.lt.s32.totalorder %v43, 1024
  %vm52 = vcmp.lt.s32.totalorder %v44, 1024
  %vm53 = vcmp.lt.s32.totalorder %v45, 1024
  %vm54 = vcmp.lt.s32.totalorder %v46, 1024
  %vm55 = vcmp.lt.s32.totalorder %v47, 1024
  %vm56 = vcmp.lt.s32.totalorder %v48, 1024
  %v57 = vsel %vm49, %v8, 0.0
  %v58 = vsel %vm50, %v9, 0.0
  %v59 = vsel %vm51, %v10, 0.0
  %v60 = vsel %vm52, %v11, 0.0
  %v61 = vsel %vm53, %v12, 0.0
  %v62 = vsel %vm54, %v13, 0.0
  %v63 = vsel %vm55, %v14, 0.0
  %v64 = vsel %vm56, %v15, 0.0
  %v65 = vsel %vm49, %v16, 0.0
  %v66 = vsel %vm50, %v17, 0.0
  %v67 = vsel %vm51, %v18, 0.0
  %v68 = vsel %vm52, %v19, 0.0
  %v69 = vsel %vm53, %v20, 0.0
  %v70 = vsel %vm54, %v21, 0.0
  %v71 = vsel %vm55, %v22, 0.0
  %v72 = vsel %vm56, %v23, 0.0
  %v73 = vsel %vm49, %v24, 0.0
  %v74 = vsel %vm50, %v25, 0.0
  %v75 = vsel %vm51, %v26, 0.0
  %v76 = vsel %vm52, %v27, 0.0
  %v77 = vsel %vm53, %v28, 0.0
  %v78 = vsel %vm54, %v29, 0.0
  %v79 = vsel %vm55, %v30, 0.0
  %v80 = vsel %vm56, %v31, 0.0
  %v81 = vsel %vm49, %v32, 0.0
  %v82 = vsel %vm50, %v33, 0.0
  %v83 = vsel %vm51, %v34, 0.0
  %v84 = vsel %vm52, %v35, 0.0
  %v85 = vsel %vm53, %v36, 0.0
  %v86 = vsel %vm54, %v37, 0.0
  %v87 = vsel %vm55, %v38, 0.0
  %v88 = vsel %vm56, %v39, 0.0
  %v89 = vadd.f32 %v57, %v58
  %v90 = vadd.f32 %v89, %v59
  %v91 = vadd.f32 %v90, %v60
  %v92 = vadd.f32 %v91, %v61
  %v93 = vadd.f32 %v92, %v62
  %v94 = vadd.f32 %v93, %v63
  %v95 = vadd.f32 %v94, %v64
  %96 = vadd.xlane.f32.xlu0 %v95
  %v97 = vpop.xlane.xlu0 %96
  %v98 = vadd.f32 %v65, %v66
  %v99 = vadd.f32 %v98, %v67
  %v100 = vadd.f32 %v99, %v68
  %v101 = vadd.f32 %v100, %v69
  %v102 = vadd.f32 %v101, %v70
  %v103 = vadd.f32 %v102, %v71
  %v104 = vadd.f32 %v103, %v72
  %105 = vadd.xlane.f32.xlu0 %v104
  %v106 = vpop.xlane.xlu0 %105
  %v107 = vadd.f32 %v73, %v74
  %v108 = vadd.f32 %v107, %v75
  %v109 = vadd.f32 %v108, %v76
  %v110 = vadd.f32 %v109, %v77
  %v111 = vadd.f32 %v110, %v78
  %v112 = vadd.f32 %v111, %v79
  %v113 = vadd.f32 %v112, %v80
  %114 = vadd.xlane.f32.xlu0 %v113
  %v115 = vpop.xlane.xlu0 %114
  %v116 = vadd.f32 %v81, %v82
  %v117 = vadd.f32 %v116, %v83
  %v118 = vadd.f32 %v117, %v84
  %v119 = vadd.f32 %v118, %v85
  %v120 = vadd.f32 %v119, %v86
  %v121 = vadd.f32 %v120, %v87
  %v122 = vadd.f32 %v121, %v88
  %123 = vadd.xlane.f32.xlu0 %v122
  %v124 = vpop.xlane.xlu0 %123
  %v125 = vmul.f32 %v97, 0.0009765625
  %v126 = vmul.f32 %v106, 0.0009765625
  %v127 = vmul.f32 %v115, 0.0009765625
  %v128 = vmul.f32 %v124, 0.0009765625
  %v129 = vsub.f32 %v8, %v125
  %v130 = vsub.f32 %v9, %v125
  %v131 = vsub.f32 %v10, %v125
  %v132 = vsub.f32 %v11, %v125
  %v133 = vsub.f32 %v12, %v125
  %v134 = vsub.f32 %v13, %v125
  %v135 = vsub.f32 %v14, %v125
  %v136 = vsub.f32 %v15, %v125
  %v137 = vsub.f32 %v16, %v126
  %v138 = vsub.f32 %v17, %v126
  %v139 = vsub.f32 %v18, %v126
  %v140 = vsub.f32 %v19, %v126
  %v141 = vsub.f32 %v20, %v126
  %v142 = vsub.f32 %v21, %v126
  %v143 = vsub.f32 %v22, %v126
  %v144 = vsub.f32 %v23, %v126
  %v145 = vsub.f32 %v24, %v127
  %v146 = vsub.f32 %v25, %v127
  %v147 = vsub.f32 %v26, %v127
  %v148 = vsub.f32 %v27, %v127
  %v149 = vsub.f32 %v28, %v127
  %v150 = vsub.f32 %v29, %v127
  %v151 = vsub.f32 %v30, %v127
  %v152 = vsub.f32 %v31, %v127
  %v153 = vsub.f32 %v32, %v128
  %v154 = vsub.f32 %v33, %v128
  %v155 = vsub.f32 %v34, %v128
  %v156 = vsub.f32 %v35, %v128
  %v157 = vsub.f32 %v36, %v128
  %v158 = vsub.f32 %v37, %v128
  %v159 = vsub.f32 %v38, %v128
  %v160 = vsub.f32 %v39, %v128
  %v161 = vsel %vm49, %v129, 0.0
  %v162 = vsel %vm50, %v130, 0.0
  %v163 = vsel %vm51, %v131, 0.0
  %v164 = vsel %vm52, %v132, 0.0
  %v165 = vsel %vm53, %v133, 0.0
  %v166 = vsel %vm54, %v134, 0.0
  %v167 = vsel %vm55, %v135, 0.0
  %v168 = vsel %vm56, %v136, 0.0
  %v169 = vsel %vm49, %v137, 0.0
  %v170 = vsel %vm50, %v138, 0.0
  %v171 = vsel %vm51, %v139, 0.0
  %v172 = vsel %vm52, %v140, 0.0
  %v173 = vsel %vm53, %v141, 0.0
  %v174 = vsel %vm54, %v142, 0.0
  %v175 = vsel %vm55, %v143, 0.0
  %v176 = vsel %vm56, %v144, 0.0
  %v177 = vsel %vm49, %v145, 0.0
  %v178 = vsel %vm50, %v146, 0.0
  %v179 = vsel %vm51, %v147, 0.0
  %v180 = vsel %vm52, %v148, 0.0
  %v181 = vsel %vm53, %v149, 0.0
  %v182 = vsel %vm54, %v150, 0.0
  %v183 = vsel %vm55, %v151, 0.0
  %v184 = vsel %vm56, %v152, 0.0
  %v185 = vsel %vm49, %v153, 0.0
  %v186 = vsel %vm50, %v154, 0.0
  %v187 = vsel %vm51, %v155, 0.0
  %v188 = vsel %vm52, %v156, 0.0
  %v189 = vsel %vm53, %v157, 0.0
  %v190 = vsel %vm54, %v158, 0.0
  %v191 = vsel %vm55, %v159, 0.0
  %v192 = vsel %vm56, %v160, 0.0
  %v193 = vmul.f32 %v161, %v161
  %v194 = vmul.f32 %v162, %v162
  %v195 = vmul.f32 %v163, %v163
  %v196 = vmul.f32 %v164, %v164
  %v197 = vmul.f32 %v165, %v165
  %v198 = vmul.f32 %v166, %v166
  %v199 = vmul.f32 %v167, %v167
  %v200 = vmul.f32 %v168, %v168
  %v201 = vmul.f32 %v169, %v169
  %v202 = vmul.f32 %v170, %v170
  %v203 = vmul.f32 %v171, %v171
  %v204 = vmul.f32 %v172, %v172
  %v205 = vmul.f32 %v173, %v173
  %v206 = vmul.f32 %v174, %v174
  %v207 = vmul.f32 %v175, %v175
  %v208 = vmul.f32 %v176, %v176
  %v209 = vmul.f32 %v177, %v177
  %v210 = vmul.f32 %v178, %v178
  %v211 = vmul.f32 %v179, %v179
  %v212 = vmul.f32 %v180, %v180
  %v213 = vmul.f32 %v181, %v181
  %v214 = vmul.f32 %v182, %v182
  %v215 = vmul.f32 %v183, %v183
  %v216 = vmul.f32 %v184, %v184
  %v217 = vmul.f32 %v185, %v185
  %v218 = vmul.f32 %v186, %v186
  %v219 = vmul.f32 %v187, %v187
  %v220 = vmul.f32 %v188, %v188
  %v221 = vmul.f32 %v189, %v189
  %v222 = vmul.f32 %v190, %v190
  %v223 = vmul.f32 %v191, %v191
  %v224 = vmul.f32 %v192, %v192
  %v225 = vadd.f32 %v193, %v194
  %v226 = vadd.f32 %v225, %v195
  %v227 = vadd.f32 %v226, %v196
  %v228 = vadd.f32 %v227, %v197
  %v229 = vadd.f32 %v228, %v198
  %v230 = vadd.f32 %v229, %v199
  %v231 = vadd.f32 %v230, %v200
  %232 = vadd.xlane.f32.xlu0 %v231
  %v233 = vpop.xlane.xlu0 %232
  %v234 = vadd.f32 %v201, %v202
  %v235 = vadd.f32 %v234, %v203
  %v236 = vadd.f32 %v235, %v204
  %v237 = vadd.f32 %v236, %v205
  %v238 = vadd.f32 %v237, %v206
  %v239 = vadd.f32 %v238, %v207
  %v240 = vadd.f32 %v239, %v208
  %241 = vadd.xlane.f32.xlu0 %v240
  %v242 = vpop.xlane.xlu0 %241
  %v243 = vadd.f32 %v209, %v210
  %v244 = vadd.f32 %v243, %v211
  %v245 = vadd.f32 %v244, %v212
  %v246 = vadd.f32 %v245, %v213
  %v247 = vadd.f32 %v246, %v214
  %v248 = vadd.f32 %v247, %v215
  %v249 = vadd.f32 %v248, %v216
  %250 = vadd.xlane.f32.xlu0 %v249
  %v251 = vpop.xlane.xlu0 %250
  %v252 = vadd.f32 %v217, %v218
  %v253 = vadd.f32 %v252, %v219
  %v254 = vadd.f32 %v253, %v220
  %v255 = vadd.f32 %v254, %v221
  %v256 = vadd.f32 %v255, %v222
  %v257 = vadd.f32 %v256, %v223
  %v258 = vadd.f32 %v257, %v224
  %259 = vadd.xlane.f32.xlu0 %v258
  %v260 = vpop.xlane.xlu0 %259
  %v261 = vmul.f32 %v233, 0.0009765625
  %v262 = vmul.f32 %v242, 0.0009765625
  %v263 = vmul.f32 %v251, 0.0009765625
  %v264 = vmul.f32 %v260, 0.0009765625
  %v265 = vadd.f32 %v261, 1e-05
  %v266 = vadd.f32 %v262, 1e-05
  %v267 = vadd.f32 %v263, 1e-05
  %v268 = vadd.f32 %v264, 1e-05
  %v269 = vrsqrt.pop %v265
  %v270 = vmul.f32 %v269, %v265
  %v271 = vmul.f32 %v270, %v269
  %v272 = vmul.f32 0.5, %v271
  %v273 = vsub.f32 1.5, %v272
  %v274 = vmul.f32 %v269, %v273
  %vm275 = vweird.f32 %v265
  %vm276 = vweird.f32 %v269
  %vm277 = vmor %vm275, %vm276
  %v278 = vsel %vm277, %v269, %v274
  %v279 = vrsqrt.pop %v266
  %v280 = vmul.f32 %v279, %v266
  %v281 = vmul.f32 %v280, %v279
  %v282 = vmul.f32 0.5, %v281
  %v283 = vsub.f32 1.5, %v282
  %v284 = vmul.f32 %v279, %v283
  %vm285 = vweird.f32 %v266
  %vm286 = vweird.f32 %v279
  %vm287 = vmor %vm285, %vm286
  %v288 = vsel %vm287, %v279, %v284
  %v289 = vrsqrt.pop %v267
  %v290 = vmul.f32 %v289, %v267
  %v291 = vmul.f32 %v290, %v289
  %v292 = vmul.f32 0.5, %v291
  %v293 = vsub.f32 1.5, %v292
  %v294 = vmul.f32 %v289, %v293
  %vm295 = vweird.f32 %v267
  %vm296 = vweird.f32 %v289
  %vm297 = vmor %vm295, %vm296
  %v298 = vsel %vm297, %v289, %v294
  %v299 = vrsqrt.pop %v268
  %v300 = vmul.f32 %v299, %v268
  %v301 = vmul.f32 %v300, %v299
  %v302 = vmul.f32 0.5, %v301
  %v303 = vsub.f32 1.5, %v302
  %v304 = vmul.f32 %v299, %v303
  %vm305 = vweird.f32 %v268
  %vm306 = vweird.f32 %v299
  %vm307 = vmor %vm305, %vm306
  %v308 = vsel %vm307, %v299, %v304
  %v309 = vmul.f32 %v129, %v278
  %v310 = vmul.f32 %v130, %v278
  %v311 = vmul.f32 %v131, %v278
  %v312 = vmul.f32 %v132, %v278
  %v313 = vmul.f32 %v133, %v278
  %v314 = vmul.f32 %v134, %v278
  %v315 = vmul.f32 %v135, %v278
  %v316 = vmul.f32 %v136, %v278
  %v317 = vmul.f32 %v137, %v288
  %v318 = vmul.f32 %v138, %v288
  %v319 = vmul.f32 %v139, %v288
  %v320 = vmul.f32 %v140, %v288
  %v321 = vmul.f32 %v141, %v288
  %v322 = vmul.f32 %v142, %v288
  %v323 = vmul.f32 %v143, %v288
  %v324 = vmul.f32 %v144, %v288
  %v325 = vmul.f32 %v145, %v298
  %v326 = vmul.f32 %v146, %v298
  %v327 = vmul.f32 %v147, %v298
  %v328 = vmul.f32 %v148, %v298
  %v329 = vmul.f32 %v149, %v298
  %v330 = vmul.f32 %v150, %v298
  %v331 = vmul.f32 %v151, %v298
  %v332 = vmul.f32 %v152, %v298
  %v333 = vmul.f32 %v153, %v308
  %v334 = vmul.f32 %v154, %v308
  %v335 = vmul.f32 %v155, %v308
  %v336 = vmul.f32 %v156, %v308
  %v337 = vmul.f32 %v157, %v308
  %v338 = vmul.f32 %v158, %v308
  %v339 = vmul.f32 %v159, %v308
  %v340 = vmul.f32 %v160, %v308
  %v341 = vmax.f32 %v309, 0.0
  %v342 = vmax.f32 %v310, 0.0
  %v343 = vmax.f32 %v311, 0.0
  %v344 = vmax.f32 %v312, 0.0
  %v345 = vmax.f32 %v313, 0.0
  %v346 = vmax.f32 %v314, 0.0
  %v347 = vmax.f32 %v315, 0.0
  %v348 = vmax.f32 %v316, 0.0
  %v349 = vmax.f32 %v317, 0.0
  %v350 = vmax.f32 %v318, 0.0
  %v351 = vmax.f32 %v319, 0.0
  %v352 = vmax.f32 %v320, 0.0
  %v353 = vmax.f32 %v321, 0.0
  %v354 = vmax.f32 %v322, 0.0
  %v355 = vmax.f32 %v323, 0.0
  %v356 = vmax.f32 %v324, 0.0
  %v357 = vmax.f32 %v325, 0.0
  %v358 = vmax.f32 %v326, 0.0
  %v359 = vmax.f32 %v327, 0.0
  %v360 = vmax.f32 %v328, 0.0
  %v361 = vmax.f32 %v329, 0.0
  %v362 = vmax.f32 %v330, 0.0
  %v363 = vmax.f32 %v331, 0.0
  %v364 = vmax.f32 %v332, 0.0
  %v365 = vmax.f32 %v333, 0.0
  %v366 = vmax.f32 %v334, 0.0
  %v367 = vmax.f32 %v335, 0.0
  %v368 = vmax.f32 %v336, 0.0
  %v369 = vmax.f32 %v337, 0.0
  %v370 = vmax.f32 %v338, 0.0
  %v371 = vmax.f32 %v339, 0.0
  %v372 = vmax.f32 %v340, 0.0
  %373 = vst [vmem:[%s1] sm:$0xff] %v341
  %374 = vst [vmem:[%s1 + $0x8] sm:$0xff] %v342
  %375 = vst [vmem:[%s1 + $0x10] sm:$0xff] %v343
  %376 = vst [vmem:[%s1 + $0x18] sm:$0xff] %v344
  %377 = vst [vmem:[%s1 + $0x20] sm:$0xff] %v345
  %378 = vst [vmem:[%s1 + $0x28] sm:$0xff] %v346
  %379 = vst [vmem:[%s1 + $0x30] sm:$0xff] %v347
  %380 = vst [vmem:[%s1 + $0x38] sm:$0xff] %v348
  %381 = vst [vmem:[%s1 + $0x40] sm:$0xff] %v349
  %382 = vst [vmem:[%s1 + $0x48] sm:$0xff] %v350
  %383 = vst [vmem:[%s1 + $0x50] sm:$0xff] %v351
  %384 = vst [vmem:[%s1 + $0x58] sm:$0xff] %v352
  %385 = vst [vmem:[%s1 + $0x60] sm:$0xff] %v353
  %386 = vst [vmem:[%s1 + $0x68] sm:$0xff] %v354
  %387 = vst [vmem:[%s1 + $0x70] sm:$0xff] %v355
  %388 = vst [vmem:[%s1 + $0x78] sm:$0xff] %v356
  %389 = vst [vmem:[%s1 + $0x80] sm:$0xff] %v357
  %390 = vst [vmem:[%s1 + $0x88] sm:$0xff] %v358
  %391 = vst [vmem:[%s1 + $0x90] sm:$0xff] %v359
  %392 = vst [vmem:[%s1 + $0x98] sm:$0xff] %v360
  %393 = vst [vmem:[%s1 + $0xa0] sm:$0xff] %v361
  %394 = vst [vmem:[%s1 + $0xa8] sm:$0xff] %v362
  %395 = vst [vmem:[%s1 + $0xb0] sm:$0xff] %v363
  %396 = vst [vmem:[%s1 + $0xb8] sm:$0xff] %v364
  %397 = vst [vmem:[%s1 + $0xc0] sm:$0xff] %v365
  %398 = vst [vmem:[%s1 + $0xc8] sm:$0xff] %v366
  %399 = vst [vmem:[%s1 + $0xd0] sm:$0xff] %v367
  %400 = vst [vmem:[%s1 + $0xd8] sm:$0xff] %v368
  %401 = vst [vmem:[%s1 + $0xe0] sm:$0xff] %v369
  %402 = vst [vmem:[%s1 + $0xe8] sm:$0xff] %v370
  %403 = vst [vmem:[%s1 + $0xf0] sm:$0xff] %v371
  %404 = vst [vmem:[%s1 + $0xf8] sm:$0xff] %v372
  // Predicated region
  $region6: #{_lambda_.9} parent=0 // pred_check
    _
  $region7: #{_lambda_.9} parent=0 // pred_check_branch
    %406 = sbr.rel (0) target = $region9
  $region8: #{_lambda_.9} parent=0 // pred_region
    _
  $region9: #{_lambda_.9} parent=0 // pred_fallthru
    _
  // Predicated region
  $region10: #{_lambda_.9} parent=0 // pred_check
    _
  $region11: #{_lambda_.9} parent=0 // pred_check_branch
    %408 = sbr.rel (0) target = $region13
  $region12: #{_lambda_.9} parent=0 // pred_region
    _
  $region13: #{_lambda_.9} parent=0 // pred_fallthru
    _

</llo_original>
